<compile_context>
chip_gen: v7x
topology: tpu7x:2x2x1
jax: 0.10.0
libtpu: 0.0.40
codegen_flags: <defaults>
</compile_context>

<pallas_src>
import functools

import jax
import jax.numpy as jnp
from jax.experimental import pallas as pl
from jax.experimental.pallas import tpu as pltpu


# ----------------------------------------------------------------------------
# Pallas kernel: single-K-step matmul with fused bias add + optional ReLU
# ----------------------------------------------------------------------------
def _matmul_bias_relu_kernel(a_ref, b_ref, bias_ref, o_ref, *, apply_relu):
    acc = jnp.dot(a_ref[...], b_ref[...], preferred_element_type=jnp.float32)
    r = acc + bias_ref[...]                      # (tm, tn) + (1, tn), f32
    if apply_relu:
        r = jnp.maximum(r, 0.0)
    o_ref[...] = r.astype(o_ref.dtype)


def _round_up(x, m):
    return ((x + m - 1) // m) * m


def _pick_tile(dim, pref):
    """`pref` if it evenly divides `dim` (and is smaller), else the full
    extent.  Full-extent blocks are exempt from the (8,128) rule."""
    if dim > pref and dim % pref == 0:
        return pref
    return dim


def pallas_matmul(a, b, bias, *, apply_relu, out_dtype):
    """out = act(a @ b + bias).   a:(M,K)  b:(K,N) bf16   bias:(1,N) f32."""
    M, K = a.shape
    K2, N = b.shape
    assert K == K2 and bias.shape == (1, N)

    # Round M only up to the sublane granule (layer 5: 2 -> 8); K and N stay
    # unpadded because their blocks span the full extent.
    Mp = _round_up(M, 8)
    if Mp != M:
        a = jnp.pad(a, ((0, Mp - M), (0, 0)))

    tm = _pick_tile(Mp, 256)     # splits only the big first layer (M = 512)
    tn = _pick_tile(N, 512)      # N <= 256 here -> always a single full tile
    grid = (Mp // tm, N // tn)   # K axis collapsed: no accumulator scratch

    out = pl.pallas_call(
        functools.partial(_matmul_bias_relu_kernel, apply_relu=apply_relu),
        out_shape=jax.ShapeDtypeStruct((Mp, N), out_dtype),
        grid_spec=pltpu.PrefetchScalarGridSpec(
            num_scalar_prefetch=0,
            grid=grid,
            in_specs=[
                pl.BlockSpec((tm, K), lambda i, j: (i, 0)),
                pl.BlockSpec((K, tn), lambda i, j: (0, j)),
                pl.BlockSpec((1, tn), lambda i, j: (0, j)),
            ],
            out_specs=pl.BlockSpec((tm, tn), lambda i, j: (i, j)),
        ),
        compiler_params=pltpu.CompilerParams(
            dimension_semantics=("parallel", "parallel")),
    )(a, b, bias)
    return out[:M] if Mp != M else out


# ----------------------------------------------------------------------------
# Conv = im2col (glue) + Pallas matmul (hot path)
# ----------------------------------------------------------------------------
def _im2col(x_nhwc, ksize, stride):
    B, H, W, C = x_nhwc.shape
    Ho = (H - ksize) // stride + 1
    Wo = (W - ksize) // stride + 1
    patches = []
    for i in range(ksize):
        for j in range(ksize):
            patches.append(
                x_nhwc[:, i:i + stride * Ho:stride, j:j + stride * Wo:stride, :])
    cols = jnp.stack(patches, axis=3)                    # (B,Ho,Wo,k*k,C)
    return cols.reshape(B * Ho * Wo, ksize * ksize * C), (B, Ho, Wo)


def conv2d_packed(x_nhwc, w_mat, bias_row, ksize, stride, *, apply_relu,
                  out_dtype):
    """VALID conv with a pre-packed (kh*kw*Cin, Cout) bf16 weight matrix."""
    cols, (B, Ho, Wo) = _im2col(x_nhwc, ksize, stride)
    y = pallas_matmul(cols, w_mat, bias_row, apply_relu=apply_relu,
                      out_dtype=out_dtype)
    return y.reshape(B, Ho, Wo, w_mat.shape[1])


# ----------------------------------------------------------------------------
# MD_E_attr parameters (pre-packed at init) + forward
# ----------------------------------------------------------------------------
def init_params(key, input_dim=4, output_nc=8, c_dim=3):
    dim = 64
    # (Cout, Cin, kernel, stride, reflection_pad) for the 5 convs in self.model
    cfg = [
        (dim,     input_dim + c_dim, 7, 1, 3),
        (dim * 2, dim,               4, 2, 1),
        (dim * 4, dim * 2,           4, 2, 1),
        (dim * 4, dim * 4,           4, 2, 1),
        (dim * 4, dim * 4,           4, 2, 1),
    ]
    keys = jax.random.split(key, 2 * len(cfg) + 2)
    layers = []
    ki = 0
    for cout, cin, k, s, p in cfg:
        w = 0.02 * jax.random.normal(keys[ki], (cout, cin, k, k), jnp.float32)
        ki += 1
        b = 0.02 * jax.random.normal(keys[ki], (cout,), jnp.float32)
        ki += 1
        # pre-pack once: OIHW -> (kh, kw, Cin, Cout) -> (K, N), cast to bf16
        w_mat = jnp.transpose(w, (2, 3, 1, 0)).reshape(k * k * cin, cout)
        layers.append(dict(w=w_mat.astype(jnp.bfloat16),
                           b=b.reshape(1, cout).astype(jnp.float32),
                           k=k, s=s, pad=p))

    # final Conv2d(dim*4, output_nc, 1, 1, 0) acts on a 1x1 map == linear head
    w_head = 0.02 * jax.random.normal(keys[ki], (output_nc, dim * 4),
                                      jnp.float32)
    ki += 1
    b_head = 0.02 * jax.random.normal(keys[ki], (output_nc,), jnp.float32)
    return dict(layers=layers, head_w=w_head.T, head_b=b_head)


def md_e_attr_forward(params, x_nchw, c):
    B, _, H, W = x_nchw.shape
    # c.view(B, c_dim, 1, 1).repeat(1, 1, H, W); cat([x, c], dim=1)
    c_map = jnp.broadcast_to(c[:, :, None, None], (B, c.shape[1], H, W))
    x_c = jnp.concatenate([x_nchw, c_map], axis=1)
    h = jnp.transpose(x_c, (0, 2, 3, 1)).astype(jnp.bfloat16)   # NHWC, bf16

    n_layers = len(params["layers"])
    for li, lyr in enumerate(params["layers"]):
        p = lyr["pad"]
        h = jnp.pad(h, ((0, 0), (p, p), (p, p), (0, 0)), mode="reflect")
        last = li == n_layers - 1
        h = conv2d_packed(h, lyr["w"], lyr["b"], lyr["k"], lyr["s"],
                          apply_relu=True,
                          out_dtype=jnp.float32 if last else jnp.bfloat16)

    # AdaptiveAvgPool2d(1) -> (B, dim*4)
    feat = jnp.mean(h, axis=(1, 2))
    # tiny 1x1 conv head (M=B, N=output_nc): plain XLA dot per perf review
    out = jnp.dot(feat, params["head_w"]) + params["head_b"]
    return out                                    # == output.view(B, -1)


if __name__ == "__main__":
    key = jax.random.PRNGKey(0)
    kx, kc, kp = jax.random.split(key, 3)

    B, Cin, S, c_dim, out_nc = 2, 4, 16, 3, 8
    x = jax.random.normal(kx, (B, Cin, S, S), jnp.float32)
    c = jax.random.normal(kc, (B, c_dim), jnp.float32)
    params = init_params(kp, input_dim=Cin, output_nc=out_nc, c_dim=c_dim)

    fwd = jax.jit(functools.partial(md_e_attr_forward, params))
    out = fwd(x, c)
    jax.block_until_ready(out)

    # 16 -> 16 -> 8 -> 4 -> 2 -> 1 spatially; pool -> head -> (B, output_nc)
    assert out.shape == (B, out_nc), out.shape
    assert bool(jnp.all(jnp.isfinite(out)))
    print("KERNEL_OK")
</pallas_src>

<mosaic_0001>
module attributes {stable_mosaic.version = 11 : i64} {
  func.func @_matmul_bias_relu_kernel(%arg0: i32, %arg1: i32, %arg2: memref<256x343xbf16, #tpu.memory_space<vmem>>, %arg3: memref<343x64xbf16, #tpu.memory_space<vmem>>, %arg4: memref<1x64xf32, #tpu.memory_space<vmem>>, %arg5: memref<256x64xbf16, #tpu.memory_space<vmem>>) attributes {dimension_semantics = [#tpu.dimension_semantics<parallel>, #tpu.dimension_semantics<parallel>], iteration_bounds = array<i64: 2, 1>, scalar_prefetch = 0 : i64, scratch_operands = 0 : i64, tpu.core_type = #tpu.core_type<tc>, window_params = [{transform_indices = @transform_0, window_bounds = array<i64: 256, 343>}, {transform_indices = @transform_1, window_bounds = array<i64: 343, 64>}, {transform_indices = @transform_2, window_bounds = array<i64: 1, 64>}, {transform_indices = @transform_3, window_bounds = array<i64: 256, 64>}]} {
    %c0 = arith.constant 0 : index
    %c0_0 = arith.constant 0 : index
    %0 = vector.load %arg2[%c0, %c0_0] : memref<256x343xbf16, #tpu.memory_space<vmem>>, vector<256x343xbf16>
    %c0_1 = arith.constant 0 : index
    %c0_2 = arith.constant 0 : index
    %1 = vector.load %arg3[%c0_1, %c0_2] : memref<343x64xbf16, #tpu.memory_space<vmem>>, vector<343x64xbf16>
    %cst = arith.constant dense<0.000000e+00> : vector<256x64xf32>
    %2 = tpu.matmul %0, %1, %cst {dimension_numbers = #tpu.dot_dimension_numbers<[1], [0], [0], [1], [0, 0, 1, 1], [], []>} : vector<256x343xbf16>, vector<343x64xbf16>, vector<256x64xf32> -> vector<256x64xf32>
    %c0_3 = arith.constant 0 : index
    %c0_4 = arith.constant 0 : index
    %3 = vector.load %arg4[%c0_3, %c0_4] : memref<1x64xf32, #tpu.memory_space<vmem>>, vector<1x64xf32>
    %4 = vector.broadcast %3 : vector<1x64xf32> to vector<256x64xf32>
    %5 = arith.addf %2, %4 : vector<256x64xf32>
    %cst_5 = arith.constant 0.000000e+00 : f32
    %6 = vector.broadcast %cst_5 : f32 to vector<256x64xf32>
    %7 = arith.maximumf %5, %6 : vector<256x64xf32>
    %8 = arith.truncf %7 : vector<256x64xf32> to vector<256x64xbf16>
    %c0_6 = arith.constant 0 : index
    %c0_7 = arith.constant 0 : index
    %9 = vector.load %arg5[%c0_6, %c0_7] : memref<256x64xbf16, #tpu.memory_space<vmem>>, vector<256x64xbf16>
    tpu.vector_store %arg5[%c0_6, %c0_7], %8 {strides = array<i32>} : memref<256x64xbf16, #tpu.memory_space<vmem>>, vector<256x64xbf16>,
    return
  }
  func.func @transform_0(%arg0: i32, %arg1: i32) -> (i32, i32) {
    %c0_i32 = arith.constant 0 : i32
    %c0_i32_0 = arith.constant 0 : i32
    return %arg0, %c0_i32 : i32, i32
  }
  func.func @transform_1(%arg0: i32, %arg1: i32) -> (i32, i32) {
    %c0_i32 = arith.constant 0 : i32
    %c0_i32_0 = arith.constant 0 : i32
    return %c0_i32, %arg1 : i32, i32
  }
  func.func @transform_2(%arg0: i32, %arg1: i32) -> (i32, i32) {
    %c0_i32 = arith.constant 0 : i32
    %c0_i32_0 = arith.constant 0 : i32
    return %c0_i32, %arg1 : i32, i32
  }
  func.func @transform_3(%arg0: i32, %arg1: i32) -> (i32, i32) {
    %c0_i32 = arith.constant 0 : i32
    return %arg0, %arg1 : i32, i32
  }
}

module attributes {stable_mosaic.version = 11 : i64} {
  func.func @_matmul_bias_relu_kernel(%arg0: i32, %arg1: i32, %arg2: memref<128x1024xbf16, #tpu.memory_space<vmem>>, %arg3: memref<1024x128xbf16, #tpu.memory_space<vmem>>, %arg4: memref<1x128xf32, #tpu.memory_space<vmem>>, %arg5: memref<128x128xbf16, #tpu.memory_space<vmem>>) attributes {dimension_semantics = [#tpu.dimension_semantics<parallel>, #tpu.dimension_semantics<parallel>], iteration_bounds = array<i64: 1, 1>, scalar_prefetch = 0 : i64, scratch_operands = 0 : i64, tpu.core_type = #tpu.core_type<tc>, window_params = [{transform_indices = @transform_0, window_bounds = array<i64: 128, 1024>}, {transform_indices = @transform_1, window_bounds = array<i64: 1024, 128>}, {transform_indices = @transform_2, window_bounds = array<i64: 1, 128>}, {transform_indices = @transform_3, window_bounds = array<i64: 128, 128>}]} {
    %c0 = arith.constant 0 : index
    %c0_0 = arith.constant 0 : index
    %0 = vector.load %arg2[%c0, %c0_0] : memref<128x1024xbf16, #tpu.memory_space<vmem>>, vector<128x1024xbf16>
    %c0_1 = arith.constant 0 : index
    %c0_2 = arith.constant 0 : index
    %1 = vector.load %arg3[%c0_1, %c0_2] : memref<1024x128xbf16, #tpu.memory_space<vmem>>, vector<1024x128xbf16>
    %cst = arith.constant dense<0.000000e+00> : vector<128x128xf32>
    %2 = tpu.matmul %0, %1, %cst {dimension_numbers = #tpu.dot_dimension_numbers<[1], [0], [0], [1], [0, 0, 1, 1], [], []>} : vector<128x1024xbf16>, vector<1024x128xbf16>, vector<128x128xf32> -> vector<128x128xf32>
    %c0_3 = arith.constant 0 : index
    %c0_4 = arith.constant 0 : index
    %3 = vector.load %arg4[%c0_3, %c0_4] : memref<1x128xf32, #tpu.memory_space<vmem>>, vector<1x128xf32>
    %4 = vector.broadcast %3 : vector<1x128xf32> to vector<128x128xf32>
    %5 = arith.addf %2, %4 : vector<128x128xf32>
    %cst_5 = arith.constant 0.000000e+00 : f32
    %6 = vector.broadcast %cst_5 : f32 to vector<128x128xf32>
    %7 = arith.maximumf %5, %6 : vector<128x128xf32>
    %8 = arith.truncf %7 : vector<128x128xf32> to vector<128x128xbf16>
    %c0_6 = arith.constant 0 : index
    %c0_7 = arith.constant 0 : index
    %9 = vector.load %arg5[%c0_6, %c0_7] : memref<128x128xbf16, #tpu.memory_space<vmem>>, vector<128x128xbf16>
    tpu.vector_store %arg5[%c0_6, %c0_7], %8 {strides = array<i32>} : memref<128x128xbf16, #tpu.memory_space<vmem>>, vector<128x128xbf16>,
    return
  }
  func.func @transform_0(%arg0: i32, %arg1: i32) -> (i32, i32) {
    %c0_i32 = arith.constant 0 : i32
    %c0_i32_0 = arith.constant 0 : i32
    return %arg0, %c0_i32 : i32, i32
  }
  func.func @transform_1(%arg0: i32, %arg1: i32) -> (i32, i32) {
    %c0_i32 = arith.constant 0 : i32
    %c0_i32_0 = arith.constant 0 : i32
    return %c0_i32, %arg1 : i32, i32
  }
  func.func @transform_2(%arg0: i32, %arg1: i32) -> (i32, i32) {
    %c0_i32 = arith.constant 0 : i32
    %c0_i32_0 = arith.constant 0 : i32
    return %c0_i32, %arg1 : i32, i32
  }
  func.func @transform_3(%arg0: i32, %arg1: i32) -> (i32, i32) {
    %c0_i32 = arith.constant 0 : i32
    return %arg0, %arg1 : i32, i32
  }
}

module attributes {stable_mosaic.version = 11 : i64} {
  func.func @_matmul_bias_relu_kernel(%arg0: i32, %arg1: i32, %arg2: memref<32x2048xbf16, #tpu.memory_space<vmem>>, %arg3: memref<2048x256xbf16, #tpu.memory_space<vmem>>, %arg4: memref<1x256xf32, #tpu.memory_space<vmem>>, %arg5: memref<32x256xbf16, #tpu.memory_space<vmem>>) attributes {dimension_semantics = [#tpu.dimension_semantics<parallel>, #tpu.dimension_semantics<parallel>], iteration_bounds = array<i64: 1, 1>, scalar_prefetch = 0 : i64, scratch_operands = 0 : i64, tpu.core_type = #tpu.core_type<tc>, window_params = [{transform_indices = @transform_0, window_bounds = array<i64: 32, 2048>}, {transform_indices = @transform_1, window_bounds = array<i64: 2048, 256>}, {transform_indices = @transform_2, window_bounds = array<i64: 1, 256>}, {transform_indices = @transform_3, window_bounds = array<i64: 32, 256>}]} {
    %c0 = arith.constant 0 : index
    %c0_0 = arith.constant 0 : index
    %0 = vector.load %arg2[%c0, %c0_0] : memref<32x2048xbf16, #tpu.memory_space<vmem>>, vector<32x2048xbf16>
    %c0_1 = arith.constant 0 : index
    %c0_2 = arith.constant 0 : index
    %1 = vector.load %arg3[%c0_1, %c0_2] : memref<2048x256xbf16, #tpu.memory_space<vmem>>, vector<2048x256xbf16>
    %cst = arith.constant dense<0.000000e+00> : vector<32x256xf32>
    %2 = tpu.matmul %0, %1, %cst {dimension_numbers = #tpu.dot_dimension_numbers<[1], [0], [0], [1], [0, 0, 1, 1], [], []>} : vector<32x2048xbf16>, vector<2048x256xbf16>, vector<32x256xf32> -> vector<32x256xf32>
    %c0_3 = arith.constant 0 : index
    %c0_4 = arith.constant 0 : index
    %3 = vector.load %arg4[%c0_3, %c0_4] : memref<1x256xf32, #tpu.memory_space<vmem>>, vector<1x256xf32>
    %4 = vector.broadcast %3 : vector<1x256xf32> to vector<32x256xf32>
    %5 = arith.addf %2, %4 : vector<32x256xf32>
    %cst_5 = arith.constant 0.000000e+00 : f32
    %6 = vector.broadcast %cst_5 : f32 to vector<32x256xf32>
    %7 = arith.maximumf %5, %6 : vector<32x256xf32>
    %8 = arith.truncf %7 : vector<32x256xf32> to vector<32x256xbf16>
    %c0_6 = arith.constant 0 : index
    %c0_7 = arith.constant 0 : index
    %9 = vector.load %arg5[%c0_6, %c0_7] : memref<32x256xbf16, #tpu.memory_space<vmem>>, vector<32x256xbf16>
    tpu.vector_store %arg5[%c0_6, %c0_7], %8 {strides = array<i32>} : memref<32x256xbf16, #tpu.memory_space<vmem>>, vector<32x256xbf16>,
    return
  }
  func.func @transform_0(%arg0: i32, %arg1: i32) -> (i32, i32) {
    %c0_i32 = arith.constant 0 : i32
    %c0_i32_0 = arith.constant 0 : i32
    return %arg0, %c0_i32 : i32, i32
  }
  func.func @transform_1(%arg0: i32, %arg1: i32) -> (i32, i32) {
    %c0_i32 = arith.constant 0 : i32
    %c0_i32_0 = arith.constant 0 : i32
    return %c0_i32, %arg1 : i32, i32
  }
  func.func @transform_2(%arg0: i32, %arg1: i32) -> (i32, i32) {
    %c0_i32 = arith.constant 0 : i32
    %c0_i32_0 = arith.constant 0 : i32
    return %c0_i32, %arg1 : i32, i32
  }
  func.func @transform_3(%arg0: i32, %arg1: i32) -> (i32, i32) {
    %c0_i32 = arith.constant 0 : i32
    return %arg0, %arg1 : i32, i32
  }
}

module attributes {stable_mosaic.version = 11 : i64} {
  func.func @_matmul_bias_relu_kernel(%arg0: i32, %arg1: i32, %arg2: memref<8x4096xbf16, #tpu.memory_space<vmem>>, %arg3: memref<4096x256xbf16, #tpu.memory_space<vmem>>, %arg4: memref<1x256xf32, #tpu.memory_space<vmem>>, %arg5: memref<8x256xbf16, #tpu.memory_space<vmem>>) attributes {dimension_semantics = [#tpu.dimension_semantics<parallel>, #tpu.dimension_semantics<parallel>], iteration_bounds = array<i64: 1, 1>, scalar_prefetch = 0 : i64, scratch_operands = 0 : i64, tpu.core_type = #tpu.core_type<tc>, window_params = [{transform_indices = @transform_0, window_bounds = array<i64: 8, 4096>}, {transform_indices = @transform_1, window_bounds = array<i64: 4096, 256>}, {transform_indices = @transform_2, window_bounds = array<i64: 1, 256>}, {transform_indices = @transform_3, window_bounds = array<i64: 8, 256>}]} {
    %c0 = arith.constant 0 : index
    %c0_0 = arith.constant 0 : index
    %0 = vector.load %arg2[%c0, %c0_0] : memref<8x4096xbf16, #tpu.memory_space<vmem>>, vector<8x4096xbf16>
    %c0_1 = arith.constant 0 : index
    %c0_2 = arith.constant 0 : index
    %1 = vector.load %arg3[%c0_1, %c0_2] : memref<4096x256xbf16, #tpu.memory_space<vmem>>, vector<4096x256xbf16>
    %cst = arith.constant dense<0.000000e+00> : vector<8x256xf32>
    %2 = tpu.matmul %0, %1, %cst {dimension_numbers = #tpu.dot_dimension_numbers<[1], [0], [0], [1], [0, 0, 1, 1], [], []>} : vector<8x4096xbf16>, vector<4096x256xbf16>, vector<8x256xf32> -> vector<8x256xf32>
    %c0_3 = arith.constant 0 : index
    %c0_4 = arith.constant 0 : index
    %3 = vector.load %arg4[%c0_3, %c0_4] : memref<1x256xf32, #tpu.memory_space<vmem>>, vector<1x256xf32>
    %4 = vector.broadcast %3 : vector<1x256xf32> to vector<8x256xf32>
    %5 = arith.addf %2, %4 : vector<8x256xf32>
    %cst_5 = arith.constant 0.000000e+00 : f32
    %6 = vector.broadcast %cst_5 : f32 to vector<8x256xf32>
    %7 = arith.maximumf %5, %6 : vector<8x256xf32>
    %8 = arith.truncf %7 : vector<8x256xf32> to vector<8x256xbf16>
    %c0_6 = arith.constant 0 : index
    %c0_7 = arith.constant 0 : index
    %9 = vector.load %arg5[%c0_6, %c0_7] : memref<8x256xbf16, #tpu.memory_space<vmem>>, vector<8x256xbf16>
    tpu.vector_store %arg5[%c0_6, %c0_7], %8 {strides = array<i32>} : memref<8x256xbf16, #tpu.memory_space<vmem>>, vector<8x256xbf16>,
    return
  }
  func.func @transform_0(%arg0: i32, %arg1: i32) -> (i32, i32) {
    %c0_i32 = arith.constant 0 : i32
    %c0_i32_0 = arith.constant 0 : i32
    return %arg0, %c0_i32 : i32, i32
  }
  func.func @transform_1(%arg0: i32, %arg1: i32) -> (i32, i32) {
    %c0_i32 = arith.constant 0 : i32
    %c0_i32_0 = arith.constant 0 : i32
    return %c0_i32, %arg1 : i32, i32
  }
  func.func @transform_2(%arg0: i32, %arg1: i32) -> (i32, i32) {
    %c0_i32 = arith.constant 0 : i32
    %c0_i32_0 = arith.constant 0 : i32
    return %c0_i32, %arg1 : i32, i32
  }
  func.func @transform_3(%arg0: i32, %arg1: i32) -> (i32, i32) {
    %c0_i32 = arith.constant 0 : i32
    return %arg0, %arg1 : i32, i32
  }
}

module attributes {stable_mosaic.version = 11 : i64} {
  func.func @_matmul_bias_relu_kernel(%arg0: i32, %arg1: i32, %arg2: memref<8x4096xbf16, #tpu.memory_space<vmem>>, %arg3: memref<4096x256xbf16, #tpu.memory_space<vmem>>, %arg4: memref<1x256xf32, #tpu.memory_space<vmem>>, %arg5: memref<8x256xf32, #tpu.memory_space<vmem>>) attributes {dimension_semantics = [#tpu.dimension_semantics<parallel>, #tpu.dimension_semantics<parallel>], iteration_bounds = array<i64: 1, 1>, scalar_prefetch = 0 : i64, scratch_operands = 0 : i64, tpu.core_type = #tpu.core_type<tc>, window_params = [{transform_indices = @transform_0, window_bounds = array<i64: 8, 4096>}, {transform_indices = @transform_1, window_bounds = array<i64: 4096, 256>}, {transform_indices = @transform_2, window_bounds = array<i64: 1, 256>}, {transform_indices = @transform_3, window_bounds = array<i64: 8, 256>}]} {
    %c0 = arith.constant 0 : index
    %c0_0 = arith.constant 0 : index
    %0 = vector.load %arg2[%c0, %c0_0] : memref<8x4096xbf16, #tpu.memory_space<vmem>>, vector<8x4096xbf16>
    %c0_1 = arith.constant 0 : index
    %c0_2 = arith.constant 0 : index
    %1 = vector.load %arg3[%c0_1, %c0_2] : memref<4096x256xbf16, #tpu.memory_space<vmem>>, vector<4096x256xbf16>
    %cst = arith.constant dense<0.000000e+00> : vector<8x256xf32>
    %2 = tpu.matmul %0, %1, %cst {dimension_numbers = #tpu.dot_dimension_numbers<[1], [0], [0], [1], [0, 0, 1, 1], [], []>} : vector<8x4096xbf16>, vector<4096x256xbf16>, vector<8x256xf32> -> vector<8x256xf32>
    %c0_3 = arith.constant 0 : index
    %c0_4 = arith.constant 0 : index
    %3 = vector.load %arg4[%c0_3, %c0_4] : memref<1x256xf32, #tpu.memory_space<vmem>>, vector<1x256xf32>
    %4 = vector.broadcast %3 : vector<1x256xf32> to vector<8x256xf32>
    %5 = arith.addf %2, %4 : vector<8x256xf32>
    %cst_5 = arith.constant 0.000000e+00 : f32
    %6 = vector.broadcast %cst_5 : f32 to vector<8x256xf32>
    %7 = arith.maximumf %5, %6 : vector<8x256xf32>
    %c0_6 = arith.constant 0 : index
    %c0_7 = arith.constant 0 : index
    %8 = vector.load %arg5[%c0_6, %c0_7] : memref<8x256xf32, #tpu.memory_space<vmem>>, vector<8x256xf32>
    tpu.vector_store %arg5[%c0_6, %c0_7], %7 {strides = array<i32>} : memref<8x256xf32, #tpu.memory_space<vmem>>, vector<8x256xf32>,
    return
  }
  func.func @transform_0(%arg0: i32, %arg1: i32) -> (i32, i32) {
    %c0_i32 = arith.constant 0 : i32
    %c0_i32_0 = arith.constant 0 : i32
    return %arg0, %c0_i32 : i32, i32
  }
  func.func @transform_1(%arg0: i32, %arg1: i32) -> (i32, i32) {
    %c0_i32 = arith.constant 0 : i32
    %c0_i32_0 = arith.constant 0 : i32
    return %c0_i32, %arg1 : i32, i32
  }
  func.func @transform_2(%arg0: i32, %arg1: i32) -> (i32, i32) {
    %c0_i32 = arith.constant 0 : i32
    %c0_i32_0 = arith.constant 0 : i32
    return %c0_i32, %arg1 : i32, i32
  }
  func.func @transform_3(%arg0: i32, %arg1: i32) -> (i32, i32) {
    %c0_i32 = arith.constant 0 : i32
    return %arg0, %arg1 : i32, i32
  }
}

</mosaic_0001>

<llo_original>
// kernel: md_e_attr_forward.5
$region0: #{md_e_attr_forward.5}
  #allocation0 [shape = 'u32[]', space=smem, size = 0x4, offset = 0x4, fixed_abs, tag = 'smem constant byte address 0x4 - core index']
  #allocation1 [shape = 'u32[144,128]{1,0:T(1,128)}', space=vmem, size = 0x12000, scoped, tag = 'internal scratch']
  %s0 = inlined_call_operand.vmem [shape: bf16[512,343], index: 0, kind: input, shape index: {}]
  %s1 = inlined_call_operand.vmem [shape: bf16[343,64], index: 1, kind: input, shape index: {}]
  %s2 = inlined_call_operand.vmem [shape: f32[1,64], index: 2, kind: input, shape index: {}]
  %s3 = inlined_call_operand.vmem [shape: bf16[512,64], index: 3, kind: output, shape index: {}]
  %s4 = sld [smem:[#allocation0]]
  $region45: #{md_e_attr_forward.5} parent=0
    _
  %s6 = ssub.s32 1, %s4
  %s7 = scalar_select 0, %s6, %s4
  loop: start=0, step=1, limit=4
  $region2: #{md_e_attr_forward.5} parent=0 // loop_pre_header
    _
  $region3: #{md_e_attr_forward.5} parent=0 // loop_header
    %s9 = sphi 0, %s13
    %p10 = scmp.ge.s32.totalorder %s9, 4
    %s16 = sphi 0, %s28
    %s17 = sphi 0, %s24
    %s18 = sphi 0, %s16
    %s19 = sphi 0, %s17
    %s20 = sphi 0, %s18
    %s21 = sphi 0, %s19
    %s31 = sphi 0, %s33
    %s34 = sphi 0, %s31
    %s35 = sphi 0, %s34
    %s51 = sphi 0, %s35
    %s57 = sphi 0, %s59
    %s60 = sphi 0, %s57
    %s61 = sphi 0, %s60
    %s77 = sphi 0, %s61
    %s83 = sphi 0, %s85
    %s86 = sphi 0, %s83
    %s87 = sphi 0, %s86
    %s103 = sphi 0, %s87
    %s111 = sphi 0, %s113
    %s114 = sphi 0, %s111
    %s115 = sphi 0, %s114
    %s131 = sphi 0, %s115
  $region4: #{md_e_attr_forward.5} parent=0 // loop_header_branch
    %12 = sbr.rel (%p10) target = $region8
  $region5: #{md_e_attr_forward.5} parent=0 // loop_body
    %s14 = ssub.s32 %s9, 1
    %s15 = ssub.s32 %s9, 2
    %s22 = sadd.s32 1, %s17
    %p23 = scmp.ge.s32.totalorder %s22, 1
    %s24 = scalar_select %p23, 0, %s22
    %s25 = sadd.s32 1, %s16
    %s26 = scalar_select %p23, %s25, %s16
    %p27 = scmp.ge.s32.totalorder %s26, 2
    %s28 = scalar_select %p27, 0, %s26
    %s29 = ssub.s32 %s16, %s28
    %p30 = scmp.eq.s32.totalorder %s29, 0
    %s32 = sadd.s32 %s31, 1
    %s33 = scalar_select %p30, %s31, %s32
    %p36 = pneg %p30
    %p37 = scmp.eq.s32.totalorder %s9, 1
    %p38 = por %p36, %p37
    %p39 = scmp.ne.s32.totalorder %s31, %s34
    %p40 = scmp.eq.s32.totalorder %s9, 0
    %p41 = por %p39, %p40
    %p42 = scmp.ne.s32.totalorder %s31, %s34
    %p43 = scmp.eq.s32.totalorder %s14, 1
    %p44 = por %p42, %p43
    %p45 = scmp.ne.s32.totalorder %s34, %s35
    %p46 = scmp.eq.s32.totalorder %s14, 0
    %p47 = por %p45, %p46
    %p48 = scmp.ne.s32.totalorder %s34, %s35
    %p49 = scmp.eq.s32.totalorder %s15, 1
    %p50 = por %p48, %p49
    %p52 = scmp.ne.s32.totalorder %s35, %s51
    %p53 = scmp.eq.s32.totalorder %s15, 0
    %p54 = por %p52, %p53
    %s55 = ssub.s32 %s17, %s24
    %p56 = scmp.eq.s32.totalorder %s55, 0
    %s58 = sadd.s32 %s57, 1
    %s59 = scalar_select %p56, %s57, %s58
    %p62 = pneg %p56
    %p63 = scmp.eq.s32.totalorder %s9, 1
    %p64 = por %p62, %p63
    %p65 = scmp.ne.s32.totalorder %s57, %s60
    %p66 = scmp.eq.s32.totalorder %s9, 0
    %p67 = por %p65, %p66
    %p68 = scmp.ne.s32.totalorder %s57, %s60
    %p69 = scmp.eq.s32.totalorder %s14, 1
    %p70 = por %p68, %p69
    %p71 = scmp.ne.s32.totalorder %s60, %s61
    %p72 = scmp.eq.s32.totalorder %s14, 0
    %p73 = por %p71, %p72
    %p74 = scmp.ne.s32.totalorder %s60, %s61
    %p75 = scmp.eq.s32.totalorder %s15, 1
    %p76 = por %p74, %p75
    %p78 = scmp.ne.s32.totalorder %s61, %s77
    %p79 = scmp.eq.s32.totalorder %s15, 0
    %p80 = por %p78, %p79
    %s81 = ssub.s32 %s17, %s24
    %p82 = scmp.eq.s32.totalorder %s81, 0
    %s84 = sadd.s32 %s83, 1
    %s85 = scalar_select %p82, %s83, %s84
    %p88 = pneg %p82
    %p89 = scmp.eq.s32.totalorder %s9, 1
    %p90 = por %p88, %p89
    %p91 = scmp.ne.s32.totalorder %s83, %s86
    %p92 = scmp.eq.s32.totalorder %s9, 0
    %p93 = por %p91, %p92
    %p94 = scmp.ne.s32.totalorder %s83, %s86
    %p95 = scmp.eq.s32.totalorder %s14, 1
    %p96 = por %p94, %p95
    %p97 = scmp.ne.s32.totalorder %s86, %s87
    %p98 = scmp.eq.s32.totalorder %s14, 0
    %p99 = por %p97, %p98
    %p100 = scmp.ne.s32.totalorder %s86, %s87
    %p101 = scmp.eq.s32.totalorder %s15, 1
    %p102 = por %p100, %p101
    %p104 = scmp.ne.s32.totalorder %s87, %s103
    %p105 = scmp.eq.s32.totalorder %s15, 0
    %p106 = por %p104, %p105
    %s107 = ssub.s32 %s16, %s28
    %s108 = ssub.s32 %s17, %s24
    %s109 = sor.u32 %s107, %s108
    %p110 = scmp.eq.s32.totalorder %s109, 0
    %s112 = sadd.s32 %s111, 1
    %s113 = scalar_select %p110, %s111, %s112
    %p116 = pneg %p110
    %p117 = scmp.eq.s32.totalorder %s9, 1
    %p118 = por %p116, %p117
    %p119 = scmp.ne.s32.totalorder %s111, %s114
    %p120 = scmp.eq.s32.totalorder %s9, 0
    %p121 = por %p119, %p120
    %p122 = scmp.ne.s32.totalorder %s111, %s114
    %p123 = scmp.eq.s32.totalorder %s14, 1
    %p124 = por %p122, %p123
    %p125 = scmp.ne.s32.totalorder %s114, %s115
    %p126 = scmp.eq.s32.totalorder %s14, 0
    %p127 = por %p125, %p126
    %p128 = scmp.ne.s32.totalorder %s114, %s115
    %p129 = scmp.eq.s32.totalorder %s15, 1
    %p130 = por %p128, %p129
    %p132 = scmp.ne.s32.totalorder %s115, %s131
    %p133 = scmp.eq.s32.totalorder %s15, 0
    %p134 = por %p132, %p133
    %p135 = scmp.le.s32.totalorder 1, %s9
    %p136 = scmp.lt.s32.totalorder %s9, 3
    %p137 = pnand %p135, %p136
    %p138 = pneg %p137
    // Predicated region
    $region9: #{md_e_attr_forward.5} parent=5 // pred_check
      _
    $region10: #{md_e_attr_forward.5} parent=5 // pred_check_branch
      %140 = sbr.rel (%p137) target = $region12
    $region11: #{md_e_attr_forward.5} parent=5 // pred_region
      %s141 = ssub.s32 %s9, 1
      // Predicated region
      $region13: #{md_e_attr_forward.5} parent=11 // pred_check
        %p142 = pneg %p73
      $region14: #{md_e_attr_forward.5} parent=11 // pred_check_branch
        %144 = sbr.rel (%p142) target = $region16
      $region15: #{md_e_attr_forward.5} parent=11 // pred_region
        %p145 = scmp.lt.s32.totalorder %s19, 0
        %s146 = scalar_select %p145, %s19, 0
        %s147 = smul.addr %s146, 4
        %s148 = scalar_lea.vmem %s1, %s147
      $region16: #{md_e_attr_forward.5} parent=11 // pred_fallthru
        _
      // Predicated region
      $region17: #{md_e_attr_forward.5} parent=11 // pred_check
        %p149 = pneg %p99
      $region18: #{md_e_attr_forward.5} parent=11 // pred_check_branch
        %151 = sbr.rel (%p149) target = $region20
      $region19: #{md_e_attr_forward.5} parent=11 // pred_region
        %p152 = scmp.lt.s32.totalorder %s19, 0
        %s153 = scalar_select %p152, %s19, 0
        %s154 = scalar_lea.vmem %s2, %s153
      $region20: #{md_e_attr_forward.5} parent=11 // pred_fallthru
        _
    $region12: #{md_e_attr_forward.5} parent=5 // pred_fallthru
      _
    %p155 = scmp.lt.s32.totalorder %s9, 2
    // Predicated region
    $region21: #{md_e_attr_forward.5} parent=5 // pred_check
      %p156 = pneg %p155
    $region22: #{md_e_attr_forward.5} parent=5 // pred_check_branch
      %158 = sbr.rel (%p156) target = $region24
    $region23: #{md_e_attr_forward.5} parent=5 // pred_region
      // Predicated region
      $region25: #{md_e_attr_forward.5} parent=23 // pred_check
        %p159 = pneg %p41
      $region26: #{md_e_attr_forward.5} parent=23 // pred_check_branch
        %161 = sbr.rel (%p159) target = $region28
      $region27: #{md_e_attr_forward.5} parent=23 // pred_region
        %s162 = smul.u32 32, %s16
        %p163 = scmp.lt.s32.totalorder %s162, 63
        %s164 = scalar_select %p163, %s162, 63
        %s165 = smul.addr %s164, 3
        %s166 = smul.addr %s165, 4
        %s167 = scalar_lea.vmem %s0, %s166
        %s168 = smul.u32 32, %s16
      $region28: #{md_e_attr_forward.5} parent=23 // pred_fallthru
        _
    $region24: #{md_e_attr_forward.5} parent=5 // pred_fallthru
      _
    %p169 = scmp.le.s32.totalorder 1, %s9
    %p170 = scmp.lt.s32.totalorder %s9, 3
    %p171 = pnand %p169, %p170
    %p172 = pneg %p171
    // Predicated region
    $region29: #{md_e_attr_forward.5} parent=5 // pred_check
      _
    $region30: #{md_e_attr_forward.5} parent=5 // pred_check_branch
      %174 = sbr.rel (%p171) target = $region32
    $region31: #{md_e_attr_forward.5} parent=5 // pred_region
      %s175 = ssub.s32 %s9, 1
      %s176 = smul.u32 32, %s18
      %p177 = scmp.lt.s32.totalorder %s176, 63
      %s178 = scalar_select %p177, %s176, 63
      %s179 = smul.addr %s178, 3
      %s180 = smul.addr %s179, 4
      %s181 = scalar_lea.vmem %s0, %s180
      %p182 = pneg %p47
      %p183 = pneg %p44
      %p184 = scmp.lt.s32.totalorder %s19, 0
      %s185 = scalar_select %p184, %s19, 0
      %s186 = smul.addr %s185, 4
      %s187 = scalar_lea.vmem %s1, %s186
      %p188 = pneg %p73
      %p189 = pneg %p70
      %p190 = scmp.lt.s32.totalorder %s19, 0
      %s191 = scalar_select %p190, %s19, 0
      %s192 = scalar_lea.vmem %s2, %s191
      %p193 = pneg %p99
      %p194 = pneg %p96
      %p195 = pneg %p127
      %p196 = pneg %p124
      %s197 = smul.u32 32, %s18
      %p198 = scmp.lt.s32.totalorder %s197, 63
      %s199 = scalar_select %p198, %s197, 63
      %p200 = scmp.lt.s32.totalorder %s19, 0
      %s201 = scalar_select %p200, %s19, 0
      %s202 = sadd.s32 %s201, %s199
      %s203 = smul.addr %s202, 4
      %s204 = scalar_lea.vmem %s3, %s203
      %s205 = smul.u32 32, %s18
      %p206 = scmp.lt.s32.totalorder %s205, 63
      %s207 = scalar_select %p206, %s205, 63
      %s208 = smul.addr %s207, 3
      %s209 = smul.addr %s208, 4
      %s210 = scalar_lea.vmem %s0, %s209
      %s211 = smul.u32 32, %s18
      %p212 = scmp.lt.s32.totalorder %s19, 0
      %s213 = scalar_select %p212, %s19, 0
      %s214 = smul.addr %s213, 4
      %s215 = scalar_lea.vmem %s1, %s214
      %p216 = scmp.lt.s32.totalorder %s19, 0
      %s217 = scalar_select %p216, %s19, 0
      %s218 = scalar_lea.vmem %s2, %s217
      %s219 = smul.u32 32, %s18
      %p220 = scmp.lt.s32.totalorder %s219, 63
      %s221 = scalar_select %p220, %s219, 63
      %p222 = scmp.lt.s32.totalorder %s19, 0
      %s223 = scalar_select %p222, %s19, 0
      %s224 = sadd.s32 %s223, %s221
      %s225 = smul.addr %s224, 4
      %s226 = scalar_lea.vmem %s3, %s225
      %s227 = smul.u32 32, %s18
      %v229 = vld [vmem:[%s210] sm:$0xff]
      %v230 = vld [vmem:[%s210 + $0x8] sm:$0xf]
      %v231 = vld [vmem:[%s210 + $0xc] sm:$0xff]
      %v232 = vld [vmem:[%s210 + $0x14] sm:$0xf]
      %v233 = vld [vmem:[%s210 + $0x18] sm:$0xff]
      %v234 = vld [vmem:[%s210 + $0x20] sm:$0xf]
      %v235 = vld [vmem:[%s210 + $0x24] sm:$0xff]
      %v236 = vld [vmem:[%s210 + $0x2c] sm:$0xf]
      %v237 = vld [vmem:[%s210 + $0x30] sm:$0xff]
      %v238 = vld [vmem:[%s210 + $0x38] sm:$0xf]
      %v239 = vld [vmem:[%s210 + $0x3c] sm:$0xff]
      %v240 = vld [vmem:[%s210 + $0x44] sm:$0xf]
      %v241 = vld [vmem:[%s210 + $0x48] sm:$0xff]
      %v242 = vld [vmem:[%s210 + $0x50] sm:$0xf]
      %v243 = vld [vmem:[%s210 + $0x54] sm:$0xff]
      %v244 = vld [vmem:[%s210 + $0x5c] sm:$0xf]
      %v245 = vld [vmem:[%s210 + $0x60] sm:$0xff]
      %v246 = vld [vmem:[%s210 + $0x68] sm:$0xf]
      %v247 = vld [vmem:[%s210 + $0x6c] sm:$0xff]
      %v248 = vld [vmem:[%s210 + $0x74] sm:$0xf]
      %v249 = vld [vmem:[%s210 + $0x78] sm:$0xff]
      %v250 = vld [vmem:[%s210 + $0x80] sm:$0xf]
      %v251 = vld [vmem:[%s210 + $0x84] sm:$0xff]
      %v252 = vld [vmem:[%s210 + $0x8c] sm:$0xf]
      %v253 = vld [vmem:[%s210 + $0x90] sm:$0xff]
      %v254 = vld [vmem:[%s210 + $0x98] sm:$0xf]
      %v255 = vld [vmem:[%s210 + $0x9c] sm:$0xff]
      %v256 = vld [vmem:[%s210 + $0xa4] sm:$0xf]
      %v257 = vld [vmem:[%s210 + $0xa8] sm:$0xff]
      %v258 = vld [vmem:[%s210 + $0xb0] sm:$0xf]
      %v259 = vld [vmem:[%s210 + $0xb4] sm:$0xff]
      %v260 = vld [vmem:[%s210 + $0xbc] sm:$0xf]
      %v261 = vld [vmem:[%s210 + $0xc0] sm:$0xff]
      %v262 = vld [vmem:[%s210 + $0xc8] sm:$0xf]
      %v263 = vld [vmem:[%s210 + $0xcc] sm:$0xff]
      %v264 = vld [vmem:[%s210 + $0xd4] sm:$0xf]
      %v265 = vld [vmem:[%s210 + $0xd8] sm:$0xff]
      %v266 = vld [vmem:[%s210 + $0xe0] sm:$0xf]
      %v267 = vld [vmem:[%s210 + $0xe4] sm:$0xff]
      %v268 = vld [vmem:[%s210 + $0xec] sm:$0xf]
      %v269 = vld [vmem:[%s210 + $0xf0] sm:$0xff]
      %v270 = vld [vmem:[%s210 + $0xf8] sm:$0xf]
      %v271 = vld [vmem:[%s210 + $0xfc] sm:$0xff]
      %v272 = vld [vmem:[%s210 + $0x104] sm:$0xf]
      %v273 = vld [vmem:[%s210 + $0x108] sm:$0xff]
      %v274 = vld [vmem:[%s210 + $0x110] sm:$0xf]
      %v275 = vld [vmem:[%s210 + $0x114] sm:$0xff]
      %v276 = vld [vmem:[%s210 + $0x11c] sm:$0xf]
      %v277 = vld [vmem:[%s210 + $0x120] sm:$0xff]
      %v278 = vld [vmem:[%s210 + $0x128] sm:$0xf]
      %v279 = vld [vmem:[%s210 + $0x12c] sm:$0xff]
      %v280 = vld [vmem:[%s210 + $0x134] sm:$0xf]
      %v281 = vld [vmem:[%s210 + $0x138] sm:$0xff]
      %v282 = vld [vmem:[%s210 + $0x140] sm:$0xf]
      %v283 = vld [vmem:[%s210 + $0x144] sm:$0xff]
      %v284 = vld [vmem:[%s210 + $0x14c] sm:$0xf]
      %v285 = vld [vmem:[%s210 + $0x150] sm:$0xff]
      %v286 = vld [vmem:[%s210 + $0x158] sm:$0xf]
      %v287 = vld [vmem:[%s210 + $0x15c] sm:$0xff]
      %v288 = vld [vmem:[%s210 + $0x164] sm:$0xf]
      %v289 = vld [vmem:[%s210 + $0x168] sm:$0xff]
      %v290 = vld [vmem:[%s210 + $0x170] sm:$0xf]
      %v291 = vld [vmem:[%s210 + $0x174] sm:$0xff]
      %v292 = vld [vmem:[%s210 + $0x17c] sm:$0xf]
      %v293 = vld [vmem:[%s215] sm:$0xf]
      %v294 = vld [vmem:[%s215 + $0x4] sm:$0xf]
      %v295 = vld [vmem:[%s215 + $0x8] sm:$0xf]
      %v296 = vld [vmem:[%s215 + $0xc] sm:$0xf]
      %v297 = vld [vmem:[%s215 + $0x10] sm:$0xf]
      %v298 = vld [vmem:[%s215 + $0x14] sm:$0xf]
      %v299 = vld [vmem:[%s215 + $0x18] sm:$0xf]
      %v300 = vld [vmem:[%s215 + $0x1c] sm:$0xf]
      %v301 = vld [vmem:[%s215 + $0x20] sm:$0xf]
      %v302 = vld [vmem:[%s215 + $0x24] sm:$0xf]
      %v303 = vld [vmem:[%s215 + $0x28] sm:$0xf]
      %v304 = vld [vmem:[%s215 + $0x2c] sm:$0xf]
      %v305 = vld [vmem:[%s215 + $0x30] sm:$0xf]
      %v306 = vld [vmem:[%s215 + $0x34] sm:$0xf]
      %v307 = vld [vmem:[%s215 + $0x38] sm:$0xf]
      %v308 = vld [vmem:[%s215 + $0x3c] sm:$0xf]
      %v309 = vld [vmem:[%s215 + $0x40] sm:$0xf]
      %v310 = vld [vmem:[%s215 + $0x44] sm:$0xf]
      %v311 = vld [vmem:[%s215 + $0x48] sm:$0xf]
      %v312 = vld [vmem:[%s215 + $0x4c] sm:$0xf]
      %v313 = vld [vmem:[%s215 + $0x50] sm:$0xf]
      %v314 = vld [vmem:[%s215 + $0x54] sm:$0xf]
      %v315 = vld [vmem:[%s215 + $0x58] sm:$0xf]
      %v316 = vld [vmem:[%s215 + $0x5c] sm:$0xf]
      %v317 = vld [vmem:[%s215 + $0x60] sm:$0xf]
      %v318 = vld [vmem:[%s215 + $0x64] sm:$0xf]
      %v319 = vld [vmem:[%s215 + $0x68] sm:$0xf]
      %v320 = vld [vmem:[%s215 + $0x6c] sm:$0xf]
      %v321 = vld [vmem:[%s215 + $0x70] sm:$0xf]
      %v322 = vld [vmem:[%s215 + $0x74] sm:$0xf]
      %v323 = vld [vmem:[%s215 + $0x78] sm:$0xf]
      %v324 = vld [vmem:[%s215 + $0x7c] sm:$0xf]
      %v325 = vld [vmem:[%s215 + $0x80] sm:$0xf]
      %v326 = vld [vmem:[%s215 + $0x84] sm:$0xf]
      %v327 = vld [vmem:[%s215 + $0x88] sm:$0xf]
      %v328 = vld [vmem:[%s215 + $0x8c] sm:$0xf]
      %v329 = vld [vmem:[%s215 + $0x90] sm:$0xf]
      %v330 = vld [vmem:[%s215 + $0x94] sm:$0xf]
      %v331 = vld [vmem:[%s215 + $0x98] sm:$0xf]
      %v332 = vld [vmem:[%s215 + $0x9c] sm:$0xf]
      %v333 = vld [vmem:[%s215 + $0xa0] sm:$0xf]
      %v334 = vld [vmem:[%s215 + $0xa4] sm:$0xf]
      %v335 = vld [vmem:[%s215 + $0xa8] sm:$0xf]
      %v336 = vld [vmem:[%s218] sm:$0x1]
      %v338 = vlaneseq
      %v339 = vshrl.u32 %v338, 7
      %v340 = vsub.s32 0, %v339
      %v341 = vrot.slane %v336, %v340
      %v407 = vunpack.c.l.b16 %v229
      %v408 = vunpack.c.h.b16 %v229
      %v409 = vunpack.c.l.b16 %v230
      %v410 = vunpack.c.l.b16 %v231
      %v411 = vunpack.c.h.b16 %v231
      %v412 = vunpack.c.l.b16 %v232
      %v413 = vunpack.c.l.b16 %v233
      %v414 = vunpack.c.h.b16 %v233
      %v415 = vunpack.c.l.b16 %v234
      %v416 = vunpack.c.l.b16 %v235
      %v417 = vunpack.c.h.b16 %v235
      %v418 = vunpack.c.l.b16 %v236
      %v419 = vunpack.c.l.b16 %v237
      %v420 = vunpack.c.h.b16 %v237
      %v421 = vunpack.c.l.b16 %v238
      %v422 = vunpack.c.l.b16 %v239
      %v423 = vunpack.c.h.b16 %v239
      %v424 = vunpack.c.l.b16 %v240
      %v425 = vunpack.c.l.b16 %v241
      %v426 = vunpack.c.h.b16 %v241
      %v427 = vunpack.c.l.b16 %v242
      %v428 = vunpack.c.l.b16 %v243
      %v429 = vunpack.c.h.b16 %v243
      %v430 = vunpack.c.l.b16 %v244
      %v431 = vunpack.c.l.b16 %v245
      %v432 = vunpack.c.h.b16 %v245
      %v433 = vunpack.c.l.b16 %v246
      %v434 = vunpack.c.l.b16 %v247
      %v435 = vunpack.c.h.b16 %v247
      %v436 = vunpack.c.l.b16 %v248
      %v437 = vunpack.c.l.b16 %v249
      %v438 = vunpack.c.h.b16 %v249
      %v439 = vunpack.c.l.b16 %v250
      %v440 = vunpack.c.l.b16 %v251
      %v441 = vunpack.c.h.b16 %v251
      %v442 = vunpack.c.l.b16 %v252
      %v443 = vunpack.c.l.b16 %v253
      %v444 = vunpack.c.h.b16 %v253
      %v445 = vunpack.c.l.b16 %v254
      %v446 = vunpack.c.l.b16 %v255
      %v447 = vunpack.c.h.b16 %v255
      %v448 = vunpack.c.l.b16 %v256
      %v449 = vunpack.c.l.b16 %v257
      %v450 = vunpack.c.h.b16 %v257
      %v451 = vunpack.c.l.b16 %v258
      %v452 = vunpack.c.l.b16 %v259
      %v453 = vunpack.c.h.b16 %v259
      %v454 = vunpack.c.l.b16 %v260
      %v455 = vunpack.c.l.b16 %v261
      %v456 = vunpack.c.h.b16 %v261
      %v457 = vunpack.c.l.b16 %v262
      %v458 = vunpack.c.l.b16 %v263
      %v459 = vunpack.c.h.b16 %v263
      %v460 = vunpack.c.l.b16 %v264
      %v461 = vunpack.c.l.b16 %v265
      %v462 = vunpack.c.h.b16 %v265
      %v463 = vunpack.c.l.b16 %v266
      %v464 = vunpack.c.l.b16 %v267
      %v465 = vunpack.c.h.b16 %v267
      %v466 = vunpack.c.l.b16 %v268
      %v467 = vunpack.c.l.b16 %v269
      %v468 = vunpack.c.h.b16 %v269
      %v469 = vunpack.c.l.b16 %v270
      %v470 = vunpack.c.l.b16 %v271
      %v471 = vunpack.c.h.b16 %v271
      %v472 = vunpack.c.l.b16 %v272
      %v473 = vunpack.c.l.b16 %v273
      %v474 = vunpack.c.h.b16 %v273
      %v475 = vunpack.c.l.b16 %v274
      %v476 = vunpack.c.l.b16 %v275
      %v477 = vunpack.c.h.b16 %v275
      %v478 = vunpack.c.l.b16 %v276
      %v479 = vunpack.c.l.b16 %v277
      %v480 = vunpack.c.h.b16 %v277
      %v481 = vunpack.c.l.b16 %v278
      %v482 = vunpack.c.l.b16 %v279
      %v483 = vunpack.c.h.b16 %v279
      %v484 = vunpack.c.l.b16 %v280
      %v485 = vunpack.c.l.b16 %v281
      %v486 = vunpack.c.h.b16 %v281
      %v487 = vunpack.c.l.b16 %v282
      %v488 = vunpack.c.l.b16 %v283
      %v489 = vunpack.c.h.b16 %v283
      %v490 = vunpack.c.l.b16 %v284
      %v491 = vunpack.c.l.b16 %v285
      %v492 = vunpack.c.h.b16 %v285
      %v493 = vunpack.c.l.b16 %v286
      %v494 = vunpack.c.l.b16 %v287
      %v495 = vunpack.c.h.b16 %v287
      %v496 = vunpack.c.l.b16 %v288
      %v497 = vunpack.c.l.b16 %v289
      %v498 = vunpack.c.h.b16 %v289
      %v499 = vunpack.c.l.b16 %v290
      %v500 = vunpack.c.l.b16 %v291
      %v501 = vunpack.c.h.b16 %v291
      %v502 = vunpack.c.l.b16 %v292
      %v503 = vpack.c.b16 %v410, %v407
      %v504 = vpack.c.b16 %v411, %v408
      %v505 = vpack.c.b16 %v412, %v409
      %v506 = vpack.c.b16 %v416, %v413
      %v507 = vpack.c.b16 %v417, %v414
      %v508 = vpack.c.b16 %v418, %v415
      %v509 = vpack.c.b16 %v422, %v419
      %v510 = vpack.c.b16 %v423, %v420
      %v511 = vpack.c.b16 %v424, %v421
      %v512 = vpack.c.b16 %v428, %v425
      %v513 = vpack.c.b16 %v429, %v426
      %v514 = vpack.c.b16 %v430, %v427
      %v515 = vpack.c.b16 %v434, %v431
      %v516 = vpack.c.b16 %v435, %v432
      %v517 = vpack.c.b16 %v436, %v433
      %v518 = vpack.c.b16 %v440, %v437
      %v519 = vpack.c.b16 %v441, %v438
      %v520 = vpack.c.b16 %v442, %v439
      %v521 = vpack.c.b16 %v446, %v443
      %v522 = vpack.c.b16 %v447, %v444
      %v523 = vpack.c.b16 %v448, %v445
      %v524 = vpack.c.b16 %v452, %v449
      %v525 = vpack.c.b16 %v453, %v450
      %v526 = vpack.c.b16 %v454, %v451
      %v527 = vpack.c.b16 %v458, %v455
      %v528 = vpack.c.b16 %v459, %v456
      %v529 = vpack.c.b16 %v460, %v457
      %v530 = vpack.c.b16 %v464, %v461
      %v531 = vpack.c.b16 %v465, %v462
      %v532 = vpack.c.b16 %v466, %v463
      %v533 = vpack.c.b16 %v470, %v467
      %v534 = vpack.c.b16 %v471, %v468
      %v535 = vpack.c.b16 %v472, %v469
      %v536 = vpack.c.b16 %v476, %v473
      %v537 = vpack.c.b16 %v477, %v474
      %v538 = vpack.c.b16 %v478, %v475
      %v539 = vpack.c.b16 %v482, %v479
      %v540 = vpack.c.b16 %v483, %v480
      %v541 = vpack.c.b16 %v484, %v481
      %v542 = vpack.c.b16 %v488, %v485
      %v543 = vpack.c.b16 %v489, %v486
      %v544 = vpack.c.b16 %v490, %v487
      %v545 = vpack.c.b16 %v494, %v491
      %v546 = vpack.c.b16 %v495, %v492
      %v547 = vpack.c.b16 %v496, %v493
      %v548 = vpack.c.b16 %v500, %v497
      %v549 = vpack.c.b16 %v501, %v498
      %v550 = vpack.c.b16 %v502, %v499
      %v626 = vunpack.c.l.b16 %v293
      %v627 = vunpack.c.l.b16 %v294
      %v628 = vunpack.c.l.b16 %v295
      %v629 = vunpack.c.l.b16 %v296
      %v630 = vunpack.c.l.b16 %v297
      %v631 = vunpack.c.l.b16 %v298
      %v632 = vunpack.c.l.b16 %v299
      %v633 = vunpack.c.l.b16 %v300
      %v634 = vunpack.c.l.b16 %v301
      %v635 = vunpack.c.l.b16 %v302
      %v636 = vunpack.c.l.b16 %v303
      %v637 = vunpack.c.l.b16 %v304
      %v638 = vunpack.c.l.b16 %v305
      %v639 = vunpack.c.l.b16 %v306
      %v640 = vunpack.c.l.b16 %v307
      %v641 = vunpack.c.l.b16 %v308
      %v642 = vunpack.c.l.b16 %v309
      %v643 = vunpack.c.l.b16 %v310
      %v644 = vunpack.c.l.b16 %v311
      %v645 = vunpack.c.l.b16 %v312
      %v646 = vunpack.c.l.b16 %v313
      %v647 = vunpack.c.l.b16 %v314
      %v648 = vunpack.c.l.b16 %v315
      %v649 = vunpack.c.l.b16 %v316
      %v650 = vunpack.c.l.b16 %v317
      %v651 = vunpack.c.l.b16 %v318
      %v652 = vunpack.c.l.b16 %v319
      %v653 = vunpack.c.l.b16 %v320
      %v654 = vunpack.c.l.b16 %v321
      %v655 = vunpack.c.l.b16 %v322
      %v656 = vunpack.c.l.b16 %v323
      %v657 = vunpack.c.l.b16 %v324
      %v658 = vunpack.c.l.b16 %v325
      %v659 = vunpack.c.l.b16 %v326
      %v660 = vunpack.c.l.b16 %v327
      %v661 = vunpack.c.l.b16 %v328
      %v662 = vunpack.c.l.b16 %v329
      %v663 = vunpack.c.l.b16 %v330
      %v664 = vunpack.c.l.b16 %v331
      %v665 = vunpack.c.l.b16 %v332
      %v666 = vunpack.c.l.b16 %v333
      %v667 = vunpack.c.l.b16 %v334
      %v668 = vunpack.c.l.b16 %v335
      %v669 = vpack.c.b16 %v627, %v626
      %v670 = vpack.c.b16 %v629, %v628
      %v671 = vpack.c.b16 %v631, %v630
      %v672 = vpack.c.b16 %v633, %v632
      %v673 = vpack.c.b16 %v635, %v634
      %v674 = vpack.c.b16 %v637, %v636
      %v675 = vpack.c.b16 %v639, %v638
      %v676 = vpack.c.b16 %v641, %v640
      %v677 = vpack.c.b16 %v643, %v642
      %v678 = vpack.c.b16 %v645, %v644
      %v679 = vpack.c.b16 %v647, %v646
      %v680 = vpack.c.b16 %v649, %v648
      %v681 = vpack.c.b16 %v651, %v650
      %v682 = vpack.c.b16 %v653, %v652
      %v683 = vpack.c.b16 %v655, %v654
      %v684 = vpack.c.b16 %v657, %v656
      %v685 = vpack.c.b16 %v659, %v658
      %v686 = vpack.c.b16 %v661, %v660
      %v687 = vpack.c.b16 %v663, %v662
      %v688 = vpack.c.b16 %v665, %v664
      %v689 = vpack.c.b16 %v667, %v666
      %v690 = vpack.c.b16 %v668, %v668
      %vm712 = vcmask 711680
      %v714 = vsel %vm712, %v505, 0
      %v717 = vsel %vm712, %v508, 0
      %v720 = vsel %vm712, %v511, 0
      %v723 = vsel %vm712, %v514, 0
      %v726 = vsel %vm712, %v517, 0
      %v729 = vsel %vm712, %v520, 0
      %v732 = vsel %vm712, %v523, 0
      %v735 = vsel %vm712, %v526, 0
      %v738 = vsel %vm712, %v529, 0
      %v741 = vsel %vm712, %v532, 0
      %v744 = vsel %vm712, %v535, 0
      %v747 = vsel %vm712, %v538, 0
      %v750 = vsel %vm712, %v541, 0
      %v753 = vsel %vm712, %v544, 0
      %v756 = vsel %vm712, %v547, 0
      %v759 = vsel %vm712, %v550, 0
      %vm761 = vcmask 1042432
      %vm762 = vcmask 1043456
      %v763 = vsel %vm761, 4294967295, 65535
      %v764 = vsel %vm762, %v763, 0
      %v766 = vand.u32 %v690, %v764
      %768 = vmatprep.subr.bf16.mxu0 0
      %769 = vmatpush1.bf16.msra.mxu0 %v669
      %770 = vmatprep.subr.bf16.mxu0 0
      %771 = vmatpush1.bf16.msra.mxu0 %v670
      %772 = vmatprep.subr.bf16.mxu0 0
      %773 = vmatpush1.bf16.msra.mxu0 %v671
      %774 = vmatprep.subr.bf16.mxu0 0
      %775 = vmatpush1.bf16.msra.mxu0 %v672
      %776 = vmatprep.subr.bf16.mxu0 0
      %777 = vmatpush1.bf16.msra.mxu0 %v673
      %778 = vmatprep.subr.bf16.mxu0 0
      %779 = vmatpush1.bf16.msra.mxu0 %v674
      %780 = vmatprep.subr.bf16.mxu0 0
      %781 = vmatpush1.bf16.msra.mxu0 %v675
      %782 = vmatprep.subr.bf16.mxu0 0
      %783 = vmatpush1.bf16.msra.mxu0 %v676
      %784 = vmatprep.subr.bf16.mxu0 0
      %785 = vmatpush1.bf16.msra.mxu0 %v677
      %786 = vmatprep.subr.bf16.mxu0 0
      %787 = vmatpush1.bf16.msra.mxu0 %v678
      %788 = vmatprep.subr.bf16.mxu0 0
      %789 = vmatpush1.bf16.msra.mxu0 %v679
      %790 = vmatprep.subr.bf16.mxu0 0
      %791 = vmatpush1.bf16.msra.mxu0 %v680
      %792 = vmatprep.subr.bf16.mxu0 0
      %793 = vmatpush1.bf16.msra.mxu0 %v681
      %794 = vmatprep.subr.bf16.mxu0 0
      %795 = vmatpush1.bf16.msra.mxu0 %v682
      %796 = vmatprep.subr.bf16.mxu0 0
      %797 = vmatpush1.bf16.msra.mxu0 %v683
      %798 = vmatprep.subr.bf16.mxu0 0
      %799 = vmatpush1.bf16.msra.mxu0 %v684
      %800 = vmatprep.mubr.bf16.mxu0 %v504
      %801 = vmatmul.mubr.bf16.gmra.mrb[0].mxu0 %v503
      %v802 = vpop.f32.mrb[0].mxu0
      %v803 = vadd.f32 %v341, %v802
      %v804 = vpop.f32.mrb[0].mxu0
      %v805 = vpop.f32.mrb[0].mxu0
      %v806 = vadd.f32 %v341, %v805
      %v807 = vpop.f32.mrb[0].mxu0
      %808 = vmatprep.mubr.bf16.mxu0 %v507
      %809 = vmatmul.mubr.bf16.gmra.mrb[0].mxu0 %v506
      %v810 = vpop.f32.mrb[0].mxu0
      %v811 = vadd.f32 %v341, %v810
      %v812 = vpop.f32.mrb[0].mxu0
      %v813 = vpop.f32.mrb[0].mxu0
      %v814 = vadd.f32 %v341, %v813
      %v815 = vpop.f32.mrb[0].mxu0
      %816 = vmatprep.mubr.bf16.mxu0 %v510
      %817 = vmatmul.mubr.bf16.gmra.mrb[0].mxu0 %v509
      %v818 = vpop.f32.mrb[0].mxu0
      %v819 = vadd.f32 %v341, %v818
      %v820 = vpop.f32.mrb[0].mxu0
      %v821 = vpop.f32.mrb[0].mxu0
      %v822 = vadd.f32 %v341, %v821
      %v823 = vpop.f32.mrb[0].mxu0
      %824 = vmatprep.mubr.bf16.mxu0 %v513
      %825 = vmatmul.mubr.bf16.gmra.mrb[0].mxu0 %v512
      %v826 = vpop.f32.mrb[0].mxu0
      %v827 = vadd.f32 %v341, %v826
      %v828 = vpop.f32.mrb[0].mxu0
      %v829 = vpop.f32.mrb[0].mxu0
      %v830 = vadd.f32 %v341, %v829
      %v831 = vpop.f32.mrb[0].mxu0
      %832 = vmatprep.mubr.bf16.mxu0 %v516
      %833 = vmatmul.mubr.bf16.gmra.mrb[0].mxu0 %v515
      %v834 = vpop.f32.mrb[0].mxu0
      %v835 = vadd.f32 %v341, %v834
      %v836 = vpop.f32.mrb[0].mxu0
      %v837 = vpop.f32.mrb[0].mxu0
      %v838 = vadd.f32 %v341, %v837
      %v839 = vpop.f32.mrb[0].mxu0
      %840 = vmatprep.mubr.bf16.mxu0 %v519
      %841 = vmatmul.mubr.bf16.gmra.mrb[0].mxu0 %v518
      %v842 = vpop.f32.mrb[0].mxu0
      %v843 = vadd.f32 %v341, %v842
      %v844 = vpop.f32.mrb[0].mxu0
      %v845 = vpop.f32.mrb[0].mxu0
      %v846 = vadd.f32 %v341, %v845
      %v847 = vpop.f32.mrb[0].mxu0
      %848 = vmatprep.mubr.bf16.mxu0 %v522
      %849 = vmatmul.mubr.bf16.gmra.mrb[0].mxu0 %v521
      %v850 = vpop.f32.mrb[0].mxu0
      %v851 = vadd.f32 %v341, %v850
      %v852 = vpop.f32.mrb[0].mxu0
      %v853 = vpop.f32.mrb[0].mxu0
      %v854 = vadd.f32 %v341, %v853
      %v855 = vpop.f32.mrb[0].mxu0
      %856 = vmatprep.mubr.bf16.mxu0 %v525
      %857 = vmatmul.mubr.bf16.gmra.mrb[0].mxu0 %v524
      %v858 = vpop.f32.mrb[0].mxu0
      %v859 = vadd.f32 %v341, %v858
      %v860 = vpop.f32.mrb[0].mxu0
      %v861 = vpop.f32.mrb[0].mxu0
      %v862 = vadd.f32 %v341, %v861
      %v863 = vpop.f32.mrb[0].mxu0
      %864 = vmatprep.mubr.bf16.mxu0 %v528
      %865 = vmatmul.mubr.bf16.gmra.mrb[0].mxu0 %v527
      %v866 = vpop.f32.mrb[0].mxu0
      %v867 = vadd.f32 %v341, %v866
      %v868 = vpop.f32.mrb[0].mxu0
      %v869 = vpop.f32.mrb[0].mxu0
      %v870 = vadd.f32 %v341, %v869
      %v871 = vpop.f32.mrb[0].mxu0
      %872 = vmatprep.mubr.bf16.mxu0 %v531
      %873 = vmatmul.mubr.bf16.gmra.mrb[0].mxu0 %v530
      %v874 = vpop.f32.mrb[0].mxu0
      %v875 = vadd.f32 %v341, %v874
      %v876 = vpop.f32.mrb[0].mxu0
      %v877 = vpop.f32.mrb[0].mxu0
      %v878 = vadd.f32 %v341, %v877
      %v879 = vpop.f32.mrb[0].mxu0
      %880 = vmatprep.mubr.bf16.mxu0 %v534
      %881 = vmatmul.mubr.bf16.gmra.mrb[0].mxu0 %v533
      %v882 = vpop.f32.mrb[0].mxu0
      %v883 = vadd.f32 %v341, %v882
      %v884 = vpop.f32.mrb[0].mxu0
      %v885 = vpop.f32.mrb[0].mxu0
      %v886 = vadd.f32 %v341, %v885
      %v887 = vpop.f32.mrb[0].mxu0
      %888 = vmatprep.mubr.bf16.mxu0 %v537
      %889 = vmatmul.mubr.bf16.gmra.mrb[0].mxu0 %v536
      %v890 = vpop.f32.mrb[0].mxu0
      %v891 = vadd.f32 %v341, %v890
      %v892 = vpop.f32.mrb[0].mxu0
      %v893 = vpop.f32.mrb[0].mxu0
      %v894 = vadd.f32 %v341, %v893
      %v895 = vpop.f32.mrb[0].mxu0
      %896 = vmatprep.mubr.bf16.mxu0 %v540
      %897 = vmatmul.mubr.bf16.gmra.mrb[0].mxu0 %v539
      %v898 = vpop.f32.mrb[0].mxu0
      %v899 = vadd.f32 %v341, %v898
      %v900 = vpop.f32.mrb[0].mxu0
      %v901 = vpop.f32.mrb[0].mxu0
      %v902 = vadd.f32 %v341, %v901
      %v903 = vpop.f32.mrb[0].mxu0
      %904 = vmatprep.mubr.bf16.mxu0 %v543
      %905 = vmatmul.mubr.bf16.gmra.mrb[0].mxu0 %v542
      %v906 = vpop.f32.mrb[0].mxu0
      %v907 = vadd.f32 %v341, %v906
      %v908 = vpop.f32.mrb[0].mxu0
      %v909 = vpop.f32.mrb[0].mxu0
      %v910 = vadd.f32 %v341, %v909
      %v911 = vpop.f32.mrb[0].mxu0
      %912 = vmatprep.mubr.bf16.mxu0 %v546
      %913 = vmatmul.mubr.bf16.gmra.mrb[0].mxu0 %v545
      %v914 = vpop.f32.mrb[0].mxu0
      %v915 = vadd.f32 %v341, %v914
      %v916 = vpop.f32.mrb[0].mxu0
      %v917 = vpop.f32.mrb[0].mxu0
      %v918 = vadd.f32 %v341, %v917
      %v919 = vpop.f32.mrb[0].mxu0
      %920 = vmatprep.mubr.bf16.mxu0 %v549
      %921 = vmatmul.mubr.bf16.gmra.mrb[0].mxu0 %v548
      %v922 = vpop.f32.mrb[0].mxu0
      %v923 = vadd.f32 %v341, %v922
      %v924 = vpop.f32.mrb[0].mxu0
      %v925 = vpop.f32.mrb[0].mxu0
      %v926 = vadd.f32 %v341, %v925
      %v927 = vpop.f32.mrb[0].mxu0
      %928 = vdwg.mxu0
      %929 = vmatprep.subr.bf16.mxu0 0
      %930 = vmatpush1.bf16.msra.mxu0 %v685
      %931 = vmatprep.subr.bf16.mxu0 0
      %932 = vmatpush1.bf16.msra.mxu0 %v686
      %933 = vmatprep.subr.bf16.mxu0 0
      %934 = vmatpush1.bf16.msra.mxu0 %v687
      %935 = vmatprep.subr.bf16.mxu0 0
      %936 = vmatpush1.bf16.msra.mxu0 %v688
      %937 = vmatprep.subr.bf16.mxu0 0
      %938 = vmatpush1.bf16.msra.mxu0 %v689
      %939 = vmatprep.subr.bf16.mxu0 0
      %940 = vmatpush1.bf16.msra.mxu0 %v766
      %941 = vmatprep.subr.bf16.mxu0 0
      %942 = vmatpush1.bf16.msra.mxu0 0
      %943 = vmatprep.subr.bf16.mxu0 0
      %944 = vmatpush1.bf16.msra.mxu0 0
      %945 = vmatprep.subr.bf16.mxu0 0
      %946 = vmatpush1.bf16.msra.mxu0 0
      %947 = vmatprep.subr.bf16.mxu0 0
      %948 = vmatpush1.bf16.msra.mxu0 0
      %949 = vmatprep.subr.bf16.mxu0 0
      %950 = vmatpush1.bf16.msra.mxu0 0
      %951 = vmatprep.subr.bf16.mxu0 0
      %952 = vmatpush1.bf16.msra.mxu0 0
      %953 = vmatprep.subr.bf16.mxu0 0
      %954 = vmatpush1.bf16.msra.mxu0 0
      %955 = vmatprep.subr.bf16.mxu0 0
      %956 = vmatpush1.bf16.msra.mxu0 0
      %957 = vmatprep.subr.bf16.mxu0 0
      %958 = vmatpush1.bf16.msra.mxu0 0
      %959 = vmatprep.subr.bf16.mxu0 0
      %960 = vmatpush1.bf16.msra.mxu0 0
      %961 = vmatprep.mubr.bf16.mxu0 0
      %962 = vmatmul.mubr.bf16.gmra.mrb[0].mxu0 %v714
      %v963 = vpop.f32.mrb[0].mxu0
      %v964 = vadd.f32 %v803, %v963
      %v965 = vpop.f32.mrb[0].mxu0
      %v966 = vpop.f32.mrb[0].mxu0
      %v967 = vadd.f32 %v806, %v966
      %v968 = vpop.f32.mrb[0].mxu0
      %969 = vmatprep.mubr.bf16.mxu0 0
      %970 = vmatmul.mubr.bf16.gmra.mrb[0].mxu0 %v717
      %v971 = vpop.f32.mrb[0].mxu0
      %v972 = vadd.f32 %v811, %v971
      %v973 = vpop.f32.mrb[0].mxu0
      %v974 = vpop.f32.mrb[0].mxu0
      %v975 = vadd.f32 %v814, %v974
      %v976 = vpop.f32.mrb[0].mxu0
      %977 = vmatprep.mubr.bf16.mxu0 0
      %978 = vmatmul.mubr.bf16.gmra.mrb[0].mxu0 %v720
      %v979 = vpop.f32.mrb[0].mxu0
      %v980 = vadd.f32 %v819, %v979
      %v981 = vpop.f32.mrb[0].mxu0
      %v982 = vpop.f32.mrb[0].mxu0
      %v983 = vadd.f32 %v822, %v982
      %v984 = vpop.f32.mrb[0].mxu0
      %985 = vmatprep.mubr.bf16.mxu0 0
      %986 = vmatmul.mubr.bf16.gmra.mrb[0].mxu0 %v723
      %v987 = vpop.f32.mrb[0].mxu0
      %v988 = vadd.f32 %v827, %v987
      %v989 = vpop.f32.mrb[0].mxu0
      %v990 = vpop.f32.mrb[0].mxu0
      %v991 = vadd.f32 %v830, %v990
      %v992 = vpop.f32.mrb[0].mxu0
      %993 = vmatprep.mubr.bf16.mxu0 0
      %994 = vmatmul.mubr.bf16.gmra.mrb[0].mxu0 %v726
      %v995 = vpop.f32.mrb[0].mxu0
      %v996 = vadd.f32 %v835, %v995
      %v997 = vpop.f32.mrb[0].mxu0
      %v998 = vpop.f32.mrb[0].mxu0
      %v999 = vadd.f32 %v838, %v998
      %v1000 = vpop.f32.mrb[0].mxu0
      %1001 = vmatprep.mubr.bf16.mxu0 0
      %1002 = vmatmul.mubr.bf16.gmra.mrb[0].mxu0 %v729
      %v1003 = vpop.f32.mrb[0].mxu0
      %v1004 = vadd.f32 %v843, %v1003
      %v1005 = vpop.f32.mrb[0].mxu0
      %v1006 = vpop.f32.mrb[0].mxu0
      %v1007 = vadd.f32 %v846, %v1006
      %v1008 = vpop.f32.mrb[0].mxu0
      %1009 = vmatprep.mubr.bf16.mxu0 0
      %1010 = vmatmul.mubr.bf16.gmra.mrb[0].mxu0 %v732
      %v1011 = vpop.f32.mrb[0].mxu0
      %v1012 = vadd.f32 %v851, %v1011
      %v1013 = vpop.f32.mrb[0].mxu0
      %v1014 = vpop.f32.mrb[0].mxu0
      %v1015 = vadd.f32 %v854, %v1014
      %v1016 = vpop.f32.mrb[0].mxu0
      %1017 = vmatprep.mubr.bf16.mxu0 0
      %1018 = vmatmul.mubr.bf16.gmra.mrb[0].mxu0 %v735
      %v1019 = vpop.f32.mrb[0].mxu0
      %v1020 = vadd.f32 %v859, %v1019
      %v1021 = vpop.f32.mrb[0].mxu0
      %v1022 = vpop.f32.mrb[0].mxu0
      %v1023 = vadd.f32 %v862, %v1022
      %v1024 = vpop.f32.mrb[0].mxu0
      %1025 = vmatprep.mubr.bf16.mxu0 0
      %1026 = vmatmul.mubr.bf16.gmra.mrb[0].mxu0 %v738
      %v1027 = vpop.f32.mrb[0].mxu0
      %v1028 = vadd.f32 %v867, %v1027
      %v1029 = vpop.f32.mrb[0].mxu0
      %v1030 = vpop.f32.mrb[0].mxu0
      %v1031 = vadd.f32 %v870, %v1030
      %v1032 = vpop.f32.mrb[0].mxu0
      %1033 = vmatprep.mubr.bf16.mxu0 0
      %1034 = vmatmul.mubr.bf16.gmra.mrb[0].mxu0 %v741
      %v1035 = vpop.f32.mrb[0].mxu0
      %v1036 = vadd.f32 %v875, %v1035
      %v1037 = vpop.f32.mrb[0].mxu0
      %v1038 = vpop.f32.mrb[0].mxu0
      %v1039 = vadd.f32 %v878, %v1038
      %v1040 = vpop.f32.mrb[0].mxu0
      %1041 = vmatprep.mubr.bf16.mxu0 0
      %1042 = vmatmul.mubr.bf16.gmra.mrb[0].mxu0 %v744
      %v1043 = vpop.f32.mrb[0].mxu0
      %v1044 = vadd.f32 %v883, %v1043
      %v1045 = vpop.f32.mrb[0].mxu0
      %v1046 = vpop.f32.mrb[0].mxu0
      %v1047 = vadd.f32 %v886, %v1046
      %v1048 = vpop.f32.mrb[0].mxu0
      %1049 = vmatprep.mubr.bf16.mxu0 0
      %1050 = vmatmul.mubr.bf16.gmra.mrb[0].mxu0 %v747
      %v1051 = vpop.f32.mrb[0].mxu0
      %v1052 = vadd.f32 %v891, %v1051
      %v1053 = vpop.f32.mrb[0].mxu0
      %v1054 = vpop.f32.mrb[0].mxu0
      %v1055 = vadd.f32 %v894, %v1054
      %v1056 = vpop.f32.mrb[0].mxu0
      %1057 = vmatprep.mubr.bf16.mxu0 0
      %1058 = vmatmul.mubr.bf16.gmra.mrb[0].mxu0 %v750
      %v1059 = vpop.f32.mrb[0].mxu0
      %v1060 = vadd.f32 %v899, %v1059
      %v1061 = vpop.f32.mrb[0].mxu0
      %v1062 = vpop.f32.mrb[0].mxu0
      %v1063 = vadd.f32 %v902, %v1062
      %v1064 = vpop.f32.mrb[0].mxu0
      %1065 = vmatprep.mubr.bf16.mxu0 0
      %1066 = vmatmul.mubr.bf16.gmra.mrb[0].mxu0 %v753
      %v1067 = vpop.f32.mrb[0].mxu0
      %v1068 = vadd.f32 %v907, %v1067
      %v1069 = vpop.f32.mrb[0].mxu0
      %v1070 = vpop.f32.mrb[0].mxu0
      %v1071 = vadd.f32 %v910, %v1070
      %v1072 = vpop.f32.mrb[0].mxu0
      %1073 = vmatprep.mubr.bf16.mxu0 0
      %1074 = vmatmul.mubr.bf16.gmra.mrb[0].mxu0 %v756
      %v1075 = vpop.f32.mrb[0].mxu0
      %v1076 = vadd.f32 %v915, %v1075
      %v1077 = vpop.f32.mrb[0].mxu0
      %v1078 = vpop.f32.mrb[0].mxu0
      %v1079 = vadd.f32 %v918, %v1078
      %v1080 = vpop.f32.mrb[0].mxu0
      %1081 = vmatprep.mubr.bf16.mxu0 0
      %1082 = vmatmul.mubr.bf16.gmra.mrb[0].mxu0 %v759
      %v1083 = vpop.f32.mrb[0].mxu0
      %v1084 = vadd.f32 %v923, %v1083
      %v1085 = vpop.f32.mrb[0].mxu0
      %v1086 = vpop.f32.mrb[0].mxu0
      %v1087 = vadd.f32 %v926, %v1086
      %v1088 = vpop.f32.mrb[0].mxu0
      %1089 = vdwg.mxu0
      %v1090 = vmax.f32 %v964, 0.0
      %v1091 = vmax.f32 %v967, 0.0
      %v1092 = vmax.f32 %v972, 0.0
      %v1093 = vmax.f32 %v975, 0.0
      %v1094 = vmax.f32 %v980, 0.0
      %v1095 = vmax.f32 %v983, 0.0
      %v1096 = vmax.f32 %v988, 0.0
      %v1097 = vmax.f32 %v991, 0.0
      %v1098 = vmax.f32 %v996, 0.0
      %v1099 = vmax.f32 %v999, 0.0
      %v1100 = vmax.f32 %v1004, 0.0
      %v1101 = vmax.f32 %v1007, 0.0
      %v1102 = vmax.f32 %v1012, 0.0
      %v1103 = vmax.f32 %v1015, 0.0
      %v1104 = vmax.f32 %v1020, 0.0
      %v1105 = vmax.f32 %v1023, 0.0
      %v1106 = vmax.f32 %v1028, 0.0
      %v1107 = vmax.f32 %v1031, 0.0
      %v1108 = vmax.f32 %v1036, 0.0
      %v1109 = vmax.f32 %v1039, 0.0
      %v1110 = vmax.f32 %v1044, 0.0
      %v1111 = vmax.f32 %v1047, 0.0
      %v1112 = vmax.f32 %v1052, 0.0
      %v1113 = vmax.f32 %v1055, 0.0
      %v1114 = vmax.f32 %v1060, 0.0
      %v1115 = vmax.f32 %v1063, 0.0
      %v1116 = vmax.f32 %v1068, 0.0
      %v1117 = vmax.f32 %v1071, 0.0
      %v1118 = vmax.f32 %v1076, 0.0
      %v1119 = vmax.f32 %v1079, 0.0
      %v1120 = vmax.f32 %v1084, 0.0
      %v1121 = vmax.f32 %v1087, 0.0
      %v1122 = vpack.c.bf16 %v1091, %v1090
      %v1123 = vpack.c.bf16 %v1093, %v1092
      %v1124 = vpack.c.bf16 %v1095, %v1094
      %v1125 = vpack.c.bf16 %v1097, %v1096
      %v1126 = vpack.c.bf16 %v1099, %v1098
      %v1127 = vpack.c.bf16 %v1101, %v1100
      %v1128 = vpack.c.bf16 %v1103, %v1102
      %v1129 = vpack.c.bf16 %v1105, %v1104
      %v1130 = vpack.c.bf16 %v1107, %v1106
      %v1131 = vpack.c.bf16 %v1109, %v1108
      %v1132 = vpack.c.bf16 %v1111, %v1110
      %v1133 = vpack.c.bf16 %v1113, %v1112
      %v1134 = vpack.c.bf16 %v1115, %v1114
      %v1135 = vpack.c.bf16 %v1117, %v1116
      %v1136 = vpack.c.bf16 %v1119, %v1118
      %v1137 = vpack.c.bf16 %v1121, %v1120
      %v1154 = vunpack.c.l.b16 %v1122
      %v1155 = vunpack.c.h.b16 %v1122
      %v1156 = vunpack.c.l.b16 %v1123
      %v1157 = vunpack.c.h.b16 %v1123
      %v1158 = vunpack.c.l.b16 %v1124
      %v1159 = vunpack.c.h.b16 %v1124
      %v1160 = vunpack.c.l.b16 %v1125
      %v1161 = vunpack.c.h.b16 %v1125
      %v1162 = vunpack.c.l.b16 %v1126
      %v1163 = vunpack.c.h.b16 %v1126
      %v1164 = vunpack.c.l.b16 %v1127
      %v1165 = vunpack.c.h.b16 %v1127
      %v1166 = vunpack.c.l.b16 %v1128
      %v1167 = vunpack.c.h.b16 %v1128
      %v1168 = vunpack.c.l.b16 %v1129
      %v1169 = vunpack.c.h.b16 %v1129
      %v1170 = vunpack.c.l.b16 %v1130
      %v1171 = vunpack.c.h.b16 %v1130
      %v1172 = vunpack.c.l.b16 %v1131
      %v1173 = vunpack.c.h.b16 %v1131
      %v1174 = vunpack.c.l.b16 %v1132
      %v1175 = vunpack.c.h.b16 %v1132
      %v1176 = vunpack.c.l.b16 %v1133
      %v1177 = vunpack.c.h.b16 %v1133
      %v1178 = vunpack.c.l.b16 %v1134
      %v1179 = vunpack.c.h.b16 %v1134
      %v1180 = vunpack.c.l.b16 %v1135
      %v1181 = vunpack.c.h.b16 %v1135
      %v1182 = vunpack.c.l.b16 %v1136
      %v1183 = vunpack.c.h.b16 %v1136
      %v1184 = vunpack.c.l.b16 %v1137
      %v1185 = vunpack.c.h.b16 %v1137
      %v1186 = vpack.c.b16 %v1154, %v1154
      %v1187 = vpack.c.b16 %v1155, %v1155
      %v1188 = vpack.c.b16 %v1156, %v1156
      %v1189 = vpack.c.b16 %v1157, %v1157
      %v1190 = vpack.c.b16 %v1158, %v1158
      %v1191 = vpack.c.b16 %v1159, %v1159
      %v1192 = vpack.c.b16 %v1160, %v1160
      %v1193 = vpack.c.b16 %v1161, %v1161
      %v1194 = vpack.c.b16 %v1162, %v1162
      %v1195 = vpack.c.b16 %v1163, %v1163
      %v1196 = vpack.c.b16 %v1164, %v1164
      %v1197 = vpack.c.b16 %v1165, %v1165
      %v1198 = vpack.c.b16 %v1166, %v1166
      %v1199 = vpack.c.b16 %v1167, %v1167
      %v1200 = vpack.c.b16 %v1168, %v1168
      %v1201 = vpack.c.b16 %v1169, %v1169
      %v1202 = vpack.c.b16 %v1170, %v1170
      %v1203 = vpack.c.b16 %v1171, %v1171
      %v1204 = vpack.c.b16 %v1172, %v1172
      %v1205 = vpack.c.b16 %v1173, %v1173
      %v1206 = vpack.c.b16 %v1174, %v1174
      %v1207 = vpack.c.b16 %v1175, %v1175
      %v1208 = vpack.c.b16 %v1176, %v1176
      %v1209 = vpack.c.b16 %v1177, %v1177
      %v1210 = vpack.c.b16 %v1178, %v1178
      %v1211 = vpack.c.b16 %v1179, %v1179
      %v1212 = vpack.c.b16 %v1180, %v1180
      %v1213 = vpack.c.b16 %v1181, %v1181
      %v1214 = vpack.c.b16 %v1182, %v1182
      %v1215 = vpack.c.b16 %v1183, %v1183
      %v1216 = vpack.c.b16 %v1184, %v1184
      %v1217 = vpack.c.b16 %v1185, %v1185
      %vm1250 = vcmask 519168
      %1251 = vst.msk [vmem:[%s226] sm:$0xf] %vm1250, %v1186
      %1252 = vst.msk [vmem:[%s226 + $0x4] sm:$0xf] %vm1250, %v1187
      %1253 = vst.msk [vmem:[%s226 + $0x8] sm:$0xf] %vm1250, %v1188
      %1254 = vst.msk [vmem:[%s226 + $0xc] sm:$0xf] %vm1250, %v1189
      %1255 = vst.msk [vmem:[%s226 + $0x10] sm:$0xf] %vm1250, %v1190
      %1256 = vst.msk [vmem:[%s226 + $0x14] sm:$0xf] %vm1250, %v1191
      %1257 = vst.msk [vmem:[%s226 + $0x18] sm:$0xf] %vm1250, %v1192
      %1258 = vst.msk [vmem:[%s226 + $0x1c] sm:$0xf] %vm1250, %v1193
      %1259 = vst.msk [vmem:[%s226 + $0x20] sm:$0xf] %vm1250, %v1194
      %1260 = vst.msk [vmem:[%s226 + $0x24] sm:$0xf] %vm1250, %v1195
      %1261 = vst.msk [vmem:[%s226 + $0x28] sm:$0xf] %vm1250, %v1196
      %1262 = vst.msk [vmem:[%s226 + $0x2c] sm:$0xf] %vm1250, %v1197
      %1263 = vst.msk [vmem:[%s226 + $0x30] sm:$0xf] %vm1250, %v1198
      %1264 = vst.msk [vmem:[%s226 + $0x34] sm:$0xf] %vm1250, %v1199
      %1265 = vst.msk [vmem:[%s226 + $0x38] sm:$0xf] %vm1250, %v1200
      %1266 = vst.msk [vmem:[%s226 + $0x3c] sm:$0xf] %vm1250, %v1201
      %1267 = vst.msk [vmem:[%s226 + $0x40] sm:$0xf] %vm1250, %v1202
      %1268 = vst.msk [vmem:[%s226 + $0x44] sm:$0xf] %vm1250, %v1203
      %1269 = vst.msk [vmem:[%s226 + $0x48] sm:$0xf] %vm1250, %v1204
      %1270 = vst.msk [vmem:[%s226 + $0x4c] sm:$0xf] %vm1250, %v1205
      %1271 = vst.msk [vmem:[%s226 + $0x50] sm:$0xf] %vm1250, %v1206
      %1272 = vst.msk [vmem:[%s226 + $0x54] sm:$0xf] %vm1250, %v1207
      %1273 = vst.msk [vmem:[%s226 + $0x58] sm:$0xf] %vm1250, %v1208
      %1274 = vst.msk [vmem:[%s226 + $0x5c] sm:$0xf] %vm1250, %v1209
      %1275 = vst.msk [vmem:[%s226 + $0x60] sm:$0xf] %vm1250, %v1210
      %1276 = vst.msk [vmem:[%s226 + $0x64] sm:$0xf] %vm1250, %v1211
      %1277 = vst.msk [vmem:[%s226 + $0x68] sm:$0xf] %vm1250, %v1212
      %1278 = vst.msk [vmem:[%s226 + $0x6c] sm:$0xf] %vm1250, %v1213
      %1279 = vst.msk [vmem:[%s226 + $0x70] sm:$0xf] %vm1250, %v1214
      %1280 = vst.msk [vmem:[%s226 + $0x74] sm:$0xf] %vm1250, %v1215
      %1281 = vst.msk [vmem:[%s226 + $0x78] sm:$0xf] %vm1250, %v1216
      %1282 = vst.msk [vmem:[%s226 + $0x7c] sm:$0xf] %vm1250, %v1217
      %s1283 = smul.u32 32, %s18
      %p1284 = scmp.lt.s32.totalorder %s1283, 63
      %s1285 = scalar_select %p1284, %s1283, 63
      %p1286 = scmp.lt.s32.totalorder %s19, 0
      %s1287 = scalar_select %p1286, %s19, 0
      %s1288 = sadd.s32 %s1287, %s1285
      %s1289 = smul.addr %s1288, 4
      %s1290 = scalar_lea.vmem %s3, %s1289
      // Predicated region
      $region33: #{md_e_attr_forward.5} parent=31 // pred_check
        %p1291 = pneg %p124
      $region34: #{md_e_attr_forward.5} parent=31 // pred_check_branch
        %1293 = sbr.rel (%p1291) target = $region36
      $region35: #{md_e_attr_forward.5} parent=31 // pred_region
        %s1294 = smul.u32 32, %s18
      $region36: #{md_e_attr_forward.5} parent=31 // pred_fallthru
        _
    $region32: #{md_e_attr_forward.5} parent=5 // pred_fallthru
      _
    %p1295 = scmp.le.s32.totalorder 2, %s9
    // Predicated region
    $region37: #{md_e_attr_forward.5} parent=5 // pred_check
      %p1296 = pneg %p1295
    $region38: #{md_e_attr_forward.5} parent=5 // pred_check_branch
      %1298 = sbr.rel (%p1296) target = $region40
    $region39: #{md_e_attr_forward.5} parent=5 // pred_region
      %s1299 = ssub.s32 %s9, 2
      // Predicated region
      $region41: #{md_e_attr_forward.5} parent=39 // pred_check
        %p1300 = pneg %p130
      $region42: #{md_e_attr_forward.5} parent=39 // pred_check_branch
        %1302 = sbr.rel (%p1300) target = $region44
      $region43: #{md_e_attr_forward.5} parent=39 // pred_region
        %s1303 = smul.u32 32, %s20
        %p1304 = scmp.lt.s32.totalorder %s1303, 63
        %s1305 = scalar_select %p1304, %s1303, 63
        %p1306 = scmp.lt.s32.totalorder %s21, 0
        %s1307 = scalar_select %p1306, %s21, 0
        %s1308 = sadd.s32 %s1307, %s1305
        %s1309 = smul.addr %s1308, 4
        %s1310 = scalar_lea.vmem %s3, %s1309
      $region44: #{md_e_attr_forward.5} parent=39 // pred_fallthru
        _
    $region40: #{md_e_attr_forward.5} parent=5 // pred_fallthru
      _
  $region6: #{md_e_attr_forward.5} parent=0 // loop_footer
    %s13 = sadd.s32 1, %s9
  $region7: #{md_e_attr_forward.5} parent=0 // loop_footer_branch
    %8 = sbr.rel target = $region3
  $region8: #{md_e_attr_forward.5} parent=0 // loop_exit
    _

// kernel: md_e_attr_forward.6
$region0: #{md_e_attr_forward.6}
  #allocation0 [shape = 'u32[]', space=smem, size = 0x4, offset = 0x4, fixed_abs, tag = 'smem constant byte address 0x4 - core index']
  #allocation1 [shape = 'u32[144,128]{1,0:T(1,128)}', space=vmem, size = 0x12000, scoped, tag = 'internal scratch']
  %s0 = inlined_call_operand.vmem [shape: bf16[128,1024], index: 0, kind: input, shape index: {}]
  %s1 = inlined_call_operand.vmem [shape: bf16[1024,128], index: 1, kind: input, shape index: {}]
  %s2 = inlined_call_operand.vmem [shape: f32[1,128], index: 2, kind: input, shape index: {}]
  %s3 = inlined_call_operand.vmem [shape: bf16[128,128], index: 3, kind: output, shape index: {}]
  %s4 = sld [smem:[#allocation0]]
  $region22: #{md_e_attr_forward.6} parent=0
    _
  %s6 = ssub.s32 1, %s4
  %s7 = scalar_select 0, %s6, %s4
  // Predicated region
  $region2: #{md_e_attr_forward.6} parent=0 // pred_check
    _
  $region3: #{md_e_attr_forward.6} parent=0 // pred_check_branch
    %9 = sbr.rel (0) target = $region5
  $region4: #{md_e_attr_forward.6} parent=0 // pred_region
    _
  $region5: #{md_e_attr_forward.6} parent=0 // pred_fallthru
    _
  // Predicated region
  $region6: #{md_e_attr_forward.6} parent=0 // pred_check
    _
  $region7: #{md_e_attr_forward.6} parent=0 // pred_check_branch
    %11 = sbr.rel (0) target = $region9
  $region8: #{md_e_attr_forward.6} parent=0 // pred_region
    _
  $region9: #{md_e_attr_forward.6} parent=0 // pred_fallthru
    _
  // Predicated region
  $region10: #{md_e_attr_forward.6} parent=0 // pred_check
    _
  $region11: #{md_e_attr_forward.6} parent=0 // pred_check_branch
    %13 = sbr.rel (0) target = $region13
  $region12: #{md_e_attr_forward.6} parent=0 // pred_region
    _
  $region13: #{md_e_attr_forward.6} parent=0 // pred_fallthru
    _
  %v15 = vld [vmem:[%s0] sm:$0xff]
  %v16 = vld [vmem:[%s0 + $0x8] sm:$0xff]
  %v17 = vld [vmem:[%s0 + $0x10] sm:$0xff]
  %v18 = vld [vmem:[%s0 + $0x18] sm:$0xff]
  %v19 = vld [vmem:[%s0 + $0x20] sm:$0xff]
  %v20 = vld [vmem:[%s0 + $0x28] sm:$0xff]
  %v21 = vld [vmem:[%s0 + $0x30] sm:$0xff]
  %v22 = vld [vmem:[%s0 + $0x38] sm:$0xff]
  %v23 = vld [vmem:[%s0 + $0x40] sm:$0xff]
  %v24 = vld [vmem:[%s0 + $0x48] sm:$0xff]
  %v25 = vld [vmem:[%s0 + $0x50] sm:$0xff]
  %v26 = vld [vmem:[%s0 + $0x58] sm:$0xff]
  %v27 = vld [vmem:[%s0 + $0x60] sm:$0xff]
  %v28 = vld [vmem:[%s0 + $0x68] sm:$0xff]
  %v29 = vld [vmem:[%s0 + $0x70] sm:$0xff]
  %v30 = vld [vmem:[%s0 + $0x78] sm:$0xff]
  %v31 = vld [vmem:[%s0 + $0x80] sm:$0xff]
  %v32 = vld [vmem:[%s0 + $0x88] sm:$0xff]
  %v33 = vld [vmem:[%s0 + $0x90] sm:$0xff]
  %v34 = vld [vmem:[%s0 + $0x98] sm:$0xff]
  %v35 = vld [vmem:[%s0 + $0xa0] sm:$0xff]
  %v36 = vld [vmem:[%s0 + $0xa8] sm:$0xff]
  %v37 = vld [vmem:[%s0 + $0xb0] sm:$0xff]
  %v38 = vld [vmem:[%s0 + $0xb8] sm:$0xff]
  %v39 = vld [vmem:[%s0 + $0xc0] sm:$0xff]
  %v40 = vld [vmem:[%s0 + $0xc8] sm:$0xff]
  %v41 = vld [vmem:[%s0 + $0xd0] sm:$0xff]
  %v42 = vld [vmem:[%s0 + $0xd8] sm:$0xff]
  %v43 = vld [vmem:[%s0 + $0xe0] sm:$0xff]
  %v44 = vld [vmem:[%s0 + $0xe8] sm:$0xff]
  %v45 = vld [vmem:[%s0 + $0xf0] sm:$0xff]
  %v46 = vld [vmem:[%s0 + $0xf8] sm:$0xff]
  %v47 = vld [vmem:[%s0 + $0x100] sm:$0xff]
  %v48 = vld [vmem:[%s0 + $0x108] sm:$0xff]
  %v49 = vld [vmem:[%s0 + $0x110] sm:$0xff]
  %v50 = vld [vmem:[%s0 + $0x118] sm:$0xff]
  %v51 = vld [vmem:[%s0 + $0x120] sm:$0xff]
  %v52 = vld [vmem:[%s0 + $0x128] sm:$0xff]
  %v53 = vld [vmem:[%s0 + $0x130] sm:$0xff]
  %v54 = vld [vmem:[%s0 + $0x138] sm:$0xff]
  %v55 = vld [vmem:[%s0 + $0x140] sm:$0xff]
  %v56 = vld [vmem:[%s0 + $0x148] sm:$0xff]
  %v57 = vld [vmem:[%s0 + $0x150] sm:$0xff]
  %v58 = vld [vmem:[%s0 + $0x158] sm:$0xff]
  %v59 = vld [vmem:[%s0 + $0x160] sm:$0xff]
  %v60 = vld [vmem:[%s0 + $0x168] sm:$0xff]
  %v61 = vld [vmem:[%s0 + $0x170] sm:$0xff]
  %v62 = vld [vmem:[%s0 + $0x178] sm:$0xff]
  %v63 = vld [vmem:[%s0 + $0x180] sm:$0xff]
  %v64 = vld [vmem:[%s0 + $0x188] sm:$0xff]
  %v65 = vld [vmem:[%s0 + $0x190] sm:$0xff]
  %v66 = vld [vmem:[%s0 + $0x198] sm:$0xff]
  %v67 = vld [vmem:[%s0 + $0x1a0] sm:$0xff]
  %v68 = vld [vmem:[%s0 + $0x1a8] sm:$0xff]
  %v69 = vld [vmem:[%s0 + $0x1b0] sm:$0xff]
  %v70 = vld [vmem:[%s0 + $0x1b8] sm:$0xff]
  %v71 = vld [vmem:[%s0 + $0x1c0] sm:$0xff]
  %v72 = vld [vmem:[%s0 + $0x1c8] sm:$0xff]
  %v73 = vld [vmem:[%s0 + $0x1d0] sm:$0xff]
  %v74 = vld [vmem:[%s0 + $0x1d8] sm:$0xff]
  %v75 = vld [vmem:[%s0 + $0x1e0] sm:$0xff]
  %v76 = vld [vmem:[%s0 + $0x1e8] sm:$0xff]
  %v77 = vld [vmem:[%s0 + $0x1f0] sm:$0xff]
  %v78 = vld [vmem:[%s0 + $0x1f8] sm:$0xff]
  %v79 = vld [vmem:[%s1] sm:$0xf]
  %v80 = vld [vmem:[%s1 + $0x4] sm:$0xf]
  %v81 = vld [vmem:[%s1 + $0x8] sm:$0xf]
  %v82 = vld [vmem:[%s1 + $0xc] sm:$0xf]
  %v83 = vld [vmem:[%s1 + $0x10] sm:$0xf]
  %v84 = vld [vmem:[%s1 + $0x14] sm:$0xf]
  %v85 = vld [vmem:[%s1 + $0x18] sm:$0xf]
  %v86 = vld [vmem:[%s1 + $0x1c] sm:$0xf]
  %v87 = vld [vmem:[%s1 + $0x20] sm:$0xf]
  %v88 = vld [vmem:[%s1 + $0x24] sm:$0xf]
  %v89 = vld [vmem:[%s1 + $0x28] sm:$0xf]
  %v90 = vld [vmem:[%s1 + $0x2c] sm:$0xf]
  %v91 = vld [vmem:[%s1 + $0x30] sm:$0xf]
  %v92 = vld [vmem:[%s1 + $0x34] sm:$0xf]
  %v93 = vld [vmem:[%s1 + $0x38] sm:$0xf]
  %v94 = vld [vmem:[%s1 + $0x3c] sm:$0xf]
  %v95 = vld [vmem:[%s1 + $0x40] sm:$0xf]
  %v96 = vld [vmem:[%s1 + $0x44] sm:$0xf]
  %v97 = vld [vmem:[%s1 + $0x48] sm:$0xf]
  %v98 = vld [vmem:[%s1 + $0x4c] sm:$0xf]
  %v99 = vld [vmem:[%s1 + $0x50] sm:$0xf]
  %v100 = vld [vmem:[%s1 + $0x54] sm:$0xf]
  %v101 = vld [vmem:[%s1 + $0x58] sm:$0xf]
  %v102 = vld [vmem:[%s1 + $0x5c] sm:$0xf]
  %v103 = vld [vmem:[%s1 + $0x60] sm:$0xf]
  %v104 = vld [vmem:[%s1 + $0x64] sm:$0xf]
  %v105 = vld [vmem:[%s1 + $0x68] sm:$0xf]
  %v106 = vld [vmem:[%s1 + $0x6c] sm:$0xf]
  %v107 = vld [vmem:[%s1 + $0x70] sm:$0xf]
  %v108 = vld [vmem:[%s1 + $0x74] sm:$0xf]
  %v109 = vld [vmem:[%s1 + $0x78] sm:$0xf]
  %v110 = vld [vmem:[%s1 + $0x7c] sm:$0xf]
  %v111 = vld [vmem:[%s1 + $0x80] sm:$0xf]
  %v112 = vld [vmem:[%s1 + $0x84] sm:$0xf]
  %v113 = vld [vmem:[%s1 + $0x88] sm:$0xf]
  %v114 = vld [vmem:[%s1 + $0x8c] sm:$0xf]
  %v115 = vld [vmem:[%s1 + $0x90] sm:$0xf]
  %v116 = vld [vmem:[%s1 + $0x94] sm:$0xf]
  %v117 = vld [vmem:[%s1 + $0x98] sm:$0xf]
  %v118 = vld [vmem:[%s1 + $0x9c] sm:$0xf]
  %v119 = vld [vmem:[%s1 + $0xa0] sm:$0xf]
  %v120 = vld [vmem:[%s1 + $0xa4] sm:$0xf]
  %v121 = vld [vmem:[%s1 + $0xa8] sm:$0xf]
  %v122 = vld [vmem:[%s1 + $0xac] sm:$0xf]
  %v123 = vld [vmem:[%s1 + $0xb0] sm:$0xf]
  %v124 = vld [vmem:[%s1 + $0xb4] sm:$0xf]
  %v125 = vld [vmem:[%s1 + $0xb8] sm:$0xf]
  %v126 = vld [vmem:[%s1 + $0xbc] sm:$0xf]
  %v127 = vld [vmem:[%s1 + $0xc0] sm:$0xf]
  %v128 = vld [vmem:[%s1 + $0xc4] sm:$0xf]
  %v129 = vld [vmem:[%s1 + $0xc8] sm:$0xf]
  %v130 = vld [vmem:[%s1 + $0xcc] sm:$0xf]
  %v131 = vld [vmem:[%s1 + $0xd0] sm:$0xf]
  %v132 = vld [vmem:[%s1 + $0xd4] sm:$0xf]
  %v133 = vld [vmem:[%s1 + $0xd8] sm:$0xf]
  %v134 = vld [vmem:[%s1 + $0xdc] sm:$0xf]
  %v135 = vld [vmem:[%s1 + $0xe0] sm:$0xf]
  %v136 = vld [vmem:[%s1 + $0xe4] sm:$0xf]
  %v137 = vld [vmem:[%s1 + $0xe8] sm:$0xf]
  %v138 = vld [vmem:[%s1 + $0xec] sm:$0xf]
  %v139 = vld [vmem:[%s1 + $0xf0] sm:$0xf]
  %v140 = vld [vmem:[%s1 + $0xf4] sm:$0xf]
  %v141 = vld [vmem:[%s1 + $0xf8] sm:$0xf]
  %v142 = vld [vmem:[%s1 + $0xfc] sm:$0xf]
  %v143 = vld [vmem:[%s1 + $0x100] sm:$0xf]
  %v144 = vld [vmem:[%s1 + $0x104] sm:$0xf]
  %v145 = vld [vmem:[%s1 + $0x108] sm:$0xf]
  %v146 = vld [vmem:[%s1 + $0x10c] sm:$0xf]
  %v147 = vld [vmem:[%s1 + $0x110] sm:$0xf]
  %v148 = vld [vmem:[%s1 + $0x114] sm:$0xf]
  %v149 = vld [vmem:[%s1 + $0x118] sm:$0xf]
  %v150 = vld [vmem:[%s1 + $0x11c] sm:$0xf]
  %v151 = vld [vmem:[%s1 + $0x120] sm:$0xf]
  %v152 = vld [vmem:[%s1 + $0x124] sm:$0xf]
  %v153 = vld [vmem:[%s1 + $0x128] sm:$0xf]
  %v154 = vld [vmem:[%s1 + $0x12c] sm:$0xf]
  %v155 = vld [vmem:[%s1 + $0x130] sm:$0xf]
  %v156 = vld [vmem:[%s1 + $0x134] sm:$0xf]
  %v157 = vld [vmem:[%s1 + $0x138] sm:$0xf]
  %v158 = vld [vmem:[%s1 + $0x13c] sm:$0xf]
  %v159 = vld [vmem:[%s1 + $0x140] sm:$0xf]
  %v160 = vld [vmem:[%s1 + $0x144] sm:$0xf]
  %v161 = vld [vmem:[%s1 + $0x148] sm:$0xf]
  %v162 = vld [vmem:[%s1 + $0x14c] sm:$0xf]
  %v163 = vld [vmem:[%s1 + $0x150] sm:$0xf]
  %v164 = vld [vmem:[%s1 + $0x154] sm:$0xf]
  %v165 = vld [vmem:[%s1 + $0x158] sm:$0xf]
  %v166 = vld [vmem:[%s1 + $0x15c] sm:$0xf]
  %v167 = vld [vmem:[%s1 + $0x160] sm:$0xf]
  %v168 = vld [vmem:[%s1 + $0x164] sm:$0xf]
  %v169 = vld [vmem:[%s1 + $0x168] sm:$0xf]
  %v170 = vld [vmem:[%s1 + $0x16c] sm:$0xf]
  %v171 = vld [vmem:[%s1 + $0x170] sm:$0xf]
  %v172 = vld [vmem:[%s1 + $0x174] sm:$0xf]
  %v173 = vld [vmem:[%s1 + $0x178] sm:$0xf]
  %v174 = vld [vmem:[%s1 + $0x17c] sm:$0xf]
  %v175 = vld [vmem:[%s1 + $0x180] sm:$0xf]
  %v176 = vld [vmem:[%s1 + $0x184] sm:$0xf]
  %v177 = vld [vmem:[%s1 + $0x188] sm:$0xf]
  %v178 = vld [vmem:[%s1 + $0x18c] sm:$0xf]
  %v179 = vld [vmem:[%s1 + $0x190] sm:$0xf]
  %v180 = vld [vmem:[%s1 + $0x194] sm:$0xf]
  %v181 = vld [vmem:[%s1 + $0x198] sm:$0xf]
  %v182 = vld [vmem:[%s1 + $0x19c] sm:$0xf]
  %v183 = vld [vmem:[%s1 + $0x1a0] sm:$0xf]
  %v184 = vld [vmem:[%s1 + $0x1a4] sm:$0xf]
  %v185 = vld [vmem:[%s1 + $0x1a8] sm:$0xf]
  %v186 = vld [vmem:[%s1 + $0x1ac] sm:$0xf]
  %v187 = vld [vmem:[%s1 + $0x1b0] sm:$0xf]
  %v188 = vld [vmem:[%s1 + $0x1b4] sm:$0xf]
  %v189 = vld [vmem:[%s1 + $0x1b8] sm:$0xf]
  %v190 = vld [vmem:[%s1 + $0x1bc] sm:$0xf]
  %v191 = vld [vmem:[%s1 + $0x1c0] sm:$0xf]
  %v192 = vld [vmem:[%s1 + $0x1c4] sm:$0xf]
  %v193 = vld [vmem:[%s1 + $0x1c8] sm:$0xf]
  %v194 = vld [vmem:[%s1 + $0x1cc] sm:$0xf]
  %v195 = vld [vmem:[%s1 + $0x1d0] sm:$0xf]
  %v196 = vld [vmem:[%s1 + $0x1d4] sm:$0xf]
  %v197 = vld [vmem:[%s1 + $0x1d8] sm:$0xf]
  %v198 = vld [vmem:[%s1 + $0x1dc] sm:$0xf]
  %v199 = vld [vmem:[%s1 + $0x1e0] sm:$0xf]
  %v200 = vld [vmem:[%s1 + $0x1e4] sm:$0xf]
  %v201 = vld [vmem:[%s1 + $0x1e8] sm:$0xf]
  %v202 = vld [vmem:[%s1 + $0x1ec] sm:$0xf]
  %v203 = vld [vmem:[%s1 + $0x1f0] sm:$0xf]
  %v204 = vld [vmem:[%s1 + $0x1f4] sm:$0xf]
  %v205 = vld [vmem:[%s1 + $0x1f8] sm:$0xf]
  %v206 = vld [vmem:[%s1 + $0x1fc] sm:$0xf]
  %v207 = vld [vmem:[%s2] sm:$0x1]
  %v209 = vlaneseq
  %v210 = vshrl.u32 %v209, 7
  %v211 = vsub.s32 0, %v210
  %v212 = vrot.slane %v207, %v211
  %v278 = vunpack.c.l.b16 %v15
  %v279 = vunpack.c.h.b16 %v15
  %v280 = vunpack.c.l.b16 %v16
  %v281 = vunpack.c.h.b16 %v16
  %v282 = vunpack.c.l.b16 %v17
  %v283 = vunpack.c.h.b16 %v17
  %v284 = vunpack.c.l.b16 %v18
  %v285 = vunpack.c.h.b16 %v18
  %v286 = vunpack.c.l.b16 %v19
  %v287 = vunpack.c.h.b16 %v19
  %v288 = vunpack.c.l.b16 %v20
  %v289 = vunpack.c.h.b16 %v20
  %v290 = vunpack.c.l.b16 %v21
  %v291 = vunpack.c.h.b16 %v21
  %v292 = vunpack.c.l.b16 %v22
  %v293 = vunpack.c.h.b16 %v22
  %v294 = vunpack.c.l.b16 %v23
  %v295 = vunpack.c.h.b16 %v23
  %v296 = vunpack.c.l.b16 %v24
  %v297 = vunpack.c.h.b16 %v24
  %v298 = vunpack.c.l.b16 %v25
  %v299 = vunpack.c.h.b16 %v25
  %v300 = vunpack.c.l.b16 %v26
  %v301 = vunpack.c.h.b16 %v26
  %v302 = vunpack.c.l.b16 %v27
  %v303 = vunpack.c.h.b16 %v27
  %v304 = vunpack.c.l.b16 %v28
  %v305 = vunpack.c.h.b16 %v28
  %v306 = vunpack.c.l.b16 %v29
  %v307 = vunpack.c.h.b16 %v29
  %v308 = vunpack.c.l.b16 %v30
  %v309 = vunpack.c.h.b16 %v30
  %v310 = vunpack.c.l.b16 %v31
  %v311 = vunpack.c.h.b16 %v31
  %v312 = vunpack.c.l.b16 %v32
  %v313 = vunpack.c.h.b16 %v32
  %v314 = vunpack.c.l.b16 %v33
  %v315 = vunpack.c.h.b16 %v33
  %v316 = vunpack.c.l.b16 %v34
  %v317 = vunpack.c.h.b16 %v34
  %v318 = vunpack.c.l.b16 %v35
  %v319 = vunpack.c.h.b16 %v35
  %v320 = vunpack.c.l.b16 %v36
  %v321 = vunpack.c.h.b16 %v36
  %v322 = vunpack.c.l.b16 %v37
  %v323 = vunpack.c.h.b16 %v37
  %v324 = vunpack.c.l.b16 %v38
  %v325 = vunpack.c.h.b16 %v38
  %v326 = vunpack.c.l.b16 %v39
  %v327 = vunpack.c.h.b16 %v39
  %v328 = vunpack.c.l.b16 %v40
  %v329 = vunpack.c.h.b16 %v40
  %v330 = vunpack.c.l.b16 %v41
  %v331 = vunpack.c.h.b16 %v41
  %v332 = vunpack.c.l.b16 %v42
  %v333 = vunpack.c.h.b16 %v42
  %v334 = vunpack.c.l.b16 %v43
  %v335 = vunpack.c.h.b16 %v43
  %v336 = vunpack.c.l.b16 %v44
  %v337 = vunpack.c.h.b16 %v44
  %v338 = vunpack.c.l.b16 %v45
  %v339 = vunpack.c.h.b16 %v45
  %v340 = vunpack.c.l.b16 %v46
  %v341 = vunpack.c.h.b16 %v46
  %v342 = vunpack.c.l.b16 %v47
  %v343 = vunpack.c.h.b16 %v47
  %v344 = vunpack.c.l.b16 %v48
  %v345 = vunpack.c.h.b16 %v48
  %v346 = vunpack.c.l.b16 %v49
  %v347 = vunpack.c.h.b16 %v49
  %v348 = vunpack.c.l.b16 %v50
  %v349 = vunpack.c.h.b16 %v50
  %v350 = vunpack.c.l.b16 %v51
  %v351 = vunpack.c.h.b16 %v51
  %v352 = vunpack.c.l.b16 %v52
  %v353 = vunpack.c.h.b16 %v52
  %v354 = vunpack.c.l.b16 %v53
  %v355 = vunpack.c.h.b16 %v53
  %v356 = vunpack.c.l.b16 %v54
  %v357 = vunpack.c.h.b16 %v54
  %v358 = vunpack.c.l.b16 %v55
  %v359 = vunpack.c.h.b16 %v55
  %v360 = vunpack.c.l.b16 %v56
  %v361 = vunpack.c.h.b16 %v56
  %v362 = vunpack.c.l.b16 %v57
  %v363 = vunpack.c.h.b16 %v57
  %v364 = vunpack.c.l.b16 %v58
  %v365 = vunpack.c.h.b16 %v58
  %v366 = vunpack.c.l.b16 %v59
  %v367 = vunpack.c.h.b16 %v59
  %v368 = vunpack.c.l.b16 %v60
  %v369 = vunpack.c.h.b16 %v60
  %v370 = vunpack.c.l.b16 %v61
  %v371 = vunpack.c.h.b16 %v61
  %v372 = vunpack.c.l.b16 %v62
  %v373 = vunpack.c.h.b16 %v62
  %v374 = vunpack.c.l.b16 %v63
  %v375 = vunpack.c.h.b16 %v63
  %v376 = vunpack.c.l.b16 %v64
  %v377 = vunpack.c.h.b16 %v64
  %v378 = vunpack.c.l.b16 %v65
  %v379 = vunpack.c.h.b16 %v65
  %v380 = vunpack.c.l.b16 %v66
  %v381 = vunpack.c.h.b16 %v66
  %v382 = vunpack.c.l.b16 %v67
  %v383 = vunpack.c.h.b16 %v67
  %v384 = vunpack.c.l.b16 %v68
  %v385 = vunpack.c.h.b16 %v68
  %v386 = vunpack.c.l.b16 %v69
  %v387 = vunpack.c.h.b16 %v69
  %v388 = vunpack.c.l.b16 %v70
  %v389 = vunpack.c.h.b16 %v70
  %v390 = vunpack.c.l.b16 %v71
  %v391 = vunpack.c.h.b16 %v71
  %v392 = vunpack.c.l.b16 %v72
  %v393 = vunpack.c.h.b16 %v72
  %v394 = vunpack.c.l.b16 %v73
  %v395 = vunpack.c.h.b16 %v73
  %v396 = vunpack.c.l.b16 %v74
  %v397 = vunpack.c.h.b16 %v74
  %v398 = vunpack.c.l.b16 %v75
  %v399 = vunpack.c.h.b16 %v75
  %v400 = vunpack.c.l.b16 %v76
  %v401 = vunpack.c.h.b16 %v76
  %v402 = vunpack.c.l.b16 %v77
  %v403 = vunpack.c.h.b16 %v77
  %v404 = vunpack.c.l.b16 %v78
  %v405 = vunpack.c.h.b16 %v78
  %v406 = vpack.c.b16 %v286, %v278
  %v407 = vpack.c.b16 %v287, %v279
  %v408 = vpack.c.b16 %v288, %v280
  %v409 = vpack.c.b16 %v289, %v281
  %v410 = vpack.c.b16 %v290, %v282
  %v411 = vpack.c.b16 %v291, %v283
  %v412 = vpack.c.b16 %v292, %v284
  %v413 = vpack.c.b16 %v293, %v285
  %v414 = vpack.c.b16 %v302, %v294
  %v415 = vpack.c.b16 %v303, %v295
  %v416 = vpack.c.b16 %v304, %v296
  %v417 = vpack.c.b16 %v305, %v297
  %v418 = vpack.c.b16 %v306, %v298
  %v419 = vpack.c.b16 %v307, %v299
  %v420 = vpack.c.b16 %v308, %v300
  %v421 = vpack.c.b16 %v309, %v301
  %v422 = vpack.c.b16 %v318, %v310
  %v423 = vpack.c.b16 %v319, %v311
  %v424 = vpack.c.b16 %v320, %v312
  %v425 = vpack.c.b16 %v321, %v313
  %v426 = vpack.c.b16 %v322, %v314
  %v427 = vpack.c.b16 %v323, %v315
  %v428 = vpack.c.b16 %v324, %v316
  %v429 = vpack.c.b16 %v325, %v317
  %v430 = vpack.c.b16 %v334, %v326
  %v431 = vpack.c.b16 %v335, %v327
  %v432 = vpack.c.b16 %v336, %v328
  %v433 = vpack.c.b16 %v337, %v329
  %v434 = vpack.c.b16 %v338, %v330
  %v435 = vpack.c.b16 %v339, %v331
  %v436 = vpack.c.b16 %v340, %v332
  %v437 = vpack.c.b16 %v341, %v333
  %v438 = vpack.c.b16 %v350, %v342
  %v439 = vpack.c.b16 %v351, %v343
  %v440 = vpack.c.b16 %v352, %v344
  %v441 = vpack.c.b16 %v353, %v345
  %v442 = vpack.c.b16 %v354, %v346
  %v443 = vpack.c.b16 %v355, %v347
  %v444 = vpack.c.b16 %v356, %v348
  %v445 = vpack.c.b16 %v357, %v349
  %v446 = vpack.c.b16 %v366, %v358
  %v447 = vpack.c.b16 %v367, %v359
  %v448 = vpack.c.b16 %v368, %v360
  %v449 = vpack.c.b16 %v369, %v361
  %v450 = vpack.c.b16 %v370, %v362
  %v451 = vpack.c.b16 %v371, %v363
  %v452 = vpack.c.b16 %v372, %v364
  %v453 = vpack.c.b16 %v373, %v365
  %v454 = vpack.c.b16 %v382, %v374
  %v455 = vpack.c.b16 %v383, %v375
  %v456 = vpack.c.b16 %v384, %v376
  %v457 = vpack.c.b16 %v385, %v377
  %v458 = vpack.c.b16 %v386, %v378
  %v459 = vpack.c.b16 %v387, %v379
  %v460 = vpack.c.b16 %v388, %v380
  %v461 = vpack.c.b16 %v389, %v381
  %v462 = vpack.c.b16 %v398, %v390
  %v463 = vpack.c.b16 %v399, %v391
  %v464 = vpack.c.b16 %v400, %v392
  %v465 = vpack.c.b16 %v401, %v393
  %v466 = vpack.c.b16 %v402, %v394
  %v467 = vpack.c.b16 %v403, %v395
  %v468 = vpack.c.b16 %v404, %v396
  %v469 = vpack.c.b16 %v405, %v397
  %v662 = vunpack.c.l.b16 %v79
  %v663 = vunpack.c.l.b16 %v80
  %v664 = vunpack.c.l.b16 %v81
  %v665 = vunpack.c.l.b16 %v82
  %v666 = vunpack.c.l.b16 %v83
  %v667 = vunpack.c.l.b16 %v84
  %v668 = vunpack.c.l.b16 %v85
  %v669 = vunpack.c.l.b16 %v86
  %v670 = vunpack.c.l.b16 %v87
  %v671 = vunpack.c.l.b16 %v88
  %v672 = vunpack.c.l.b16 %v89
  %v673 = vunpack.c.l.b16 %v90
  %v674 = vunpack.c.l.b16 %v91
  %v675 = vunpack.c.l.b16 %v92
  %v676 = vunpack.c.l.b16 %v93
  %v677 = vunpack.c.l.b16 %v94
  %v678 = vunpack.c.l.b16 %v95
  %v679 = vunpack.c.l.b16 %v96
  %v680 = vunpack.c.l.b16 %v97
  %v681 = vunpack.c.l.b16 %v98
  %v682 = vunpack.c.l.b16 %v99
  %v683 = vunpack.c.l.b16 %v100
  %v684 = vunpack.c.l.b16 %v101
  %v685 = vunpack.c.l.b16 %v102
  %v686 = vunpack.c.l.b16 %v103
  %v687 = vunpack.c.l.b16 %v104
  %v688 = vunpack.c.l.b16 %v105
  %v689 = vunpack.c.l.b16 %v106
  %v690 = vunpack.c.l.b16 %v107
  %v691 = vunpack.c.l.b16 %v108
  %v692 = vunpack.c.l.b16 %v109
  %v693 = vunpack.c.l.b16 %v110
  %v694 = vunpack.c.l.b16 %v111
  %v695 = vunpack.c.l.b16 %v112
  %v696 = vunpack.c.l.b16 %v113
  %v697 = vunpack.c.l.b16 %v114
  %v698 = vunpack.c.l.b16 %v115
  %v699 = vunpack.c.l.b16 %v116
  %v700 = vunpack.c.l.b16 %v117
  %v701 = vunpack.c.l.b16 %v118
  %v702 = vunpack.c.l.b16 %v119
  %v703 = vunpack.c.l.b16 %v120
  %v704 = vunpack.c.l.b16 %v121
  %v705 = vunpack.c.l.b16 %v122
  %v706 = vunpack.c.l.b16 %v123
  %v707 = vunpack.c.l.b16 %v124
  %v708 = vunpack.c.l.b16 %v125
  %v709 = vunpack.c.l.b16 %v126
  %v710 = vunpack.c.l.b16 %v127
  %v711 = vunpack.c.l.b16 %v128
  %v712 = vunpack.c.l.b16 %v129
  %v713 = vunpack.c.l.b16 %v130
  %v714 = vunpack.c.l.b16 %v131
  %v715 = vunpack.c.l.b16 %v132
  %v716 = vunpack.c.l.b16 %v133
  %v717 = vunpack.c.l.b16 %v134
  %v718 = vunpack.c.l.b16 %v135
  %v719 = vunpack.c.l.b16 %v136
  %v720 = vunpack.c.l.b16 %v137
  %v721 = vunpack.c.l.b16 %v138
  %v722 = vunpack.c.l.b16 %v139
  %v723 = vunpack.c.l.b16 %v140
  %v724 = vunpack.c.l.b16 %v141
  %v725 = vunpack.c.l.b16 %v142
  %v726 = vunpack.c.l.b16 %v143
  %v727 = vunpack.c.l.b16 %v144
  %v728 = vunpack.c.l.b16 %v145
  %v729 = vunpack.c.l.b16 %v146
  %v730 = vunpack.c.l.b16 %v147
  %v731 = vunpack.c.l.b16 %v148
  %v732 = vunpack.c.l.b16 %v149
  %v733 = vunpack.c.l.b16 %v150
  %v734 = vunpack.c.l.b16 %v151
  %v735 = vunpack.c.l.b16 %v152
  %v736 = vunpack.c.l.b16 %v153
  %v737 = vunpack.c.l.b16 %v154
  %v738 = vunpack.c.l.b16 %v155
  %v739 = vunpack.c.l.b16 %v156
  %v740 = vunpack.c.l.b16 %v157
  %v741 = vunpack.c.l.b16 %v158
  %v742 = vunpack.c.l.b16 %v159
  %v743 = vunpack.c.l.b16 %v160
  %v744 = vunpack.c.l.b16 %v161
  %v745 = vunpack.c.l.b16 %v162
  %v746 = vunpack.c.l.b16 %v163
  %v747 = vunpack.c.l.b16 %v164
  %v748 = vunpack.c.l.b16 %v165
  %v749 = vunpack.c.l.b16 %v166
  %v750 = vunpack.c.l.b16 %v167
  %v751 = vunpack.c.l.b16 %v168
  %v752 = vunpack.c.l.b16 %v169
  %v753 = vunpack.c.l.b16 %v170
  %v754 = vunpack.c.l.b16 %v171
  %v755 = vunpack.c.l.b16 %v172
  %v756 = vunpack.c.l.b16 %v173
  %v757 = vunpack.c.l.b16 %v174
  %v758 = vunpack.c.l.b16 %v175
  %v759 = vunpack.c.l.b16 %v176
  %v760 = vunpack.c.l.b16 %v177
  %v761 = vunpack.c.l.b16 %v178
  %v762 = vunpack.c.l.b16 %v179
  %v763 = vunpack.c.l.b16 %v180
  %v764 = vunpack.c.l.b16 %v181
  %v765 = vunpack.c.l.b16 %v182
  %v766 = vunpack.c.l.b16 %v183
  %v767 = vunpack.c.l.b16 %v184
  %v768 = vunpack.c.l.b16 %v185
  %v769 = vunpack.c.l.b16 %v186
  %v770 = vunpack.c.l.b16 %v187
  %v771 = vunpack.c.l.b16 %v188
  %v772 = vunpack.c.l.b16 %v189
  %v773 = vunpack.c.l.b16 %v190
  %v774 = vunpack.c.l.b16 %v191
  %v775 = vunpack.c.l.b16 %v192
  %v776 = vunpack.c.l.b16 %v193
  %v777 = vunpack.c.l.b16 %v194
  %v778 = vunpack.c.l.b16 %v195
  %v779 = vunpack.c.l.b16 %v196
  %v780 = vunpack.c.l.b16 %v197
  %v781 = vunpack.c.l.b16 %v198
  %v782 = vunpack.c.l.b16 %v199
  %v783 = vunpack.c.l.b16 %v200
  %v784 = vunpack.c.l.b16 %v201
  %v785 = vunpack.c.l.b16 %v202
  %v786 = vunpack.c.l.b16 %v203
  %v787 = vunpack.c.l.b16 %v204
  %v788 = vunpack.c.l.b16 %v205
  %v789 = vunpack.c.l.b16 %v206
  %v790 = vpack.c.b16 %v663, %v662
  %v791 = vpack.c.b16 %v665, %v664
  %v792 = vpack.c.b16 %v667, %v666
  %v793 = vpack.c.b16 %v669, %v668
  %v794 = vpack.c.b16 %v671, %v670
  %v795 = vpack.c.b16 %v673, %v672
  %v796 = vpack.c.b16 %v675, %v674
  %v797 = vpack.c.b16 %v677, %v676
  %v798 = vpack.c.b16 %v679, %v678
  %v799 = vpack.c.b16 %v681, %v680
  %v800 = vpack.c.b16 %v683, %v682
  %v801 = vpack.c.b16 %v685, %v684
  %v802 = vpack.c.b16 %v687, %v686
  %v803 = vpack.c.b16 %v689, %v688
  %v804 = vpack.c.b16 %v691, %v690
  %v805 = vpack.c.b16 %v693, %v692
  %v806 = vpack.c.b16 %v695, %v694
  %v807 = vpack.c.b16 %v697, %v696
  %v808 = vpack.c.b16 %v699, %v698
  %v809 = vpack.c.b16 %v701, %v700
  %v810 = vpack.c.b16 %v703, %v702
  %v811 = vpack.c.b16 %v705, %v704
  %v812 = vpack.c.b16 %v707, %v706
  %v813 = vpack.c.b16 %v709, %v708
  %v814 = vpack.c.b16 %v711, %v710
  %v815 = vpack.c.b16 %v713, %v712
  %v816 = vpack.c.b16 %v715, %v714
  %v817 = vpack.c.b16 %v717, %v716
  %v818 = vpack.c.b16 %v719, %v718
  %v819 = vpack.c.b16 %v721, %v720
  %v820 = vpack.c.b16 %v723, %v722
  %v821 = vpack.c.b16 %v725, %v724
  %v822 = vpack.c.b16 %v727, %v726
  %v823 = vpack.c.b16 %v729, %v728
  %v824 = vpack.c.b16 %v731, %v730
  %v825 = vpack.c.b16 %v733, %v732
  %v826 = vpack.c.b16 %v735, %v734
  %v827 = vpack.c.b16 %v737, %v736
  %v828 = vpack.c.b16 %v739, %v738
  %v829 = vpack.c.b16 %v741, %v740
  %v830 = vpack.c.b16 %v743, %v742
  %v831 = vpack.c.b16 %v745, %v744
  %v832 = vpack.c.b16 %v747, %v746
  %v833 = vpack.c.b16 %v749, %v748
  %v834 = vpack.c.b16 %v751, %v750
  %v835 = vpack.c.b16 %v753, %v752
  %v836 = vpack.c.b16 %v755, %v754
  %v837 = vpack.c.b16 %v757, %v756
  %v838 = vpack.c.b16 %v759, %v758
  %v839 = vpack.c.b16 %v761, %v760
  %v840 = vpack.c.b16 %v763, %v762
  %v841 = vpack.c.b16 %v765, %v764
  %v842 = vpack.c.b16 %v767, %v766
  %v843 = vpack.c.b16 %v769, %v768
  %v844 = vpack.c.b16 %v771, %v770
  %v845 = vpack.c.b16 %v773, %v772
  %v846 = vpack.c.b16 %v775, %v774
  %v847 = vpack.c.b16 %v777, %v776
  %v848 = vpack.c.b16 %v779, %v778
  %v849 = vpack.c.b16 %v781, %v780
  %v850 = vpack.c.b16 %v783, %v782
  %v851 = vpack.c.b16 %v785, %v784
  %v852 = vpack.c.b16 %v787, %v786
  %v853 = vpack.c.b16 %v789, %v788
  %918 = vmatprep.subr.bf16.mxu0 0
  %919 = vmatpush1.bf16.msra.mxu0 %v790
  %920 = vmatprep.subr.bf16.mxu0 0
  %921 = vmatpush1.bf16.msra.mxu0 %v791
  %922 = vmatprep.subr.bf16.mxu0 0
  %923 = vmatpush1.bf16.msra.mxu0 %v792
  %924 = vmatprep.subr.bf16.mxu0 0
  %925 = vmatpush1.bf16.msra.mxu0 %v793
  %926 = vmatprep.subr.bf16.mxu0 0
  %927 = vmatpush1.bf16.msra.mxu0 %v794
  %928 = vmatprep.subr.bf16.mxu0 0
  %929 = vmatpush1.bf16.msra.mxu0 %v795
  %930 = vmatprep.subr.bf16.mxu0 0
  %931 = vmatpush1.bf16.msra.mxu0 %v796
  %932 = vmatprep.subr.bf16.mxu0 0
  %933 = vmatpush1.bf16.msra.mxu0 %v797
  %934 = vmatprep.subr.bf16.mxu0 0
  %935 = vmatpush1.bf16.msra.mxu0 %v798
  %936 = vmatprep.subr.bf16.mxu0 0
  %937 = vmatpush1.bf16.msra.mxu0 %v799
  %938 = vmatprep.subr.bf16.mxu0 0
  %939 = vmatpush1.bf16.msra.mxu0 %v800
  %940 = vmatprep.subr.bf16.mxu0 0
  %941 = vmatpush1.bf16.msra.mxu0 %v801
  %942 = vmatprep.subr.bf16.mxu0 0
  %943 = vmatpush1.bf16.msra.mxu0 %v802
  %944 = vmatprep.subr.bf16.mxu0 0
  %945 = vmatpush1.bf16.msra.mxu0 %v803
  %946 = vmatprep.subr.bf16.mxu0 0
  %947 = vmatpush1.bf16.msra.mxu0 %v804
  %948 = vmatprep.subr.bf16.mxu0 0
  %949 = vmatpush1.bf16.msra.mxu0 %v805
  %950 = vmatprep.mubr.bf16.mxu0 %v407
  %951 = vmatmul.mubr.bf16.gmra.mrb[0].mxu0 %v406
  %v952 = vpop.f32.mrb[0].mxu0
  %v953 = vadd.f32 %v212, %v952
  %v954 = vpop.f32.mrb[0].mxu0
  %v955 = vpop.f32.mrb[0].mxu0
  %v956 = vadd.f32 %v212, %v955
  %v957 = vpop.f32.mrb[0].mxu0
  %958 = vmatprep.mubr.bf16.mxu0 %v415
  %959 = vmatmul.mubr.bf16.gmra.mrb[0].mxu0 %v414
  %v960 = vpop.f32.mrb[0].mxu0
  %v961 = vadd.f32 %v212, %v960
  %v962 = vpop.f32.mrb[0].mxu0
  %v963 = vpop.f32.mrb[0].mxu0
  %v964 = vadd.f32 %v212, %v963
  %v965 = vpop.f32.mrb[0].mxu0
  %966 = vmatprep.mubr.bf16.mxu0 %v423
  %967 = vmatmul.mubr.bf16.gmra.mrb[0].mxu0 %v422
  %v968 = vpop.f32.mrb[0].mxu0
  %v969 = vadd.f32 %v212, %v968
  %v970 = vpop.f32.mrb[0].mxu0
  %v971 = vpop.f32.mrb[0].mxu0
  %v972 = vadd.f32 %v212, %v971
  %v973 = vpop.f32.mrb[0].mxu0
  %974 = vmatprep.mubr.bf16.mxu0 %v431
  %975 = vmatmul.mubr.bf16.gmra.mrb[0].mxu0 %v430
  %v976 = vpop.f32.mrb[0].mxu0
  %v977 = vadd.f32 %v212, %v976
  %v978 = vpop.f32.mrb[0].mxu0
  %v979 = vpop.f32.mrb[0].mxu0
  %v980 = vadd.f32 %v212, %v979
  %v981 = vpop.f32.mrb[0].mxu0
  %982 = vmatprep.mubr.bf16.mxu0 %v439
  %983 = vmatmul.mubr.bf16.gmra.mrb[0].mxu0 %v438
  %v984 = vpop.f32.mrb[0].mxu0
  %v985 = vadd.f32 %v212, %v984
  %v986 = vpop.f32.mrb[0].mxu0
  %v987 = vpop.f32.mrb[0].mxu0
  %v988 = vadd.f32 %v212, %v987
  %v989 = vpop.f32.mrb[0].mxu0
  %990 = vmatprep.mubr.bf16.mxu0 %v447
  %991 = vmatmul.mubr.bf16.gmra.mrb[0].mxu0 %v446
  %v992 = vpop.f32.mrb[0].mxu0
  %v993 = vadd.f32 %v212, %v992
  %v994 = vpop.f32.mrb[0].mxu0
  %v995 = vpop.f32.mrb[0].mxu0
  %v996 = vadd.f32 %v212, %v995
  %v997 = vpop.f32.mrb[0].mxu0
  %998 = vmatprep.mubr.bf16.mxu0 %v455
  %999 = vmatmul.mubr.bf16.gmra.mrb[0].mxu0 %v454
  %v1000 = vpop.f32.mrb[0].mxu0
  %v1001 = vadd.f32 %v212, %v1000
  %v1002 = vpop.f32.mrb[0].mxu0
  %v1003 = vpop.f32.mrb[0].mxu0
  %v1004 = vadd.f32 %v212, %v1003
  %v1005 = vpop.f32.mrb[0].mxu0
  %1006 = vmatprep.mubr.bf16.mxu0 %v463
  %1007 = vmatmul.mubr.bf16.gmra.mrb[0].mxu0 %v462
  %v1008 = vpop.f32.mrb[0].mxu0
  %v1009 = vadd.f32 %v212, %v1008
  %v1010 = vpop.f32.mrb[0].mxu0
  %v1011 = vpop.f32.mrb[0].mxu0
  %v1012 = vadd.f32 %v212, %v1011
  %v1013 = vpop.f32.mrb[0].mxu0
  %1014 = vdwg.mxu0
  %1015 = vmatprep.subr.bf16.mxu0 0
  %1016 = vmatpush1.bf16.msra.mxu0 %v806
  %1017 = vmatprep.subr.bf16.mxu0 0
  %1018 = vmatpush1.bf16.msra.mxu0 %v807
  %1019 = vmatprep.subr.bf16.mxu0 0
  %1020 = vmatpush1.bf16.msra.mxu0 %v808
  %1021 = vmatprep.subr.bf16.mxu0 0
  %1022 = vmatpush1.bf16.msra.mxu0 %v809
  %1023 = vmatprep.subr.bf16.mxu0 0
  %1024 = vmatpush1.bf16.msra.mxu0 %v810
  %1025 = vmatprep.subr.bf16.mxu0 0
  %1026 = vmatpush1.bf16.msra.mxu0 %v811
  %1027 = vmatprep.subr.bf16.mxu0 0
  %1028 = vmatpush1.bf16.msra.mxu0 %v812
  %1029 = vmatprep.subr.bf16.mxu0 0
  %1030 = vmatpush1.bf16.msra.mxu0 %v813
  %1031 = vmatprep.subr.bf16.mxu0 0
  %1032 = vmatpush1.bf16.msra.mxu0 %v814
  %1033 = vmatprep.subr.bf16.mxu0 0
  %1034 = vmatpush1.bf16.msra.mxu0 %v815
  %1035 = vmatprep.subr.bf16.mxu0 0
  %1036 = vmatpush1.bf16.msra.mxu0 %v816
  %1037 = vmatprep.subr.bf16.mxu0 0
  %1038 = vmatpush1.bf16.msra.mxu0 %v817
  %1039 = vmatprep.subr.bf16.mxu0 0
  %1040 = vmatpush1.bf16.msra.mxu0 %v818
  %1041 = vmatprep.subr.bf16.mxu0 0
  %1042 = vmatpush1.bf16.msra.mxu0 %v819
  %1043 = vmatprep.subr.bf16.mxu0 0
  %1044 = vmatpush1.bf16.msra.mxu0 %v820
  %1045 = vmatprep.subr.bf16.mxu0 0
  %1046 = vmatpush1.bf16.msra.mxu0 %v821
  %1047 = vmatprep.mubr.bf16.mxu0 %v409
  %1048 = vmatmul.mubr.bf16.gmra.mrb[0].mxu0 %v408
  %v1049 = vpop.f32.mrb[0].mxu0
  %v1050 = vadd.f32 %v953, %v1049
  %v1051 = vpop.f32.mrb[0].mxu0
  %v1052 = vpop.f32.mrb[0].mxu0
  %v1053 = vadd.f32 %v956, %v1052
  %v1054 = vpop.f32.mrb[0].mxu0
  %1055 = vmatprep.mubr.bf16.mxu0 %v417
  %1056 = vmatmul.mubr.bf16.gmra.mrb[0].mxu0 %v416
  %v1057 = vpop.f32.mrb[0].mxu0
  %v1058 = vadd.f32 %v961, %v1057
  %v1059 = vpop.f32.mrb[0].mxu0
  %v1060 = vpop.f32.mrb[0].mxu0
  %v1061 = vadd.f32 %v964, %v1060
  %v1062 = vpop.f32.mrb[0].mxu0
  %1063 = vmatprep.mubr.bf16.mxu0 %v425
  %1064 = vmatmul.mubr.bf16.gmra.mrb[0].mxu0 %v424
  %v1065 = vpop.f32.mrb[0].mxu0
  %v1066 = vadd.f32 %v969, %v1065
  %v1067 = vpop.f32.mrb[0].mxu0
  %v1068 = vpop.f32.mrb[0].mxu0
  %v1069 = vadd.f32 %v972, %v1068
  %v1070 = vpop.f32.mrb[0].mxu0
  %1071 = vmatprep.mubr.bf16.mxu0 %v433
  %1072 = vmatmul.mubr.bf16.gmra.mrb[0].mxu0 %v432
  %v1073 = vpop.f32.mrb[0].mxu0
  %v1074 = vadd.f32 %v977, %v1073
  %v1075 = vpop.f32.mrb[0].mxu0
  %v1076 = vpop.f32.mrb[0].mxu0
  %v1077 = vadd.f32 %v980, %v1076
  %v1078 = vpop.f32.mrb[0].mxu0
  %1079 = vmatprep.mubr.bf16.mxu0 %v441
  %1080 = vmatmul.mubr.bf16.gmra.mrb[0].mxu0 %v440
  %v1081 = vpop.f32.mrb[0].mxu0
  %v1082 = vadd.f32 %v985, %v1081
  %v1083 = vpop.f32.mrb[0].mxu0
  %v1084 = vpop.f32.mrb[0].mxu0
  %v1085 = vadd.f32 %v988, %v1084
  %v1086 = vpop.f32.mrb[0].mxu0
  %1087 = vmatprep.mubr.bf16.mxu0 %v449
  %1088 = vmatmul.mubr.bf16.gmra.mrb[0].mxu0 %v448
  %v1089 = vpop.f32.mrb[0].mxu0
  %v1090 = vadd.f32 %v993, %v1089
  %v1091 = vpop.f32.mrb[0].mxu0
  %v1092 = vpop.f32.mrb[0].mxu0
  %v1093 = vadd.f32 %v996, %v1092
  %v1094 = vpop.f32.mrb[0].mxu0
  %1095 = vmatprep.mubr.bf16.mxu0 %v457
  %1096 = vmatmul.mubr.bf16.gmra.mrb[0].mxu0 %v456
  %v1097 = vpop.f32.mrb[0].mxu0
  %v1098 = vadd.f32 %v1001, %v1097
  %v1099 = vpop.f32.mrb[0].mxu0
  %v1100 = vpop.f32.mrb[0].mxu0
  %v1101 = vadd.f32 %v1004, %v1100
  %v1102 = vpop.f32.mrb[0].mxu0
  %1103 = vmatprep.mubr.bf16.mxu0 %v465
  %1104 = vmatmul.mubr.bf16.gmra.mrb[0].mxu0 %v464
  %v1105 = vpop.f32.mrb[0].mxu0
  %v1106 = vadd.f32 %v1009, %v1105
  %v1107 = vpop.f32.mrb[0].mxu0
  %v1108 = vpop.f32.mrb[0].mxu0
  %v1109 = vadd.f32 %v1012, %v1108
  %v1110 = vpop.f32.mrb[0].mxu0
  %1111 = vdwg.mxu0
  %1112 = vmatprep.subr.bf16.mxu0 0
  %1113 = vmatpush1.bf16.msra.mxu0 %v822
  %1114 = vmatprep.subr.bf16.mxu0 0
  %1115 = vmatpush1.bf16.msra.mxu0 %v823
  %1116 = vmatprep.subr.bf16.mxu0 0
  %1117 = vmatpush1.bf16.msra.mxu0 %v824
  %1118 = vmatprep.subr.bf16.mxu0 0
  %1119 = vmatpush1.bf16.msra.mxu0 %v825
  %1120 = vmatprep.subr.bf16.mxu0 0
  %1121 = vmatpush1.bf16.msra.mxu0 %v826
  %1122 = vmatprep.subr.bf16.mxu0 0
  %1123 = vmatpush1.bf16.msra.mxu0 %v827
  %1124 = vmatprep.subr.bf16.mxu0 0
  %1125 = vmatpush1.bf16.msra.mxu0 %v828
  %1126 = vmatprep.subr.bf16.mxu0 0
  %1127 = vmatpush1.bf16.msra.mxu0 %v829
  %1128 = vmatprep.subr.bf16.mxu0 0
  %1129 = vmatpush1.bf16.msra.mxu0 %v830
  %1130 = vmatprep.subr.bf16.mxu0 0
  %1131 = vmatpush1.bf16.msra.mxu0 %v831
  %1132 = vmatprep.subr.bf16.mxu0 0
  %1133 = vmatpush1.bf16.msra.mxu0 %v832
  %1134 = vmatprep.subr.bf16.mxu0 0
  %1135 = vmatpush1.bf16.msra.mxu0 %v833
  %1136 = vmatprep.subr.bf16.mxu0 0
  %1137 = vmatpush1.bf16.msra.mxu0 %v834
  %1138 = vmatprep.subr.bf16.mxu0 0
  %1139 = vmatpush1.bf16.msra.mxu0 %v835
  %1140 = vmatprep.subr.bf16.mxu0 0
  %1141 = vmatpush1.bf16.msra.mxu0 %v836
  %1142 = vmatprep.subr.bf16.mxu0 0
  %1143 = vmatpush1.bf16.msra.mxu0 %v837
  %1144 = vmatprep.mubr.bf16.mxu0 %v411
  %1145 = vmatmul.mubr.bf16.gmra.mrb[0].mxu0 %v410
  %v1146 = vpop.f32.mrb[0].mxu0
  %v1147 = vadd.f32 %v1050, %v1146
  %v1148 = vpop.f32.mrb[0].mxu0
  %v1149 = vpop.f32.mrb[0].mxu0
  %v1150 = vadd.f32 %v1053, %v1149
  %v1151 = vpop.f32.mrb[0].mxu0
  %1152 = vmatprep.mubr.bf16.mxu0 %v419
  %1153 = vmatmul.mubr.bf16.gmra.mrb[0].mxu0 %v418
  %v1154 = vpop.f32.mrb[0].mxu0
  %v1155 = vadd.f32 %v1058, %v1154
  %v1156 = vpop.f32.mrb[0].mxu0
  %v1157 = vpop.f32.mrb[0].mxu0
  %v1158 = vadd.f32 %v1061, %v1157
  %v1159 = vpop.f32.mrb[0].mxu0
  %1160 = vmatprep.mubr.bf16.mxu0 %v427
  %1161 = vmatmul.mubr.bf16.gmra.mrb[0].mxu0 %v426
  %v1162 = vpop.f32.mrb[0].mxu0
  %v1163 = vadd.f32 %v1066, %v1162
  %v1164 = vpop.f32.mrb[0].mxu0
  %v1165 = vpop.f32.mrb[0].mxu0
  %v1166 = vadd.f32 %v1069, %v1165
  %v1167 = vpop.f32.mrb[0].mxu0
  %1168 = vmatprep.mubr.bf16.mxu0 %v435
  %1169 = vmatmul.mubr.bf16.gmra.mrb[0].mxu0 %v434
  %v1170 = vpop.f32.mrb[0].mxu0
  %v1171 = vadd.f32 %v1074, %v1170
  %v1172 = vpop.f32.mrb[0].mxu0
  %v1173 = vpop.f32.mrb[0].mxu0
  %v1174 = vadd.f32 %v1077, %v1173
  %v1175 = vpop.f32.mrb[0].mxu0
  %1176 = vmatprep.mubr.bf16.mxu0 %v443
  %1177 = vmatmul.mubr.bf16.gmra.mrb[0].mxu0 %v442
  %v1178 = vpop.f32.mrb[0].mxu0
  %v1179 = vadd.f32 %v1082, %v1178
  %v1180 = vpop.f32.mrb[0].mxu0
  %v1181 = vpop.f32.mrb[0].mxu0
  %v1182 = vadd.f32 %v1085, %v1181
  %v1183 = vpop.f32.mrb[0].mxu0
  %1184 = vmatprep.mubr.bf16.mxu0 %v451
  %1185 = vmatmul.mubr.bf16.gmra.mrb[0].mxu0 %v450
  %v1186 = vpop.f32.mrb[0].mxu0
  %v1187 = vadd.f32 %v1090, %v1186
  %v1188 = vpop.f32.mrb[0].mxu0
  %v1189 = vpop.f32.mrb[0].mxu0
  %v1190 = vadd.f32 %v1093, %v1189
  %v1191 = vpop.f32.mrb[0].mxu0
  %1192 = vmatprep.mubr.bf16.mxu0 %v459
  %1193 = vmatmul.mubr.bf16.gmra.mrb[0].mxu0 %v458
  %v1194 = vpop.f32.mrb[0].mxu0
  %v1195 = vadd.f32 %v1098, %v1194
  %v1196 = vpop.f32.mrb[0].mxu0
  %v1197 = vpop.f32.mrb[0].mxu0
  %v1198 = vadd.f32 %v1101, %v1197
  %v1199 = vpop.f32.mrb[0].mxu0
  %1200 = vmatprep.mubr.bf16.mxu0 %v467
  %1201 = vmatmul.mubr.bf16.gmra.mrb[0].mxu0 %v466
  %v1202 = vpop.f32.mrb[0].mxu0
  %v1203 = vadd.f32 %v1106, %v1202
  %v1204 = vpop.f32.mrb[0].mxu0
  %v1205 = vpop.f32.mrb[0].mxu0
  %v1206 = vadd.f32 %v1109, %v1205
  %v1207 = vpop.f32.mrb[0].mxu0
  %1208 = vdwg.mxu0
  %1209 = vmatprep.subr.bf16.mxu0 0
  %1210 = vmatpush1.bf16.msra.mxu0 %v838
  %1211 = vmatprep.subr.bf16.mxu0 0
  %1212 = vmatpush1.bf16.msra.mxu0 %v839
  %1213 = vmatprep.subr.bf16.mxu0 0
  %1214 = vmatpush1.bf16.msra.mxu0 %v840
  %1215 = vmatprep.subr.bf16.mxu0 0
  %1216 = vmatpush1.bf16.msra.mxu0 %v841
  %1217 = vmatprep.subr.bf16.mxu0 0
  %1218 = vmatpush1.bf16.msra.mxu0 %v842
  %1219 = vmatprep.subr.bf16.mxu0 0
  %1220 = vmatpush1.bf16.msra.mxu0 %v843
  %1221 = vmatprep.subr.bf16.mxu0 0
  %1222 = vmatpush1.bf16.msra.mxu0 %v844
  %1223 = vmatprep.subr.bf16.mxu0 0
  %1224 = vmatpush1.bf16.msra.mxu0 %v845
  %1225 = vmatprep.subr.bf16.mxu0 0
  %1226 = vmatpush1.bf16.msra.mxu0 %v846
  %1227 = vmatprep.subr.bf16.mxu0 0
  %1228 = vmatpush1.bf16.msra.mxu0 %v847
  %1229 = vmatprep.subr.bf16.mxu0 0
  %1230 = vmatpush1.bf16.msra.mxu0 %v848
  %1231 = vmatprep.subr.bf16.mxu0 0
  %1232 = vmatpush1.bf16.msra.mxu0 %v849
  %1233 = vmatprep.subr.bf16.mxu0 0
  %1234 = vmatpush1.bf16.msra.mxu0 %v850
  %1235 = vmatprep.subr.bf16.mxu0 0
  %1236 = vmatpush1.bf16.msra.mxu0 %v851
  %1237 = vmatprep.subr.bf16.mxu0 0
  %1238 = vmatpush1.bf16.msra.mxu0 %v852
  %1239 = vmatprep.subr.bf16.mxu0 0
  %1240 = vmatpush1.bf16.msra.mxu0 %v853
  %1241 = vmatprep.mubr.bf16.mxu0 %v413
  %1242 = vmatmul.mubr.bf16.gmra.mrb[0].mxu0 %v412
  %v1243 = vpop.f32.mrb[0].mxu0
  %v1244 = vadd.f32 %v1147, %v1243
  %v1245 = vpop.f32.mrb[0].mxu0
  %v1246 = vpop.f32.mrb[0].mxu0
  %v1247 = vadd.f32 %v1150, %v1246
  %v1248 = vpop.f32.mrb[0].mxu0
  %1249 = vmatprep.mubr.bf16.mxu0 %v421
  %1250 = vmatmul.mubr.bf16.gmra.mrb[0].mxu0 %v420
  %v1251 = vpop.f32.mrb[0].mxu0
  %v1252 = vadd.f32 %v1155, %v1251
  %v1253 = vpop.f32.mrb[0].mxu0
  %v1254 = vpop.f32.mrb[0].mxu0
  %v1255 = vadd.f32 %v1158, %v1254
  %v1256 = vpop.f32.mrb[0].mxu0
  %1257 = vmatprep.mubr.bf16.mxu0 %v429
  %1258 = vmatmul.mubr.bf16.gmra.mrb[0].mxu0 %v428
  %v1259 = vpop.f32.mrb[0].mxu0
  %v1260 = vadd.f32 %v1163, %v1259
  %v1261 = vpop.f32.mrb[0].mxu0
  %v1262 = vpop.f32.mrb[0].mxu0
  %v1263 = vadd.f32 %v1166, %v1262
  %v1264 = vpop.f32.mrb[0].mxu0
  %1265 = vmatprep.mubr.bf16.mxu0 %v437
  %1266 = vmatmul.mubr.bf16.gmra.mrb[0].mxu0 %v436
  %v1267 = vpop.f32.mrb[0].mxu0
  %v1268 = vadd.f32 %v1171, %v1267
  %v1269 = vpop.f32.mrb[0].mxu0
  %v1270 = vpop.f32.mrb[0].mxu0
  %v1271 = vadd.f32 %v1174, %v1270
  %v1272 = vpop.f32.mrb[0].mxu0
  %1273 = vmatprep.mubr.bf16.mxu0 %v445
  %1274 = vmatmul.mubr.bf16.gmra.mrb[0].mxu0 %v444
  %v1275 = vpop.f32.mrb[0].mxu0
  %v1276 = vadd.f32 %v1179, %v1275
  %v1277 = vpop.f32.mrb[0].mxu0
  %v1278 = vpop.f32.mrb[0].mxu0
  %v1279 = vadd.f32 %v1182, %v1278
  %v1280 = vpop.f32.mrb[0].mxu0
  %1281 = vmatprep.mubr.bf16.mxu0 %v453
  %1282 = vmatmul.mubr.bf16.gmra.mrb[0].mxu0 %v452
  %v1283 = vpop.f32.mrb[0].mxu0
  %v1284 = vadd.f32 %v1187, %v1283
  %v1285 = vpop.f32.mrb[0].mxu0
  %v1286 = vpop.f32.mrb[0].mxu0
  %v1287 = vadd.f32 %v1190, %v1286
  %v1288 = vpop.f32.mrb[0].mxu0
  %1289 = vmatprep.mubr.bf16.mxu0 %v461
  %1290 = vmatmul.mubr.bf16.gmra.mrb[0].mxu0 %v460
  %v1291 = vpop.f32.mrb[0].mxu0
  %v1292 = vadd.f32 %v1195, %v1291
  %v1293 = vpop.f32.mrb[0].mxu0
  %v1294 = vpop.f32.mrb[0].mxu0
  %v1295 = vadd.f32 %v1198, %v1294
  %v1296 = vpop.f32.mrb[0].mxu0
  %1297 = vmatprep.mubr.bf16.mxu0 %v469
  %1298 = vmatmul.mubr.bf16.gmra.mrb[0].mxu0 %v468
  %v1299 = vpop.f32.mrb[0].mxu0
  %v1300 = vadd.f32 %v1203, %v1299
  %v1301 = vpop.f32.mrb[0].mxu0
  %v1302 = vpop.f32.mrb[0].mxu0
  %v1303 = vadd.f32 %v1206, %v1302
  %v1304 = vpop.f32.mrb[0].mxu0
  %1305 = vdwg.mxu0
  %v1306 = vmax.f32 %v1244, 0.0
  %v1307 = vmax.f32 %v1247, 0.0
  %v1308 = vmax.f32 %v1252, 0.0
  %v1309 = vmax.f32 %v1255, 0.0
  %v1310 = vmax.f32 %v1260, 0.0
  %v1311 = vmax.f32 %v1263, 0.0
  %v1312 = vmax.f32 %v1268, 0.0
  %v1313 = vmax.f32 %v1271, 0.0
  %v1314 = vmax.f32 %v1276, 0.0
  %v1315 = vmax.f32 %v1279, 0.0
  %v1316 = vmax.f32 %v1284, 0.0
  %v1317 = vmax.f32 %v1287, 0.0
  %v1318 = vmax.f32 %v1292, 0.0
  %v1319 = vmax.f32 %v1295, 0.0
  %v1320 = vmax.f32 %v1300, 0.0
  %v1321 = vmax.f32 %v1303, 0.0
  %v1322 = vpack.c.bf16 %v1307, %v1306
  %v1323 = vpack.c.bf16 %v1309, %v1308
  %v1324 = vpack.c.bf16 %v1311, %v1310
  %v1325 = vpack.c.bf16 %v1313, %v1312
  %v1326 = vpack.c.bf16 %v1315, %v1314
  %v1327 = vpack.c.bf16 %v1317, %v1316
  %v1328 = vpack.c.bf16 %v1319, %v1318
  %v1329 = vpack.c.bf16 %v1321, %v1320
  %v1338 = vunpack.c.l.b16 %v1322
  %v1339 = vunpack.c.h.b16 %v1322
  %v1340 = vunpack.c.l.b16 %v1323
  %v1341 = vunpack.c.h.b16 %v1323
  %v1342 = vunpack.c.l.b16 %v1324
  %v1343 = vunpack.c.h.b16 %v1324
  %v1344 = vunpack.c.l.b16 %v1325
  %v1345 = vunpack.c.h.b16 %v1325
  %v1346 = vunpack.c.l.b16 %v1326
  %v1347 = vunpack.c.h.b16 %v1326
  %v1348 = vunpack.c.l.b16 %v1327
  %v1349 = vunpack.c.h.b16 %v1327
  %v1350 = vunpack.c.l.b16 %v1328
  %v1351 = vunpack.c.h.b16 %v1328
  %v1352 = vunpack.c.l.b16 %v1329
  %v1353 = vunpack.c.h.b16 %v1329
  %v1354 = vpack.c.b16 %v1338, %v1338
  %v1355 = vpack.c.b16 %v1339, %v1339
  %v1356 = vpack.c.b16 %v1340, %v1340
  %v1357 = vpack.c.b16 %v1341, %v1341
  %v1358 = vpack.c.b16 %v1342, %v1342
  %v1359 = vpack.c.b16 %v1343, %v1343
  %v1360 = vpack.c.b16 %v1344, %v1344
  %v1361 = vpack.c.b16 %v1345, %v1345
  %v1362 = vpack.c.b16 %v1346, %v1346
  %v1363 = vpack.c.b16 %v1347, %v1347
  %v1364 = vpack.c.b16 %v1348, %v1348
  %v1365 = vpack.c.b16 %v1349, %v1349
  %v1366 = vpack.c.b16 %v1350, %v1350
  %v1367 = vpack.c.b16 %v1351, %v1351
  %v1368 = vpack.c.b16 %v1352, %v1352
  %v1369 = vpack.c.b16 %v1353, %v1353
  %1386 = vst [vmem:[%s3] sm:$0xf] %v1354
  %1387 = vst [vmem:[%s3 + $0x4] sm:$0xf] %v1355
  %1388 = vst [vmem:[%s3 + $0x8] sm:$0xf] %v1356
  %1389 = vst [vmem:[%s3 + $0xc] sm:$0xf] %v1357
  %1390 = vst [vmem:[%s3 + $0x10] sm:$0xf] %v1358
  %1391 = vst [vmem:[%s3 + $0x14] sm:$0xf] %v1359
  %1392 = vst [vmem:[%s3 + $0x18] sm:$0xf] %v1360
  %1393 = vst [vmem:[%s3 + $0x1c] sm:$0xf] %v1361
  %1394 = vst [vmem:[%s3 + $0x20] sm:$0xf] %v1362
  %1395 = vst [vmem:[%s3 + $0x24] sm:$0xf] %v1363
  %1396 = vst [vmem:[%s3 + $0x28] sm:$0xf] %v1364
  %1397 = vst [vmem:[%s3 + $0x2c] sm:$0xf] %v1365
  %1398 = vst [vmem:[%s3 + $0x30] sm:$0xf] %v1366
  %1399 = vst [vmem:[%s3 + $0x34] sm:$0xf] %v1367
  %1400 = vst [vmem:[%s3 + $0x38] sm:$0xf] %v1368
  %1401 = vst [vmem:[%s3 + $0x3c] sm:$0xf] %v1369
  // Predicated region
  $region14: #{md_e_attr_forward.6} parent=0 // pred_check
    _
  $region15: #{md_e_attr_forward.6} parent=0 // pred_check_branch
    %1403 = sbr.rel (0) target = $region17
  $region16: #{md_e_attr_forward.6} parent=0 // pred_region
    _
  $region17: #{md_e_attr_forward.6} parent=0 // pred_fallthru
    _
  // Predicated region
  $region18: #{md_e_attr_forward.6} parent=0 // pred_check
    _
  $region19: #{md_e_attr_forward.6} parent=0 // pred_check_branch
    %1405 = sbr.rel (0) target = $region21
  $region20: #{md_e_attr_forward.6} parent=0 // pred_region
    _
  $region21: #{md_e_attr_forward.6} parent=0 // pred_fallthru
    _

// kernel: md_e_attr_forward.7
$region0: #{md_e_attr_forward.7}
  #allocation0 [shape = 'u32[]', space=smem, size = 0x4, offset = 0x4, fixed_abs, tag = 'smem constant byte address 0x4 - core index']
  #allocation1 [shape = 'u32[144,128]{1,0:T(1,128)}', space=vmem, size = 0x12000, scoped, tag = 'internal scratch']
  %s0 = inlined_call_operand.vmem [shape: bf16[32,2048], index: 0, kind: input, shape index: {}]
  %s1 = inlined_call_operand.vmem [shape: bf16[2048,256], index: 1, kind: input, shape index: {}]
  %s2 = inlined_call_operand.vmem [shape: f32[1,256], index: 2, kind: input, shape index: {}]
  %s3 = inlined_call_operand.vmem [shape: bf16[32,256], index: 3, kind: output, shape index: {}]
  %s4 = sld [smem:[#allocation0]]
  $region22: #{md_e_attr_forward.7} parent=0
    _
  %s6 = ssub.s32 1, %s4
  %s7 = scalar_select 0, %s6, %s4
  // Predicated region
  $region2: #{md_e_attr_forward.7} parent=0 // pred_check
    _
  $region3: #{md_e_attr_forward.7} parent=0 // pred_check_branch
    %9 = sbr.rel (0) target = $region5
  $region4: #{md_e_attr_forward.7} parent=0 // pred_region
    _
  $region5: #{md_e_attr_forward.7} parent=0 // pred_fallthru
    _
  // Predicated region
  $region6: #{md_e_attr_forward.7} parent=0 // pred_check
    _
  $region7: #{md_e_attr_forward.7} parent=0 // pred_check_branch
    %11 = sbr.rel (0) target = $region9
  $region8: #{md_e_attr_forward.7} parent=0 // pred_region
    _
  $region9: #{md_e_attr_forward.7} parent=0 // pred_fallthru
    _
  // Predicated region
  $region10: #{md_e_attr_forward.7} parent=0 // pred_check
    _
  $region11: #{md_e_attr_forward.7} parent=0 // pred_check_branch
    %13 = sbr.rel (0) target = $region13
  $region12: #{md_e_attr_forward.7} parent=0 // pred_region
    _
  $region13: #{md_e_attr_forward.7} parent=0 // pred_fallthru
    _
  %v14 = vld [vmem:[%s0] sm:$0xff]
  %v15 = vld [vmem:[%s0 + $0x8] sm:$0xff]
  %v16 = vld [vmem:[%s0 + $0x10] sm:$0xff]
  %v17 = vld [vmem:[%s0 + $0x18] sm:$0xff]
  %v18 = vld [vmem:[%s0 + $0x20] sm:$0xff]
  %v19 = vld [vmem:[%s0 + $0x28] sm:$0xff]
  %v20 = vld [vmem:[%s0 + $0x30] sm:$0xff]
  %v21 = vld [vmem:[%s0 + $0x38] sm:$0xff]
  %v22 = vld [vmem:[%s0 + $0x40] sm:$0xff]
  %v23 = vld [vmem:[%s0 + $0x48] sm:$0xff]
  %v24 = vld [vmem:[%s0 + $0x50] sm:$0xff]
  %v25 = vld [vmem:[%s0 + $0x58] sm:$0xff]
  %v26 = vld [vmem:[%s0 + $0x60] sm:$0xff]
  %v27 = vld [vmem:[%s0 + $0x68] sm:$0xff]
  %v28 = vld [vmem:[%s0 + $0x70] sm:$0xff]
  %v29 = vld [vmem:[%s0 + $0x78] sm:$0xff]
  %v30 = vld [vmem:[%s0 + $0x80] sm:$0xff]
  %v31 = vld [vmem:[%s0 + $0x88] sm:$0xff]
  %v32 = vld [vmem:[%s0 + $0x90] sm:$0xff]
  %v33 = vld [vmem:[%s0 + $0x98] sm:$0xff]
  %v34 = vld [vmem:[%s0 + $0xa0] sm:$0xff]
  %v35 = vld [vmem:[%s0 + $0xa8] sm:$0xff]
  %v36 = vld [vmem:[%s0 + $0xb0] sm:$0xff]
  %v37 = vld [vmem:[%s0 + $0xb8] sm:$0xff]
  %v38 = vld [vmem:[%s0 + $0xc0] sm:$0xff]
  %v39 = vld [vmem:[%s0 + $0xc8] sm:$0xff]
  %v40 = vld [vmem:[%s0 + $0xd0] sm:$0xff]
  %v41 = vld [vmem:[%s0 + $0xd8] sm:$0xff]
  %v42 = vld [vmem:[%s0 + $0xe0] sm:$0xff]
  %v43 = vld [vmem:[%s0 + $0xe8] sm:$0xff]
  %v44 = vld [vmem:[%s0 + $0xf0] sm:$0xff]
  %v45 = vld [vmem:[%s0 + $0xf8] sm:$0xff]
  %v46 = vld [vmem:[%s1] sm:$0xff]
  %v47 = vld [vmem:[%s1 + $0x8] sm:$0xff]
  %v48 = vld [vmem:[%s1 + $0x10] sm:$0xff]
  %v49 = vld [vmem:[%s1 + $0x18] sm:$0xff]
  %v50 = vld [vmem:[%s1 + $0x20] sm:$0xff]
  %v51 = vld [vmem:[%s1 + $0x28] sm:$0xff]
  %v52 = vld [vmem:[%s1 + $0x30] sm:$0xff]
  %v53 = vld [vmem:[%s1 + $0x38] sm:$0xff]
  %v54 = vld [vmem:[%s1 + $0x40] sm:$0xff]
  %v55 = vld [vmem:[%s1 + $0x48] sm:$0xff]
  %v56 = vld [vmem:[%s1 + $0x50] sm:$0xff]
  %v57 = vld [vmem:[%s1 + $0x58] sm:$0xff]
  %v58 = vld [vmem:[%s1 + $0x60] sm:$0xff]
  %v59 = vld [vmem:[%s1 + $0x68] sm:$0xff]
  %v60 = vld [vmem:[%s1 + $0x70] sm:$0xff]
  %v61 = vld [vmem:[%s1 + $0x78] sm:$0xff]
  %v62 = vld [vmem:[%s1 + $0x80] sm:$0xff]
  %v63 = vld [vmem:[%s1 + $0x88] sm:$0xff]
  %v64 = vld [vmem:[%s1 + $0x90] sm:$0xff]
  %v65 = vld [vmem:[%s1 + $0x98] sm:$0xff]
  %v66 = vld [vmem:[%s1 + $0xa0] sm:$0xff]
  %v67 = vld [vmem:[%s1 + $0xa8] sm:$0xff]
  %v68 = vld [vmem:[%s1 + $0xb0] sm:$0xff]
  %v69 = vld [vmem:[%s1 + $0xb8] sm:$0xff]
  %v70 = vld [vmem:[%s1 + $0xc0] sm:$0xff]
  %v71 = vld [vmem:[%s1 + $0xc8] sm:$0xff]
  %v72 = vld [vmem:[%s1 + $0xd0] sm:$0xff]
  %v73 = vld [vmem:[%s1 + $0xd8] sm:$0xff]
  %v74 = vld [vmem:[%s1 + $0xe0] sm:$0xff]
  %v75 = vld [vmem:[%s1 + $0xe8] sm:$0xff]
  %v76 = vld [vmem:[%s1 + $0xf0] sm:$0xff]
  %v77 = vld [vmem:[%s1 + $0xf8] sm:$0xff]
  %v78 = vld [vmem:[%s1 + $0x100] sm:$0xff]
  %v79 = vld [vmem:[%s1 + $0x108] sm:$0xff]
  %v80 = vld [vmem:[%s1 + $0x110] sm:$0xff]
  %v81 = vld [vmem:[%s1 + $0x118] sm:$0xff]
  %v82 = vld [vmem:[%s1 + $0x120] sm:$0xff]
  %v83 = vld [vmem:[%s1 + $0x128] sm:$0xff]
  %v84 = vld [vmem:[%s1 + $0x130] sm:$0xff]
  %v85 = vld [vmem:[%s1 + $0x138] sm:$0xff]
  %v86 = vld [vmem:[%s1 + $0x140] sm:$0xff]
  %v87 = vld [vmem:[%s1 + $0x148] sm:$0xff]
  %v88 = vld [vmem:[%s1 + $0x150] sm:$0xff]
  %v89 = vld [vmem:[%s1 + $0x158] sm:$0xff]
  %v90 = vld [vmem:[%s1 + $0x160] sm:$0xff]
  %v91 = vld [vmem:[%s1 + $0x168] sm:$0xff]
  %v92 = vld [vmem:[%s1 + $0x170] sm:$0xff]
  %v93 = vld [vmem:[%s1 + $0x178] sm:$0xff]
  %v94 = vld [vmem:[%s1 + $0x180] sm:$0xff]
  %v95 = vld [vmem:[%s1 + $0x188] sm:$0xff]
  %v96 = vld [vmem:[%s1 + $0x190] sm:$0xff]
  %v97 = vld [vmem:[%s1 + $0x198] sm:$0xff]
  %v98 = vld [vmem:[%s1 + $0x1a0] sm:$0xff]
  %v99 = vld [vmem:[%s1 + $0x1a8] sm:$0xff]
  %v100 = vld [vmem:[%s1 + $0x1b0] sm:$0xff]
  %v101 = vld [vmem:[%s1 + $0x1b8] sm:$0xff]
  %v102 = vld [vmem:[%s1 + $0x1c0] sm:$0xff]
  %v103 = vld [vmem:[%s1 + $0x1c8] sm:$0xff]
  %v104 = vld [vmem:[%s1 + $0x1d0] sm:$0xff]
  %v105 = vld [vmem:[%s1 + $0x1d8] sm:$0xff]
  %v106 = vld [vmem:[%s1 + $0x1e0] sm:$0xff]
  %v107 = vld [vmem:[%s1 + $0x1e8] sm:$0xff]
  %v108 = vld [vmem:[%s1 + $0x1f0] sm:$0xff]
  %v109 = vld [vmem:[%s1 + $0x1f8] sm:$0xff]
  %v110 = vld [vmem:[%s1 + $0x200] sm:$0xff]
  %v111 = vld [vmem:[%s1 + $0x208] sm:$0xff]
  %v112 = vld [vmem:[%s1 + $0x210] sm:$0xff]
  %v113 = vld [vmem:[%s1 + $0x218] sm:$0xff]
  %v114 = vld [vmem:[%s1 + $0x220] sm:$0xff]
  %v115 = vld [vmem:[%s1 + $0x228] sm:$0xff]
  %v116 = vld [vmem:[%s1 + $0x230] sm:$0xff]
  %v117 = vld [vmem:[%s1 + $0x238] sm:$0xff]
  %v118 = vld [vmem:[%s1 + $0x240] sm:$0xff]
  %v119 = vld [vmem:[%s1 + $0x248] sm:$0xff]
  %v120 = vld [vmem:[%s1 + $0x250] sm:$0xff]
  %v121 = vld [vmem:[%s1 + $0x258] sm:$0xff]
  %v122 = vld [vmem:[%s1 + $0x260] sm:$0xff]
  %v123 = vld [vmem:[%s1 + $0x268] sm:$0xff]
  %v124 = vld [vmem:[%s1 + $0x270] sm:$0xff]
  %v125 = vld [vmem:[%s1 + $0x278] sm:$0xff]
  %v126 = vld [vmem:[%s1 + $0x280] sm:$0xff]
  %v127 = vld [vmem:[%s1 + $0x288] sm:$0xff]
  %v128 = vld [vmem:[%s1 + $0x290] sm:$0xff]
  %v129 = vld [vmem:[%s1 + $0x298] sm:$0xff]
  %v130 = vld [vmem:[%s1 + $0x2a0] sm:$0xff]
  %v131 = vld [vmem:[%s1 + $0x2a8] sm:$0xff]
  %v132 = vld [vmem:[%s1 + $0x2b0] sm:$0xff]
  %v133 = vld [vmem:[%s1 + $0x2b8] sm:$0xff]
  %v134 = vld [vmem:[%s1 + $0x2c0] sm:$0xff]
  %v135 = vld [vmem:[%s1 + $0x2c8] sm:$0xff]
  %v136 = vld [vmem:[%s1 + $0x2d0] sm:$0xff]
  %v137 = vld [vmem:[%s1 + $0x2d8] sm:$0xff]
  %v138 = vld [vmem:[%s1 + $0x2e0] sm:$0xff]
  %v139 = vld [vmem:[%s1 + $0x2e8] sm:$0xff]
  %v140 = vld [vmem:[%s1 + $0x2f0] sm:$0xff]
  %v141 = vld [vmem:[%s1 + $0x2f8] sm:$0xff]
  %v142 = vld [vmem:[%s1 + $0x300] sm:$0xff]
  %v143 = vld [vmem:[%s1 + $0x308] sm:$0xff]
  %v144 = vld [vmem:[%s1 + $0x310] sm:$0xff]
  %v145 = vld [vmem:[%s1 + $0x318] sm:$0xff]
  %v146 = vld [vmem:[%s1 + $0x320] sm:$0xff]
  %v147 = vld [vmem:[%s1 + $0x328] sm:$0xff]
  %v148 = vld [vmem:[%s1 + $0x330] sm:$0xff]
  %v149 = vld [vmem:[%s1 + $0x338] sm:$0xff]
  %v150 = vld [vmem:[%s1 + $0x340] sm:$0xff]
  %v151 = vld [vmem:[%s1 + $0x348] sm:$0xff]
  %v152 = vld [vmem:[%s1 + $0x350] sm:$0xff]
  %v153 = vld [vmem:[%s1 + $0x358] sm:$0xff]
  %v154 = vld [vmem:[%s1 + $0x360] sm:$0xff]
  %v155 = vld [vmem:[%s1 + $0x368] sm:$0xff]
  %v156 = vld [vmem:[%s1 + $0x370] sm:$0xff]
  %v157 = vld [vmem:[%s1 + $0x378] sm:$0xff]
  %v158 = vld [vmem:[%s1 + $0x380] sm:$0xff]
  %v159 = vld [vmem:[%s1 + $0x388] sm:$0xff]
  %v160 = vld [vmem:[%s1 + $0x390] sm:$0xff]
  %v161 = vld [vmem:[%s1 + $0x398] sm:$0xff]
  %v162 = vld [vmem:[%s1 + $0x3a0] sm:$0xff]
  %v163 = vld [vmem:[%s1 + $0x3a8] sm:$0xff]
  %v164 = vld [vmem:[%s1 + $0x3b0] sm:$0xff]
  %v165 = vld [vmem:[%s1 + $0x3b8] sm:$0xff]
  %v166 = vld [vmem:[%s1 + $0x3c0] sm:$0xff]
  %v167 = vld [vmem:[%s1 + $0x3c8] sm:$0xff]
  %v168 = vld [vmem:[%s1 + $0x3d0] sm:$0xff]
  %v169 = vld [vmem:[%s1 + $0x3d8] sm:$0xff]
  %v170 = vld [vmem:[%s1 + $0x3e0] sm:$0xff]
  %v171 = vld [vmem:[%s1 + $0x3e8] sm:$0xff]
  %v172 = vld [vmem:[%s1 + $0x3f0] sm:$0xff]
  %v173 = vld [vmem:[%s1 + $0x3f8] sm:$0xff]
  %v174 = vld [vmem:[%s1 + $0x400] sm:$0xff]
  %v175 = vld [vmem:[%s1 + $0x408] sm:$0xff]
  %v176 = vld [vmem:[%s1 + $0x410] sm:$0xff]
  %v177 = vld [vmem:[%s1 + $0x418] sm:$0xff]
  %v178 = vld [vmem:[%s1 + $0x420] sm:$0xff]
  %v179 = vld [vmem:[%s1 + $0x428] sm:$0xff]
  %v180 = vld [vmem:[%s1 + $0x430] sm:$0xff]
  %v181 = vld [vmem:[%s1 + $0x438] sm:$0xff]
  %v182 = vld [vmem:[%s1 + $0x440] sm:$0xff]
  %v183 = vld [vmem:[%s1 + $0x448] sm:$0xff]
  %v184 = vld [vmem:[%s1 + $0x450] sm:$0xff]
  %v185 = vld [vmem:[%s1 + $0x458] sm:$0xff]
  %v186 = vld [vmem:[%s1 + $0x460] sm:$0xff]
  %v187 = vld [vmem:[%s1 + $0x468] sm:$0xff]
  %v188 = vld [vmem:[%s1 + $0x470] sm:$0xff]
  %v189 = vld [vmem:[%s1 + $0x478] sm:$0xff]
  %v190 = vld [vmem:[%s1 + $0x480] sm:$0xff]
  %v191 = vld [vmem:[%s1 + $0x488] sm:$0xff]
  %v192 = vld [vmem:[%s1 + $0x490] sm:$0xff]
  %v193 = vld [vmem:[%s1 + $0x498] sm:$0xff]
  %v194 = vld [vmem:[%s1 + $0x4a0] sm:$0xff]
  %v195 = vld [vmem:[%s1 + $0x4a8] sm:$0xff]
  %v196 = vld [vmem:[%s1 + $0x4b0] sm:$0xff]
  %v197 = vld [vmem:[%s1 + $0x4b8] sm:$0xff]
  %v198 = vld [vmem:[%s1 + $0x4c0] sm:$0xff]
  %v199 = vld [vmem:[%s1 + $0x4c8] sm:$0xff]
  %v200 = vld [vmem:[%s1 + $0x4d0] sm:$0xff]
  %v201 = vld [vmem:[%s1 + $0x4d8] sm:$0xff]
  %v202 = vld [vmem:[%s1 + $0x4e0] sm:$0xff]
  %v203 = vld [vmem:[%s1 + $0x4e8] sm:$0xff]
  %v204 = vld [vmem:[%s1 + $0x4f0] sm:$0xff]
  %v205 = vld [vmem:[%s1 + $0x4f8] sm:$0xff]
  %v206 = vld [vmem:[%s1 + $0x500] sm:$0xff]
  %v207 = vld [vmem:[%s1 + $0x508] sm:$0xff]
  %v208 = vld [vmem:[%s1 + $0x510] sm:$0xff]
  %v209 = vld [vmem:[%s1 + $0x518] sm:$0xff]
  %v210 = vld [vmem:[%s1 + $0x520] sm:$0xff]
  %v211 = vld [vmem:[%s1 + $0x528] sm:$0xff]
  %v212 = vld [vmem:[%s1 + $0x530] sm:$0xff]
  %v213 = vld [vmem:[%s1 + $0x538] sm:$0xff]
  %v214 = vld [vmem:[%s1 + $0x540] sm:$0xff]
  %v215 = vld [vmem:[%s1 + $0x548] sm:$0xff]
  %v216 = vld [vmem:[%s1 + $0x550] sm:$0xff]
  %v217 = vld [vmem:[%s1 + $0x558] sm:$0xff]
  %v218 = vld [vmem:[%s1 + $0x560] sm:$0xff]
  %v219 = vld [vmem:[%s1 + $0x568] sm:$0xff]
  %v220 = vld [vmem:[%s1 + $0x570] sm:$0xff]
  %v221 = vld [vmem:[%s1 + $0x578] sm:$0xff]
  %v222 = vld [vmem:[%s1 + $0x580] sm:$0xff]
  %v223 = vld [vmem:[%s1 + $0x588] sm:$0xff]
  %v224 = vld [vmem:[%s1 + $0x590] sm:$0xff]
  %v225 = vld [vmem:[%s1 + $0x598] sm:$0xff]
  %v226 = vld [vmem:[%s1 + $0x5a0] sm:$0xff]
  %v227 = vld [vmem:[%s1 + $0x5a8] sm:$0xff]
  %v228 = vld [vmem:[%s1 + $0x5b0] sm:$0xff]
  %v229 = vld [vmem:[%s1 + $0x5b8] sm:$0xff]
  %v230 = vld [vmem:[%s1 + $0x5c0] sm:$0xff]
  %v231 = vld [vmem:[%s1 + $0x5c8] sm:$0xff]
  %v232 = vld [vmem:[%s1 + $0x5d0] sm:$0xff]
  %v233 = vld [vmem:[%s1 + $0x5d8] sm:$0xff]
  %v234 = vld [vmem:[%s1 + $0x5e0] sm:$0xff]
  %v235 = vld [vmem:[%s1 + $0x5e8] sm:$0xff]
  %v236 = vld [vmem:[%s1 + $0x5f0] sm:$0xff]
  %v237 = vld [vmem:[%s1 + $0x5f8] sm:$0xff]
  %v238 = vld [vmem:[%s1 + $0x600] sm:$0xff]
  %v239 = vld [vmem:[%s1 + $0x608] sm:$0xff]
  %v240 = vld [vmem:[%s1 + $0x610] sm:$0xff]
  %v241 = vld [vmem:[%s1 + $0x618] sm:$0xff]
  %v242 = vld [vmem:[%s1 + $0x620] sm:$0xff]
  %v243 = vld [vmem:[%s1 + $0x628] sm:$0xff]
  %v244 = vld [vmem:[%s1 + $0x630] sm:$0xff]
  %v245 = vld [vmem:[%s1 + $0x638] sm:$0xff]
  %v246 = vld [vmem:[%s1 + $0x640] sm:$0xff]
  %v247 = vld [vmem:[%s1 + $0x648] sm:$0xff]
  %v248 = vld [vmem:[%s1 + $0x650] sm:$0xff]
  %v249 = vld [vmem:[%s1 + $0x658] sm:$0xff]
  %v250 = vld [vmem:[%s1 + $0x660] sm:$0xff]
  %v251 = vld [vmem:[%s1 + $0x668] sm:$0xff]
  %v252 = vld [vmem:[%s1 + $0x670] sm:$0xff]
  %v253 = vld [vmem:[%s1 + $0x678] sm:$0xff]
  %v254 = vld [vmem:[%s1 + $0x680] sm:$0xff]
  %v255 = vld [vmem:[%s1 + $0x688] sm:$0xff]
  %v256 = vld [vmem:[%s1 + $0x690] sm:$0xff]
  %v257 = vld [vmem:[%s1 + $0x698] sm:$0xff]
  %v258 = vld [vmem:[%s1 + $0x6a0] sm:$0xff]
  %v259 = vld [vmem:[%s1 + $0x6a8] sm:$0xff]
  %v260 = vld [vmem:[%s1 + $0x6b0] sm:$0xff]
  %v261 = vld [vmem:[%s1 + $0x6b8] sm:$0xff]
  %v262 = vld [vmem:[%s1 + $0x6c0] sm:$0xff]
  %v263 = vld [vmem:[%s1 + $0x6c8] sm:$0xff]
  %v264 = vld [vmem:[%s1 + $0x6d0] sm:$0xff]
  %v265 = vld [vmem:[%s1 + $0x6d8] sm:$0xff]
  %v266 = vld [vmem:[%s1 + $0x6e0] sm:$0xff]
  %v267 = vld [vmem:[%s1 + $0x6e8] sm:$0xff]
  %v268 = vld [vmem:[%s1 + $0x6f0] sm:$0xff]
  %v269 = vld [vmem:[%s1 + $0x6f8] sm:$0xff]
  %v270 = vld [vmem:[%s1 + $0x700] sm:$0xff]
  %v271 = vld [vmem:[%s1 + $0x708] sm:$0xff]
  %v272 = vld [vmem:[%s1 + $0x710] sm:$0xff]
  %v273 = vld [vmem:[%s1 + $0x718] sm:$0xff]
  %v274 = vld [vmem:[%s1 + $0x720] sm:$0xff]
  %v275 = vld [vmem:[%s1 + $0x728] sm:$0xff]
  %v276 = vld [vmem:[%s1 + $0x730] sm:$0xff]
  %v277 = vld [vmem:[%s1 + $0x738] sm:$0xff]
  %v278 = vld [vmem:[%s1 + $0x740] sm:$0xff]
  %v279 = vld [vmem:[%s1 + $0x748] sm:$0xff]
  %v280 = vld [vmem:[%s1 + $0x750] sm:$0xff]
  %v281 = vld [vmem:[%s1 + $0x758] sm:$0xff]
  %v282 = vld [vmem:[%s1 + $0x760] sm:$0xff]
  %v283 = vld [vmem:[%s1 + $0x768] sm:$0xff]
  %v284 = vld [vmem:[%s1 + $0x770] sm:$0xff]
  %v285 = vld [vmem:[%s1 + $0x778] sm:$0xff]
  %v286 = vld [vmem:[%s1 + $0x780] sm:$0xff]
  %v287 = vld [vmem:[%s1 + $0x788] sm:$0xff]
  %v288 = vld [vmem:[%s1 + $0x790] sm:$0xff]
  %v289 = vld [vmem:[%s1 + $0x798] sm:$0xff]
  %v290 = vld [vmem:[%s1 + $0x7a0] sm:$0xff]
  %v291 = vld [vmem:[%s1 + $0x7a8] sm:$0xff]
  %v292 = vld [vmem:[%s1 + $0x7b0] sm:$0xff]
  %v293 = vld [vmem:[%s1 + $0x7b8] sm:$0xff]
  %v294 = vld [vmem:[%s1 + $0x7c0] sm:$0xff]
  %v295 = vld [vmem:[%s1 + $0x7c8] sm:$0xff]
  %v296 = vld [vmem:[%s1 + $0x7d0] sm:$0xff]
  %v297 = vld [vmem:[%s1 + $0x7d8] sm:$0xff]
  %v298 = vld [vmem:[%s1 + $0x7e0] sm:$0xff]
  %v299 = vld [vmem:[%s1 + $0x7e8] sm:$0xff]
  %v300 = vld [vmem:[%s1 + $0x7f0] sm:$0xff]
  %v301 = vld [vmem:[%s1 + $0x7f8] sm:$0xff]
  %v302 = vld [vmem:[%s2] sm:$0x3]
  %v304 = vlaneseq
  %v305 = vshrl.u32 %v304, 7
  %v306 = vsub.s32 0, %v305
  %v307 = vrot.slane %v302, %v306
  %v308 = vlaneseq
  %v309 = vshrl.u32 %v308, 7
  %v310 = vsub.s32 1, %v309
  %v311 = vrot.slane %v302, %v310
  %v346 = vunpack.c.l.b16 %v14
  %v347 = vunpack.c.h.b16 %v14
  %v348 = vunpack.c.l.b16 %v15
  %v349 = vunpack.c.h.b16 %v15
  %v350 = vunpack.c.l.b16 %v16
  %v351 = vunpack.c.h.b16 %v16
  %v352 = vunpack.c.l.b16 %v17
  %v353 = vunpack.c.h.b16 %v17
  %v354 = vunpack.c.l.b16 %v18
  %v355 = vunpack.c.h.b16 %v18
  %v356 = vunpack.c.l.b16 %v19
  %v357 = vunpack.c.h.b16 %v19
  %v358 = vunpack.c.l.b16 %v20
  %v359 = vunpack.c.h.b16 %v20
  %v360 = vunpack.c.l.b16 %v21
  %v361 = vunpack.c.h.b16 %v21
  %v362 = vunpack.c.l.b16 %v22
  %v363 = vunpack.c.h.b16 %v22
  %v364 = vunpack.c.l.b16 %v23
  %v365 = vunpack.c.h.b16 %v23
  %v366 = vunpack.c.l.b16 %v24
  %v367 = vunpack.c.h.b16 %v24
  %v368 = vunpack.c.l.b16 %v25
  %v369 = vunpack.c.h.b16 %v25
  %v370 = vunpack.c.l.b16 %v26
  %v371 = vunpack.c.h.b16 %v26
  %v372 = vunpack.c.l.b16 %v27
  %v373 = vunpack.c.h.b16 %v27
  %v374 = vunpack.c.l.b16 %v28
  %v375 = vunpack.c.h.b16 %v28
  %v376 = vunpack.c.l.b16 %v29
  %v377 = vunpack.c.h.b16 %v29
  %v378 = vunpack.c.l.b16 %v30
  %v379 = vunpack.c.h.b16 %v30
  %v380 = vunpack.c.l.b16 %v31
  %v381 = vunpack.c.h.b16 %v31
  %v382 = vunpack.c.l.b16 %v32
  %v383 = vunpack.c.h.b16 %v32
  %v384 = vunpack.c.l.b16 %v33
  %v385 = vunpack.c.h.b16 %v33
  %v386 = vunpack.c.l.b16 %v34
  %v387 = vunpack.c.h.b16 %v34
  %v388 = vunpack.c.l.b16 %v35
  %v389 = vunpack.c.h.b16 %v35
  %v390 = vunpack.c.l.b16 %v36
  %v391 = vunpack.c.h.b16 %v36
  %v392 = vunpack.c.l.b16 %v37
  %v393 = vunpack.c.h.b16 %v37
  %v394 = vunpack.c.l.b16 %v38
  %v395 = vunpack.c.h.b16 %v38
  %v396 = vunpack.c.l.b16 %v39
  %v397 = vunpack.c.h.b16 %v39
  %v398 = vunpack.c.l.b16 %v40
  %v399 = vunpack.c.h.b16 %v40
  %v400 = vunpack.c.l.b16 %v41
  %v401 = vunpack.c.h.b16 %v41
  %v402 = vunpack.c.l.b16 %v42
  %v403 = vunpack.c.h.b16 %v42
  %v404 = vunpack.c.l.b16 %v43
  %v405 = vunpack.c.h.b16 %v43
  %v406 = vunpack.c.l.b16 %v44
  %v407 = vunpack.c.h.b16 %v44
  %v408 = vunpack.c.l.b16 %v45
  %v409 = vunpack.c.h.b16 %v45
  %v410 = vpack.c.b16 %v362, %v346
  %v411 = vpack.c.b16 %v363, %v347
  %v412 = vpack.c.b16 %v364, %v348
  %v413 = vpack.c.b16 %v365, %v349
  %v414 = vpack.c.b16 %v366, %v350
  %v415 = vpack.c.b16 %v367, %v351
  %v416 = vpack.c.b16 %v368, %v352
  %v417 = vpack.c.b16 %v369, %v353
  %v418 = vpack.c.b16 %v370, %v354
  %v419 = vpack.c.b16 %v371, %v355
  %v420 = vpack.c.b16 %v372, %v356
  %v421 = vpack.c.b16 %v373, %v357
  %v422 = vpack.c.b16 %v374, %v358
  %v423 = vpack.c.b16 %v375, %v359
  %v424 = vpack.c.b16 %v376, %v360
  %v425 = vpack.c.b16 %v377, %v361
  %v426 = vpack.c.b16 %v394, %v378
  %v427 = vpack.c.b16 %v395, %v379
  %v428 = vpack.c.b16 %v396, %v380
  %v429 = vpack.c.b16 %v397, %v381
  %v430 = vpack.c.b16 %v398, %v382
  %v431 = vpack.c.b16 %v399, %v383
  %v432 = vpack.c.b16 %v400, %v384
  %v433 = vpack.c.b16 %v401, %v385
  %v434 = vpack.c.b16 %v402, %v386
  %v435 = vpack.c.b16 %v403, %v387
  %v436 = vpack.c.b16 %v404, %v388
  %v437 = vpack.c.b16 %v405, %v389
  %v438 = vpack.c.b16 %v406, %v390
  %v439 = vpack.c.b16 %v407, %v391
  %v440 = vpack.c.b16 %v408, %v392
  %v441 = vpack.c.b16 %v409, %v393
  %v730 = vunpack.c.l.b16 %v46
  %v731 = vunpack.c.h.b16 %v46
  %v732 = vunpack.c.l.b16 %v47
  %v733 = vunpack.c.h.b16 %v47
  %v734 = vunpack.c.l.b16 %v48
  %v735 = vunpack.c.h.b16 %v48
  %v736 = vunpack.c.l.b16 %v49
  %v737 = vunpack.c.h.b16 %v49
  %v738 = vunpack.c.l.b16 %v50
  %v739 = vunpack.c.h.b16 %v50
  %v740 = vunpack.c.l.b16 %v51
  %v741 = vunpack.c.h.b16 %v51
  %v742 = vunpack.c.l.b16 %v52
  %v743 = vunpack.c.h.b16 %v52
  %v744 = vunpack.c.l.b16 %v53
  %v745 = vunpack.c.h.b16 %v53
  %v746 = vunpack.c.l.b16 %v54
  %v747 = vunpack.c.h.b16 %v54
  %v748 = vunpack.c.l.b16 %v55
  %v749 = vunpack.c.h.b16 %v55
  %v750 = vunpack.c.l.b16 %v56
  %v751 = vunpack.c.h.b16 %v56
  %v752 = vunpack.c.l.b16 %v57
  %v753 = vunpack.c.h.b16 %v57
  %v754 = vunpack.c.l.b16 %v58
  %v755 = vunpack.c.h.b16 %v58
  %v756 = vunpack.c.l.b16 %v59
  %v757 = vunpack.c.h.b16 %v59
  %v758 = vunpack.c.l.b16 %v60
  %v759 = vunpack.c.h.b16 %v60
  %v760 = vunpack.c.l.b16 %v61
  %v761 = vunpack.c.h.b16 %v61
  %v762 = vunpack.c.l.b16 %v62
  %v763 = vunpack.c.h.b16 %v62
  %v764 = vunpack.c.l.b16 %v63
  %v765 = vunpack.c.h.b16 %v63
  %v766 = vunpack.c.l.b16 %v64
  %v767 = vunpack.c.h.b16 %v64
  %v768 = vunpack.c.l.b16 %v65
  %v769 = vunpack.c.h.b16 %v65
  %v770 = vunpack.c.l.b16 %v66
  %v771 = vunpack.c.h.b16 %v66
  %v772 = vunpack.c.l.b16 %v67
  %v773 = vunpack.c.h.b16 %v67
  %v774 = vunpack.c.l.b16 %v68
  %v775 = vunpack.c.h.b16 %v68
  %v776 = vunpack.c.l.b16 %v69
  %v777 = vunpack.c.h.b16 %v69
  %v778 = vunpack.c.l.b16 %v70
  %v779 = vunpack.c.h.b16 %v70
  %v780 = vunpack.c.l.b16 %v71
  %v781 = vunpack.c.h.b16 %v71
  %v782 = vunpack.c.l.b16 %v72
  %v783 = vunpack.c.h.b16 %v72
  %v784 = vunpack.c.l.b16 %v73
  %v785 = vunpack.c.h.b16 %v73
  %v786 = vunpack.c.l.b16 %v74
  %v787 = vunpack.c.h.b16 %v74
  %v788 = vunpack.c.l.b16 %v75
  %v789 = vunpack.c.h.b16 %v75
  %v790 = vunpack.c.l.b16 %v76
  %v791 = vunpack.c.h.b16 %v76
  %v792 = vunpack.c.l.b16 %v77
  %v793 = vunpack.c.h.b16 %v77
  %v794 = vunpack.c.l.b16 %v78
  %v795 = vunpack.c.h.b16 %v78
  %v796 = vunpack.c.l.b16 %v79
  %v797 = vunpack.c.h.b16 %v79
  %v798 = vunpack.c.l.b16 %v80
  %v799 = vunpack.c.h.b16 %v80
  %v800 = vunpack.c.l.b16 %v81
  %v801 = vunpack.c.h.b16 %v81
  %v802 = vunpack.c.l.b16 %v82
  %v803 = vunpack.c.h.b16 %v82
  %v804 = vunpack.c.l.b16 %v83
  %v805 = vunpack.c.h.b16 %v83
  %v806 = vunpack.c.l.b16 %v84
  %v807 = vunpack.c.h.b16 %v84
  %v808 = vunpack.c.l.b16 %v85
  %v809 = vunpack.c.h.b16 %v85
  %v810 = vunpack.c.l.b16 %v86
  %v811 = vunpack.c.h.b16 %v86
  %v812 = vunpack.c.l.b16 %v87
  %v813 = vunpack.c.h.b16 %v87
  %v814 = vunpack.c.l.b16 %v88
  %v815 = vunpack.c.h.b16 %v88
  %v816 = vunpack.c.l.b16 %v89
  %v817 = vunpack.c.h.b16 %v89
  %v818 = vunpack.c.l.b16 %v90
  %v819 = vunpack.c.h.b16 %v90
  %v820 = vunpack.c.l.b16 %v91
  %v821 = vunpack.c.h.b16 %v91
  %v822 = vunpack.c.l.b16 %v92
  %v823 = vunpack.c.h.b16 %v92
  %v824 = vunpack.c.l.b16 %v93
  %v825 = vunpack.c.h.b16 %v93
  %v826 = vunpack.c.l.b16 %v94
  %v827 = vunpack.c.h.b16 %v94
  %v828 = vunpack.c.l.b16 %v95
  %v829 = vunpack.c.h.b16 %v95
  %v830 = vunpack.c.l.b16 %v96
  %v831 = vunpack.c.h.b16 %v96
  %v832 = vunpack.c.l.b16 %v97
  %v833 = vunpack.c.h.b16 %v97
  %v834 = vunpack.c.l.b16 %v98
  %v835 = vunpack.c.h.b16 %v98
  %v836 = vunpack.c.l.b16 %v99
  %v837 = vunpack.c.h.b16 %v99
  %v838 = vunpack.c.l.b16 %v100
  %v839 = vunpack.c.h.b16 %v100
  %v840 = vunpack.c.l.b16 %v101
  %v841 = vunpack.c.h.b16 %v101
  %v842 = vunpack.c.l.b16 %v102
  %v843 = vunpack.c.h.b16 %v102
  %v844 = vunpack.c.l.b16 %v103
  %v845 = vunpack.c.h.b16 %v103
  %v846 = vunpack.c.l.b16 %v104
  %v847 = vunpack.c.h.b16 %v104
  %v848 = vunpack.c.l.b16 %v105
  %v849 = vunpack.c.h.b16 %v105
  %v850 = vunpack.c.l.b16 %v106
  %v851 = vunpack.c.h.b16 %v106
  %v852 = vunpack.c.l.b16 %v107
  %v853 = vunpack.c.h.b16 %v107
  %v854 = vunpack.c.l.b16 %v108
  %v855 = vunpack.c.h.b16 %v108
  %v856 = vunpack.c.l.b16 %v109
  %v857 = vunpack.c.h.b16 %v109
  %v858 = vunpack.c.l.b16 %v110
  %v859 = vunpack.c.h.b16 %v110
  %v860 = vunpack.c.l.b16 %v111
  %v861 = vunpack.c.h.b16 %v111
  %v862 = vunpack.c.l.b16 %v112
  %v863 = vunpack.c.h.b16 %v112
  %v864 = vunpack.c.l.b16 %v113
  %v865 = vunpack.c.h.b16 %v113
  %v866 = vunpack.c.l.b16 %v114
  %v867 = vunpack.c.h.b16 %v114
  %v868 = vunpack.c.l.b16 %v115
  %v869 = vunpack.c.h.b16 %v115
  %v870 = vunpack.c.l.b16 %v116
  %v871 = vunpack.c.h.b16 %v116
  %v872 = vunpack.c.l.b16 %v117
  %v873 = vunpack.c.h.b16 %v117
  %v874 = vunpack.c.l.b16 %v118
  %v875 = vunpack.c.h.b16 %v118
  %v876 = vunpack.c.l.b16 %v119
  %v877 = vunpack.c.h.b16 %v119
  %v878 = vunpack.c.l.b16 %v120
  %v879 = vunpack.c.h.b16 %v120
  %v880 = vunpack.c.l.b16 %v121
  %v881 = vunpack.c.h.b16 %v121
  %v882 = vunpack.c.l.b16 %v122
  %v883 = vunpack.c.h.b16 %v122
  %v884 = vunpack.c.l.b16 %v123
  %v885 = vunpack.c.h.b16 %v123
  %v886 = vunpack.c.l.b16 %v124
  %v887 = vunpack.c.h.b16 %v124
  %v888 = vunpack.c.l.b16 %v125
  %v889 = vunpack.c.h.b16 %v125
  %v890 = vunpack.c.l.b16 %v126
  %v891 = vunpack.c.h.b16 %v126
  %v892 = vunpack.c.l.b16 %v127
  %v893 = vunpack.c.h.b16 %v127
  %v894 = vunpack.c.l.b16 %v128
  %v895 = vunpack.c.h.b16 %v128
  %v896 = vunpack.c.l.b16 %v129
  %v897 = vunpack.c.h.b16 %v129
  %v898 = vunpack.c.l.b16 %v130
  %v899 = vunpack.c.h.b16 %v130
  %v900 = vunpack.c.l.b16 %v131
  %v901 = vunpack.c.h.b16 %v131
  %v902 = vunpack.c.l.b16 %v132
  %v903 = vunpack.c.h.b16 %v132
  %v904 = vunpack.c.l.b16 %v133
  %v905 = vunpack.c.h.b16 %v133
  %v906 = vunpack.c.l.b16 %v134
  %v907 = vunpack.c.h.b16 %v134
  %v908 = vunpack.c.l.b16 %v135
  %v909 = vunpack.c.h.b16 %v135
  %v910 = vunpack.c.l.b16 %v136
  %v911 = vunpack.c.h.b16 %v136
  %v912 = vunpack.c.l.b16 %v137
  %v913 = vunpack.c.h.b16 %v137
  %v914 = vunpack.c.l.b16 %v138
  %v915 = vunpack.c.h.b16 %v138
  %v916 = vunpack.c.l.b16 %v139
  %v917 = vunpack.c.h.b16 %v139
  %v918 = vunpack.c.l.b16 %v140
  %v919 = vunpack.c.h.b16 %v140
  %v920 = vunpack.c.l.b16 %v141
  %v921 = vunpack.c.h.b16 %v141
  %v922 = vunpack.c.l.b16 %v142
  %v923 = vunpack.c.h.b16 %v142
  %v924 = vunpack.c.l.b16 %v143
  %v925 = vunpack.c.h.b16 %v143
  %v926 = vunpack.c.l.b16 %v144
  %v927 = vunpack.c.h.b16 %v144
  %v928 = vunpack.c.l.b16 %v145
  %v929 = vunpack.c.h.b16 %v145
  %v930 = vunpack.c.l.b16 %v146
  %v931 = vunpack.c.h.b16 %v146
  %v932 = vunpack.c.l.b16 %v147
  %v933 = vunpack.c.h.b16 %v147
  %v934 = vunpack.c.l.b16 %v148
  %v935 = vunpack.c.h.b16 %v148
  %v936 = vunpack.c.l.b16 %v149
  %v937 = vunpack.c.h.b16 %v149
  %v938 = vunpack.c.l.b16 %v150
  %v939 = vunpack.c.h.b16 %v150
  %v940 = vunpack.c.l.b16 %v151
  %v941 = vunpack.c.h.b16 %v151
  %v942 = vunpack.c.l.b16 %v152
  %v943 = vunpack.c.h.b16 %v152
  %v944 = vunpack.c.l.b16 %v153
  %v945 = vunpack.c.h.b16 %v153
  %v946 = vunpack.c.l.b16 %v154
  %v947 = vunpack.c.h.b16 %v154
  %v948 = vunpack.c.l.b16 %v155
  %v949 = vunpack.c.h.b16 %v155
  %v950 = vunpack.c.l.b16 %v156
  %v951 = vunpack.c.h.b16 %v156
  %v952 = vunpack.c.l.b16 %v157
  %v953 = vunpack.c.h.b16 %v157
  %v954 = vunpack.c.l.b16 %v158
  %v955 = vunpack.c.h.b16 %v158
  %v956 = vunpack.c.l.b16 %v159
  %v957 = vunpack.c.h.b16 %v159
  %v958 = vunpack.c.l.b16 %v160
  %v959 = vunpack.c.h.b16 %v160
  %v960 = vunpack.c.l.b16 %v161
  %v961 = vunpack.c.h.b16 %v161
  %v962 = vunpack.c.l.b16 %v162
  %v963 = vunpack.c.h.b16 %v162
  %v964 = vunpack.c.l.b16 %v163
  %v965 = vunpack.c.h.b16 %v163
  %v966 = vunpack.c.l.b16 %v164
  %v967 = vunpack.c.h.b16 %v164
  %v968 = vunpack.c.l.b16 %v165
  %v969 = vunpack.c.h.b16 %v165
  %v970 = vunpack.c.l.b16 %v166
  %v971 = vunpack.c.h.b16 %v166
  %v972 = vunpack.c.l.b16 %v167
  %v973 = vunpack.c.h.b16 %v167
  %v974 = vunpack.c.l.b16 %v168
  %v975 = vunpack.c.h.b16 %v168
  %v976 = vunpack.c.l.b16 %v169
  %v977 = vunpack.c.h.b16 %v169
  %v978 = vunpack.c.l.b16 %v170
  %v979 = vunpack.c.h.b16 %v170
  %v980 = vunpack.c.l.b16 %v171
  %v981 = vunpack.c.h.b16 %v171
  %v982 = vunpack.c.l.b16 %v172
  %v983 = vunpack.c.h.b16 %v172
  %v984 = vunpack.c.l.b16 %v173
  %v985 = vunpack.c.h.b16 %v173
  %v986 = vunpack.c.l.b16 %v174
  %v987 = vunpack.c.h.b16 %v174
  %v988 = vunpack.c.l.b16 %v175
  %v989 = vunpack.c.h.b16 %v175
  %v990 = vunpack.c.l.b16 %v176
  %v991 = vunpack.c.h.b16 %v176
  %v992 = vunpack.c.l.b16 %v177
  %v993 = vunpack.c.h.b16 %v177
  %v994 = vunpack.c.l.b16 %v178
  %v995 = vunpack.c.h.b16 %v178
  %v996 = vunpack.c.l.b16 %v179
  %v997 = vunpack.c.h.b16 %v179
  %v998 = vunpack.c.l.b16 %v180
  %v999 = vunpack.c.h.b16 %v180
  %v1000 = vunpack.c.l.b16 %v181
  %v1001 = vunpack.c.h.b16 %v181
  %v1002 = vunpack.c.l.b16 %v182
  %v1003 = vunpack.c.h.b16 %v182
  %v1004 = vunpack.c.l.b16 %v183
  %v1005 = vunpack.c.h.b16 %v183
  %v1006 = vunpack.c.l.b16 %v184
  %v1007 = vunpack.c.h.b16 %v184
  %v1008 = vunpack.c.l.b16 %v185
  %v1009 = vunpack.c.h.b16 %v185
  %v1010 = vunpack.c.l.b16 %v186
  %v1011 = vunpack.c.h.b16 %v186
  %v1012 = vunpack.c.l.b16 %v187
  %v1013 = vunpack.c.h.b16 %v187
  %v1014 = vunpack.c.l.b16 %v188
  %v1015 = vunpack.c.h.b16 %v188
  %v1016 = vunpack.c.l.b16 %v189
  %v1017 = vunpack.c.h.b16 %v189
  %v1018 = vunpack.c.l.b16 %v190
  %v1019 = vunpack.c.h.b16 %v190
  %v1020 = vunpack.c.l.b16 %v191
  %v1021 = vunpack.c.h.b16 %v191
  %v1022 = vunpack.c.l.b16 %v192
  %v1023 = vunpack.c.h.b16 %v192
  %v1024 = vunpack.c.l.b16 %v193
  %v1025 = vunpack.c.h.b16 %v193
  %v1026 = vunpack.c.l.b16 %v194
  %v1027 = vunpack.c.h.b16 %v194
  %v1028 = vunpack.c.l.b16 %v195
  %v1029 = vunpack.c.h.b16 %v195
  %v1030 = vunpack.c.l.b16 %v196
  %v1031 = vunpack.c.h.b16 %v196
  %v1032 = vunpack.c.l.b16 %v197
  %v1033 = vunpack.c.h.b16 %v197
  %v1034 = vunpack.c.l.b16 %v198
  %v1035 = vunpack.c.h.b16 %v198
  %v1036 = vunpack.c.l.b16 %v199
  %v1037 = vunpack.c.h.b16 %v199
  %v1038 = vunpack.c.l.b16 %v200
  %v1039 = vunpack.c.h.b16 %v200
  %v1040 = vunpack.c.l.b16 %v201
  %v1041 = vunpack.c.h.b16 %v201
  %v1042 = vunpack.c.l.b16 %v202
  %v1043 = vunpack.c.h.b16 %v202
  %v1044 = vunpack.c.l.b16 %v203
  %v1045 = vunpack.c.h.b16 %v203
  %v1046 = vunpack.c.l.b16 %v204
  %v1047 = vunpack.c.h.b16 %v204
  %v1048 = vunpack.c.l.b16 %v205
  %v1049 = vunpack.c.h.b16 %v205
  %v1050 = vunpack.c.l.b16 %v206
  %v1051 = vunpack.c.h.b16 %v206
  %v1052 = vunpack.c.l.b16 %v207
  %v1053 = vunpack.c.h.b16 %v207
  %v1054 = vunpack.c.l.b16 %v208
  %v1055 = vunpack.c.h.b16 %v208
  %v1056 = vunpack.c.l.b16 %v209
  %v1057 = vunpack.c.h.b16 %v209
  %v1058 = vunpack.c.l.b16 %v210
  %v1059 = vunpack.c.h.b16 %v210
  %v1060 = vunpack.c.l.b16 %v211
  %v1061 = vunpack.c.h.b16 %v211
  %v1062 = vunpack.c.l.b16 %v212
  %v1063 = vunpack.c.h.b16 %v212
  %v1064 = vunpack.c.l.b16 %v213
  %v1065 = vunpack.c.h.b16 %v213
  %v1066 = vunpack.c.l.b16 %v214
  %v1067 = vunpack.c.h.b16 %v214
  %v1068 = vunpack.c.l.b16 %v215
  %v1069 = vunpack.c.h.b16 %v215
  %v1070 = vunpack.c.l.b16 %v216
  %v1071 = vunpack.c.h.b16 %v216
  %v1072 = vunpack.c.l.b16 %v217
  %v1073 = vunpack.c.h.b16 %v217
  %v1074 = vunpack.c.l.b16 %v218
  %v1075 = vunpack.c.h.b16 %v218
  %v1076 = vunpack.c.l.b16 %v219
  %v1077 = vunpack.c.h.b16 %v219
  %v1078 = vunpack.c.l.b16 %v220
  %v1079 = vunpack.c.h.b16 %v220
  %v1080 = vunpack.c.l.b16 %v221
  %v1081 = vunpack.c.h.b16 %v221
  %v1082 = vunpack.c.l.b16 %v222
  %v1083 = vunpack.c.h.b16 %v222
  %v1084 = vunpack.c.l.b16 %v223
  %v1085 = vunpack.c.h.b16 %v223
  %v1086 = vunpack.c.l.b16 %v224
  %v1087 = vunpack.c.h.b16 %v224
  %v1088 = vunpack.c.l.b16 %v225
  %v1089 = vunpack.c.h.b16 %v225
  %v1090 = vunpack.c.l.b16 %v226
  %v1091 = vunpack.c.h.b16 %v226
  %v1092 = vunpack.c.l.b16 %v227
  %v1093 = vunpack.c.h.b16 %v227
  %v1094 = vunpack.c.l.b16 %v228
  %v1095 = vunpack.c.h.b16 %v228
  %v1096 = vunpack.c.l.b16 %v229
  %v1097 = vunpack.c.h.b16 %v229
  %v1098 = vunpack.c.l.b16 %v230
  %v1099 = vunpack.c.h.b16 %v230
  %v1100 = vunpack.c.l.b16 %v231
  %v1101 = vunpack.c.h.b16 %v231
  %v1102 = vunpack.c.l.b16 %v232
  %v1103 = vunpack.c.h.b16 %v232
  %v1104 = vunpack.c.l.b16 %v233
  %v1105 = vunpack.c.h.b16 %v233
  %v1106 = vunpack.c.l.b16 %v234
  %v1107 = vunpack.c.h.b16 %v234
  %v1108 = vunpack.c.l.b16 %v235
  %v1109 = vunpack.c.h.b16 %v235
  %v1110 = vunpack.c.l.b16 %v236
  %v1111 = vunpack.c.h.b16 %v236
  %v1112 = vunpack.c.l.b16 %v237
  %v1113 = vunpack.c.h.b16 %v237
  %v1114 = vunpack.c.l.b16 %v238
  %v1115 = vunpack.c.h.b16 %v238
  %v1116 = vunpack.c.l.b16 %v239
  %v1117 = vunpack.c.h.b16 %v239
  %v1118 = vunpack.c.l.b16 %v240
  %v1119 = vunpack.c.h.b16 %v240
  %v1120 = vunpack.c.l.b16 %v241
  %v1121 = vunpack.c.h.b16 %v241
  %v1122 = vunpack.c.l.b16 %v242
  %v1123 = vunpack.c.h.b16 %v242
  %v1124 = vunpack.c.l.b16 %v243
  %v1125 = vunpack.c.h.b16 %v243
  %v1126 = vunpack.c.l.b16 %v244
  %v1127 = vunpack.c.h.b16 %v244
  %v1128 = vunpack.c.l.b16 %v245
  %v1129 = vunpack.c.h.b16 %v245
  %v1130 = vunpack.c.l.b16 %v246
  %v1131 = vunpack.c.h.b16 %v246
  %v1132 = vunpack.c.l.b16 %v247
  %v1133 = vunpack.c.h.b16 %v247
  %v1134 = vunpack.c.l.b16 %v248
  %v1135 = vunpack.c.h.b16 %v248
  %v1136 = vunpack.c.l.b16 %v249
  %v1137 = vunpack.c.h.b16 %v249
  %v1138 = vunpack.c.l.b16 %v250
  %v1139 = vunpack.c.h.b16 %v250
  %v1140 = vunpack.c.l.b16 %v251
  %v1141 = vunpack.c.h.b16 %v251
  %v1142 = vunpack.c.l.b16 %v252
  %v1143 = vunpack.c.h.b16 %v252
  %v1144 = vunpack.c.l.b16 %v253
  %v1145 = vunpack.c.h.b16 %v253
  %v1146 = vunpack.c.l.b16 %v254
  %v1147 = vunpack.c.h.b16 %v254
  %v1148 = vunpack.c.l.b16 %v255
  %v1149 = vunpack.c.h.b16 %v255
  %v1150 = vunpack.c.l.b16 %v256
  %v1151 = vunpack.c.h.b16 %v256
  %v1152 = vunpack.c.l.b16 %v257
  %v1153 = vunpack.c.h.b16 %v257
  %v1154 = vunpack.c.l.b16 %v258
  %v1155 = vunpack.c.h.b16 %v258
  %v1156 = vunpack.c.l.b16 %v259
  %v1157 = vunpack.c.h.b16 %v259
  %v1158 = vunpack.c.l.b16 %v260
  %v1159 = vunpack.c.h.b16 %v260
  %v1160 = vunpack.c.l.b16 %v261
  %v1161 = vunpack.c.h.b16 %v261
  %v1162 = vunpack.c.l.b16 %v262
  %v1163 = vunpack.c.h.b16 %v262
  %v1164 = vunpack.c.l.b16 %v263
  %v1165 = vunpack.c.h.b16 %v263
  %v1166 = vunpack.c.l.b16 %v264
  %v1167 = vunpack.c.h.b16 %v264
  %v1168 = vunpack.c.l.b16 %v265
  %v1169 = vunpack.c.h.b16 %v265
  %v1170 = vunpack.c.l.b16 %v266
  %v1171 = vunpack.c.h.b16 %v266
  %v1172 = vunpack.c.l.b16 %v267
  %v1173 = vunpack.c.h.b16 %v267
  %v1174 = vunpack.c.l.b16 %v268
  %v1175 = vunpack.c.h.b16 %v268
  %v1176 = vunpack.c.l.b16 %v269
  %v1177 = vunpack.c.h.b16 %v269
  %v1178 = vunpack.c.l.b16 %v270
  %v1179 = vunpack.c.h.b16 %v270
  %v1180 = vunpack.c.l.b16 %v271
  %v1181 = vunpack.c.h.b16 %v271
  %v1182 = vunpack.c.l.b16 %v272
  %v1183 = vunpack.c.h.b16 %v272
  %v1184 = vunpack.c.l.b16 %v273
  %v1185 = vunpack.c.h.b16 %v273
  %v1186 = vunpack.c.l.b16 %v274
  %v1187 = vunpack.c.h.b16 %v274
  %v1188 = vunpack.c.l.b16 %v275
  %v1189 = vunpack.c.h.b16 %v275
  %v1190 = vunpack.c.l.b16 %v276
  %v1191 = vunpack.c.h.b16 %v276
  %v1192 = vunpack.c.l.b16 %v277
  %v1193 = vunpack.c.h.b16 %v277
  %v1194 = vunpack.c.l.b16 %v278
  %v1195 = vunpack.c.h.b16 %v278
  %v1196 = vunpack.c.l.b16 %v279
  %v1197 = vunpack.c.h.b16 %v279
  %v1198 = vunpack.c.l.b16 %v280
  %v1199 = vunpack.c.h.b16 %v280
  %v1200 = vunpack.c.l.b16 %v281
  %v1201 = vunpack.c.h.b16 %v281
  %v1202 = vunpack.c.l.b16 %v282
  %v1203 = vunpack.c.h.b16 %v282
  %v1204 = vunpack.c.l.b16 %v283
  %v1205 = vunpack.c.h.b16 %v283
  %v1206 = vunpack.c.l.b16 %v284
  %v1207 = vunpack.c.h.b16 %v284
  %v1208 = vunpack.c.l.b16 %v285
  %v1209 = vunpack.c.h.b16 %v285
  %v1210 = vunpack.c.l.b16 %v286
  %v1211 = vunpack.c.h.b16 %v286
  %v1212 = vunpack.c.l.b16 %v287
  %v1213 = vunpack.c.h.b16 %v287
  %v1214 = vunpack.c.l.b16 %v288
  %v1215 = vunpack.c.h.b16 %v288
  %v1216 = vunpack.c.l.b16 %v289
  %v1217 = vunpack.c.h.b16 %v289
  %v1218 = vunpack.c.l.b16 %v290
  %v1219 = vunpack.c.h.b16 %v290
  %v1220 = vunpack.c.l.b16 %v291
  %v1221 = vunpack.c.h.b16 %v291
  %v1222 = vunpack.c.l.b16 %v292
  %v1223 = vunpack.c.h.b16 %v292
  %v1224 = vunpack.c.l.b16 %v293
  %v1225 = vunpack.c.h.b16 %v293
  %v1226 = vunpack.c.l.b16 %v294
  %v1227 = vunpack.c.h.b16 %v294
  %v1228 = vunpack.c.l.b16 %v295
  %v1229 = vunpack.c.h.b16 %v295
  %v1230 = vunpack.c.l.b16 %v296
  %v1231 = vunpack.c.h.b16 %v296
  %v1232 = vunpack.c.l.b16 %v297
  %v1233 = vunpack.c.h.b16 %v297
  %v1234 = vunpack.c.l.b16 %v298
  %v1235 = vunpack.c.h.b16 %v298
  %v1236 = vunpack.c.l.b16 %v299
  %v1237 = vunpack.c.h.b16 %v299
  %v1238 = vunpack.c.l.b16 %v300
  %v1239 = vunpack.c.h.b16 %v300
  %v1240 = vunpack.c.l.b16 %v301
  %v1241 = vunpack.c.h.b16 %v301
  %v1242 = vpack.c.b16 %v732, %v730
  %v1243 = vpack.c.b16 %v733, %v731
  %v1244 = vpack.c.b16 %v736, %v734
  %v1245 = vpack.c.b16 %v737, %v735
  %v1246 = vpack.c.b16 %v740, %v738
  %v1247 = vpack.c.b16 %v741, %v739
  %v1248 = vpack.c.b16 %v744, %v742
  %v1249 = vpack.c.b16 %v745, %v743
  %v1250 = vpack.c.b16 %v748, %v746
  %v1251 = vpack.c.b16 %v749, %v747
  %v1252 = vpack.c.b16 %v752, %v750
  %v1253 = vpack.c.b16 %v753, %v751
  %v1254 = vpack.c.b16 %v756, %v754
  %v1255 = vpack.c.b16 %v757, %v755
  %v1256 = vpack.c.b16 %v760, %v758
  %v1257 = vpack.c.b16 %v761, %v759
  %v1258 = vpack.c.b16 %v764, %v762
  %v1259 = vpack.c.b16 %v765, %v763
  %v1260 = vpack.c.b16 %v768, %v766
  %v1261 = vpack.c.b16 %v769, %v767
  %v1262 = vpack.c.b16 %v772, %v770
  %v1263 = vpack.c.b16 %v773, %v771
  %v1264 = vpack.c.b16 %v776, %v774
  %v1265 = vpack.c.b16 %v777, %v775
  %v1266 = vpack.c.b16 %v780, %v778
  %v1267 = vpack.c.b16 %v781, %v779
  %v1268 = vpack.c.b16 %v784, %v782
  %v1269 = vpack.c.b16 %v785, %v783
  %v1270 = vpack.c.b16 %v788, %v786
  %v1271 = vpack.c.b16 %v789, %v787
  %v1272 = vpack.c.b16 %v792, %v790
  %v1273 = vpack.c.b16 %v793, %v791
  %v1274 = vpack.c.b16 %v796, %v794
  %v1275 = vpack.c.b16 %v797, %v795
  %v1276 = vpack.c.b16 %v800, %v798
  %v1277 = vpack.c.b16 %v801, %v799
  %v1278 = vpack.c.b16 %v804, %v802
  %v1279 = vpack.c.b16 %v805, %v803
  %v1280 = vpack.c.b16 %v808, %v806
  %v1281 = vpack.c.b16 %v809, %v807
  %v1282 = vpack.c.b16 %v812, %v810
  %v1283 = vpack.c.b16 %v813, %v811
  %v1284 = vpack.c.b16 %v816, %v814
  %v1285 = vpack.c.b16 %v817, %v815
  %v1286 = vpack.c.b16 %v820, %v818
  %v1287 = vpack.c.b16 %v821, %v819
  %v1288 = vpack.c.b16 %v824, %v822
  %v1289 = vpack.c.b16 %v825, %v823
  %v1290 = vpack.c.b16 %v828, %v826
  %v1291 = vpack.c.b16 %v829, %v827
  %v1292 = vpack.c.b16 %v832, %v830
  %v1293 = vpack.c.b16 %v833, %v831
  %v1294 = vpack.c.b16 %v836, %v834
  %v1295 = vpack.c.b16 %v837, %v835
  %v1296 = vpack.c.b16 %v840, %v838
  %v1297 = vpack.c.b16 %v841, %v839
  %v1298 = vpack.c.b16 %v844, %v842
  %v1299 = vpack.c.b16 %v845, %v843
  %v1300 = vpack.c.b16 %v848, %v846
  %v1301 = vpack.c.b16 %v849, %v847
  %v1302 = vpack.c.b16 %v852, %v850
  %v1303 = vpack.c.b16 %v853, %v851
  %v1304 = vpack.c.b16 %v856, %v854
  %v1305 = vpack.c.b16 %v857, %v855
  %v1306 = vpack.c.b16 %v860, %v858
  %v1307 = vpack.c.b16 %v861, %v859
  %v1308 = vpack.c.b16 %v864, %v862
  %v1309 = vpack.c.b16 %v865, %v863
  %v1310 = vpack.c.b16 %v868, %v866
  %v1311 = vpack.c.b16 %v869, %v867
  %v1312 = vpack.c.b16 %v872, %v870
  %v1313 = vpack.c.b16 %v873, %v871
  %v1314 = vpack.c.b16 %v876, %v874
  %v1315 = vpack.c.b16 %v877, %v875
  %v1316 = vpack.c.b16 %v880, %v878
  %v1317 = vpack.c.b16 %v881, %v879
  %v1318 = vpack.c.b16 %v884, %v882
  %v1319 = vpack.c.b16 %v885, %v883
  %v1320 = vpack.c.b16 %v888, %v886
  %v1321 = vpack.c.b16 %v889, %v887
  %v1322 = vpack.c.b16 %v892, %v890
  %v1323 = vpack.c.b16 %v893, %v891
  %v1324 = vpack.c.b16 %v896, %v894
  %v1325 = vpack.c.b16 %v897, %v895
  %v1326 = vpack.c.b16 %v900, %v898
  %v1327 = vpack.c.b16 %v901, %v899
  %v1328 = vpack.c.b16 %v904, %v902
  %v1329 = vpack.c.b16 %v905, %v903
  %v1330 = vpack.c.b16 %v908, %v906
  %v1331 = vpack.c.b16 %v909, %v907
  %v1332 = vpack.c.b16 %v912, %v910
  %v1333 = vpack.c.b16 %v913, %v911
  %v1334 = vpack.c.b16 %v916, %v914
  %v1335 = vpack.c.b16 %v917, %v915
  %v1336 = vpack.c.b16 %v920, %v918
  %v1337 = vpack.c.b16 %v921, %v919
  %v1338 = vpack.c.b16 %v924, %v922
  %v1339 = vpack.c.b16 %v925, %v923
  %v1340 = vpack.c.b16 %v928, %v926
  %v1341 = vpack.c.b16 %v929, %v927
  %v1342 = vpack.c.b16 %v932, %v930
  %v1343 = vpack.c.b16 %v933, %v931
  %v1344 = vpack.c.b16 %v936, %v934
  %v1345 = vpack.c.b16 %v937, %v935
  %v1346 = vpack.c.b16 %v940, %v938
  %v1347 = vpack.c.b16 %v941, %v939
  %v1348 = vpack.c.b16 %v944, %v942
  %v1349 = vpack.c.b16 %v945, %v943
  %v1350 = vpack.c.b16 %v948, %v946
  %v1351 = vpack.c.b16 %v949, %v947
  %v1352 = vpack.c.b16 %v952, %v950
  %v1353 = vpack.c.b16 %v953, %v951
  %v1354 = vpack.c.b16 %v956, %v954
  %v1355 = vpack.c.b16 %v957, %v955
  %v1356 = vpack.c.b16 %v960, %v958
  %v1357 = vpack.c.b16 %v961, %v959
  %v1358 = vpack.c.b16 %v964, %v962
  %v1359 = vpack.c.b16 %v965, %v963
  %v1360 = vpack.c.b16 %v968, %v966
  %v1361 = vpack.c.b16 %v969, %v967
  %v1362 = vpack.c.b16 %v972, %v970
  %v1363 = vpack.c.b16 %v973, %v971
  %v1364 = vpack.c.b16 %v976, %v974
  %v1365 = vpack.c.b16 %v977, %v975
  %v1366 = vpack.c.b16 %v980, %v978
  %v1367 = vpack.c.b16 %v981, %v979
  %v1368 = vpack.c.b16 %v984, %v982
  %v1369 = vpack.c.b16 %v985, %v983
  %v1370 = vpack.c.b16 %v988, %v986
  %v1371 = vpack.c.b16 %v989, %v987
  %v1372 = vpack.c.b16 %v992, %v990
  %v1373 = vpack.c.b16 %v993, %v991
  %v1374 = vpack.c.b16 %v996, %v994
  %v1375 = vpack.c.b16 %v997, %v995
  %v1376 = vpack.c.b16 %v1000, %v998
  %v1377 = vpack.c.b16 %v1001, %v999
  %v1378 = vpack.c.b16 %v1004, %v1002
  %v1379 = vpack.c.b16 %v1005, %v1003
  %v1380 = vpack.c.b16 %v1008, %v1006
  %v1381 = vpack.c.b16 %v1009, %v1007
  %v1382 = vpack.c.b16 %v1012, %v1010
  %v1383 = vpack.c.b16 %v1013, %v1011
  %v1384 = vpack.c.b16 %v1016, %v1014
  %v1385 = vpack.c.b16 %v1017, %v1015
  %v1386 = vpack.c.b16 %v1020, %v1018
  %v1387 = vpack.c.b16 %v1021, %v1019
  %v1388 = vpack.c.b16 %v1024, %v1022
  %v1389 = vpack.c.b16 %v1025, %v1023
  %v1390 = vpack.c.b16 %v1028, %v1026
  %v1391 = vpack.c.b16 %v1029, %v1027
  %v1392 = vpack.c.b16 %v1032, %v1030
  %v1393 = vpack.c.b16 %v1033, %v1031
  %v1394 = vpack.c.b16 %v1036, %v1034
  %v1395 = vpack.c.b16 %v1037, %v1035
  %v1396 = vpack.c.b16 %v1040, %v1038
  %v1397 = vpack.c.b16 %v1041, %v1039
  %v1398 = vpack.c.b16 %v1044, %v1042
  %v1399 = vpack.c.b16 %v1045, %v1043
  %v1400 = vpack.c.b16 %v1048, %v1046
  %v1401 = vpack.c.b16 %v1049, %v1047
  %v1402 = vpack.c.b16 %v1052, %v1050
  %v1403 = vpack.c.b16 %v1053, %v1051
  %v1404 = vpack.c.b16 %v1056, %v1054
  %v1405 = vpack.c.b16 %v1057, %v1055
  %v1406 = vpack.c.b16 %v1060, %v1058
  %v1407 = vpack.c.b16 %v1061, %v1059
  %v1408 = vpack.c.b16 %v1064, %v1062
  %v1409 = vpack.c.b16 %v1065, %v1063
  %v1410 = vpack.c.b16 %v1068, %v1066
  %v1411 = vpack.c.b16 %v1069, %v1067
  %v1412 = vpack.c.b16 %v1072, %v1070
  %v1413 = vpack.c.b16 %v1073, %v1071
  %v1414 = vpack.c.b16 %v1076, %v1074
  %v1415 = vpack.c.b16 %v1077, %v1075
  %v1416 = vpack.c.b16 %v1080, %v1078
  %v1417 = vpack.c.b16 %v1081, %v1079
  %v1418 = vpack.c.b16 %v1084, %v1082
  %v1419 = vpack.c.b16 %v1085, %v1083
  %v1420 = vpack.c.b16 %v1088, %v1086
  %v1421 = vpack.c.b16 %v1089, %v1087
  %v1422 = vpack.c.b16 %v1092, %v1090
  %v1423 = vpack.c.b16 %v1093, %v1091
  %v1424 = vpack.c.b16 %v1096, %v1094
  %v1425 = vpack.c.b16 %v1097, %v1095
  %v1426 = vpack.c.b16 %v1100, %v1098
  %v1427 = vpack.c.b16 %v1101, %v1099
  %v1428 = vpack.c.b16 %v1104, %v1102
  %v1429 = vpack.c.b16 %v1105, %v1103
  %v1430 = vpack.c.b16 %v1108, %v1106
  %v1431 = vpack.c.b16 %v1109, %v1107
  %v1432 = vpack.c.b16 %v1112, %v1110
  %v1433 = vpack.c.b16 %v1113, %v1111
  %v1434 = vpack.c.b16 %v1116, %v1114
  %v1435 = vpack.c.b16 %v1117, %v1115
  %v1436 = vpack.c.b16 %v1120, %v1118
  %v1437 = vpack.c.b16 %v1121, %v1119
  %v1438 = vpack.c.b16 %v1124, %v1122
  %v1439 = vpack.c.b16 %v1125, %v1123
  %v1440 = vpack.c.b16 %v1128, %v1126
  %v1441 = vpack.c.b16 %v1129, %v1127
  %v1442 = vpack.c.b16 %v1132, %v1130
  %v1443 = vpack.c.b16 %v1133, %v1131
  %v1444 = vpack.c.b16 %v1136, %v1134
  %v1445 = vpack.c.b16 %v1137, %v1135
  %v1446 = vpack.c.b16 %v1140, %v1138
  %v1447 = vpack.c.b16 %v1141, %v1139
  %v1448 = vpack.c.b16 %v1144, %v1142
  %v1449 = vpack.c.b16 %v1145, %v1143
  %v1450 = vpack.c.b16 %v1148, %v1146
  %v1451 = vpack.c.b16 %v1149, %v1147
  %v1452 = vpack.c.b16 %v1152, %v1150
  %v1453 = vpack.c.b16 %v1153, %v1151
  %v1454 = vpack.c.b16 %v1156, %v1154
  %v1455 = vpack.c.b16 %v1157, %v1155
  %v1456 = vpack.c.b16 %v1160, %v1158
  %v1457 = vpack.c.b16 %v1161, %v1159
  %v1458 = vpack.c.b16 %v1164, %v1162
  %v1459 = vpack.c.b16 %v1165, %v1163
  %v1460 = vpack.c.b16 %v1168, %v1166
  %v1461 = vpack.c.b16 %v1169, %v1167
  %v1462 = vpack.c.b16 %v1172, %v1170
  %v1463 = vpack.c.b16 %v1173, %v1171
  %v1464 = vpack.c.b16 %v1176, %v1174
  %v1465 = vpack.c.b16 %v1177, %v1175
  %v1466 = vpack.c.b16 %v1180, %v1178
  %v1467 = vpack.c.b16 %v1181, %v1179
  %v1468 = vpack.c.b16 %v1184, %v1182
  %v1469 = vpack.c.b16 %v1185, %v1183
  %v1470 = vpack.c.b16 %v1188, %v1186
  %v1471 = vpack.c.b16 %v1189, %v1187
  %v1472 = vpack.c.b16 %v1192, %v1190
  %v1473 = vpack.c.b16 %v1193, %v1191
  %v1474 = vpack.c.b16 %v1196, %v1194
  %v1475 = vpack.c.b16 %v1197, %v1195
  %v1476 = vpack.c.b16 %v1200, %v1198
  %v1477 = vpack.c.b16 %v1201, %v1199
  %v1478 = vpack.c.b16 %v1204, %v1202
  %v1479 = vpack.c.b16 %v1205, %v1203
  %v1480 = vpack.c.b16 %v1208, %v1206
  %v1481 = vpack.c.b16 %v1209, %v1207
  %v1482 = vpack.c.b16 %v1212, %v1210
  %v1483 = vpack.c.b16 %v1213, %v1211
  %v1484 = vpack.c.b16 %v1216, %v1214
  %v1485 = vpack.c.b16 %v1217, %v1215
  %v1486 = vpack.c.b16 %v1220, %v1218
  %v1487 = vpack.c.b16 %v1221, %v1219
  %v1488 = vpack.c.b16 %v1224, %v1222
  %v1489 = vpack.c.b16 %v1225, %v1223
  %v1490 = vpack.c.b16 %v1228, %v1226
  %v1491 = vpack.c.b16 %v1229, %v1227
  %v1492 = vpack.c.b16 %v1232, %v1230
  %v1493 = vpack.c.b16 %v1233, %v1231
  %v1494 = vpack.c.b16 %v1236, %v1234
  %v1495 = vpack.c.b16 %v1237, %v1235
  %v1496 = vpack.c.b16 %v1240, %v1238
  %v1497 = vpack.c.b16 %v1241, %v1239
  %1754 = vmatprep.subr.bf16.mxu0 %v1243
  %1755 = vmatpush1.bf16.msra.mxu0 %v1242
  %1756 = vmatprep.subr.bf16.mxu0 %v1245
  %1757 = vmatpush1.bf16.msra.mxu0 %v1244
  %1758 = vmatprep.subr.bf16.mxu0 %v1247
  %1759 = vmatpush1.bf16.msra.mxu0 %v1246
  %1760 = vmatprep.subr.bf16.mxu0 %v1249
  %1761 = vmatpush1.bf16.msra.mxu0 %v1248
  %1762 = vmatprep.subr.bf16.mxu0 %v1251
  %1763 = vmatpush1.bf16.msra.mxu0 %v1250
  %1764 = vmatprep.subr.bf16.mxu0 %v1253
  %1765 = vmatpush1.bf16.msra.mxu0 %v1252
  %1766 = vmatprep.subr.bf16.mxu0 %v1255
  %1767 = vmatpush1.bf16.msra.mxu0 %v1254
  %1768 = vmatprep.subr.bf16.mxu0 %v1257
  %1769 = vmatpush1.bf16.msra.mxu0 %v1256
  %1770 = vmatprep.subr.bf16.mxu0 %v1259
  %1771 = vmatpush1.bf16.msra.mxu0 %v1258
  %1772 = vmatprep.subr.bf16.mxu0 %v1261
  %1773 = vmatpush1.bf16.msra.mxu0 %v1260
  %1774 = vmatprep.subr.bf16.mxu0 %v1263
  %1775 = vmatpush1.bf16.msra.mxu0 %v1262
  %1776 = vmatprep.subr.bf16.mxu0 %v1265
  %1777 = vmatpush1.bf16.msra.mxu0 %v1264
  %1778 = vmatprep.subr.bf16.mxu0 %v1267
  %1779 = vmatpush1.bf16.msra.mxu0 %v1266
  %1780 = vmatprep.subr.bf16.mxu0 %v1269
  %1781 = vmatpush1.bf16.msra.mxu0 %v1268
  %1782 = vmatprep.subr.bf16.mxu0 %v1271
  %1783 = vmatpush1.bf16.msra.mxu0 %v1270
  %1784 = vmatprep.subr.bf16.mxu0 %v1273
  %1785 = vmatpush1.bf16.msra.mxu0 %v1272
  %1786 = vmatprep.mubr.bf16.mxu0 %v411
  %1787 = vmatmul.mubr.bf16.gmra.mrb[0].mxu0 %v410
  %v1788 = vpop.f32.mrb[0].mxu0
  %v1789 = vadd.f32 %v307, %v1788
  %v1790 = vpop.f32.mrb[0].mxu0
  %v1791 = vadd.f32 %v311, %v1790
  %v1792 = vpop.f32.mrb[0].mxu0
  %v1793 = vadd.f32 %v307, %v1792
  %v1794 = vpop.f32.mrb[0].mxu0
  %v1795 = vadd.f32 %v311, %v1794
  %1796 = vmatprep.mubr.bf16.mxu0 %v427
  %1797 = vmatmul.mubr.bf16.gmra.mrb[0].mxu0 %v426
  %v1798 = vpop.f32.mrb[0].mxu0
  %v1799 = vadd.f32 %v307, %v1798
  %v1800 = vpop.f32.mrb[0].mxu0
  %v1801 = vadd.f32 %v311, %v1800
  %v1802 = vpop.f32.mrb[0].mxu0
  %v1803 = vadd.f32 %v307, %v1802
  %v1804 = vpop.f32.mrb[0].mxu0
  %v1805 = vadd.f32 %v311, %v1804
  %1806 = vdwg.mxu0
  %1807 = vmatprep.subr.bf16.mxu0 %v1275
  %1808 = vmatpush1.bf16.msra.mxu0 %v1274
  %1809 = vmatprep.subr.bf16.mxu0 %v1277
  %1810 = vmatpush1.bf16.msra.mxu0 %v1276
  %1811 = vmatprep.subr.bf16.mxu0 %v1279
  %1812 = vmatpush1.bf16.msra.mxu0 %v1278
  %1813 = vmatprep.subr.bf16.mxu0 %v1281
  %1814 = vmatpush1.bf16.msra.mxu0 %v1280
  %1815 = vmatprep.subr.bf16.mxu0 %v1283
  %1816 = vmatpush1.bf16.msra.mxu0 %v1282
  %1817 = vmatprep.subr.bf16.mxu0 %v1285
  %1818 = vmatpush1.bf16.msra.mxu0 %v1284
  %1819 = vmatprep.subr.bf16.mxu0 %v1287
  %1820 = vmatpush1.bf16.msra.mxu0 %v1286
  %1821 = vmatprep.subr.bf16.mxu0 %v1289
  %1822 = vmatpush1.bf16.msra.mxu0 %v1288
  %1823 = vmatprep.subr.bf16.mxu0 %v1291
  %1824 = vmatpush1.bf16.msra.mxu0 %v1290
  %1825 = vmatprep.subr.bf16.mxu0 %v1293
  %1826 = vmatpush1.bf16.msra.mxu0 %v1292
  %1827 = vmatprep.subr.bf16.mxu0 %v1295
  %1828 = vmatpush1.bf16.msra.mxu0 %v1294
  %1829 = vmatprep.subr.bf16.mxu0 %v1297
  %1830 = vmatpush1.bf16.msra.mxu0 %v1296
  %1831 = vmatprep.subr.bf16.mxu0 %v1299
  %1832 = vmatpush1.bf16.msra.mxu0 %v1298
  %1833 = vmatprep.subr.bf16.mxu0 %v1301
  %1834 = vmatpush1.bf16.msra.mxu0 %v1300
  %1835 = vmatprep.subr.bf16.mxu0 %v1303
  %1836 = vmatpush1.bf16.msra.mxu0 %v1302
  %1837 = vmatprep.subr.bf16.mxu0 %v1305
  %1838 = vmatpush1.bf16.msra.mxu0 %v1304
  %1839 = vmatprep.mubr.bf16.mxu0 %v413
  %1840 = vmatmul.mubr.bf16.gmra.mrb[0].mxu0 %v412
  %v1841 = vpop.f32.mrb[0].mxu0
  %v1842 = vadd.f32 %v1789, %v1841
  %v1843 = vpop.f32.mrb[0].mxu0
  %v1844 = vadd.f32 %v1791, %v1843
  %v1845 = vpop.f32.mrb[0].mxu0
  %v1846 = vadd.f32 %v1793, %v1845
  %v1847 = vpop.f32.mrb[0].mxu0
  %v1848 = vadd.f32 %v1795, %v1847
  %1849 = vmatprep.mubr.bf16.mxu0 %v429
  %1850 = vmatmul.mubr.bf16.gmra.mrb[0].mxu0 %v428
  %v1851 = vpop.f32.mrb[0].mxu0
  %v1852 = vadd.f32 %v1799, %v1851
  %v1853 = vpop.f32.mrb[0].mxu0
  %v1854 = vadd.f32 %v1801, %v1853
  %v1855 = vpop.f32.mrb[0].mxu0
  %v1856 = vadd.f32 %v1803, %v1855
  %v1857 = vpop.f32.mrb[0].mxu0
  %v1858 = vadd.f32 %v1805, %v1857
  %1859 = vdwg.mxu0
  %1860 = vmatprep.subr.bf16.mxu0 %v1307
  %1861 = vmatpush1.bf16.msra.mxu0 %v1306
  %1862 = vmatprep.subr.bf16.mxu0 %v1309
  %1863 = vmatpush1.bf16.msra.mxu0 %v1308
  %1864 = vmatprep.subr.bf16.mxu0 %v1311
  %1865 = vmatpush1.bf16.msra.mxu0 %v1310
  %1866 = vmatprep.subr.bf16.mxu0 %v1313
  %1867 = vmatpush1.bf16.msra.mxu0 %v1312
  %1868 = vmatprep.subr.bf16.mxu0 %v1315
  %1869 = vmatpush1.bf16.msra.mxu0 %v1314
  %1870 = vmatprep.subr.bf16.mxu0 %v1317
  %1871 = vmatpush1.bf16.msra.mxu0 %v1316
  %1872 = vmatprep.subr.bf16.mxu0 %v1319
  %1873 = vmatpush1.bf16.msra.mxu0 %v1318
  %1874 = vmatprep.subr.bf16.mxu0 %v1321
  %1875 = vmatpush1.bf16.msra.mxu0 %v1320
  %1876 = vmatprep.subr.bf16.mxu0 %v1323
  %1877 = vmatpush1.bf16.msra.mxu0 %v1322
  %1878 = vmatprep.subr.bf16.mxu0 %v1325
  %1879 = vmatpush1.bf16.msra.mxu0 %v1324
  %1880 = vmatprep.subr.bf16.mxu0 %v1327
  %1881 = vmatpush1.bf16.msra.mxu0 %v1326
  %1882 = vmatprep.subr.bf16.mxu0 %v1329
  %1883 = vmatpush1.bf16.msra.mxu0 %v1328
  %1884 = vmatprep.subr.bf16.mxu0 %v1331
  %1885 = vmatpush1.bf16.msra.mxu0 %v1330
  %1886 = vmatprep.subr.bf16.mxu0 %v1333
  %1887 = vmatpush1.bf16.msra.mxu0 %v1332
  %1888 = vmatprep.subr.bf16.mxu0 %v1335
  %1889 = vmatpush1.bf16.msra.mxu0 %v1334
  %1890 = vmatprep.subr.bf16.mxu0 %v1337
  %1891 = vmatpush1.bf16.msra.mxu0 %v1336
  %1892 = vmatprep.mubr.bf16.mxu0 %v415
  %1893 = vmatmul.mubr.bf16.gmra.mrb[0].mxu0 %v414
  %v1894 = vpop.f32.mrb[0].mxu0
  %v1895 = vadd.f32 %v1842, %v1894
  %v1896 = vpop.f32.mrb[0].mxu0
  %v1897 = vadd.f32 %v1844, %v1896
  %v1898 = vpop.f32.mrb[0].mxu0
  %v1899 = vadd.f32 %v1846, %v1898
  %v1900 = vpop.f32.mrb[0].mxu0
  %v1901 = vadd.f32 %v1848, %v1900
  %1902 = vmatprep.mubr.bf16.mxu0 %v431
  %1903 = vmatmul.mubr.bf16.gmra.mrb[0].mxu0 %v430
  %v1904 = vpop.f32.mrb[0].mxu0
  %v1905 = vadd.f32 %v1852, %v1904
  %v1906 = vpop.f32.mrb[0].mxu0
  %v1907 = vadd.f32 %v1854, %v1906
  %v1908 = vpop.f32.mrb[0].mxu0
  %v1909 = vadd.f32 %v1856, %v1908
  %v1910 = vpop.f32.mrb[0].mxu0
  %v1911 = vadd.f32 %v1858, %v1910
  %1912 = vdwg.mxu0
  %1913 = vmatprep.subr.bf16.mxu0 %v1339
  %1914 = vmatpush1.bf16.msra.mxu0 %v1338
  %1915 = vmatprep.subr.bf16.mxu0 %v1341
  %1916 = vmatpush1.bf16.msra.mxu0 %v1340
  %1917 = vmatprep.subr.bf16.mxu0 %v1343
  %1918 = vmatpush1.bf16.msra.mxu0 %v1342
  %1919 = vmatprep.subr.bf16.mxu0 %v1345
  %1920 = vmatpush1.bf16.msra.mxu0 %v1344
  %1921 = vmatprep.subr.bf16.mxu0 %v1347
  %1922 = vmatpush1.bf16.msra.mxu0 %v1346
  %1923 = vmatprep.subr.bf16.mxu0 %v1349
  %1924 = vmatpush1.bf16.msra.mxu0 %v1348
  %1925 = vmatprep.subr.bf16.mxu0 %v1351
  %1926 = vmatpush1.bf16.msra.mxu0 %v1350
  %1927 = vmatprep.subr.bf16.mxu0 %v1353
  %1928 = vmatpush1.bf16.msra.mxu0 %v1352
  %1929 = vmatprep.subr.bf16.mxu0 %v1355
  %1930 = vmatpush1.bf16.msra.mxu0 %v1354
  %1931 = vmatprep.subr.bf16.mxu0 %v1357
  %1932 = vmatpush1.bf16.msra.mxu0 %v1356
  %1933 = vmatprep.subr.bf16.mxu0 %v1359
  %1934 = vmatpush1.bf16.msra.mxu0 %v1358
  %1935 = vmatprep.subr.bf16.mxu0 %v1361
  %1936 = vmatpush1.bf16.msra.mxu0 %v1360
  %1937 = vmatprep.subr.bf16.mxu0 %v1363
  %1938 = vmatpush1.bf16.msra.mxu0 %v1362
  %1939 = vmatprep.subr.bf16.mxu0 %v1365
  %1940 = vmatpush1.bf16.msra.mxu0 %v1364
  %1941 = vmatprep.subr.bf16.mxu0 %v1367
  %1942 = vmatpush1.bf16.msra.mxu0 %v1366
  %1943 = vmatprep.subr.bf16.mxu0 %v1369
  %1944 = vmatpush1.bf16.msra.mxu0 %v1368
  %1945 = vmatprep.mubr.bf16.mxu0 %v417
  %1946 = vmatmul.mubr.bf16.gmra.mrb[0].mxu0 %v416
  %v1947 = vpop.f32.mrb[0].mxu0
  %v1948 = vadd.f32 %v1895, %v1947
  %v1949 = vpop.f32.mrb[0].mxu0
  %v1950 = vadd.f32 %v1897, %v1949
  %v1951 = vpop.f32.mrb[0].mxu0
  %v1952 = vadd.f32 %v1899, %v1951
  %v1953 = vpop.f32.mrb[0].mxu0
  %v1954 = vadd.f32 %v1901, %v1953
  %1955 = vmatprep.mubr.bf16.mxu0 %v433
  %1956 = vmatmul.mubr.bf16.gmra.mrb[0].mxu0 %v432
  %v1957 = vpop.f32.mrb[0].mxu0
  %v1958 = vadd.f32 %v1905, %v1957
  %v1959 = vpop.f32.mrb[0].mxu0
  %v1960 = vadd.f32 %v1907, %v1959
  %v1961 = vpop.f32.mrb[0].mxu0
  %v1962 = vadd.f32 %v1909, %v1961
  %v1963 = vpop.f32.mrb[0].mxu0
  %v1964 = vadd.f32 %v1911, %v1963
  %1965 = vdwg.mxu0
  %1966 = vmatprep.subr.bf16.mxu0 %v1371
  %1967 = vmatpush1.bf16.msra.mxu0 %v1370
  %1968 = vmatprep.subr.bf16.mxu0 %v1373
  %1969 = vmatpush1.bf16.msra.mxu0 %v1372
  %1970 = vmatprep.subr.bf16.mxu0 %v1375
  %1971 = vmatpush1.bf16.msra.mxu0 %v1374
  %1972 = vmatprep.subr.bf16.mxu0 %v1377
  %1973 = vmatpush1.bf16.msra.mxu0 %v1376
  %1974 = vmatprep.subr.bf16.mxu0 %v1379
  %1975 = vmatpush1.bf16.msra.mxu0 %v1378
  %1976 = vmatprep.subr.bf16.mxu0 %v1381
  %1977 = vmatpush1.bf16.msra.mxu0 %v1380
  %1978 = vmatprep.subr.bf16.mxu0 %v1383
  %1979 = vmatpush1.bf16.msra.mxu0 %v1382
  %1980 = vmatprep.subr.bf16.mxu0 %v1385
  %1981 = vmatpush1.bf16.msra.mxu0 %v1384
  %1982 = vmatprep.subr.bf16.mxu0 %v1387
  %1983 = vmatpush1.bf16.msra.mxu0 %v1386
  %1984 = vmatprep.subr.bf16.mxu0 %v1389
  %1985 = vmatpush1.bf16.msra.mxu0 %v1388
  %1986 = vmatprep.subr.bf16.mxu0 %v1391
  %1987 = vmatpush1.bf16.msra.mxu0 %v1390
  %1988 = vmatprep.subr.bf16.mxu0 %v1393
  %1989 = vmatpush1.bf16.msra.mxu0 %v1392
  %1990 = vmatprep.subr.bf16.mxu0 %v1395
  %1991 = vmatpush1.bf16.msra.mxu0 %v1394
  %1992 = vmatprep.subr.bf16.mxu0 %v1397
  %1993 = vmatpush1.bf16.msra.mxu0 %v1396
  %1994 = vmatprep.subr.bf16.mxu0 %v1399
  %1995 = vmatpush1.bf16.msra.mxu0 %v1398
  %1996 = vmatprep.subr.bf16.mxu0 %v1401
  %1997 = vmatpush1.bf16.msra.mxu0 %v1400
  %1998 = vmatprep.mubr.bf16.mxu0 %v419
  %1999 = vmatmul.mubr.bf16.gmra.mrb[0].mxu0 %v418
  %v2000 = vpop.f32.mrb[0].mxu0
  %v2001 = vadd.f32 %v1948, %v2000
  %v2002 = vpop.f32.mrb[0].mxu0
  %v2003 = vadd.f32 %v1950, %v2002
  %v2004 = vpop.f32.mrb[0].mxu0
  %v2005 = vadd.f32 %v1952, %v2004
  %v2006 = vpop.f32.mrb[0].mxu0
  %v2007 = vadd.f32 %v1954, %v2006
  %2008 = vmatprep.mubr.bf16.mxu0 %v435
  %2009 = vmatmul.mubr.bf16.gmra.mrb[0].mxu0 %v434
  %v2010 = vpop.f32.mrb[0].mxu0
  %v2011 = vadd.f32 %v1958, %v2010
  %v2012 = vpop.f32.mrb[0].mxu0
  %v2013 = vadd.f32 %v1960, %v2012
  %v2014 = vpop.f32.mrb[0].mxu0
  %v2015 = vadd.f32 %v1962, %v2014
  %v2016 = vpop.f32.mrb[0].mxu0
  %v2017 = vadd.f32 %v1964, %v2016
  %2018 = vdwg.mxu0
  %2019 = vmatprep.subr.bf16.mxu0 %v1403
  %2020 = vmatpush1.bf16.msra.mxu0 %v1402
  %2021 = vmatprep.subr.bf16.mxu0 %v1405
  %2022 = vmatpush1.bf16.msra.mxu0 %v1404
  %2023 = vmatprep.subr.bf16.mxu0 %v1407
  %2024 = vmatpush1.bf16.msra.mxu0 %v1406
  %2025 = vmatprep.subr.bf16.mxu0 %v1409
  %2026 = vmatpush1.bf16.msra.mxu0 %v1408
  %2027 = vmatprep.subr.bf16.mxu0 %v1411
  %2028 = vmatpush1.bf16.msra.mxu0 %v1410
  %2029 = vmatprep.subr.bf16.mxu0 %v1413
  %2030 = vmatpush1.bf16.msra.mxu0 %v1412
  %2031 = vmatprep.subr.bf16.mxu0 %v1415
  %2032 = vmatpush1.bf16.msra.mxu0 %v1414
  %2033 = vmatprep.subr.bf16.mxu0 %v1417
  %2034 = vmatpush1.bf16.msra.mxu0 %v1416
  %2035 = vmatprep.subr.bf16.mxu0 %v1419
  %2036 = vmatpush1.bf16.msra.mxu0 %v1418
  %2037 = vmatprep.subr.bf16.mxu0 %v1421
  %2038 = vmatpush1.bf16.msra.mxu0 %v1420
  %2039 = vmatprep.subr.bf16.mxu0 %v1423
  %2040 = vmatpush1.bf16.msra.mxu0 %v1422
  %2041 = vmatprep.subr.bf16.mxu0 %v1425
  %2042 = vmatpush1.bf16.msra.mxu0 %v1424
  %2043 = vmatprep.subr.bf16.mxu0 %v1427
  %2044 = vmatpush1.bf16.msra.mxu0 %v1426
  %2045 = vmatprep.subr.bf16.mxu0 %v1429
  %2046 = vmatpush1.bf16.msra.mxu0 %v1428
  %2047 = vmatprep.subr.bf16.mxu0 %v1431
  %2048 = vmatpush1.bf16.msra.mxu0 %v1430
  %2049 = vmatprep.subr.bf16.mxu0 %v1433
  %2050 = vmatpush1.bf16.msra.mxu0 %v1432
  %2051 = vmatprep.mubr.bf16.mxu0 %v421
  %2052 = vmatmul.mubr.bf16.gmra.mrb[0].mxu0 %v420
  %v2053 = vpop.f32.mrb[0].mxu0
  %v2054 = vadd.f32 %v2001, %v2053
  %v2055 = vpop.f32.mrb[0].mxu0
  %v2056 = vadd.f32 %v2003, %v2055
  %v2057 = vpop.f32.mrb[0].mxu0
  %v2058 = vadd.f32 %v2005, %v2057
  %v2059 = vpop.f32.mrb[0].mxu0
  %v2060 = vadd.f32 %v2007, %v2059
  %2061 = vmatprep.mubr.bf16.mxu0 %v437
  %2062 = vmatmul.mubr.bf16.gmra.mrb[0].mxu0 %v436
  %v2063 = vpop.f32.mrb[0].mxu0
  %v2064 = vadd.f32 %v2011, %v2063
  %v2065 = vpop.f32.mrb[0].mxu0
  %v2066 = vadd.f32 %v2013, %v2065
  %v2067 = vpop.f32.mrb[0].mxu0
  %v2068 = vadd.f32 %v2015, %v2067
  %v2069 = vpop.f32.mrb[0].mxu0
  %v2070 = vadd.f32 %v2017, %v2069
  %2071 = vdwg.mxu0
  %2072 = vmatprep.subr.bf16.mxu0 %v1435
  %2073 = vmatpush1.bf16.msra.mxu0 %v1434
  %2074 = vmatprep.subr.bf16.mxu0 %v1437
  %2075 = vmatpush1.bf16.msra.mxu0 %v1436
  %2076 = vmatprep.subr.bf16.mxu0 %v1439
  %2077 = vmatpush1.bf16.msra.mxu0 %v1438
  %2078 = vmatprep.subr.bf16.mxu0 %v1441
  %2079 = vmatpush1.bf16.msra.mxu0 %v1440
  %2080 = vmatprep.subr.bf16.mxu0 %v1443
  %2081 = vmatpush1.bf16.msra.mxu0 %v1442
  %2082 = vmatprep.subr.bf16.mxu0 %v1445
  %2083 = vmatpush1.bf16.msra.mxu0 %v1444
  %2084 = vmatprep.subr.bf16.mxu0 %v1447
  %2085 = vmatpush1.bf16.msra.mxu0 %v1446
  %2086 = vmatprep.subr.bf16.mxu0 %v1449
  %2087 = vmatpush1.bf16.msra.mxu0 %v1448
  %2088 = vmatprep.subr.bf16.mxu0 %v1451
  %2089 = vmatpush1.bf16.msra.mxu0 %v1450
  %2090 = vmatprep.subr.bf16.mxu0 %v1453
  %2091 = vmatpush1.bf16.msra.mxu0 %v1452
  %2092 = vmatprep.subr.bf16.mxu0 %v1455
  %2093 = vmatpush1.bf16.msra.mxu0 %v1454
  %2094 = vmatprep.subr.bf16.mxu0 %v1457
  %2095 = vmatpush1.bf16.msra.mxu0 %v1456
  %2096 = vmatprep.subr.bf16.mxu0 %v1459
  %2097 = vmatpush1.bf16.msra.mxu0 %v1458
  %2098 = vmatprep.subr.bf16.mxu0 %v1461
  %2099 = vmatpush1.bf16.msra.mxu0 %v1460
  %2100 = vmatprep.subr.bf16.mxu0 %v1463
  %2101 = vmatpush1.bf16.msra.mxu0 %v1462
  %2102 = vmatprep.subr.bf16.mxu0 %v1465
  %2103 = vmatpush1.bf16.msra.mxu0 %v1464
  %2104 = vmatprep.mubr.bf16.mxu0 %v423
  %2105 = vmatmul.mubr.bf16.gmra.mrb[0].mxu0 %v422
  %v2106 = vpop.f32.mrb[0].mxu0
  %v2107 = vadd.f32 %v2054, %v2106
  %v2108 = vpop.f32.mrb[0].mxu0
  %v2109 = vadd.f32 %v2056, %v2108
  %v2110 = vpop.f32.mrb[0].mxu0
  %v2111 = vadd.f32 %v2058, %v2110
  %v2112 = vpop.f32.mrb[0].mxu0
  %v2113 = vadd.f32 %v2060, %v2112
  %2114 = vmatprep.mubr.bf16.mxu0 %v439
  %2115 = vmatmul.mubr.bf16.gmra.mrb[0].mxu0 %v438
  %v2116 = vpop.f32.mrb[0].mxu0
  %v2117 = vadd.f32 %v2064, %v2116
  %v2118 = vpop.f32.mrb[0].mxu0
  %v2119 = vadd.f32 %v2066, %v2118
  %v2120 = vpop.f32.mrb[0].mxu0
  %v2121 = vadd.f32 %v2068, %v2120
  %v2122 = vpop.f32.mrb[0].mxu0
  %v2123 = vadd.f32 %v2070, %v2122
  %2124 = vdwg.mxu0
  %2125 = vmatprep.subr.bf16.mxu0 %v1467
  %2126 = vmatpush1.bf16.msra.mxu0 %v1466
  %2127 = vmatprep.subr.bf16.mxu0 %v1469
  %2128 = vmatpush1.bf16.msra.mxu0 %v1468
  %2129 = vmatprep.subr.bf16.mxu0 %v1471
  %2130 = vmatpush1.bf16.msra.mxu0 %v1470
  %2131 = vmatprep.subr.bf16.mxu0 %v1473
  %2132 = vmatpush1.bf16.msra.mxu0 %v1472
  %2133 = vmatprep.subr.bf16.mxu0 %v1475
  %2134 = vmatpush1.bf16.msra.mxu0 %v1474
  %2135 = vmatprep.subr.bf16.mxu0 %v1477
  %2136 = vmatpush1.bf16.msra.mxu0 %v1476
  %2137 = vmatprep.subr.bf16.mxu0 %v1479
  %2138 = vmatpush1.bf16.msra.mxu0 %v1478
  %2139 = vmatprep.subr.bf16.mxu0 %v1481
  %2140 = vmatpush1.bf16.msra.mxu0 %v1480
  %2141 = vmatprep.subr.bf16.mxu0 %v1483
  %2142 = vmatpush1.bf16.msra.mxu0 %v1482
  %2143 = vmatprep.subr.bf16.mxu0 %v1485
  %2144 = vmatpush1.bf16.msra.mxu0 %v1484
  %2145 = vmatprep.subr.bf16.mxu0 %v1487
  %2146 = vmatpush1.bf16.msra.mxu0 %v1486
  %2147 = vmatprep.subr.bf16.mxu0 %v1489
  %2148 = vmatpush1.bf16.msra.mxu0 %v1488
  %2149 = vmatprep.subr.bf16.mxu0 %v1491
  %2150 = vmatpush1.bf16.msra.mxu0 %v1490
  %2151 = vmatprep.subr.bf16.mxu0 %v1493
  %2152 = vmatpush1.bf16.msra.mxu0 %v1492
  %2153 = vmatprep.subr.bf16.mxu0 %v1495
  %2154 = vmatpush1.bf16.msra.mxu0 %v1494
  %2155 = vmatprep.subr.bf16.mxu0 %v1497
  %2156 = vmatpush1.bf16.msra.mxu0 %v1496
  %2157 = vmatprep.mubr.bf16.mxu0 %v425
  %2158 = vmatmul.mubr.bf16.gmra.mrb[0].mxu0 %v424
  %v2159 = vpop.f32.mrb[0].mxu0
  %v2160 = vadd.f32 %v2107, %v2159
  %v2161 = vpop.f32.mrb[0].mxu0
  %v2162 = vadd.f32 %v2109, %v2161
  %v2163 = vpop.f32.mrb[0].mxu0
  %v2164 = vadd.f32 %v2111, %v2163
  %v2165 = vpop.f32.mrb[0].mxu0
  %v2166 = vadd.f32 %v2113, %v2165
  %2167 = vmatprep.mubr.bf16.mxu0 %v441
  %2168 = vmatmul.mubr.bf16.gmra.mrb[0].mxu0 %v440
  %v2169 = vpop.f32.mrb[0].mxu0
  %v2170 = vadd.f32 %v2117, %v2169
  %v2171 = vpop.f32.mrb[0].mxu0
  %v2172 = vadd.f32 %v2119, %v2171
  %v2173 = vpop.f32.mrb[0].mxu0
  %v2174 = vadd.f32 %v2121, %v2173
  %v2175 = vpop.f32.mrb[0].mxu0
  %v2176 = vadd.f32 %v2123, %v2175
  %2177 = vdwg.mxu0
  %v2178 = vmax.f32 %v2160, 0.0
  %v2179 = vmax.f32 %v2162, 0.0
  %v2180 = vmax.f32 %v2164, 0.0
  %v2181 = vmax.f32 %v2166, 0.0
  %v2182 = vmax.f32 %v2170, 0.0
  %v2183 = vmax.f32 %v2172, 0.0
  %v2184 = vmax.f32 %v2174, 0.0
  %v2185 = vmax.f32 %v2176, 0.0
  %v2186 = vpack.c.bf16 %v2180, %v2178
  %v2187 = vpack.c.bf16 %v2181, %v2179
  %v2188 = vpack.c.bf16 %v2184, %v2182
  %v2189 = vpack.c.bf16 %v2185, %v2183
  %v2194 = vunpack.c.l.b16 %v2186
  %v2195 = vunpack.c.l.b16 %v2187
  %v2196 = vunpack.c.h.b16 %v2186
  %v2197 = vunpack.c.h.b16 %v2187
  %v2198 = vunpack.c.l.b16 %v2188
  %v2199 = vunpack.c.l.b16 %v2189
  %v2200 = vunpack.c.h.b16 %v2188
  %v2201 = vunpack.c.h.b16 %v2189
  %v2202 = vpack.c.b16 %v2195, %v2194
  %v2203 = vpack.c.b16 %v2197, %v2196
  %v2204 = vpack.c.b16 %v2199, %v2198
  %v2205 = vpack.c.b16 %v2201, %v2200
  %2210 = vst [vmem:[%s3] sm:$0xff] %v2202
  %2211 = vst [vmem:[%s3 + $0x8] sm:$0xff] %v2203
  %2212 = vst [vmem:[%s3 + $0x10] sm:$0xff] %v2204
  %2213 = vst [vmem:[%s3 + $0x18] sm:$0xff] %v2205
  // Predicated region
  $region14: #{md_e_attr_forward.7} parent=0 // pred_check
    _
  $region15: #{md_e_attr_forward.7} parent=0 // pred_check_branch
    %2215 = sbr.rel (0) target = $region17
  $region16: #{md_e_attr_forward.7} parent=0 // pred_region
    _
  $region17: #{md_e_attr_forward.7} parent=0 // pred_fallthru
    _
  // Predicated region
  $region18: #{md_e_attr_forward.7} parent=0 // pred_check
    _
  $region19: #{md_e_attr_forward.7} parent=0 // pred_check_branch
    %2217 = sbr.rel (0) target = $region21
  $region20: #{md_e_attr_forward.7} parent=0 // pred_region
    _
  $region21: #{md_e_attr_forward.7} parent=0 // pred_fallthru
    _

// kernel: md_e_attr_forward.8
$region0: #{md_e_attr_forward.8}
  #allocation0 [shape = 'u32[]', space=smem, size = 0x4, offset = 0x4, fixed_abs, tag = 'smem constant byte address 0x4 - core index']
  #allocation1 [shape = 'u32[144,128]{1,0:T(1,128)}', space=vmem, size = 0x12000, scoped, tag = 'internal scratch']
  %s0 = inlined_call_operand.vmem [shape: bf16[8,4096], index: 0, kind: input, shape index: {}]
  %s1 = inlined_call_operand.vmem [shape: bf16[4096,256], index: 1, kind: input, shape index: {}]
  %s2 = inlined_call_operand.vmem [shape: f32[1,256], index: 2, kind: input, shape index: {}]
  %s3 = inlined_call_operand.vmem [shape: bf16[8,256], index: 3, kind: output, shape index: {}]
  %s4 = sld [smem:[#allocation0]]
  $region22: #{md_e_attr_forward.8} parent=0
    _
  %s6 = ssub.s32 1, %s4
  %s7 = scalar_select 0, %s6, %s4
  // Predicated region
  $region2: #{md_e_attr_forward.8} parent=0 // pred_check
    _
  $region3: #{md_e_attr_forward.8} parent=0 // pred_check_branch
    %9 = sbr.rel (0) target = $region5
  $region4: #{md_e_attr_forward.8} parent=0 // pred_region
    _
  $region5: #{md_e_attr_forward.8} parent=0 // pred_fallthru
    _
  // Predicated region
  $region6: #{md_e_attr_forward.8} parent=0 // pred_check
    _
  $region7: #{md_e_attr_forward.8} parent=0 // pred_check_branch
    %11 = sbr.rel (0) target = $region9
  $region8: #{md_e_attr_forward.8} parent=0 // pred_region
    _
  $region9: #{md_e_attr_forward.8} parent=0 // pred_fallthru
    _
  // Predicated region
  $region10: #{md_e_attr_forward.8} parent=0 // pred_check
    _
  $region11: #{md_e_attr_forward.8} parent=0 // pred_check_branch
    %13 = sbr.rel (0) target = $region13
  $region12: #{md_e_attr_forward.8} parent=0 // pred_region
    _
  $region13: #{md_e_attr_forward.8} parent=0 // pred_fallthru
    _
  %v14 = vld [vmem:[%s0] sm:$0xff]
  %v15 = vld [vmem:[%s0 + $0x8] sm:$0xff]
  %v16 = vld [vmem:[%s0 + $0x10] sm:$0xff]
  %v17 = vld [vmem:[%s0 + $0x18] sm:$0xff]
  %v18 = vld [vmem:[%s0 + $0x20] sm:$0xff]
  %v19 = vld [vmem:[%s0 + $0x28] sm:$0xff]
  %v20 = vld [vmem:[%s0 + $0x30] sm:$0xff]
  %v21 = vld [vmem:[%s0 + $0x38] sm:$0xff]
  %v22 = vld [vmem:[%s0 + $0x40] sm:$0xff]
  %v23 = vld [vmem:[%s0 + $0x48] sm:$0xff]
  %v24 = vld [vmem:[%s0 + $0x50] sm:$0xff]
  %v25 = vld [vmem:[%s0 + $0x58] sm:$0xff]
  %v26 = vld [vmem:[%s0 + $0x60] sm:$0xff]
  %v27 = vld [vmem:[%s0 + $0x68] sm:$0xff]
  %v28 = vld [vmem:[%s0 + $0x70] sm:$0xff]
  %v29 = vld [vmem:[%s0 + $0x78] sm:$0xff]
  %v30 = vld [vmem:[%s1] sm:$0xff]
  %v31 = vld [vmem:[%s1 + $0x8] sm:$0xff]
  %v32 = vld [vmem:[%s1 + $0x10] sm:$0xff]
  %v33 = vld [vmem:[%s1 + $0x18] sm:$0xff]
  %v34 = vld [vmem:[%s1 + $0x20] sm:$0xff]
  %v35 = vld [vmem:[%s1 + $0x28] sm:$0xff]
  %v36 = vld [vmem:[%s1 + $0x30] sm:$0xff]
  %v37 = vld [vmem:[%s1 + $0x38] sm:$0xff]
  %v38 = vld [vmem:[%s1 + $0x40] sm:$0xff]
  %v39 = vld [vmem:[%s1 + $0x48] sm:$0xff]
  %v40 = vld [vmem:[%s1 + $0x50] sm:$0xff]
  %v41 = vld [vmem:[%s1 + $0x58] sm:$0xff]
  %v42 = vld [vmem:[%s1 + $0x60] sm:$0xff]
  %v43 = vld [vmem:[%s1 + $0x68] sm:$0xff]
  %v44 = vld [vmem:[%s1 + $0x70] sm:$0xff]
  %v45 = vld [vmem:[%s1 + $0x78] sm:$0xff]
  %v46 = vld [vmem:[%s1 + $0x80] sm:$0xff]
  %v47 = vld [vmem:[%s1 + $0x88] sm:$0xff]
  %v48 = vld [vmem:[%s1 + $0x90] sm:$0xff]
  %v49 = vld [vmem:[%s1 + $0x98] sm:$0xff]
  %v50 = vld [vmem:[%s1 + $0xa0] sm:$0xff]
  %v51 = vld [vmem:[%s1 + $0xa8] sm:$0xff]
  %v52 = vld [vmem:[%s1 + $0xb0] sm:$0xff]
  %v53 = vld [vmem:[%s1 + $0xb8] sm:$0xff]
  %v54 = vld [vmem:[%s1 + $0xc0] sm:$0xff]
  %v55 = vld [vmem:[%s1 + $0xc8] sm:$0xff]
  %v56 = vld [vmem:[%s1 + $0xd0] sm:$0xff]
  %v57 = vld [vmem:[%s1 + $0xd8] sm:$0xff]
  %v58 = vld [vmem:[%s1 + $0xe0] sm:$0xff]
  %v59 = vld [vmem:[%s1 + $0xe8] sm:$0xff]
  %v60 = vld [vmem:[%s1 + $0xf0] sm:$0xff]
  %v61 = vld [vmem:[%s1 + $0xf8] sm:$0xff]
  %v62 = vld [vmem:[%s1 + $0x100] sm:$0xff]
  %v63 = vld [vmem:[%s1 + $0x108] sm:$0xff]
  %v64 = vld [vmem:[%s1 + $0x110] sm:$0xff]
  %v65 = vld [vmem:[%s1 + $0x118] sm:$0xff]
  %v66 = vld [vmem:[%s1 + $0x120] sm:$0xff]
  %v67 = vld [vmem:[%s1 + $0x128] sm:$0xff]
  %v68 = vld [vmem:[%s1 + $0x130] sm:$0xff]
  %v69 = vld [vmem:[%s1 + $0x138] sm:$0xff]
  %v70 = vld [vmem:[%s1 + $0x140] sm:$0xff]
  %v71 = vld [vmem:[%s1 + $0x148] sm:$0xff]
  %v72 = vld [vmem:[%s1 + $0x150] sm:$0xff]
  %v73 = vld [vmem:[%s1 + $0x158] sm:$0xff]
  %v74 = vld [vmem:[%s1 + $0x160] sm:$0xff]
  %v75 = vld [vmem:[%s1 + $0x168] sm:$0xff]
  %v76 = vld [vmem:[%s1 + $0x170] sm:$0xff]
  %v77 = vld [vmem:[%s1 + $0x178] sm:$0xff]
  %v78 = vld [vmem:[%s1 + $0x180] sm:$0xff]
  %v79 = vld [vmem:[%s1 + $0x188] sm:$0xff]
  %v80 = vld [vmem:[%s1 + $0x190] sm:$0xff]
  %v81 = vld [vmem:[%s1 + $0x198] sm:$0xff]
  %v82 = vld [vmem:[%s1 + $0x1a0] sm:$0xff]
  %v83 = vld [vmem:[%s1 + $0x1a8] sm:$0xff]
  %v84 = vld [vmem:[%s1 + $0x1b0] sm:$0xff]
  %v85 = vld [vmem:[%s1 + $0x1b8] sm:$0xff]
  %v86 = vld [vmem:[%s1 + $0x1c0] sm:$0xff]
  %v87 = vld [vmem:[%s1 + $0x1c8] sm:$0xff]
  %v88 = vld [vmem:[%s1 + $0x1d0] sm:$0xff]
  %v89 = vld [vmem:[%s1 + $0x1d8] sm:$0xff]
  %v90 = vld [vmem:[%s1 + $0x1e0] sm:$0xff]
  %v91 = vld [vmem:[%s1 + $0x1e8] sm:$0xff]
  %v92 = vld [vmem:[%s1 + $0x1f0] sm:$0xff]
  %v93 = vld [vmem:[%s1 + $0x1f8] sm:$0xff]
  %v94 = vld [vmem:[%s1 + $0x200] sm:$0xff]
  %v95 = vld [vmem:[%s1 + $0x208] sm:$0xff]
  %v96 = vld [vmem:[%s1 + $0x210] sm:$0xff]
  %v97 = vld [vmem:[%s1 + $0x218] sm:$0xff]
  %v98 = vld [vmem:[%s1 + $0x220] sm:$0xff]
  %v99 = vld [vmem:[%s1 + $0x228] sm:$0xff]
  %v100 = vld [vmem:[%s1 + $0x230] sm:$0xff]
  %v101 = vld [vmem:[%s1 + $0x238] sm:$0xff]
  %v102 = vld [vmem:[%s1 + $0x240] sm:$0xff]
  %v103 = vld [vmem:[%s1 + $0x248] sm:$0xff]
  %v104 = vld [vmem:[%s1 + $0x250] sm:$0xff]
  %v105 = vld [vmem:[%s1 + $0x258] sm:$0xff]
  %v106 = vld [vmem:[%s1 + $0x260] sm:$0xff]
  %v107 = vld [vmem:[%s1 + $0x268] sm:$0xff]
  %v108 = vld [vmem:[%s1 + $0x270] sm:$0xff]
  %v109 = vld [vmem:[%s1 + $0x278] sm:$0xff]
  %v110 = vld [vmem:[%s1 + $0x280] sm:$0xff]
  %v111 = vld [vmem:[%s1 + $0x288] sm:$0xff]
  %v112 = vld [vmem:[%s1 + $0x290] sm:$0xff]
  %v113 = vld [vmem:[%s1 + $0x298] sm:$0xff]
  %v114 = vld [vmem:[%s1 + $0x2a0] sm:$0xff]
  %v115 = vld [vmem:[%s1 + $0x2a8] sm:$0xff]
  %v116 = vld [vmem:[%s1 + $0x2b0] sm:$0xff]
  %v117 = vld [vmem:[%s1 + $0x2b8] sm:$0xff]
  %v118 = vld [vmem:[%s1 + $0x2c0] sm:$0xff]
  %v119 = vld [vmem:[%s1 + $0x2c8] sm:$0xff]
  %v120 = vld [vmem:[%s1 + $0x2d0] sm:$0xff]
  %v121 = vld [vmem:[%s1 + $0x2d8] sm:$0xff]
  %v122 = vld [vmem:[%s1 + $0x2e0] sm:$0xff]
  %v123 = vld [vmem:[%s1 + $0x2e8] sm:$0xff]
  %v124 = vld [vmem:[%s1 + $0x2f0] sm:$0xff]
  %v125 = vld [vmem:[%s1 + $0x2f8] sm:$0xff]
  %v126 = vld [vmem:[%s1 + $0x300] sm:$0xff]
  %v127 = vld [vmem:[%s1 + $0x308] sm:$0xff]
  %v128 = vld [vmem:[%s1 + $0x310] sm:$0xff]
  %v129 = vld [vmem:[%s1 + $0x318] sm:$0xff]
  %v130 = vld [vmem:[%s1 + $0x320] sm:$0xff]
  %v131 = vld [vmem:[%s1 + $0x328] sm:$0xff]
  %v132 = vld [vmem:[%s1 + $0x330] sm:$0xff]
  %v133 = vld [vmem:[%s1 + $0x338] sm:$0xff]
  %v134 = vld [vmem:[%s1 + $0x340] sm:$0xff]
  %v135 = vld [vmem:[%s1 + $0x348] sm:$0xff]
  %v136 = vld [vmem:[%s1 + $0x350] sm:$0xff]
  %v137 = vld [vmem:[%s1 + $0x358] sm:$0xff]
  %v138 = vld [vmem:[%s1 + $0x360] sm:$0xff]
  %v139 = vld [vmem:[%s1 + $0x368] sm:$0xff]
  %v140 = vld [vmem:[%s1 + $0x370] sm:$0xff]
  %v141 = vld [vmem:[%s1 + $0x378] sm:$0xff]
  %v142 = vld [vmem:[%s1 + $0x380] sm:$0xff]
  %v143 = vld [vmem:[%s1 + $0x388] sm:$0xff]
  %v144 = vld [vmem:[%s1 + $0x390] sm:$0xff]
  %v145 = vld [vmem:[%s1 + $0x398] sm:$0xff]
  %v146 = vld [vmem:[%s1 + $0x3a0] sm:$0xff]
  %v147 = vld [vmem:[%s1 + $0x3a8] sm:$0xff]
  %v148 = vld [vmem:[%s1 + $0x3b0] sm:$0xff]
  %v149 = vld [vmem:[%s1 + $0x3b8] sm:$0xff]
  %v150 = vld [vmem:[%s1 + $0x3c0] sm:$0xff]
  %v151 = vld [vmem:[%s1 + $0x3c8] sm:$0xff]
  %v152 = vld [vmem:[%s1 + $0x3d0] sm:$0xff]
  %v153 = vld [vmem:[%s1 + $0x3d8] sm:$0xff]
  %v154 = vld [vmem:[%s1 + $0x3e0] sm:$0xff]
  %v155 = vld [vmem:[%s1 + $0x3e8] sm:$0xff]
  %v156 = vld [vmem:[%s1 + $0x3f0] sm:$0xff]
  %v157 = vld [vmem:[%s1 + $0x3f8] sm:$0xff]
  %v158 = vld [vmem:[%s1 + $0x400] sm:$0xff]
  %v159 = vld [vmem:[%s1 + $0x408] sm:$0xff]
  %v160 = vld [vmem:[%s1 + $0x410] sm:$0xff]
  %v161 = vld [vmem:[%s1 + $0x418] sm:$0xff]
  %v162 = vld [vmem:[%s1 + $0x420] sm:$0xff]
  %v163 = vld [vmem:[%s1 + $0x428] sm:$0xff]
  %v164 = vld [vmem:[%s1 + $0x430] sm:$0xff]
  %v165 = vld [vmem:[%s1 + $0x438] sm:$0xff]
  %v166 = vld [vmem:[%s1 + $0x440] sm:$0xff]
  %v167 = vld [vmem:[%s1 + $0x448] sm:$0xff]
  %v168 = vld [vmem:[%s1 + $0x450] sm:$0xff]
  %v169 = vld [vmem:[%s1 + $0x458] sm:$0xff]
  %v170 = vld [vmem:[%s1 + $0x460] sm:$0xff]
  %v171 = vld [vmem:[%s1 + $0x468] sm:$0xff]
  %v172 = vld [vmem:[%s1 + $0x470] sm:$0xff]
  %v173 = vld [vmem:[%s1 + $0x478] sm:$0xff]
  %v174 = vld [vmem:[%s1 + $0x480] sm:$0xff]
  %v175 = vld [vmem:[%s1 + $0x488] sm:$0xff]
  %v176 = vld [vmem:[%s1 + $0x490] sm:$0xff]
  %v177 = vld [vmem:[%s1 + $0x498] sm:$0xff]
  %v178 = vld [vmem:[%s1 + $0x4a0] sm:$0xff]
  %v179 = vld [vmem:[%s1 + $0x4a8] sm:$0xff]
  %v180 = vld [vmem:[%s1 + $0x4b0] sm:$0xff]
  %v181 = vld [vmem:[%s1 + $0x4b8] sm:$0xff]
  %v182 = vld [vmem:[%s1 + $0x4c0] sm:$0xff]
  %v183 = vld [vmem:[%s1 + $0x4c8] sm:$0xff]
  %v184 = vld [vmem:[%s1 + $0x4d0] sm:$0xff]
  %v185 = vld [vmem:[%s1 + $0x4d8] sm:$0xff]
  %v186 = vld [vmem:[%s1 + $0x4e0] sm:$0xff]
  %v187 = vld [vmem:[%s1 + $0x4e8] sm:$0xff]
  %v188 = vld [vmem:[%s1 + $0x4f0] sm:$0xff]
  %v189 = vld [vmem:[%s1 + $0x4f8] sm:$0xff]
  %v190 = vld [vmem:[%s1 + $0x500] sm:$0xff]
  %v191 = vld [vmem:[%s1 + $0x508] sm:$0xff]
  %v192 = vld [vmem:[%s1 + $0x510] sm:$0xff]
  %v193 = vld [vmem:[%s1 + $0x518] sm:$0xff]
  %v194 = vld [vmem:[%s1 + $0x520] sm:$0xff]
  %v195 = vld [vmem:[%s1 + $0x528] sm:$0xff]
  %v196 = vld [vmem:[%s1 + $0x530] sm:$0xff]
  %v197 = vld [vmem:[%s1 + $0x538] sm:$0xff]
  %v198 = vld [vmem:[%s1 + $0x540] sm:$0xff]
  %v199 = vld [vmem:[%s1 + $0x548] sm:$0xff]
  %v200 = vld [vmem:[%s1 + $0x550] sm:$0xff]
  %v201 = vld [vmem:[%s1 + $0x558] sm:$0xff]
  %v202 = vld [vmem:[%s1 + $0x560] sm:$0xff]
  %v203 = vld [vmem:[%s1 + $0x568] sm:$0xff]
  %v204 = vld [vmem:[%s1 + $0x570] sm:$0xff]
  %v205 = vld [vmem:[%s1 + $0x578] sm:$0xff]
  %v206 = vld [vmem:[%s1 + $0x580] sm:$0xff]
  %v207 = vld [vmem:[%s1 + $0x588] sm:$0xff]
  %v208 = vld [vmem:[%s1 + $0x590] sm:$0xff]
  %v209 = vld [vmem:[%s1 + $0x598] sm:$0xff]
  %v210 = vld [vmem:[%s1 + $0x5a0] sm:$0xff]
  %v211 = vld [vmem:[%s1 + $0x5a8] sm:$0xff]
  %v212 = vld [vmem:[%s1 + $0x5b0] sm:$0xff]
  %v213 = vld [vmem:[%s1 + $0x5b8] sm:$0xff]
  %v214 = vld [vmem:[%s1 + $0x5c0] sm:$0xff]
  %v215 = vld [vmem:[%s1 + $0x5c8] sm:$0xff]
  %v216 = vld [vmem:[%s1 + $0x5d0] sm:$0xff]
  %v217 = vld [vmem:[%s1 + $0x5d8] sm:$0xff]
  %v218 = vld [vmem:[%s1 + $0x5e0] sm:$0xff]
  %v219 = vld [vmem:[%s1 + $0x5e8] sm:$0xff]
  %v220 = vld [vmem:[%s1 + $0x5f0] sm:$0xff]
  %v221 = vld [vmem:[%s1 + $0x5f8] sm:$0xff]
  %v222 = vld [vmem:[%s1 + $0x600] sm:$0xff]
  %v223 = vld [vmem:[%s1 + $0x608] sm:$0xff]
  %v224 = vld [vmem:[%s1 + $0x610] sm:$0xff]
  %v225 = vld [vmem:[%s1 + $0x618] sm:$0xff]
  %v226 = vld [vmem:[%s1 + $0x620] sm:$0xff]
  %v227 = vld [vmem:[%s1 + $0x628] sm:$0xff]
  %v228 = vld [vmem:[%s1 + $0x630] sm:$0xff]
  %v229 = vld [vmem:[%s1 + $0x638] sm:$0xff]
  %v230 = vld [vmem:[%s1 + $0x640] sm:$0xff]
  %v231 = vld [vmem:[%s1 + $0x648] sm:$0xff]
  %v232 = vld [vmem:[%s1 + $0x650] sm:$0xff]
  %v233 = vld [vmem:[%s1 + $0x658] sm:$0xff]
  %v234 = vld [vmem:[%s1 + $0x660] sm:$0xff]
  %v235 = vld [vmem:[%s1 + $0x668] sm:$0xff]
  %v236 = vld [vmem:[%s1 + $0x670] sm:$0xff]
  %v237 = vld [vmem:[%s1 + $0x678] sm:$0xff]
  %v238 = vld [vmem:[%s1 + $0x680] sm:$0xff]
  %v239 = vld [vmem:[%s1 + $0x688] sm:$0xff]
  %v240 = vld [vmem:[%s1 + $0x690] sm:$0xff]
  %v241 = vld [vmem:[%s1 + $0x698] sm:$0xff]
  %v242 = vld [vmem:[%s1 + $0x6a0] sm:$0xff]
  %v243 = vld [vmem:[%s1 + $0x6a8] sm:$0xff]
  %v244 = vld [vmem:[%s1 + $0x6b0] sm:$0xff]
  %v245 = vld [vmem:[%s1 + $0x6b8] sm:$0xff]
  %v246 = vld [vmem:[%s1 + $0x6c0] sm:$0xff]
  %v247 = vld [vmem:[%s1 + $0x6c8] sm:$0xff]
  %v248 = vld [vmem:[%s1 + $0x6d0] sm:$0xff]
  %v249 = vld [vmem:[%s1 + $0x6d8] sm:$0xff]
  %v250 = vld [vmem:[%s1 + $0x6e0] sm:$0xff]
  %v251 = vld [vmem:[%s1 + $0x6e8] sm:$0xff]
  %v252 = vld [vmem:[%s1 + $0x6f0] sm:$0xff]
  %v253 = vld [vmem:[%s1 + $0x6f8] sm:$0xff]
  %v254 = vld [vmem:[%s1 + $0x700] sm:$0xff]
  %v255 = vld [vmem:[%s1 + $0x708] sm:$0xff]
  %v256 = vld [vmem:[%s1 + $0x710] sm:$0xff]
  %v257 = vld [vmem:[%s1 + $0x718] sm:$0xff]
  %v258 = vld [vmem:[%s1 + $0x720] sm:$0xff]
  %v259 = vld [vmem:[%s1 + $0x728] sm:$0xff]
  %v260 = vld [vmem:[%s1 + $0x730] sm:$0xff]
  %v261 = vld [vmem:[%s1 + $0x738] sm:$0xff]
  %v262 = vld [vmem:[%s1 + $0x740] sm:$0xff]
  %v263 = vld [vmem:[%s1 + $0x748] sm:$0xff]
  %v264 = vld [vmem:[%s1 + $0x750] sm:$0xff]
  %v265 = vld [vmem:[%s1 + $0x758] sm:$0xff]
  %v266 = vld [vmem:[%s1 + $0x760] sm:$0xff]
  %v267 = vld [vmem:[%s1 + $0x768] sm:$0xff]
  %v268 = vld [vmem:[%s1 + $0x770] sm:$0xff]
  %v269 = vld [vmem:[%s1 + $0x778] sm:$0xff]
  %v270 = vld [vmem:[%s1 + $0x780] sm:$0xff]
  %v271 = vld [vmem:[%s1 + $0x788] sm:$0xff]
  %v272 = vld [vmem:[%s1 + $0x790] sm:$0xff]
  %v273 = vld [vmem:[%s1 + $0x798] sm:$0xff]
  %v274 = vld [vmem:[%s1 + $0x7a0] sm:$0xff]
  %v275 = vld [vmem:[%s1 + $0x7a8] sm:$0xff]
  %v276 = vld [vmem:[%s1 + $0x7b0] sm:$0xff]
  %v277 = vld [vmem:[%s1 + $0x7b8] sm:$0xff]
  %v278 = vld [vmem:[%s1 + $0x7c0] sm:$0xff]
  %v279 = vld [vmem:[%s1 + $0x7c8] sm:$0xff]
  %v280 = vld [vmem:[%s1 + $0x7d0] sm:$0xff]
  %v281 = vld [vmem:[%s1 + $0x7d8] sm:$0xff]
  %v282 = vld [vmem:[%s1 + $0x7e0] sm:$0xff]
  %v283 = vld [vmem:[%s1 + $0x7e8] sm:$0xff]
  %v284 = vld [vmem:[%s1 + $0x7f0] sm:$0xff]
  %v285 = vld [vmem:[%s1 + $0x7f8] sm:$0xff]
  %v286 = vld [vmem:[%s1 + $0x800] sm:$0xff]
  %v287 = vld [vmem:[%s1 + $0x808] sm:$0xff]
  %v288 = vld [vmem:[%s1 + $0x810] sm:$0xff]
  %v289 = vld [vmem:[%s1 + $0x818] sm:$0xff]
  %v290 = vld [vmem:[%s1 + $0x820] sm:$0xff]
  %v291 = vld [vmem:[%s1 + $0x828] sm:$0xff]
  %v292 = vld [vmem:[%s1 + $0x830] sm:$0xff]
  %v293 = vld [vmem:[%s1 + $0x838] sm:$0xff]
  %v294 = vld [vmem:[%s1 + $0x840] sm:$0xff]
  %v295 = vld [vmem:[%s1 + $0x848] sm:$0xff]
  %v296 = vld [vmem:[%s1 + $0x850] sm:$0xff]
  %v297 = vld [vmem:[%s1 + $0x858] sm:$0xff]
  %v298 = vld [vmem:[%s1 + $0x860] sm:$0xff]
  %v299 = vld [vmem:[%s1 + $0x868] sm:$0xff]
  %v300 = vld [vmem:[%s1 + $0x870] sm:$0xff]
  %v301 = vld [vmem:[%s1 + $0x878] sm:$0xff]
  %v302 = vld [vmem:[%s1 + $0x880] sm:$0xff]
  %v303 = vld [vmem:[%s1 + $0x888] sm:$0xff]
  %v304 = vld [vmem:[%s1 + $0x890] sm:$0xff]
  %v305 = vld [vmem:[%s1 + $0x898] sm:$0xff]
  %v306 = vld [vmem:[%s1 + $0x8a0] sm:$0xff]
  %v307 = vld [vmem:[%s1 + $0x8a8] sm:$0xff]
  %v308 = vld [vmem:[%s1 + $0x8b0] sm:$0xff]
  %v309 = vld [vmem:[%s1 + $0x8b8] sm:$0xff]
  %v310 = vld [vmem:[%s1 + $0x8c0] sm:$0xff]
  %v311 = vld [vmem:[%s1 + $0x8c8] sm:$0xff]
  %v312 = vld [vmem:[%s1 + $0x8d0] sm:$0xff]
  %v313 = vld [vmem:[%s1 + $0x8d8] sm:$0xff]
  %v314 = vld [vmem:[%s1 + $0x8e0] sm:$0xff]
  %v315 = vld [vmem:[%s1 + $0x8e8] sm:$0xff]
  %v316 = vld [vmem:[%s1 + $0x8f0] sm:$0xff]
  %v317 = vld [vmem:[%s1 + $0x8f8] sm:$0xff]
  %v318 = vld [vmem:[%s1 + $0x900] sm:$0xff]
  %v319 = vld [vmem:[%s1 + $0x908] sm:$0xff]
  %v320 = vld [vmem:[%s1 + $0x910] sm:$0xff]
  %v321 = vld [vmem:[%s1 + $0x918] sm:$0xff]
  %v322 = vld [vmem:[%s1 + $0x920] sm:$0xff]
  %v323 = vld [vmem:[%s1 + $0x928] sm:$0xff]
  %v324 = vld [vmem:[%s1 + $0x930] sm:$0xff]
  %v325 = vld [vmem:[%s1 + $0x938] sm:$0xff]
  %v326 = vld [vmem:[%s1 + $0x940] sm:$0xff]
  %v327 = vld [vmem:[%s1 + $0x948] sm:$0xff]
  %v328 = vld [vmem:[%s1 + $0x950] sm:$0xff]
  %v329 = vld [vmem:[%s1 + $0x958] sm:$0xff]
  %v330 = vld [vmem:[%s1 + $0x960] sm:$0xff]
  %v331 = vld [vmem:[%s1 + $0x968] sm:$0xff]
  %v332 = vld [vmem:[%s1 + $0x970] sm:$0xff]
  %v333 = vld [vmem:[%s1 + $0x978] sm:$0xff]
  %v334 = vld [vmem:[%s1 + $0x980] sm:$0xff]
  %v335 = vld [vmem:[%s1 + $0x988] sm:$0xff]
  %v336 = vld [vmem:[%s1 + $0x990] sm:$0xff]
  %v337 = vld [vmem:[%s1 + $0x998] sm:$0xff]
  %v338 = vld [vmem:[%s1 + $0x9a0] sm:$0xff]
  %v339 = vld [vmem:[%s1 + $0x9a8] sm:$0xff]
  %v340 = vld [vmem:[%s1 + $0x9b0] sm:$0xff]
  %v341 = vld [vmem:[%s1 + $0x9b8] sm:$0xff]
  %v342 = vld [vmem:[%s1 + $0x9c0] sm:$0xff]
  %v343 = vld [vmem:[%s1 + $0x9c8] sm:$0xff]
  %v344 = vld [vmem:[%s1 + $0x9d0] sm:$0xff]
  %v345 = vld [vmem:[%s1 + $0x9d8] sm:$0xff]
  %v346 = vld [vmem:[%s1 + $0x9e0] sm:$0xff]
  %v347 = vld [vmem:[%s1 + $0x9e8] sm:$0xff]
  %v348 = vld [vmem:[%s1 + $0x9f0] sm:$0xff]
  %v349 = vld [vmem:[%s1 + $0x9f8] sm:$0xff]
  %v350 = vld [vmem:[%s1 + $0xa00] sm:$0xff]
  %v351 = vld [vmem:[%s1 + $0xa08] sm:$0xff]
  %v352 = vld [vmem:[%s1 + $0xa10] sm:$0xff]
  %v353 = vld [vmem:[%s1 + $0xa18] sm:$0xff]
  %v354 = vld [vmem:[%s1 + $0xa20] sm:$0xff]
  %v355 = vld [vmem:[%s1 + $0xa28] sm:$0xff]
  %v356 = vld [vmem:[%s1 + $0xa30] sm:$0xff]
  %v357 = vld [vmem:[%s1 + $0xa38] sm:$0xff]
  %v358 = vld [vmem:[%s1 + $0xa40] sm:$0xff]
  %v359 = vld [vmem:[%s1 + $0xa48] sm:$0xff]
  %v360 = vld [vmem:[%s1 + $0xa50] sm:$0xff]
  %v361 = vld [vmem:[%s1 + $0xa58] sm:$0xff]
  %v362 = vld [vmem:[%s1 + $0xa60] sm:$0xff]
  %v363 = vld [vmem:[%s1 + $0xa68] sm:$0xff]
  %v364 = vld [vmem:[%s1 + $0xa70] sm:$0xff]
  %v365 = vld [vmem:[%s1 + $0xa78] sm:$0xff]
  %v366 = vld [vmem:[%s1 + $0xa80] sm:$0xff]
  %v367 = vld [vmem:[%s1 + $0xa88] sm:$0xff]
  %v368 = vld [vmem:[%s1 + $0xa90] sm:$0xff]
  %v369 = vld [vmem:[%s1 + $0xa98] sm:$0xff]
  %v370 = vld [vmem:[%s1 + $0xaa0] sm:$0xff]
  %v371 = vld [vmem:[%s1 + $0xaa8] sm:$0xff]
  %v372 = vld [vmem:[%s1 + $0xab0] sm:$0xff]
  %v373 = vld [vmem:[%s1 + $0xab8] sm:$0xff]
  %v374 = vld [vmem:[%s1 + $0xac0] sm:$0xff]
  %v375 = vld [vmem:[%s1 + $0xac8] sm:$0xff]
  %v376 = vld [vmem:[%s1 + $0xad0] sm:$0xff]
  %v377 = vld [vmem:[%s1 + $0xad8] sm:$0xff]
  %v378 = vld [vmem:[%s1 + $0xae0] sm:$0xff]
  %v379 = vld [vmem:[%s1 + $0xae8] sm:$0xff]
  %v380 = vld [vmem:[%s1 + $0xaf0] sm:$0xff]
  %v381 = vld [vmem:[%s1 + $0xaf8] sm:$0xff]
  %v382 = vld [vmem:[%s1 + $0xb00] sm:$0xff]
  %v383 = vld [vmem:[%s1 + $0xb08] sm:$0xff]
  %v384 = vld [vmem:[%s1 + $0xb10] sm:$0xff]
  %v385 = vld [vmem:[%s1 + $0xb18] sm:$0xff]
  %v386 = vld [vmem:[%s1 + $0xb20] sm:$0xff]
  %v387 = vld [vmem:[%s1 + $0xb28] sm:$0xff]
  %v388 = vld [vmem:[%s1 + $0xb30] sm:$0xff]
  %v389 = vld [vmem:[%s1 + $0xb38] sm:$0xff]
  %v390 = vld [vmem:[%s1 + $0xb40] sm:$0xff]
  %v391 = vld [vmem:[%s1 + $0xb48] sm:$0xff]
  %v392 = vld [vmem:[%s1 + $0xb50] sm:$0xff]
  %v393 = vld [vmem:[%s1 + $0xb58] sm:$0xff]
  %v394 = vld [vmem:[%s1 + $0xb60] sm:$0xff]
  %v395 = vld [vmem:[%s1 + $0xb68] sm:$0xff]
  %v396 = vld [vmem:[%s1 + $0xb70] sm:$0xff]
  %v397 = vld [vmem:[%s1 + $0xb78] sm:$0xff]
  %v398 = vld [vmem:[%s1 + $0xb80] sm:$0xff]
  %v399 = vld [vmem:[%s1 + $0xb88] sm:$0xff]
  %v400 = vld [vmem:[%s1 + $0xb90] sm:$0xff]
  %v401 = vld [vmem:[%s1 + $0xb98] sm:$0xff]
  %v402 = vld [vmem:[%s1 + $0xba0] sm:$0xff]
  %v403 = vld [vmem:[%s1 + $0xba8] sm:$0xff]
  %v404 = vld [vmem:[%s1 + $0xbb0] sm:$0xff]
  %v405 = vld [vmem:[%s1 + $0xbb8] sm:$0xff]
  %v406 = vld [vmem:[%s1 + $0xbc0] sm:$0xff]
  %v407 = vld [vmem:[%s1 + $0xbc8] sm:$0xff]
  %v408 = vld [vmem:[%s1 + $0xbd0] sm:$0xff]
  %v409 = vld [vmem:[%s1 + $0xbd8] sm:$0xff]
  %v410 = vld [vmem:[%s1 + $0xbe0] sm:$0xff]
  %v411 = vld [vmem:[%s1 + $0xbe8] sm:$0xff]
  %v412 = vld [vmem:[%s1 + $0xbf0] sm:$0xff]
  %v413 = vld [vmem:[%s1 + $0xbf8] sm:$0xff]
  %v414 = vld [vmem:[%s1 + $0xc00] sm:$0xff]
  %v415 = vld [vmem:[%s1 + $0xc08] sm:$0xff]
  %v416 = vld [vmem:[%s1 + $0xc10] sm:$0xff]
  %v417 = vld [vmem:[%s1 + $0xc18] sm:$0xff]
  %v418 = vld [vmem:[%s1 + $0xc20] sm:$0xff]
  %v419 = vld [vmem:[%s1 + $0xc28] sm:$0xff]
  %v420 = vld [vmem:[%s1 + $0xc30] sm:$0xff]
  %v421 = vld [vmem:[%s1 + $0xc38] sm:$0xff]
  %v422 = vld [vmem:[%s1 + $0xc40] sm:$0xff]
  %v423 = vld [vmem:[%s1 + $0xc48] sm:$0xff]
  %v424 = vld [vmem:[%s1 + $0xc50] sm:$0xff]
  %v425 = vld [vmem:[%s1 + $0xc58] sm:$0xff]
  %v426 = vld [vmem:[%s1 + $0xc60] sm:$0xff]
  %v427 = vld [vmem:[%s1 + $0xc68] sm:$0xff]
  %v428 = vld [vmem:[%s1 + $0xc70] sm:$0xff]
  %v429 = vld [vmem:[%s1 + $0xc78] sm:$0xff]
  %v430 = vld [vmem:[%s1 + $0xc80] sm:$0xff]
  %v431 = vld [vmem:[%s1 + $0xc88] sm:$0xff]
  %v432 = vld [vmem:[%s1 + $0xc90] sm:$0xff]
  %v433 = vld [vmem:[%s1 + $0xc98] sm:$0xff]
  %v434 = vld [vmem:[%s1 + $0xca0] sm:$0xff]
  %v435 = vld [vmem:[%s1 + $0xca8] sm:$0xff]
  %v436 = vld [vmem:[%s1 + $0xcb0] sm:$0xff]
  %v437 = vld [vmem:[%s1 + $0xcb8] sm:$0xff]
  %v438 = vld [vmem:[%s1 + $0xcc0] sm:$0xff]
  %v439 = vld [vmem:[%s1 + $0xcc8] sm:$0xff]
  %v440 = vld [vmem:[%s1 + $0xcd0] sm:$0xff]
  %v441 = vld [vmem:[%s1 + $0xcd8] sm:$0xff]
  %v442 = vld [vmem:[%s1 + $0xce0] sm:$0xff]
  %v443 = vld [vmem:[%s1 + $0xce8] sm:$0xff]
  %v444 = vld [vmem:[%s1 + $0xcf0] sm:$0xff]
  %v445 = vld [vmem:[%s1 + $0xcf8] sm:$0xff]
  %v446 = vld [vmem:[%s1 + $0xd00] sm:$0xff]
  %v447 = vld [vmem:[%s1 + $0xd08] sm:$0xff]
  %v448 = vld [vmem:[%s1 + $0xd10] sm:$0xff]
  %v449 = vld [vmem:[%s1 + $0xd18] sm:$0xff]
  %v450 = vld [vmem:[%s1 + $0xd20] sm:$0xff]
  %v451 = vld [vmem:[%s1 + $0xd28] sm:$0xff]
  %v452 = vld [vmem:[%s1 + $0xd30] sm:$0xff]
  %v453 = vld [vmem:[%s1 + $0xd38] sm:$0xff]
  %v454 = vld [vmem:[%s1 + $0xd40] sm:$0xff]
  %v455 = vld [vmem:[%s1 + $0xd48] sm:$0xff]
  %v456 = vld [vmem:[%s1 + $0xd50] sm:$0xff]
  %v457 = vld [vmem:[%s1 + $0xd58] sm:$0xff]
  %v458 = vld [vmem:[%s1 + $0xd60] sm:$0xff]
  %v459 = vld [vmem:[%s1 + $0xd68] sm:$0xff]
  %v460 = vld [vmem:[%s1 + $0xd70] sm:$0xff]
  %v461 = vld [vmem:[%s1 + $0xd78] sm:$0xff]
  %v462 = vld [vmem:[%s1 + $0xd80] sm:$0xff]
  %v463 = vld [vmem:[%s1 + $0xd88] sm:$0xff]
  %v464 = vld [vmem:[%s1 + $0xd90] sm:$0xff]
  %v465 = vld [vmem:[%s1 + $0xd98] sm:$0xff]
  %v466 = vld [vmem:[%s1 + $0xda0] sm:$0xff]
  %v467 = vld [vmem:[%s1 + $0xda8] sm:$0xff]
  %v468 = vld [vmem:[%s1 + $0xdb0] sm:$0xff]
  %v469 = vld [vmem:[%s1 + $0xdb8] sm:$0xff]
  %v470 = vld [vmem:[%s1 + $0xdc0] sm:$0xff]
  %v471 = vld [vmem:[%s1 + $0xdc8] sm:$0xff]
  %v472 = vld [vmem:[%s1 + $0xdd0] sm:$0xff]
  %v473 = vld [vmem:[%s1 + $0xdd8] sm:$0xff]
  %v474 = vld [vmem:[%s1 + $0xde0] sm:$0xff]
  %v475 = vld [vmem:[%s1 + $0xde8] sm:$0xff]
  %v476 = vld [vmem:[%s1 + $0xdf0] sm:$0xff]
  %v477 = vld [vmem:[%s1 + $0xdf8] sm:$0xff]
  %v478 = vld [vmem:[%s1 + $0xe00] sm:$0xff]
  %v479 = vld [vmem:[%s1 + $0xe08] sm:$0xff]
  %v480 = vld [vmem:[%s1 + $0xe10] sm:$0xff]
  %v481 = vld [vmem:[%s1 + $0xe18] sm:$0xff]
  %v482 = vld [vmem:[%s1 + $0xe20] sm:$0xff]
  %v483 = vld [vmem:[%s1 + $0xe28] sm:$0xff]
  %v484 = vld [vmem:[%s1 + $0xe30] sm:$0xff]
  %v485 = vld [vmem:[%s1 + $0xe38] sm:$0xff]
  %v486 = vld [vmem:[%s1 + $0xe40] sm:$0xff]
  %v487 = vld [vmem:[%s1 + $0xe48] sm:$0xff]
  %v488 = vld [vmem:[%s1 + $0xe50] sm:$0xff]
  %v489 = vld [vmem:[%s1 + $0xe58] sm:$0xff]
  %v490 = vld [vmem:[%s1 + $0xe60] sm:$0xff]
  %v491 = vld [vmem:[%s1 + $0xe68] sm:$0xff]
  %v492 = vld [vmem:[%s1 + $0xe70] sm:$0xff]
  %v493 = vld [vmem:[%s1 + $0xe78] sm:$0xff]
  %v494 = vld [vmem:[%s1 + $0xe80] sm:$0xff]
  %v495 = vld [vmem:[%s1 + $0xe88] sm:$0xff]
  %v496 = vld [vmem:[%s1 + $0xe90] sm:$0xff]
  %v497 = vld [vmem:[%s1 + $0xe98] sm:$0xff]
  %v498 = vld [vmem:[%s1 + $0xea0] sm:$0xff]
  %v499 = vld [vmem:[%s1 + $0xea8] sm:$0xff]
  %v500 = vld [vmem:[%s1 + $0xeb0] sm:$0xff]
  %v501 = vld [vmem:[%s1 + $0xeb8] sm:$0xff]
  %v502 = vld [vmem:[%s1 + $0xec0] sm:$0xff]
  %v503 = vld [vmem:[%s1 + $0xec8] sm:$0xff]
  %v504 = vld [vmem:[%s1 + $0xed0] sm:$0xff]
  %v505 = vld [vmem:[%s1 + $0xed8] sm:$0xff]
  %v506 = vld [vmem:[%s1 + $0xee0] sm:$0xff]
  %v507 = vld [vmem:[%s1 + $0xee8] sm:$0xff]
  %v508 = vld [vmem:[%s1 + $0xef0] sm:$0xff]
  %v509 = vld [vmem:[%s1 + $0xef8] sm:$0xff]
  %v510 = vld [vmem:[%s1 + $0xf00] sm:$0xff]
  %v511 = vld [vmem:[%s1 + $0xf08] sm:$0xff]
  %v512 = vld [vmem:[%s1 + $0xf10] sm:$0xff]
  %v513 = vld [vmem:[%s1 + $0xf18] sm:$0xff]
  %v514 = vld [vmem:[%s1 + $0xf20] sm:$0xff]
  %v515 = vld [vmem:[%s1 + $0xf28] sm:$0xff]
  %v516 = vld [vmem:[%s1 + $0xf30] sm:$0xff]
  %v517 = vld [vmem:[%s1 + $0xf38] sm:$0xff]
  %v518 = vld [vmem:[%s1 + $0xf40] sm:$0xff]
  %v519 = vld [vmem:[%s1 + $0xf48] sm:$0xff]
  %v520 = vld [vmem:[%s1 + $0xf50] sm:$0xff]
  %v521 = vld [vmem:[%s1 + $0xf58] sm:$0xff]
  %v522 = vld [vmem:[%s1 + $0xf60] sm:$0xff]
  %v523 = vld [vmem:[%s1 + $0xf68] sm:$0xff]
  %v524 = vld [vmem:[%s1 + $0xf70] sm:$0xff]
  %v525 = vld [vmem:[%s1 + $0xf78] sm:$0xff]
  %v526 = vld [vmem:[%s1 + $0xf80] sm:$0xff]
  %v527 = vld [vmem:[%s1 + $0xf88] sm:$0xff]
  %v528 = vld [vmem:[%s1 + $0xf90] sm:$0xff]
  %v529 = vld [vmem:[%s1 + $0xf98] sm:$0xff]
  %v530 = vld [vmem:[%s1 + $0xfa0] sm:$0xff]
  %v531 = vld [vmem:[%s1 + $0xfa8] sm:$0xff]
  %v532 = vld [vmem:[%s1 + $0xfb0] sm:$0xff]
  %v533 = vld [vmem:[%s1 + $0xfb8] sm:$0xff]
  %v534 = vld [vmem:[%s1 + $0xfc0] sm:$0xff]
  %v535 = vld [vmem:[%s1 + $0xfc8] sm:$0xff]
  %v536 = vld [vmem:[%s1 + $0xfd0] sm:$0xff]
  %v537 = vld [vmem:[%s1 + $0xfd8] sm:$0xff]
  %v538 = vld [vmem:[%s1 + $0xfe0] sm:$0xff]
  %v539 = vld [vmem:[%s1 + $0xfe8] sm:$0xff]
  %v540 = vld [vmem:[%s1 + $0xff0] sm:$0xff]
  %v541 = vld [vmem:[%s1 + $0xff8] sm:$0xff]
  %v542 = vld [vmem:[%s2] sm:$0x3]
  %v544 = vlaneseq
  %v545 = vshrl.u32 %v544, 7
  %v546 = vsub.s32 0, %v545
  %v547 = vrot.slane %v542, %v546
  %v548 = vlaneseq
  %v549 = vshrl.u32 %v548, 7
  %v550 = vsub.s32 1, %v549
  %v551 = vrot.slane %v542, %v550
  %v570 = vunpack.c.l.b16 %v14
  %v571 = vunpack.c.h.b16 %v14
  %v572 = vunpack.c.l.b16 %v15
  %v573 = vunpack.c.h.b16 %v15
  %v574 = vunpack.c.l.b16 %v16
  %v575 = vunpack.c.h.b16 %v16
  %v576 = vunpack.c.l.b16 %v17
  %v577 = vunpack.c.h.b16 %v17
  %v578 = vunpack.c.l.b16 %v18
  %v579 = vunpack.c.h.b16 %v18
  %v580 = vunpack.c.l.b16 %v19
  %v581 = vunpack.c.h.b16 %v19
  %v582 = vunpack.c.l.b16 %v20
  %v583 = vunpack.c.h.b16 %v20
  %v584 = vunpack.c.l.b16 %v21
  %v585 = vunpack.c.h.b16 %v21
  %v586 = vunpack.c.l.b16 %v22
  %v587 = vunpack.c.h.b16 %v22
  %v588 = vunpack.c.l.b16 %v23
  %v589 = vunpack.c.h.b16 %v23
  %v590 = vunpack.c.l.b16 %v24
  %v591 = vunpack.c.h.b16 %v24
  %v592 = vunpack.c.l.b16 %v25
  %v593 = vunpack.c.h.b16 %v25
  %v594 = vunpack.c.l.b16 %v26
  %v595 = vunpack.c.h.b16 %v26
  %v596 = vunpack.c.l.b16 %v27
  %v597 = vunpack.c.h.b16 %v27
  %v598 = vunpack.c.l.b16 %v28
  %v599 = vunpack.c.h.b16 %v28
  %v600 = vunpack.c.l.b16 %v29
  %v601 = vunpack.c.h.b16 %v29
  %v602 = vpack.c.b16 %v570, %v570
  %v603 = vpack.c.b16 %v571, %v571
  %v604 = vpack.c.b16 %v572, %v572
  %v605 = vpack.c.b16 %v573, %v573
  %v606 = vpack.c.b16 %v574, %v574
  %v607 = vpack.c.b16 %v575, %v575
  %v608 = vpack.c.b16 %v576, %v576
  %v609 = vpack.c.b16 %v577, %v577
  %v610 = vpack.c.b16 %v578, %v578
  %v611 = vpack.c.b16 %v579, %v579
  %v612 = vpack.c.b16 %v580, %v580
  %v613 = vpack.c.b16 %v581, %v581
  %v614 = vpack.c.b16 %v582, %v582
  %v615 = vpack.c.b16 %v583, %v583
  %v616 = vpack.c.b16 %v584, %v584
  %v617 = vpack.c.b16 %v585, %v585
  %v618 = vpack.c.b16 %v586, %v586
  %v619 = vpack.c.b16 %v587, %v587
  %v620 = vpack.c.b16 %v588, %v588
  %v621 = vpack.c.b16 %v589, %v589
  %v622 = vpack.c.b16 %v590, %v590
  %v623 = vpack.c.b16 %v591, %v591
  %v624 = vpack.c.b16 %v592, %v592
  %v625 = vpack.c.b16 %v593, %v593
  %v626 = vpack.c.b16 %v594, %v594
  %v627 = vpack.c.b16 %v595, %v595
  %v628 = vpack.c.b16 %v596, %v596
  %v629 = vpack.c.b16 %v597, %v597
  %v630 = vpack.c.b16 %v598, %v598
  %v631 = vpack.c.b16 %v599, %v599
  %v632 = vpack.c.b16 %v600, %v600
  %v633 = vpack.c.b16 %v601, %v601
  %v1178 = vunpack.c.l.b16 %v30
  %v1179 = vunpack.c.h.b16 %v30
  %v1180 = vunpack.c.l.b16 %v31
  %v1181 = vunpack.c.h.b16 %v31
  %v1182 = vunpack.c.l.b16 %v32
  %v1183 = vunpack.c.h.b16 %v32
  %v1184 = vunpack.c.l.b16 %v33
  %v1185 = vunpack.c.h.b16 %v33
  %v1186 = vunpack.c.l.b16 %v34
  %v1187 = vunpack.c.h.b16 %v34
  %v1188 = vunpack.c.l.b16 %v35
  %v1189 = vunpack.c.h.b16 %v35
  %v1190 = vunpack.c.l.b16 %v36
  %v1191 = vunpack.c.h.b16 %v36
  %v1192 = vunpack.c.l.b16 %v37
  %v1193 = vunpack.c.h.b16 %v37
  %v1194 = vunpack.c.l.b16 %v38
  %v1195 = vunpack.c.h.b16 %v38
  %v1196 = vunpack.c.l.b16 %v39
  %v1197 = vunpack.c.h.b16 %v39
  %v1198 = vunpack.c.l.b16 %v40
  %v1199 = vunpack.c.h.b16 %v40
  %v1200 = vunpack.c.l.b16 %v41
  %v1201 = vunpack.c.h.b16 %v41
  %v1202 = vunpack.c.l.b16 %v42
  %v1203 = vunpack.c.h.b16 %v42
  %v1204 = vunpack.c.l.b16 %v43
  %v1205 = vunpack.c.h.b16 %v43
  %v1206 = vunpack.c.l.b16 %v44
  %v1207 = vunpack.c.h.b16 %v44
  %v1208 = vunpack.c.l.b16 %v45
  %v1209 = vunpack.c.h.b16 %v45
  %v1210 = vunpack.c.l.b16 %v46
  %v1211 = vunpack.c.h.b16 %v46
  %v1212 = vunpack.c.l.b16 %v47
  %v1213 = vunpack.c.h.b16 %v47
  %v1214 = vunpack.c.l.b16 %v48
  %v1215 = vunpack.c.h.b16 %v48
  %v1216 = vunpack.c.l.b16 %v49
  %v1217 = vunpack.c.h.b16 %v49
  %v1218 = vunpack.c.l.b16 %v50
  %v1219 = vunpack.c.h.b16 %v50
  %v1220 = vunpack.c.l.b16 %v51
  %v1221 = vunpack.c.h.b16 %v51
  %v1222 = vunpack.c.l.b16 %v52
  %v1223 = vunpack.c.h.b16 %v52
  %v1224 = vunpack.c.l.b16 %v53
  %v1225 = vunpack.c.h.b16 %v53
  %v1226 = vunpack.c.l.b16 %v54
  %v1227 = vunpack.c.h.b16 %v54
  %v1228 = vunpack.c.l.b16 %v55
  %v1229 = vunpack.c.h.b16 %v55
  %v1230 = vunpack.c.l.b16 %v56
  %v1231 = vunpack.c.h.b16 %v56
  %v1232 = vunpack.c.l.b16 %v57
  %v1233 = vunpack.c.h.b16 %v57
  %v1234 = vunpack.c.l.b16 %v58
  %v1235 = vunpack.c.h.b16 %v58
  %v1236 = vunpack.c.l.b16 %v59
  %v1237 = vunpack.c.h.b16 %v59
  %v1238 = vunpack.c.l.b16 %v60
  %v1239 = vunpack.c.h.b16 %v60
  %v1240 = vunpack.c.l.b16 %v61
  %v1241 = vunpack.c.h.b16 %v61
  %v1242 = vunpack.c.l.b16 %v62
  %v1243 = vunpack.c.h.b16 %v62
  %v1244 = vunpack.c.l.b16 %v63
  %v1245 = vunpack.c.h.b16 %v63
  %v1246 = vunpack.c.l.b16 %v64
  %v1247 = vunpack.c.h.b16 %v64
  %v1248 = vunpack.c.l.b16 %v65
  %v1249 = vunpack.c.h.b16 %v65
  %v1250 = vunpack.c.l.b16 %v66
  %v1251 = vunpack.c.h.b16 %v66
  %v1252 = vunpack.c.l.b16 %v67
  %v1253 = vunpack.c.h.b16 %v67
  %v1254 = vunpack.c.l.b16 %v68
  %v1255 = vunpack.c.h.b16 %v68
  %v1256 = vunpack.c.l.b16 %v69
  %v1257 = vunpack.c.h.b16 %v69
  %v1258 = vunpack.c.l.b16 %v70
  %v1259 = vunpack.c.h.b16 %v70
  %v1260 = vunpack.c.l.b16 %v71
  %v1261 = vunpack.c.h.b16 %v71
  %v1262 = vunpack.c.l.b16 %v72
  %v1263 = vunpack.c.h.b16 %v72
  %v1264 = vunpack.c.l.b16 %v73
  %v1265 = vunpack.c.h.b16 %v73
  %v1266 = vunpack.c.l.b16 %v74
  %v1267 = vunpack.c.h.b16 %v74
  %v1268 = vunpack.c.l.b16 %v75
  %v1269 = vunpack.c.h.b16 %v75
  %v1270 = vunpack.c.l.b16 %v76
  %v1271 = vunpack.c.h.b16 %v76
  %v1272 = vunpack.c.l.b16 %v77
  %v1273 = vunpack.c.h.b16 %v77
  %v1274 = vunpack.c.l.b16 %v78
  %v1275 = vunpack.c.h.b16 %v78
  %v1276 = vunpack.c.l.b16 %v79
  %v1277 = vunpack.c.h.b16 %v79
  %v1278 = vunpack.c.l.b16 %v80
  %v1279 = vunpack.c.h.b16 %v80
  %v1280 = vunpack.c.l.b16 %v81
  %v1281 = vunpack.c.h.b16 %v81
  %v1282 = vunpack.c.l.b16 %v82
  %v1283 = vunpack.c.h.b16 %v82
  %v1284 = vunpack.c.l.b16 %v83
  %v1285 = vunpack.c.h.b16 %v83
  %v1286 = vunpack.c.l.b16 %v84
  %v1287 = vunpack.c.h.b16 %v84
  %v1288 = vunpack.c.l.b16 %v85
  %v1289 = vunpack.c.h.b16 %v85
  %v1290 = vunpack.c.l.b16 %v86
  %v1291 = vunpack.c.h.b16 %v86
  %v1292 = vunpack.c.l.b16 %v87
  %v1293 = vunpack.c.h.b16 %v87
  %v1294 = vunpack.c.l.b16 %v88
  %v1295 = vunpack.c.h.b16 %v88
  %v1296 = vunpack.c.l.b16 %v89
  %v1297 = vunpack.c.h.b16 %v89
  %v1298 = vunpack.c.l.b16 %v90
  %v1299 = vunpack.c.h.b16 %v90
  %v1300 = vunpack.c.l.b16 %v91
  %v1301 = vunpack.c.h.b16 %v91
  %v1302 = vunpack.c.l.b16 %v92
  %v1303 = vunpack.c.h.b16 %v92
  %v1304 = vunpack.c.l.b16 %v93
  %v1305 = vunpack.c.h.b16 %v93
  %v1306 = vunpack.c.l.b16 %v94
  %v1307 = vunpack.c.h.b16 %v94
  %v1308 = vunpack.c.l.b16 %v95
  %v1309 = vunpack.c.h.b16 %v95
  %v1310 = vunpack.c.l.b16 %v96
  %v1311 = vunpack.c.h.b16 %v96
  %v1312 = vunpack.c.l.b16 %v97
  %v1313 = vunpack.c.h.b16 %v97
  %v1314 = vunpack.c.l.b16 %v98
  %v1315 = vunpack.c.h.b16 %v98
  %v1316 = vunpack.c.l.b16 %v99
  %v1317 = vunpack.c.h.b16 %v99
  %v1318 = vunpack.c.l.b16 %v100
  %v1319 = vunpack.c.h.b16 %v100
  %v1320 = vunpack.c.l.b16 %v101
  %v1321 = vunpack.c.h.b16 %v101
  %v1322 = vunpack.c.l.b16 %v102
  %v1323 = vunpack.c.h.b16 %v102
  %v1324 = vunpack.c.l.b16 %v103
  %v1325 = vunpack.c.h.b16 %v103
  %v1326 = vunpack.c.l.b16 %v104
  %v1327 = vunpack.c.h.b16 %v104
  %v1328 = vunpack.c.l.b16 %v105
  %v1329 = vunpack.c.h.b16 %v105
  %v1330 = vunpack.c.l.b16 %v106
  %v1331 = vunpack.c.h.b16 %v106
  %v1332 = vunpack.c.l.b16 %v107
  %v1333 = vunpack.c.h.b16 %v107
  %v1334 = vunpack.c.l.b16 %v108
  %v1335 = vunpack.c.h.b16 %v108
  %v1336 = vunpack.c.l.b16 %v109
  %v1337 = vunpack.c.h.b16 %v109
  %v1338 = vunpack.c.l.b16 %v110
  %v1339 = vunpack.c.h.b16 %v110
  %v1340 = vunpack.c.l.b16 %v111
  %v1341 = vunpack.c.h.b16 %v111
  %v1342 = vunpack.c.l.b16 %v112
  %v1343 = vunpack.c.h.b16 %v112
  %v1344 = vunpack.c.l.b16 %v113
  %v1345 = vunpack.c.h.b16 %v113
  %v1346 = vunpack.c.l.b16 %v114
  %v1347 = vunpack.c.h.b16 %v114
  %v1348 = vunpack.c.l.b16 %v115
  %v1349 = vunpack.c.h.b16 %v115
  %v1350 = vunpack.c.l.b16 %v116
  %v1351 = vunpack.c.h.b16 %v116
  %v1352 = vunpack.c.l.b16 %v117
  %v1353 = vunpack.c.h.b16 %v117
  %v1354 = vunpack.c.l.b16 %v118
  %v1355 = vunpack.c.h.b16 %v118
  %v1356 = vunpack.c.l.b16 %v119
  %v1357 = vunpack.c.h.b16 %v119
  %v1358 = vunpack.c.l.b16 %v120
  %v1359 = vunpack.c.h.b16 %v120
  %v1360 = vunpack.c.l.b16 %v121
  %v1361 = vunpack.c.h.b16 %v121
  %v1362 = vunpack.c.l.b16 %v122
  %v1363 = vunpack.c.h.b16 %v122
  %v1364 = vunpack.c.l.b16 %v123
  %v1365 = vunpack.c.h.b16 %v123
  %v1366 = vunpack.c.l.b16 %v124
  %v1367 = vunpack.c.h.b16 %v124
  %v1368 = vunpack.c.l.b16 %v125
  %v1369 = vunpack.c.h.b16 %v125
  %v1370 = vunpack.c.l.b16 %v126
  %v1371 = vunpack.c.h.b16 %v126
  %v1372 = vunpack.c.l.b16 %v127
  %v1373 = vunpack.c.h.b16 %v127
  %v1374 = vunpack.c.l.b16 %v128
  %v1375 = vunpack.c.h.b16 %v128
  %v1376 = vunpack.c.l.b16 %v129
  %v1377 = vunpack.c.h.b16 %v129
  %v1378 = vunpack.c.l.b16 %v130
  %v1379 = vunpack.c.h.b16 %v130
  %v1380 = vunpack.c.l.b16 %v131
  %v1381 = vunpack.c.h.b16 %v131
  %v1382 = vunpack.c.l.b16 %v132
  %v1383 = vunpack.c.h.b16 %v132
  %v1384 = vunpack.c.l.b16 %v133
  %v1385 = vunpack.c.h.b16 %v133
  %v1386 = vunpack.c.l.b16 %v134
  %v1387 = vunpack.c.h.b16 %v134
  %v1388 = vunpack.c.l.b16 %v135
  %v1389 = vunpack.c.h.b16 %v135
  %v1390 = vunpack.c.l.b16 %v136
  %v1391 = vunpack.c.h.b16 %v136
  %v1392 = vunpack.c.l.b16 %v137
  %v1393 = vunpack.c.h.b16 %v137
  %v1394 = vunpack.c.l.b16 %v138
  %v1395 = vunpack.c.h.b16 %v138
  %v1396 = vunpack.c.l.b16 %v139
  %v1397 = vunpack.c.h.b16 %v139
  %v1398 = vunpack.c.l.b16 %v140
  %v1399 = vunpack.c.h.b16 %v140
  %v1400 = vunpack.c.l.b16 %v141
  %v1401 = vunpack.c.h.b16 %v141
  %v1402 = vunpack.c.l.b16 %v142
  %v1403 = vunpack.c.h.b16 %v142
  %v1404 = vunpack.c.l.b16 %v143
  %v1405 = vunpack.c.h.b16 %v143
  %v1406 = vunpack.c.l.b16 %v144
  %v1407 = vunpack.c.h.b16 %v144
  %v1408 = vunpack.c.l.b16 %v145
  %v1409 = vunpack.c.h.b16 %v145
  %v1410 = vunpack.c.l.b16 %v146
  %v1411 = vunpack.c.h.b16 %v146
  %v1412 = vunpack.c.l.b16 %v147
  %v1413 = vunpack.c.h.b16 %v147
  %v1414 = vunpack.c.l.b16 %v148
  %v1415 = vunpack.c.h.b16 %v148
  %v1416 = vunpack.c.l.b16 %v149
  %v1417 = vunpack.c.h.b16 %v149
  %v1418 = vunpack.c.l.b16 %v150
  %v1419 = vunpack.c.h.b16 %v150
  %v1420 = vunpack.c.l.b16 %v151
  %v1421 = vunpack.c.h.b16 %v151
  %v1422 = vunpack.c.l.b16 %v152
  %v1423 = vunpack.c.h.b16 %v152
  %v1424 = vunpack.c.l.b16 %v153
  %v1425 = vunpack.c.h.b16 %v153
  %v1426 = vunpack.c.l.b16 %v154
  %v1427 = vunpack.c.h.b16 %v154
  %v1428 = vunpack.c.l.b16 %v155
  %v1429 = vunpack.c.h.b16 %v155
  %v1430 = vunpack.c.l.b16 %v156
  %v1431 = vunpack.c.h.b16 %v156
  %v1432 = vunpack.c.l.b16 %v157
  %v1433 = vunpack.c.h.b16 %v157
  %v1434 = vunpack.c.l.b16 %v158
  %v1435 = vunpack.c.h.b16 %v158
  %v1436 = vunpack.c.l.b16 %v159
  %v1437 = vunpack.c.h.b16 %v159
  %v1438 = vunpack.c.l.b16 %v160
  %v1439 = vunpack.c.h.b16 %v160
  %v1440 = vunpack.c.l.b16 %v161
  %v1441 = vunpack.c.h.b16 %v161
  %v1442 = vunpack.c.l.b16 %v162
  %v1443 = vunpack.c.h.b16 %v162
  %v1444 = vunpack.c.l.b16 %v163
  %v1445 = vunpack.c.h.b16 %v163
  %v1446 = vunpack.c.l.b16 %v164
  %v1447 = vunpack.c.h.b16 %v164
  %v1448 = vunpack.c.l.b16 %v165
  %v1449 = vunpack.c.h.b16 %v165
  %v1450 = vunpack.c.l.b16 %v166
  %v1451 = vunpack.c.h.b16 %v166
  %v1452 = vunpack.c.l.b16 %v167
  %v1453 = vunpack.c.h.b16 %v167
  %v1454 = vunpack.c.l.b16 %v168
  %v1455 = vunpack.c.h.b16 %v168
  %v1456 = vunpack.c.l.b16 %v169
  %v1457 = vunpack.c.h.b16 %v169
  %v1458 = vunpack.c.l.b16 %v170
  %v1459 = vunpack.c.h.b16 %v170
  %v1460 = vunpack.c.l.b16 %v171
  %v1461 = vunpack.c.h.b16 %v171
  %v1462 = vunpack.c.l.b16 %v172
  %v1463 = vunpack.c.h.b16 %v172
  %v1464 = vunpack.c.l.b16 %v173
  %v1465 = vunpack.c.h.b16 %v173
  %v1466 = vunpack.c.l.b16 %v174
  %v1467 = vunpack.c.h.b16 %v174
  %v1468 = vunpack.c.l.b16 %v175
  %v1469 = vunpack.c.h.b16 %v175
  %v1470 = vunpack.c.l.b16 %v176
  %v1471 = vunpack.c.h.b16 %v176
  %v1472 = vunpack.c.l.b16 %v177
  %v1473 = vunpack.c.h.b16 %v177
  %v1474 = vunpack.c.l.b16 %v178
  %v1475 = vunpack.c.h.b16 %v178
  %v1476 = vunpack.c.l.b16 %v179
  %v1477 = vunpack.c.h.b16 %v179
  %v1478 = vunpack.c.l.b16 %v180
  %v1479 = vunpack.c.h.b16 %v180
  %v1480 = vunpack.c.l.b16 %v181
  %v1481 = vunpack.c.h.b16 %v181
  %v1482 = vunpack.c.l.b16 %v182
  %v1483 = vunpack.c.h.b16 %v182
  %v1484 = vunpack.c.l.b16 %v183
  %v1485 = vunpack.c.h.b16 %v183
  %v1486 = vunpack.c.l.b16 %v184
  %v1487 = vunpack.c.h.b16 %v184
  %v1488 = vunpack.c.l.b16 %v185
  %v1489 = vunpack.c.h.b16 %v185
  %v1490 = vunpack.c.l.b16 %v186
  %v1491 = vunpack.c.h.b16 %v186
  %v1492 = vunpack.c.l.b16 %v187
  %v1493 = vunpack.c.h.b16 %v187
  %v1494 = vunpack.c.l.b16 %v188
  %v1495 = vunpack.c.h.b16 %v188
  %v1496 = vunpack.c.l.b16 %v189
  %v1497 = vunpack.c.h.b16 %v189
  %v1498 = vunpack.c.l.b16 %v190
  %v1499 = vunpack.c.h.b16 %v190
  %v1500 = vunpack.c.l.b16 %v191
  %v1501 = vunpack.c.h.b16 %v191
  %v1502 = vunpack.c.l.b16 %v192
  %v1503 = vunpack.c.h.b16 %v192
  %v1504 = vunpack.c.l.b16 %v193
  %v1505 = vunpack.c.h.b16 %v193
  %v1506 = vunpack.c.l.b16 %v194
  %v1507 = vunpack.c.h.b16 %v194
  %v1508 = vunpack.c.l.b16 %v195
  %v1509 = vunpack.c.h.b16 %v195
  %v1510 = vunpack.c.l.b16 %v196
  %v1511 = vunpack.c.h.b16 %v196
  %v1512 = vunpack.c.l.b16 %v197
  %v1513 = vunpack.c.h.b16 %v197
  %v1514 = vunpack.c.l.b16 %v198
  %v1515 = vunpack.c.h.b16 %v198
  %v1516 = vunpack.c.l.b16 %v199
  %v1517 = vunpack.c.h.b16 %v199
  %v1518 = vunpack.c.l.b16 %v200
  %v1519 = vunpack.c.h.b16 %v200
  %v1520 = vunpack.c.l.b16 %v201
  %v1521 = vunpack.c.h.b16 %v201
  %v1522 = vunpack.c.l.b16 %v202
  %v1523 = vunpack.c.h.b16 %v202
  %v1524 = vunpack.c.l.b16 %v203
  %v1525 = vunpack.c.h.b16 %v203
  %v1526 = vunpack.c.l.b16 %v204
  %v1527 = vunpack.c.h.b16 %v204
  %v1528 = vunpack.c.l.b16 %v205
  %v1529 = vunpack.c.h.b16 %v205
  %v1530 = vunpack.c.l.b16 %v206
  %v1531 = vunpack.c.h.b16 %v206
  %v1532 = vunpack.c.l.b16 %v207
  %v1533 = vunpack.c.h.b16 %v207
  %v1534 = vunpack.c.l.b16 %v208
  %v1535 = vunpack.c.h.b16 %v208
  %v1536 = vunpack.c.l.b16 %v209
  %v1537 = vunpack.c.h.b16 %v209
  %v1538 = vunpack.c.l.b16 %v210
  %v1539 = vunpack.c.h.b16 %v210
  %v1540 = vunpack.c.l.b16 %v211
  %v1541 = vunpack.c.h.b16 %v211
  %v1542 = vunpack.c.l.b16 %v212
  %v1543 = vunpack.c.h.b16 %v212
  %v1544 = vunpack.c.l.b16 %v213
  %v1545 = vunpack.c.h.b16 %v213
  %v1546 = vunpack.c.l.b16 %v214
  %v1547 = vunpack.c.h.b16 %v214
  %v1548 = vunpack.c.l.b16 %v215
  %v1549 = vunpack.c.h.b16 %v215
  %v1550 = vunpack.c.l.b16 %v216
  %v1551 = vunpack.c.h.b16 %v216
  %v1552 = vunpack.c.l.b16 %v217
  %v1553 = vunpack.c.h.b16 %v217
  %v1554 = vunpack.c.l.b16 %v218
  %v1555 = vunpack.c.h.b16 %v218
  %v1556 = vunpack.c.l.b16 %v219
  %v1557 = vunpack.c.h.b16 %v219
  %v1558 = vunpack.c.l.b16 %v220
  %v1559 = vunpack.c.h.b16 %v220
  %v1560 = vunpack.c.l.b16 %v221
  %v1561 = vunpack.c.h.b16 %v221
  %v1562 = vunpack.c.l.b16 %v222
  %v1563 = vunpack.c.h.b16 %v222
  %v1564 = vunpack.c.l.b16 %v223
  %v1565 = vunpack.c.h.b16 %v223
  %v1566 = vunpack.c.l.b16 %v224
  %v1567 = vunpack.c.h.b16 %v224
  %v1568 = vunpack.c.l.b16 %v225
  %v1569 = vunpack.c.h.b16 %v225
  %v1570 = vunpack.c.l.b16 %v226
  %v1571 = vunpack.c.h.b16 %v226
  %v1572 = vunpack.c.l.b16 %v227
  %v1573 = vunpack.c.h.b16 %v227
  %v1574 = vunpack.c.l.b16 %v228
  %v1575 = vunpack.c.h.b16 %v228
  %v1576 = vunpack.c.l.b16 %v229
  %v1577 = vunpack.c.h.b16 %v229
  %v1578 = vunpack.c.l.b16 %v230
  %v1579 = vunpack.c.h.b16 %v230
  %v1580 = vunpack.c.l.b16 %v231
  %v1581 = vunpack.c.h.b16 %v231
  %v1582 = vunpack.c.l.b16 %v232
  %v1583 = vunpack.c.h.b16 %v232
  %v1584 = vunpack.c.l.b16 %v233
  %v1585 = vunpack.c.h.b16 %v233
  %v1586 = vunpack.c.l.b16 %v234
  %v1587 = vunpack.c.h.b16 %v234
  %v1588 = vunpack.c.l.b16 %v235
  %v1589 = vunpack.c.h.b16 %v235
  %v1590 = vunpack.c.l.b16 %v236
  %v1591 = vunpack.c.h.b16 %v236
  %v1592 = vunpack.c.l.b16 %v237
  %v1593 = vunpack.c.h.b16 %v237
  %v1594 = vunpack.c.l.b16 %v238
  %v1595 = vunpack.c.h.b16 %v238
  %v1596 = vunpack.c.l.b16 %v239
  %v1597 = vunpack.c.h.b16 %v239
  %v1598 = vunpack.c.l.b16 %v240
  %v1599 = vunpack.c.h.b16 %v240
  %v1600 = vunpack.c.l.b16 %v241
  %v1601 = vunpack.c.h.b16 %v241
  %v1602 = vunpack.c.l.b16 %v242
  %v1603 = vunpack.c.h.b16 %v242
  %v1604 = vunpack.c.l.b16 %v243
  %v1605 = vunpack.c.h.b16 %v243
  %v1606 = vunpack.c.l.b16 %v244
  %v1607 = vunpack.c.h.b16 %v244
  %v1608 = vunpack.c.l.b16 %v245
  %v1609 = vunpack.c.h.b16 %v245
  %v1610 = vunpack.c.l.b16 %v246
  %v1611 = vunpack.c.h.b16 %v246
  %v1612 = vunpack.c.l.b16 %v247
  %v1613 = vunpack.c.h.b16 %v247
  %v1614 = vunpack.c.l.b16 %v248
  %v1615 = vunpack.c.h.b16 %v248
  %v1616 = vunpack.c.l.b16 %v249
  %v1617 = vunpack.c.h.b16 %v249
  %v1618 = vunpack.c.l.b16 %v250
  %v1619 = vunpack.c.h.b16 %v250
  %v1620 = vunpack.c.l.b16 %v251
  %v1621 = vunpack.c.h.b16 %v251
  %v1622 = vunpack.c.l.b16 %v252
  %v1623 = vunpack.c.h.b16 %v252
  %v1624 = vunpack.c.l.b16 %v253
  %v1625 = vunpack.c.h.b16 %v253
  %v1626 = vunpack.c.l.b16 %v254
  %v1627 = vunpack.c.h.b16 %v254
  %v1628 = vunpack.c.l.b16 %v255
  %v1629 = vunpack.c.h.b16 %v255
  %v1630 = vunpack.c.l.b16 %v256
  %v1631 = vunpack.c.h.b16 %v256
  %v1632 = vunpack.c.l.b16 %v257
  %v1633 = vunpack.c.h.b16 %v257
  %v1634 = vunpack.c.l.b16 %v258
  %v1635 = vunpack.c.h.b16 %v258
  %v1636 = vunpack.c.l.b16 %v259
  %v1637 = vunpack.c.h.b16 %v259
  %v1638 = vunpack.c.l.b16 %v260
  %v1639 = vunpack.c.h.b16 %v260
  %v1640 = vunpack.c.l.b16 %v261
  %v1641 = vunpack.c.h.b16 %v261
  %v1642 = vunpack.c.l.b16 %v262
  %v1643 = vunpack.c.h.b16 %v262
  %v1644 = vunpack.c.l.b16 %v263
  %v1645 = vunpack.c.h.b16 %v263
  %v1646 = vunpack.c.l.b16 %v264
  %v1647 = vunpack.c.h.b16 %v264
  %v1648 = vunpack.c.l.b16 %v265
  %v1649 = vunpack.c.h.b16 %v265
  %v1650 = vunpack.c.l.b16 %v266
  %v1651 = vunpack.c.h.b16 %v266
  %v1652 = vunpack.c.l.b16 %v267
  %v1653 = vunpack.c.h.b16 %v267
  %v1654 = vunpack.c.l.b16 %v268
  %v1655 = vunpack.c.h.b16 %v268
  %v1656 = vunpack.c.l.b16 %v269
  %v1657 = vunpack.c.h.b16 %v269
  %v1658 = vunpack.c.l.b16 %v270
  %v1659 = vunpack.c.h.b16 %v270
  %v1660 = vunpack.c.l.b16 %v271
  %v1661 = vunpack.c.h.b16 %v271
  %v1662 = vunpack.c.l.b16 %v272
  %v1663 = vunpack.c.h.b16 %v272
  %v1664 = vunpack.c.l.b16 %v273
  %v1665 = vunpack.c.h.b16 %v273
  %v1666 = vunpack.c.l.b16 %v274
  %v1667 = vunpack.c.h.b16 %v274
  %v1668 = vunpack.c.l.b16 %v275
  %v1669 = vunpack.c.h.b16 %v275
  %v1670 = vunpack.c.l.b16 %v276
  %v1671 = vunpack.c.h.b16 %v276
  %v1672 = vunpack.c.l.b16 %v277
  %v1673 = vunpack.c.h.b16 %v277
  %v1674 = vunpack.c.l.b16 %v278
  %v1675 = vunpack.c.h.b16 %v278
  %v1676 = vunpack.c.l.b16 %v279
  %v1677 = vunpack.c.h.b16 %v279
  %v1678 = vunpack.c.l.b16 %v280
  %v1679 = vunpack.c.h.b16 %v280
  %v1680 = vunpack.c.l.b16 %v281
  %v1681 = vunpack.c.h.b16 %v281
  %v1682 = vunpack.c.l.b16 %v282
  %v1683 = vunpack.c.h.b16 %v282
  %v1684 = vunpack.c.l.b16 %v283
  %v1685 = vunpack.c.h.b16 %v283
  %v1686 = vunpack.c.l.b16 %v284
  %v1687 = vunpack.c.h.b16 %v284
  %v1688 = vunpack.c.l.b16 %v285
  %v1689 = vunpack.c.h.b16 %v285
  %v1690 = vunpack.c.l.b16 %v286
  %v1691 = vunpack.c.h.b16 %v286
  %v1692 = vunpack.c.l.b16 %v287
  %v1693 = vunpack.c.h.b16 %v287
  %v1694 = vunpack.c.l.b16 %v288
  %v1695 = vunpack.c.h.b16 %v288
  %v1696 = vunpack.c.l.b16 %v289
  %v1697 = vunpack.c.h.b16 %v289
  %v1698 = vunpack.c.l.b16 %v290
  %v1699 = vunpack.c.h.b16 %v290
  %v1700 = vunpack.c.l.b16 %v291
  %v1701 = vunpack.c.h.b16 %v291
  %v1702 = vunpack.c.l.b16 %v292
  %v1703 = vunpack.c.h.b16 %v292
  %v1704 = vunpack.c.l.b16 %v293
  %v1705 = vunpack.c.h.b16 %v293
  %v1706 = vunpack.c.l.b16 %v294
  %v1707 = vunpack.c.h.b16 %v294
  %v1708 = vunpack.c.l.b16 %v295
  %v1709 = vunpack.c.h.b16 %v295
  %v1710 = vunpack.c.l.b16 %v296
  %v1711 = vunpack.c.h.b16 %v296
  %v1712 = vunpack.c.l.b16 %v297
  %v1713 = vunpack.c.h.b16 %v297
  %v1714 = vunpack.c.l.b16 %v298
  %v1715 = vunpack.c.h.b16 %v298
  %v1716 = vunpack.c.l.b16 %v299
  %v1717 = vunpack.c.h.b16 %v299
  %v1718 = vunpack.c.l.b16 %v300
  %v1719 = vunpack.c.h.b16 %v300
  %v1720 = vunpack.c.l.b16 %v301
  %v1721 = vunpack.c.h.b16 %v301
  %v1722 = vunpack.c.l.b16 %v302
  %v1723 = vunpack.c.h.b16 %v302
  %v1724 = vunpack.c.l.b16 %v303
  %v1725 = vunpack.c.h.b16 %v303
  %v1726 = vunpack.c.l.b16 %v304
  %v1727 = vunpack.c.h.b16 %v304
  %v1728 = vunpack.c.l.b16 %v305
  %v1729 = vunpack.c.h.b16 %v305
  %v1730 = vunpack.c.l.b16 %v306
  %v1731 = vunpack.c.h.b16 %v306
  %v1732 = vunpack.c.l.b16 %v307
  %v1733 = vunpack.c.h.b16 %v307
  %v1734 = vunpack.c.l.b16 %v308
  %v1735 = vunpack.c.h.b16 %v308
  %v1736 = vunpack.c.l.b16 %v309
  %v1737 = vunpack.c.h.b16 %v309
  %v1738 = vunpack.c.l.b16 %v310
  %v1739 = vunpack.c.h.b16 %v310
  %v1740 = vunpack.c.l.b16 %v311
  %v1741 = vunpack.c.h.b16 %v311
  %v1742 = vunpack.c.l.b16 %v312
  %v1743 = vunpack.c.h.b16 %v312
  %v1744 = vunpack.c.l.b16 %v313
  %v1745 = vunpack.c.h.b16 %v313
  %v1746 = vunpack.c.l.b16 %v314
  %v1747 = vunpack.c.h.b16 %v314
  %v1748 = vunpack.c.l.b16 %v315
  %v1749 = vunpack.c.h.b16 %v315
  %v1750 = vunpack.c.l.b16 %v316
  %v1751 = vunpack.c.h.b16 %v316
  %v1752 = vunpack.c.l.b16 %v317
  %v1753 = vunpack.c.h.b16 %v317
  %v1754 = vunpack.c.l.b16 %v318
  %v1755 = vunpack.c.h.b16 %v318
  %v1756 = vunpack.c.l.b16 %v319
  %v1757 = vunpack.c.h.b16 %v319
  %v1758 = vunpack.c.l.b16 %v320
  %v1759 = vunpack.c.h.b16 %v320
  %v1760 = vunpack.c.l.b16 %v321
  %v1761 = vunpack.c.h.b16 %v321
  %v1762 = vunpack.c.l.b16 %v322
  %v1763 = vunpack.c.h.b16 %v322
  %v1764 = vunpack.c.l.b16 %v323
  %v1765 = vunpack.c.h.b16 %v323
  %v1766 = vunpack.c.l.b16 %v324
  %v1767 = vunpack.c.h.b16 %v324
  %v1768 = vunpack.c.l.b16 %v325
  %v1769 = vunpack.c.h.b16 %v325
  %v1770 = vunpack.c.l.b16 %v326
  %v1771 = vunpack.c.h.b16 %v326
  %v1772 = vunpack.c.l.b16 %v327
  %v1773 = vunpack.c.h.b16 %v327
  %v1774 = vunpack.c.l.b16 %v328
  %v1775 = vunpack.c.h.b16 %v328
  %v1776 = vunpack.c.l.b16 %v329
  %v1777 = vunpack.c.h.b16 %v329
  %v1778 = vunpack.c.l.b16 %v330
  %v1779 = vunpack.c.h.b16 %v330
  %v1780 = vunpack.c.l.b16 %v331
  %v1781 = vunpack.c.h.b16 %v331
  %v1782 = vunpack.c.l.b16 %v332
  %v1783 = vunpack.c.h.b16 %v332
  %v1784 = vunpack.c.l.b16 %v333
  %v1785 = vunpack.c.h.b16 %v333
  %v1786 = vunpack.c.l.b16 %v334
  %v1787 = vunpack.c.h.b16 %v334
  %v1788 = vunpack.c.l.b16 %v335
  %v1789 = vunpack.c.h.b16 %v335
  %v1790 = vunpack.c.l.b16 %v336
  %v1791 = vunpack.c.h.b16 %v336
  %v1792 = vunpack.c.l.b16 %v337
  %v1793 = vunpack.c.h.b16 %v337
  %v1794 = vunpack.c.l.b16 %v338
  %v1795 = vunpack.c.h.b16 %v338
  %v1796 = vunpack.c.l.b16 %v339
  %v1797 = vunpack.c.h.b16 %v339
  %v1798 = vunpack.c.l.b16 %v340
  %v1799 = vunpack.c.h.b16 %v340
  %v1800 = vunpack.c.l.b16 %v341
  %v1801 = vunpack.c.h.b16 %v341
  %v1802 = vunpack.c.l.b16 %v342
  %v1803 = vunpack.c.h.b16 %v342
  %v1804 = vunpack.c.l.b16 %v343
  %v1805 = vunpack.c.h.b16 %v343
  %v1806 = vunpack.c.l.b16 %v344
  %v1807 = vunpack.c.h.b16 %v344
  %v1808 = vunpack.c.l.b16 %v345
  %v1809 = vunpack.c.h.b16 %v345
  %v1810 = vunpack.c.l.b16 %v346
  %v1811 = vunpack.c.h.b16 %v346
  %v1812 = vunpack.c.l.b16 %v347
  %v1813 = vunpack.c.h.b16 %v347
  %v1814 = vunpack.c.l.b16 %v348
  %v1815 = vunpack.c.h.b16 %v348
  %v1816 = vunpack.c.l.b16 %v349
  %v1817 = vunpack.c.h.b16 %v349
  %v1818 = vunpack.c.l.b16 %v350
  %v1819 = vunpack.c.h.b16 %v350
  %v1820 = vunpack.c.l.b16 %v351
  %v1821 = vunpack.c.h.b16 %v351
  %v1822 = vunpack.c.l.b16 %v352
  %v1823 = vunpack.c.h.b16 %v352
  %v1824 = vunpack.c.l.b16 %v353
  %v1825 = vunpack.c.h.b16 %v353
  %v1826 = vunpack.c.l.b16 %v354
  %v1827 = vunpack.c.h.b16 %v354
  %v1828 = vunpack.c.l.b16 %v355
  %v1829 = vunpack.c.h.b16 %v355
  %v1830 = vunpack.c.l.b16 %v356
  %v1831 = vunpack.c.h.b16 %v356
  %v1832 = vunpack.c.l.b16 %v357
  %v1833 = vunpack.c.h.b16 %v357
  %v1834 = vunpack.c.l.b16 %v358
  %v1835 = vunpack.c.h.b16 %v358
  %v1836 = vunpack.c.l.b16 %v359
  %v1837 = vunpack.c.h.b16 %v359
  %v1838 = vunpack.c.l.b16 %v360
  %v1839 = vunpack.c.h.b16 %v360
  %v1840 = vunpack.c.l.b16 %v361
  %v1841 = vunpack.c.h.b16 %v361
  %v1842 = vunpack.c.l.b16 %v362
  %v1843 = vunpack.c.h.b16 %v362
  %v1844 = vunpack.c.l.b16 %v363
  %v1845 = vunpack.c.h.b16 %v363
  %v1846 = vunpack.c.l.b16 %v364
  %v1847 = vunpack.c.h.b16 %v364
  %v1848 = vunpack.c.l.b16 %v365
  %v1849 = vunpack.c.h.b16 %v365
  %v1850 = vunpack.c.l.b16 %v366
  %v1851 = vunpack.c.h.b16 %v366
  %v1852 = vunpack.c.l.b16 %v367
  %v1853 = vunpack.c.h.b16 %v367
  %v1854 = vunpack.c.l.b16 %v368
  %v1855 = vunpack.c.h.b16 %v368
  %v1856 = vunpack.c.l.b16 %v369
  %v1857 = vunpack.c.h.b16 %v369
  %v1858 = vunpack.c.l.b16 %v370
  %v1859 = vunpack.c.h.b16 %v370
  %v1860 = vunpack.c.l.b16 %v371
  %v1861 = vunpack.c.h.b16 %v371
  %v1862 = vunpack.c.l.b16 %v372
  %v1863 = vunpack.c.h.b16 %v372
  %v1864 = vunpack.c.l.b16 %v373
  %v1865 = vunpack.c.h.b16 %v373
  %v1866 = vunpack.c.l.b16 %v374
  %v1867 = vunpack.c.h.b16 %v374
  %v1868 = vunpack.c.l.b16 %v375
  %v1869 = vunpack.c.h.b16 %v375
  %v1870 = vunpack.c.l.b16 %v376
  %v1871 = vunpack.c.h.b16 %v376
  %v1872 = vunpack.c.l.b16 %v377
  %v1873 = vunpack.c.h.b16 %v377
  %v1874 = vunpack.c.l.b16 %v378
  %v1875 = vunpack.c.h.b16 %v378
  %v1876 = vunpack.c.l.b16 %v379
  %v1877 = vunpack.c.h.b16 %v379
  %v1878 = vunpack.c.l.b16 %v380
  %v1879 = vunpack.c.h.b16 %v380
  %v1880 = vunpack.c.l.b16 %v381
  %v1881 = vunpack.c.h.b16 %v381
  %v1882 = vunpack.c.l.b16 %v382
  %v1883 = vunpack.c.h.b16 %v382
  %v1884 = vunpack.c.l.b16 %v383
  %v1885 = vunpack.c.h.b16 %v383
  %v1886 = vunpack.c.l.b16 %v384
  %v1887 = vunpack.c.h.b16 %v384
  %v1888 = vunpack.c.l.b16 %v385
  %v1889 = vunpack.c.h.b16 %v385
  %v1890 = vunpack.c.l.b16 %v386
  %v1891 = vunpack.c.h.b16 %v386
  %v1892 = vunpack.c.l.b16 %v387
  %v1893 = vunpack.c.h.b16 %v387
  %v1894 = vunpack.c.l.b16 %v388
  %v1895 = vunpack.c.h.b16 %v388
  %v1896 = vunpack.c.l.b16 %v389
  %v1897 = vunpack.c.h.b16 %v389
  %v1898 = vunpack.c.l.b16 %v390
  %v1899 = vunpack.c.h.b16 %v390
  %v1900 = vunpack.c.l.b16 %v391
  %v1901 = vunpack.c.h.b16 %v391
  %v1902 = vunpack.c.l.b16 %v392
  %v1903 = vunpack.c.h.b16 %v392
  %v1904 = vunpack.c.l.b16 %v393
  %v1905 = vunpack.c.h.b16 %v393
  %v1906 = vunpack.c.l.b16 %v394
  %v1907 = vunpack.c.h.b16 %v394
  %v1908 = vunpack.c.l.b16 %v395
  %v1909 = vunpack.c.h.b16 %v395
  %v1910 = vunpack.c.l.b16 %v396
  %v1911 = vunpack.c.h.b16 %v396
  %v1912 = vunpack.c.l.b16 %v397
  %v1913 = vunpack.c.h.b16 %v397
  %v1914 = vunpack.c.l.b16 %v398
  %v1915 = vunpack.c.h.b16 %v398
  %v1916 = vunpack.c.l.b16 %v399
  %v1917 = vunpack.c.h.b16 %v399
  %v1918 = vunpack.c.l.b16 %v400
  %v1919 = vunpack.c.h.b16 %v400
  %v1920 = vunpack.c.l.b16 %v401
  %v1921 = vunpack.c.h.b16 %v401
  %v1922 = vunpack.c.l.b16 %v402
  %v1923 = vunpack.c.h.b16 %v402
  %v1924 = vunpack.c.l.b16 %v403
  %v1925 = vunpack.c.h.b16 %v403
  %v1926 = vunpack.c.l.b16 %v404
  %v1927 = vunpack.c.h.b16 %v404
  %v1928 = vunpack.c.l.b16 %v405
  %v1929 = vunpack.c.h.b16 %v405
  %v1930 = vunpack.c.l.b16 %v406
  %v1931 = vunpack.c.h.b16 %v406
  %v1932 = vunpack.c.l.b16 %v407
  %v1933 = vunpack.c.h.b16 %v407
  %v1934 = vunpack.c.l.b16 %v408
  %v1935 = vunpack.c.h.b16 %v408
  %v1936 = vunpack.c.l.b16 %v409
  %v1937 = vunpack.c.h.b16 %v409
  %v1938 = vunpack.c.l.b16 %v410
  %v1939 = vunpack.c.h.b16 %v410
  %v1940 = vunpack.c.l.b16 %v411
  %v1941 = vunpack.c.h.b16 %v411
  %v1942 = vunpack.c.l.b16 %v412
  %v1943 = vunpack.c.h.b16 %v412
  %v1944 = vunpack.c.l.b16 %v413
  %v1945 = vunpack.c.h.b16 %v413
  %v1946 = vunpack.c.l.b16 %v414
  %v1947 = vunpack.c.h.b16 %v414
  %v1948 = vunpack.c.l.b16 %v415
  %v1949 = vunpack.c.h.b16 %v415
  %v1950 = vunpack.c.l.b16 %v416
  %v1951 = vunpack.c.h.b16 %v416
  %v1952 = vunpack.c.l.b16 %v417
  %v1953 = vunpack.c.h.b16 %v417
  %v1954 = vunpack.c.l.b16 %v418
  %v1955 = vunpack.c.h.b16 %v418
  %v1956 = vunpack.c.l.b16 %v419
  %v1957 = vunpack.c.h.b16 %v419
  %v1958 = vunpack.c.l.b16 %v420
  %v1959 = vunpack.c.h.b16 %v420
  %v1960 = vunpack.c.l.b16 %v421
  %v1961 = vunpack.c.h.b16 %v421
  %v1962 = vunpack.c.l.b16 %v422
  %v1963 = vunpack.c.h.b16 %v422
  %v1964 = vunpack.c.l.b16 %v423
  %v1965 = vunpack.c.h.b16 %v423
  %v1966 = vunpack.c.l.b16 %v424
  %v1967 = vunpack.c.h.b16 %v424
  %v1968 = vunpack.c.l.b16 %v425
  %v1969 = vunpack.c.h.b16 %v425
  %v1970 = vunpack.c.l.b16 %v426
  %v1971 = vunpack.c.h.b16 %v426
  %v1972 = vunpack.c.l.b16 %v427
  %v1973 = vunpack.c.h.b16 %v427
  %v1974 = vunpack.c.l.b16 %v428
  %v1975 = vunpack.c.h.b16 %v428
  %v1976 = vunpack.c.l.b16 %v429
  %v1977 = vunpack.c.h.b16 %v429
  %v1978 = vunpack.c.l.b16 %v430
  %v1979 = vunpack.c.h.b16 %v430
  %v1980 = vunpack.c.l.b16 %v431
  %v1981 = vunpack.c.h.b16 %v431
  %v1982 = vunpack.c.l.b16 %v432
  %v1983 = vunpack.c.h.b16 %v432
  %v1984 = vunpack.c.l.b16 %v433
  %v1985 = vunpack.c.h.b16 %v433
  %v1986 = vunpack.c.l.b16 %v434
  %v1987 = vunpack.c.h.b16 %v434
  %v1988 = vunpack.c.l.b16 %v435
  %v1989 = vunpack.c.h.b16 %v435
  %v1990 = vunpack.c.l.b16 %v436
  %v1991 = vunpack.c.h.b16 %v436
  %v1992 = vunpack.c.l.b16 %v437
  %v1993 = vunpack.c.h.b16 %v437
  %v1994 = vunpack.c.l.b16 %v438
  %v1995 = vunpack.c.h.b16 %v438
  %v1996 = vunpack.c.l.b16 %v439
  %v1997 = vunpack.c.h.b16 %v439
  %v1998 = vunpack.c.l.b16 %v440
  %v1999 = vunpack.c.h.b16 %v440
  %v2000 = vunpack.c.l.b16 %v441
  %v2001 = vunpack.c.h.b16 %v441
  %v2002 = vunpack.c.l.b16 %v442
  %v2003 = vunpack.c.h.b16 %v442
  %v2004 = vunpack.c.l.b16 %v443
  %v2005 = vunpack.c.h.b16 %v443
  %v2006 = vunpack.c.l.b16 %v444
  %v2007 = vunpack.c.h.b16 %v444
  %v2008 = vunpack.c.l.b16 %v445
  %v2009 = vunpack.c.h.b16 %v445
  %v2010 = vunpack.c.l.b16 %v446
  %v2011 = vunpack.c.h.b16 %v446
  %v2012 = vunpack.c.l.b16 %v447
  %v2013 = vunpack.c.h.b16 %v447
  %v2014 = vunpack.c.l.b16 %v448
  %v2015 = vunpack.c.h.b16 %v448
  %v2016 = vunpack.c.l.b16 %v449
  %v2017 = vunpack.c.h.b16 %v449
  %v2018 = vunpack.c.l.b16 %v450
  %v2019 = vunpack.c.h.b16 %v450
  %v2020 = vunpack.c.l.b16 %v451
  %v2021 = vunpack.c.h.b16 %v451
  %v2022 = vunpack.c.l.b16 %v452
  %v2023 = vunpack.c.h.b16 %v452
  %v2024 = vunpack.c.l.b16 %v453
  %v2025 = vunpack.c.h.b16 %v453
  %v2026 = vunpack.c.l.b16 %v454
  %v2027 = vunpack.c.h.b16 %v454
  %v2028 = vunpack.c.l.b16 %v455
  %v2029 = vunpack.c.h.b16 %v455
  %v2030 = vunpack.c.l.b16 %v456
  %v2031 = vunpack.c.h.b16 %v456
  %v2032 = vunpack.c.l.b16 %v457
  %v2033 = vunpack.c.h.b16 %v457
  %v2034 = vunpack.c.l.b16 %v458
  %v2035 = vunpack.c.h.b16 %v458
  %v2036 = vunpack.c.l.b16 %v459
  %v2037 = vunpack.c.h.b16 %v459
  %v2038 = vunpack.c.l.b16 %v460
  %v2039 = vunpack.c.h.b16 %v460
  %v2040 = vunpack.c.l.b16 %v461
  %v2041 = vunpack.c.h.b16 %v461
  %v2042 = vunpack.c.l.b16 %v462
  %v2043 = vunpack.c.h.b16 %v462
  %v2044 = vunpack.c.l.b16 %v463
  %v2045 = vunpack.c.h.b16 %v463
  %v2046 = vunpack.c.l.b16 %v464
  %v2047 = vunpack.c.h.b16 %v464
  %v2048 = vunpack.c.l.b16 %v465
  %v2049 = vunpack.c.h.b16 %v465
  %v2050 = vunpack.c.l.b16 %v466
  %v2051 = vunpack.c.h.b16 %v466
  %v2052 = vunpack.c.l.b16 %v467
  %v2053 = vunpack.c.h.b16 %v467
  %v2054 = vunpack.c.l.b16 %v468
  %v2055 = vunpack.c.h.b16 %v468
  %v2056 = vunpack.c.l.b16 %v469
  %v2057 = vunpack.c.h.b16 %v469
  %v2058 = vunpack.c.l.b16 %v470
  %v2059 = vunpack.c.h.b16 %v470
  %v2060 = vunpack.c.l.b16 %v471
  %v2061 = vunpack.c.h.b16 %v471
  %v2062 = vunpack.c.l.b16 %v472
  %v2063 = vunpack.c.h.b16 %v472
  %v2064 = vunpack.c.l.b16 %v473
  %v2065 = vunpack.c.h.b16 %v473
  %v2066 = vunpack.c.l.b16 %v474
  %v2067 = vunpack.c.h.b16 %v474
  %v2068 = vunpack.c.l.b16 %v475
  %v2069 = vunpack.c.h.b16 %v475
  %v2070 = vunpack.c.l.b16 %v476
  %v2071 = vunpack.c.h.b16 %v476
  %v2072 = vunpack.c.l.b16 %v477
  %v2073 = vunpack.c.h.b16 %v477
  %v2074 = vunpack.c.l.b16 %v478
  %v2075 = vunpack.c.h.b16 %v478
  %v2076 = vunpack.c.l.b16 %v479
  %v2077 = vunpack.c.h.b16 %v479
  %v2078 = vunpack.c.l.b16 %v480
  %v2079 = vunpack.c.h.b16 %v480
  %v2080 = vunpack.c.l.b16 %v481
  %v2081 = vunpack.c.h.b16 %v481
  %v2082 = vunpack.c.l.b16 %v482
  %v2083 = vunpack.c.h.b16 %v482
  %v2084 = vunpack.c.l.b16 %v483
  %v2085 = vunpack.c.h.b16 %v483
  %v2086 = vunpack.c.l.b16 %v484
  %v2087 = vunpack.c.h.b16 %v484
  %v2088 = vunpack.c.l.b16 %v485
  %v2089 = vunpack.c.h.b16 %v485
  %v2090 = vunpack.c.l.b16 %v486
  %v2091 = vunpack.c.h.b16 %v486
  %v2092 = vunpack.c.l.b16 %v487
  %v2093 = vunpack.c.h.b16 %v487
  %v2094 = vunpack.c.l.b16 %v488
  %v2095 = vunpack.c.h.b16 %v488
  %v2096 = vunpack.c.l.b16 %v489
  %v2097 = vunpack.c.h.b16 %v489
  %v2098 = vunpack.c.l.b16 %v490
  %v2099 = vunpack.c.h.b16 %v490
  %v2100 = vunpack.c.l.b16 %v491
  %v2101 = vunpack.c.h.b16 %v491
  %v2102 = vunpack.c.l.b16 %v492
  %v2103 = vunpack.c.h.b16 %v492
  %v2104 = vunpack.c.l.b16 %v493
  %v2105 = vunpack.c.h.b16 %v493
  %v2106 = vunpack.c.l.b16 %v494
  %v2107 = vunpack.c.h.b16 %v494
  %v2108 = vunpack.c.l.b16 %v495
  %v2109 = vunpack.c.h.b16 %v495
  %v2110 = vunpack.c.l.b16 %v496
  %v2111 = vunpack.c.h.b16 %v496
  %v2112 = vunpack.c.l.b16 %v497
  %v2113 = vunpack.c.h.b16 %v497
  %v2114 = vunpack.c.l.b16 %v498
  %v2115 = vunpack.c.h.b16 %v498
  %v2116 = vunpack.c.l.b16 %v499
  %v2117 = vunpack.c.h.b16 %v499
  %v2118 = vunpack.c.l.b16 %v500
  %v2119 = vunpack.c.h.b16 %v500
  %v2120 = vunpack.c.l.b16 %v501
  %v2121 = vunpack.c.h.b16 %v501
  %v2122 = vunpack.c.l.b16 %v502
  %v2123 = vunpack.c.h.b16 %v502
  %v2124 = vunpack.c.l.b16 %v503
  %v2125 = vunpack.c.h.b16 %v503
  %v2126 = vunpack.c.l.b16 %v504
  %v2127 = vunpack.c.h.b16 %v504
  %v2128 = vunpack.c.l.b16 %v505
  %v2129 = vunpack.c.h.b16 %v505
  %v2130 = vunpack.c.l.b16 %v506
  %v2131 = vunpack.c.h.b16 %v506
  %v2132 = vunpack.c.l.b16 %v507
  %v2133 = vunpack.c.h.b16 %v507
  %v2134 = vunpack.c.l.b16 %v508
  %v2135 = vunpack.c.h.b16 %v508
  %v2136 = vunpack.c.l.b16 %v509
  %v2137 = vunpack.c.h.b16 %v509
  %v2138 = vunpack.c.l.b16 %v510
  %v2139 = vunpack.c.h.b16 %v510
  %v2140 = vunpack.c.l.b16 %v511
  %v2141 = vunpack.c.h.b16 %v511
  %v2142 = vunpack.c.l.b16 %v512
  %v2143 = vunpack.c.h.b16 %v512
  %v2144 = vunpack.c.l.b16 %v513
  %v2145 = vunpack.c.h.b16 %v513
  %v2146 = vunpack.c.l.b16 %v514
  %v2147 = vunpack.c.h.b16 %v514
  %v2148 = vunpack.c.l.b16 %v515
  %v2149 = vunpack.c.h.b16 %v515
  %v2150 = vunpack.c.l.b16 %v516
  %v2151 = vunpack.c.h.b16 %v516
  %v2152 = vunpack.c.l.b16 %v517
  %v2153 = vunpack.c.h.b16 %v517
  %v2154 = vunpack.c.l.b16 %v518
  %v2155 = vunpack.c.h.b16 %v518
  %v2156 = vunpack.c.l.b16 %v519
  %v2157 = vunpack.c.h.b16 %v519
  %v2158 = vunpack.c.l.b16 %v520
  %v2159 = vunpack.c.h.b16 %v520
  %v2160 = vunpack.c.l.b16 %v521
  %v2161 = vunpack.c.h.b16 %v521
  %v2162 = vunpack.c.l.b16 %v522
  %v2163 = vunpack.c.h.b16 %v522
  %v2164 = vunpack.c.l.b16 %v523
  %v2165 = vunpack.c.h.b16 %v523
  %v2166 = vunpack.c.l.b16 %v524
  %v2167 = vunpack.c.h.b16 %v524
  %v2168 = vunpack.c.l.b16 %v525
  %v2169 = vunpack.c.h.b16 %v525
  %v2170 = vunpack.c.l.b16 %v526
  %v2171 = vunpack.c.h.b16 %v526
  %v2172 = vunpack.c.l.b16 %v527
  %v2173 = vunpack.c.h.b16 %v527
  %v2174 = vunpack.c.l.b16 %v528
  %v2175 = vunpack.c.h.b16 %v528
  %v2176 = vunpack.c.l.b16 %v529
  %v2177 = vunpack.c.h.b16 %v529
  %v2178 = vunpack.c.l.b16 %v530
  %v2179 = vunpack.c.h.b16 %v530
  %v2180 = vunpack.c.l.b16 %v531
  %v2181 = vunpack.c.h.b16 %v531
  %v2182 = vunpack.c.l.b16 %v532
  %v2183 = vunpack.c.h.b16 %v532
  %v2184 = vunpack.c.l.b16 %v533
  %v2185 = vunpack.c.h.b16 %v533
  %v2186 = vunpack.c.l.b16 %v534
  %v2187 = vunpack.c.h.b16 %v534
  %v2188 = vunpack.c.l.b16 %v535
  %v2189 = vunpack.c.h.b16 %v535
  %v2190 = vunpack.c.l.b16 %v536
  %v2191 = vunpack.c.h.b16 %v536
  %v2192 = vunpack.c.l.b16 %v537
  %v2193 = vunpack.c.h.b16 %v537
  %v2194 = vunpack.c.l.b16 %v538
  %v2195 = vunpack.c.h.b16 %v538
  %v2196 = vunpack.c.l.b16 %v539
  %v2197 = vunpack.c.h.b16 %v539
  %v2198 = vunpack.c.l.b16 %v540
  %v2199 = vunpack.c.h.b16 %v540
  %v2200 = vunpack.c.l.b16 %v541
  %v2201 = vunpack.c.h.b16 %v541
  %v2202 = vpack.c.b16 %v1180, %v1178
  %v2203 = vpack.c.b16 %v1181, %v1179
  %v2204 = vpack.c.b16 %v1184, %v1182
  %v2205 = vpack.c.b16 %v1185, %v1183
  %v2206 = vpack.c.b16 %v1188, %v1186
  %v2207 = vpack.c.b16 %v1189, %v1187
  %v2208 = vpack.c.b16 %v1192, %v1190
  %v2209 = vpack.c.b16 %v1193, %v1191
  %v2210 = vpack.c.b16 %v1196, %v1194
  %v2211 = vpack.c.b16 %v1197, %v1195
  %v2212 = vpack.c.b16 %v1200, %v1198
  %v2213 = vpack.c.b16 %v1201, %v1199
  %v2214 = vpack.c.b16 %v1204, %v1202
  %v2215 = vpack.c.b16 %v1205, %v1203
  %v2216 = vpack.c.b16 %v1208, %v1206
  %v2217 = vpack.c.b16 %v1209, %v1207
  %v2218 = vpack.c.b16 %v1212, %v1210
  %v2219 = vpack.c.b16 %v1213, %v1211
  %v2220 = vpack.c.b16 %v1216, %v1214
  %v2221 = vpack.c.b16 %v1217, %v1215
  %v2222 = vpack.c.b16 %v1220, %v1218
  %v2223 = vpack.c.b16 %v1221, %v1219
  %v2224 = vpack.c.b16 %v1224, %v1222
  %v2225 = vpack.c.b16 %v1225, %v1223
  %v2226 = vpack.c.b16 %v1228, %v1226
  %v2227 = vpack.c.b16 %v1229, %v1227
  %v2228 = vpack.c.b16 %v1232, %v1230
  %v2229 = vpack.c.b16 %v1233, %v1231
  %v2230 = vpack.c.b16 %v1236, %v1234
  %v2231 = vpack.c.b16 %v1237, %v1235
  %v2232 = vpack.c.b16 %v1240, %v1238
  %v2233 = vpack.c.b16 %v1241, %v1239
  %v2234 = vpack.c.b16 %v1244, %v1242
  %v2235 = vpack.c.b16 %v1245, %v1243
  %v2236 = vpack.c.b16 %v1248, %v1246
  %v2237 = vpack.c.b16 %v1249, %v1247
  %v2238 = vpack.c.b16 %v1252, %v1250
  %v2239 = vpack.c.b16 %v1253, %v1251
  %v2240 = vpack.c.b16 %v1256, %v1254
  %v2241 = vpack.c.b16 %v1257, %v1255
  %v2242 = vpack.c.b16 %v1260, %v1258
  %v2243 = vpack.c.b16 %v1261, %v1259
  %v2244 = vpack.c.b16 %v1264, %v1262
  %v2245 = vpack.c.b16 %v1265, %v1263
  %v2246 = vpack.c.b16 %v1268, %v1266
  %v2247 = vpack.c.b16 %v1269, %v1267
  %v2248 = vpack.c.b16 %v1272, %v1270
  %v2249 = vpack.c.b16 %v1273, %v1271
  %v2250 = vpack.c.b16 %v1276, %v1274
  %v2251 = vpack.c.b16 %v1277, %v1275
  %v2252 = vpack.c.b16 %v1280, %v1278
  %v2253 = vpack.c.b16 %v1281, %v1279
  %v2254 = vpack.c.b16 %v1284, %v1282
  %v2255 = vpack.c.b16 %v1285, %v1283
  %v2256 = vpack.c.b16 %v1288, %v1286
  %v2257 = vpack.c.b16 %v1289, %v1287
  %v2258 = vpack.c.b16 %v1292, %v1290
  %v2259 = vpack.c.b16 %v1293, %v1291
  %v2260 = vpack.c.b16 %v1296, %v1294
  %v2261 = vpack.c.b16 %v1297, %v1295
  %v2262 = vpack.c.b16 %v1300, %v1298
  %v2263 = vpack.c.b16 %v1301, %v1299
  %v2264 = vpack.c.b16 %v1304, %v1302
  %v2265 = vpack.c.b16 %v1305, %v1303
  %v2266 = vpack.c.b16 %v1308, %v1306
  %v2267 = vpack.c.b16 %v1309, %v1307
  %v2268 = vpack.c.b16 %v1312, %v1310
  %v2269 = vpack.c.b16 %v1313, %v1311
  %v2270 = vpack.c.b16 %v1316, %v1314
  %v2271 = vpack.c.b16 %v1317, %v1315
  %v2272 = vpack.c.b16 %v1320, %v1318
  %v2273 = vpack.c.b16 %v1321, %v1319
  %v2274 = vpack.c.b16 %v1324, %v1322
  %v2275 = vpack.c.b16 %v1325, %v1323
  %v2276 = vpack.c.b16 %v1328, %v1326
  %v2277 = vpack.c.b16 %v1329, %v1327
  %v2278 = vpack.c.b16 %v1332, %v1330
  %v2279 = vpack.c.b16 %v1333, %v1331
  %v2280 = vpack.c.b16 %v1336, %v1334
  %v2281 = vpack.c.b16 %v1337, %v1335
  %v2282 = vpack.c.b16 %v1340, %v1338
  %v2283 = vpack.c.b16 %v1341, %v1339
  %v2284 = vpack.c.b16 %v1344, %v1342
  %v2285 = vpack.c.b16 %v1345, %v1343
  %v2286 = vpack.c.b16 %v1348, %v1346
  %v2287 = vpack.c.b16 %v1349, %v1347
  %v2288 = vpack.c.b16 %v1352, %v1350
  %v2289 = vpack.c.b16 %v1353, %v1351
  %v2290 = vpack.c.b16 %v1356, %v1354
  %v2291 = vpack.c.b16 %v1357, %v1355
  %v2292 = vpack.c.b16 %v1360, %v1358
  %v2293 = vpack.c.b16 %v1361, %v1359
  %v2294 = vpack.c.b16 %v1364, %v1362
  %v2295 = vpack.c.b16 %v1365, %v1363
  %v2296 = vpack.c.b16 %v1368, %v1366
  %v2297 = vpack.c.b16 %v1369, %v1367
  %v2298 = vpack.c.b16 %v1372, %v1370
  %v2299 = vpack.c.b16 %v1373, %v1371
  %v2300 = vpack.c.b16 %v1376, %v1374
  %v2301 = vpack.c.b16 %v1377, %v1375
  %v2302 = vpack.c.b16 %v1380, %v1378
  %v2303 = vpack.c.b16 %v1381, %v1379
  %v2304 = vpack.c.b16 %v1384, %v1382
  %v2305 = vpack.c.b16 %v1385, %v1383
  %v2306 = vpack.c.b16 %v1388, %v1386
  %v2307 = vpack.c.b16 %v1389, %v1387
  %v2308 = vpack.c.b16 %v1392, %v1390
  %v2309 = vpack.c.b16 %v1393, %v1391
  %v2310 = vpack.c.b16 %v1396, %v1394
  %v2311 = vpack.c.b16 %v1397, %v1395
  %v2312 = vpack.c.b16 %v1400, %v1398
  %v2313 = vpack.c.b16 %v1401, %v1399
  %v2314 = vpack.c.b16 %v1404, %v1402
  %v2315 = vpack.c.b16 %v1405, %v1403
  %v2316 = vpack.c.b16 %v1408, %v1406
  %v2317 = vpack.c.b16 %v1409, %v1407
  %v2318 = vpack.c.b16 %v1412, %v1410
  %v2319 = vpack.c.b16 %v1413, %v1411
  %v2320 = vpack.c.b16 %v1416, %v1414
  %v2321 = vpack.c.b16 %v1417, %v1415
  %v2322 = vpack.c.b16 %v1420, %v1418
  %v2323 = vpack.c.b16 %v1421, %v1419
  %v2324 = vpack.c.b16 %v1424, %v1422
  %v2325 = vpack.c.b16 %v1425, %v1423
  %v2326 = vpack.c.b16 %v1428, %v1426
  %v2327 = vpack.c.b16 %v1429, %v1427
  %v2328 = vpack.c.b16 %v1432, %v1430
  %v2329 = vpack.c.b16 %v1433, %v1431
  %v2330 = vpack.c.b16 %v1436, %v1434
  %v2331 = vpack.c.b16 %v1437, %v1435
  %v2332 = vpack.c.b16 %v1440, %v1438
  %v2333 = vpack.c.b16 %v1441, %v1439
  %v2334 = vpack.c.b16 %v1444, %v1442
  %v2335 = vpack.c.b16 %v1445, %v1443
  %v2336 = vpack.c.b16 %v1448, %v1446
  %v2337 = vpack.c.b16 %v1449, %v1447
  %v2338 = vpack.c.b16 %v1452, %v1450
  %v2339 = vpack.c.b16 %v1453, %v1451
  %v2340 = vpack.c.b16 %v1456, %v1454
  %v2341 = vpack.c.b16 %v1457, %v1455
  %v2342 = vpack.c.b16 %v1460, %v1458
  %v2343 = vpack.c.b16 %v1461, %v1459
  %v2344 = vpack.c.b16 %v1464, %v1462
  %v2345 = vpack.c.b16 %v1465, %v1463
  %v2346 = vpack.c.b16 %v1468, %v1466
  %v2347 = vpack.c.b16 %v1469, %v1467
  %v2348 = vpack.c.b16 %v1472, %v1470
  %v2349 = vpack.c.b16 %v1473, %v1471
  %v2350 = vpack.c.b16 %v1476, %v1474
  %v2351 = vpack.c.b16 %v1477, %v1475
  %v2352 = vpack.c.b16 %v1480, %v1478
  %v2353 = vpack.c.b16 %v1481, %v1479
  %v2354 = vpack.c.b16 %v1484, %v1482
  %v2355 = vpack.c.b16 %v1485, %v1483
  %v2356 = vpack.c.b16 %v1488, %v1486
  %v2357 = vpack.c.b16 %v1489, %v1487
  %v2358 = vpack.c.b16 %v1492, %v1490
  %v2359 = vpack.c.b16 %v1493, %v1491
  %v2360 = vpack.c.b16 %v1496, %v1494
  %v2361 = vpack.c.b16 %v1497, %v1495
  %v2362 = vpack.c.b16 %v1500, %v1498
  %v2363 = vpack.c.b16 %v1501, %v1499
  %v2364 = vpack.c.b16 %v1504, %v1502
  %v2365 = vpack.c.b16 %v1505, %v1503
  %v2366 = vpack.c.b16 %v1508, %v1506
  %v2367 = vpack.c.b16 %v1509, %v1507
  %v2368 = vpack.c.b16 %v1512, %v1510
  %v2369 = vpack.c.b16 %v1513, %v1511
  %v2370 = vpack.c.b16 %v1516, %v1514
  %v2371 = vpack.c.b16 %v1517, %v1515
  %v2372 = vpack.c.b16 %v1520, %v1518
  %v2373 = vpack.c.b16 %v1521, %v1519
  %v2374 = vpack.c.b16 %v1524, %v1522
  %v2375 = vpack.c.b16 %v1525, %v1523
  %v2376 = vpack.c.b16 %v1528, %v1526
  %v2377 = vpack.c.b16 %v1529, %v1527
  %v2378 = vpack.c.b16 %v1532, %v1530
  %v2379 = vpack.c.b16 %v1533, %v1531
  %v2380 = vpack.c.b16 %v1536, %v1534
  %v2381 = vpack.c.b16 %v1537, %v1535
  %v2382 = vpack.c.b16 %v1540, %v1538
  %v2383 = vpack.c.b16 %v1541, %v1539
  %v2384 = vpack.c.b16 %v1544, %v1542
  %v2385 = vpack.c.b16 %v1545, %v1543
  %v2386 = vpack.c.b16 %v1548, %v1546
  %v2387 = vpack.c.b16 %v1549, %v1547
  %v2388 = vpack.c.b16 %v1552, %v1550
  %v2389 = vpack.c.b16 %v1553, %v1551
  %v2390 = vpack.c.b16 %v1556, %v1554
  %v2391 = vpack.c.b16 %v1557, %v1555
  %v2392 = vpack.c.b16 %v1560, %v1558
  %v2393 = vpack.c.b16 %v1561, %v1559
  %v2394 = vpack.c.b16 %v1564, %v1562
  %v2395 = vpack.c.b16 %v1565, %v1563
  %v2396 = vpack.c.b16 %v1568, %v1566
  %v2397 = vpack.c.b16 %v1569, %v1567
  %v2398 = vpack.c.b16 %v1572, %v1570
  %v2399 = vpack.c.b16 %v1573, %v1571
  %v2400 = vpack.c.b16 %v1576, %v1574
  %v2401 = vpack.c.b16 %v1577, %v1575
  %v2402 = vpack.c.b16 %v1580, %v1578
  %v2403 = vpack.c.b16 %v1581, %v1579
  %v2404 = vpack.c.b16 %v1584, %v1582
  %v2405 = vpack.c.b16 %v1585, %v1583
  %v2406 = vpack.c.b16 %v1588, %v1586
  %v2407 = vpack.c.b16 %v1589, %v1587
  %v2408 = vpack.c.b16 %v1592, %v1590
  %v2409 = vpack.c.b16 %v1593, %v1591
  %v2410 = vpack.c.b16 %v1596, %v1594
  %v2411 = vpack.c.b16 %v1597, %v1595
  %v2412 = vpack.c.b16 %v1600, %v1598
  %v2413 = vpack.c.b16 %v1601, %v1599
  %v2414 = vpack.c.b16 %v1604, %v1602
  %v2415 = vpack.c.b16 %v1605, %v1603
  %v2416 = vpack.c.b16 %v1608, %v1606
  %v2417 = vpack.c.b16 %v1609, %v1607
  %v2418 = vpack.c.b16 %v1612, %v1610
  %v2419 = vpack.c.b16 %v1613, %v1611
  %v2420 = vpack.c.b16 %v1616, %v1614
  %v2421 = vpack.c.b16 %v1617, %v1615
  %v2422 = vpack.c.b16 %v1620, %v1618
  %v2423 = vpack.c.b16 %v1621, %v1619
  %v2424 = vpack.c.b16 %v1624, %v1622
  %v2425 = vpack.c.b16 %v1625, %v1623
  %v2426 = vpack.c.b16 %v1628, %v1626
  %v2427 = vpack.c.b16 %v1629, %v1627
  %v2428 = vpack.c.b16 %v1632, %v1630
  %v2429 = vpack.c.b16 %v1633, %v1631
  %v2430 = vpack.c.b16 %v1636, %v1634
  %v2431 = vpack.c.b16 %v1637, %v1635
  %v2432 = vpack.c.b16 %v1640, %v1638
  %v2433 = vpack.c.b16 %v1641, %v1639
  %v2434 = vpack.c.b16 %v1644, %v1642
  %v2435 = vpack.c.b16 %v1645, %v1643
  %v2436 = vpack.c.b16 %v1648, %v1646
  %v2437 = vpack.c.b16 %v1649, %v1647
  %v2438 = vpack.c.b16 %v1652, %v1650
  %v2439 = vpack.c.b16 %v1653, %v1651
  %v2440 = vpack.c.b16 %v1656, %v1654
  %v2441 = vpack.c.b16 %v1657, %v1655
  %v2442 = vpack.c.b16 %v1660, %v1658
  %v2443 = vpack.c.b16 %v1661, %v1659
  %v2444 = vpack.c.b16 %v1664, %v1662
  %v2445 = vpack.c.b16 %v1665, %v1663
  %v2446 = vpack.c.b16 %v1668, %v1666
  %v2447 = vpack.c.b16 %v1669, %v1667
  %v2448 = vpack.c.b16 %v1672, %v1670
  %v2449 = vpack.c.b16 %v1673, %v1671
  %v2450 = vpack.c.b16 %v1676, %v1674
  %v2451 = vpack.c.b16 %v1677, %v1675
  %v2452 = vpack.c.b16 %v1680, %v1678
  %v2453 = vpack.c.b16 %v1681, %v1679
  %v2454 = vpack.c.b16 %v1684, %v1682
  %v2455 = vpack.c.b16 %v1685, %v1683
  %v2456 = vpack.c.b16 %v1688, %v1686
  %v2457 = vpack.c.b16 %v1689, %v1687
  %v2458 = vpack.c.b16 %v1692, %v1690
  %v2459 = vpack.c.b16 %v1693, %v1691
  %v2460 = vpack.c.b16 %v1696, %v1694
  %v2461 = vpack.c.b16 %v1697, %v1695
  %v2462 = vpack.c.b16 %v1700, %v1698
  %v2463 = vpack.c.b16 %v1701, %v1699
  %v2464 = vpack.c.b16 %v1704, %v1702
  %v2465 = vpack.c.b16 %v1705, %v1703
  %v2466 = vpack.c.b16 %v1708, %v1706
  %v2467 = vpack.c.b16 %v1709, %v1707
  %v2468 = vpack.c.b16 %v1712, %v1710
  %v2469 = vpack.c.b16 %v1713, %v1711
  %v2470 = vpack.c.b16 %v1716, %v1714
  %v2471 = vpack.c.b16 %v1717, %v1715
  %v2472 = vpack.c.b16 %v1720, %v1718
  %v2473 = vpack.c.b16 %v1721, %v1719
  %v2474 = vpack.c.b16 %v1724, %v1722
  %v2475 = vpack.c.b16 %v1725, %v1723
  %v2476 = vpack.c.b16 %v1728, %v1726
  %v2477 = vpack.c.b16 %v1729, %v1727
  %v2478 = vpack.c.b16 %v1732, %v1730
  %v2479 = vpack.c.b16 %v1733, %v1731
  %v2480 = vpack.c.b16 %v1736, %v1734
  %v2481 = vpack.c.b16 %v1737, %v1735
  %v2482 = vpack.c.b16 %v1740, %v1738
  %v2483 = vpack.c.b16 %v1741, %v1739
  %v2484 = vpack.c.b16 %v1744, %v1742
  %v2485 = vpack.c.b16 %v1745, %v1743
  %v2486 = vpack.c.b16 %v1748, %v1746
  %v2487 = vpack.c.b16 %v1749, %v1747
  %v2488 = vpack.c.b16 %v1752, %v1750
  %v2489 = vpack.c.b16 %v1753, %v1751
  %v2490 = vpack.c.b16 %v1756, %v1754
  %v2491 = vpack.c.b16 %v1757, %v1755
  %v2492 = vpack.c.b16 %v1760, %v1758
  %v2493 = vpack.c.b16 %v1761, %v1759
  %v2494 = vpack.c.b16 %v1764, %v1762
  %v2495 = vpack.c.b16 %v1765, %v1763
  %v2496 = vpack.c.b16 %v1768, %v1766
  %v2497 = vpack.c.b16 %v1769, %v1767
  %v2498 = vpack.c.b16 %v1772, %v1770
  %v2499 = vpack.c.b16 %v1773, %v1771
  %v2500 = vpack.c.b16 %v1776, %v1774
  %v2501 = vpack.c.b16 %v1777, %v1775
  %v2502 = vpack.c.b16 %v1780, %v1778
  %v2503 = vpack.c.b16 %v1781, %v1779
  %v2504 = vpack.c.b16 %v1784, %v1782
  %v2505 = vpack.c.b16 %v1785, %v1783
  %v2506 = vpack.c.b16 %v1788, %v1786
  %v2507 = vpack.c.b16 %v1789, %v1787
  %v2508 = vpack.c.b16 %v1792, %v1790
  %v2509 = vpack.c.b16 %v1793, %v1791
  %v2510 = vpack.c.b16 %v1796, %v1794
  %v2511 = vpack.c.b16 %v1797, %v1795
  %v2512 = vpack.c.b16 %v1800, %v1798
  %v2513 = vpack.c.b16 %v1801, %v1799
  %v2514 = vpack.c.b16 %v1804, %v1802
  %v2515 = vpack.c.b16 %v1805, %v1803
  %v2516 = vpack.c.b16 %v1808, %v1806
  %v2517 = vpack.c.b16 %v1809, %v1807
  %v2518 = vpack.c.b16 %v1812, %v1810
  %v2519 = vpack.c.b16 %v1813, %v1811
  %v2520 = vpack.c.b16 %v1816, %v1814
  %v2521 = vpack.c.b16 %v1817, %v1815
  %v2522 = vpack.c.b16 %v1820, %v1818
  %v2523 = vpack.c.b16 %v1821, %v1819
  %v2524 = vpack.c.b16 %v1824, %v1822
  %v2525 = vpack.c.b16 %v1825, %v1823
  %v2526 = vpack.c.b16 %v1828, %v1826
  %v2527 = vpack.c.b16 %v1829, %v1827
  %v2528 = vpack.c.b16 %v1832, %v1830
  %v2529 = vpack.c.b16 %v1833, %v1831
  %v2530 = vpack.c.b16 %v1836, %v1834
  %v2531 = vpack.c.b16 %v1837, %v1835
  %v2532 = vpack.c.b16 %v1840, %v1838
  %v2533 = vpack.c.b16 %v1841, %v1839
  %v2534 = vpack.c.b16 %v1844, %v1842
  %v2535 = vpack.c.b16 %v1845, %v1843
  %v2536 = vpack.c.b16 %v1848, %v1846
  %v2537 = vpack.c.b16 %v1849, %v1847
  %v2538 = vpack.c.b16 %v1852, %v1850
  %v2539 = vpack.c.b16 %v1853, %v1851
  %v2540 = vpack.c.b16 %v1856, %v1854
  %v2541 = vpack.c.b16 %v1857, %v1855
  %v2542 = vpack.c.b16 %v1860, %v1858
  %v2543 = vpack.c.b16 %v1861, %v1859
  %v2544 = vpack.c.b16 %v1864, %v1862
  %v2545 = vpack.c.b16 %v1865, %v1863
  %v2546 = vpack.c.b16 %v1868, %v1866
  %v2547 = vpack.c.b16 %v1869, %v1867
  %v2548 = vpack.c.b16 %v1872, %v1870
  %v2549 = vpack.c.b16 %v1873, %v1871
  %v2550 = vpack.c.b16 %v1876, %v1874
  %v2551 = vpack.c.b16 %v1877, %v1875
  %v2552 = vpack.c.b16 %v1880, %v1878
  %v2553 = vpack.c.b16 %v1881, %v1879
  %v2554 = vpack.c.b16 %v1884, %v1882
  %v2555 = vpack.c.b16 %v1885, %v1883
  %v2556 = vpack.c.b16 %v1888, %v1886
  %v2557 = vpack.c.b16 %v1889, %v1887
  %v2558 = vpack.c.b16 %v1892, %v1890
  %v2559 = vpack.c.b16 %v1893, %v1891
  %v2560 = vpack.c.b16 %v1896, %v1894
  %v2561 = vpack.c.b16 %v1897, %v1895
  %v2562 = vpack.c.b16 %v1900, %v1898
  %v2563 = vpack.c.b16 %v1901, %v1899
  %v2564 = vpack.c.b16 %v1904, %v1902
  %v2565 = vpack.c.b16 %v1905, %v1903
  %v2566 = vpack.c.b16 %v1908, %v1906
  %v2567 = vpack.c.b16 %v1909, %v1907
  %v2568 = vpack.c.b16 %v1912, %v1910
  %v2569 = vpack.c.b16 %v1913, %v1911
  %v2570 = vpack.c.b16 %v1916, %v1914
  %v2571 = vpack.c.b16 %v1917, %v1915
  %v2572 = vpack.c.b16 %v1920, %v1918
  %v2573 = vpack.c.b16 %v1921, %v1919
  %v2574 = vpack.c.b16 %v1924, %v1922
  %v2575 = vpack.c.b16 %v1925, %v1923
  %v2576 = vpack.c.b16 %v1928, %v1926
  %v2577 = vpack.c.b16 %v1929, %v1927
  %v2578 = vpack.c.b16 %v1932, %v1930
  %v2579 = vpack.c.b16 %v1933, %v1931
  %v2580 = vpack.c.b16 %v1936, %v1934
  %v2581 = vpack.c.b16 %v1937, %v1935
  %v2582 = vpack.c.b16 %v1940, %v1938
  %v2583 = vpack.c.b16 %v1941, %v1939
  %v2584 = vpack.c.b16 %v1944, %v1942
  %v2585 = vpack.c.b16 %v1945, %v1943
  %v2586 = vpack.c.b16 %v1948, %v1946
  %v2587 = vpack.c.b16 %v1949, %v1947
  %v2588 = vpack.c.b16 %v1952, %v1950
  %v2589 = vpack.c.b16 %v1953, %v1951
  %v2590 = vpack.c.b16 %v1956, %v1954
  %v2591 = vpack.c.b16 %v1957, %v1955
  %v2592 = vpack.c.b16 %v1960, %v1958
  %v2593 = vpack.c.b16 %v1961, %v1959
  %v2594 = vpack.c.b16 %v1964, %v1962
  %v2595 = vpack.c.b16 %v1965, %v1963
  %v2596 = vpack.c.b16 %v1968, %v1966
  %v2597 = vpack.c.b16 %v1969, %v1967
  %v2598 = vpack.c.b16 %v1972, %v1970
  %v2599 = vpack.c.b16 %v1973, %v1971
  %v2600 = vpack.c.b16 %v1976, %v1974
  %v2601 = vpack.c.b16 %v1977, %v1975
  %v2602 = vpack.c.b16 %v1980, %v1978
  %v2603 = vpack.c.b16 %v1981, %v1979
  %v2604 = vpack.c.b16 %v1984, %v1982
  %v2605 = vpack.c.b16 %v1985, %v1983
  %v2606 = vpack.c.b16 %v1988, %v1986
  %v2607 = vpack.c.b16 %v1989, %v1987
  %v2608 = vpack.c.b16 %v1992, %v1990
  %v2609 = vpack.c.b16 %v1993, %v1991
  %v2610 = vpack.c.b16 %v1996, %v1994
  %v2611 = vpack.c.b16 %v1997, %v1995
  %v2612 = vpack.c.b16 %v2000, %v1998
  %v2613 = vpack.c.b16 %v2001, %v1999
  %v2614 = vpack.c.b16 %v2004, %v2002
  %v2615 = vpack.c.b16 %v2005, %v2003
  %v2616 = vpack.c.b16 %v2008, %v2006
  %v2617 = vpack.c.b16 %v2009, %v2007
  %v2618 = vpack.c.b16 %v2012, %v2010
  %v2619 = vpack.c.b16 %v2013, %v2011
  %v2620 = vpack.c.b16 %v2016, %v2014
  %v2621 = vpack.c.b16 %v2017, %v2015
  %v2622 = vpack.c.b16 %v2020, %v2018
  %v2623 = vpack.c.b16 %v2021, %v2019
  %v2624 = vpack.c.b16 %v2024, %v2022
  %v2625 = vpack.c.b16 %v2025, %v2023
  %v2626 = vpack.c.b16 %v2028, %v2026
  %v2627 = vpack.c.b16 %v2029, %v2027
  %v2628 = vpack.c.b16 %v2032, %v2030
  %v2629 = vpack.c.b16 %v2033, %v2031
  %v2630 = vpack.c.b16 %v2036, %v2034
  %v2631 = vpack.c.b16 %v2037, %v2035
  %v2632 = vpack.c.b16 %v2040, %v2038
  %v2633 = vpack.c.b16 %v2041, %v2039
  %v2634 = vpack.c.b16 %v2044, %v2042
  %v2635 = vpack.c.b16 %v2045, %v2043
  %v2636 = vpack.c.b16 %v2048, %v2046
  %v2637 = vpack.c.b16 %v2049, %v2047
  %v2638 = vpack.c.b16 %v2052, %v2050
  %v2639 = vpack.c.b16 %v2053, %v2051
  %v2640 = vpack.c.b16 %v2056, %v2054
  %v2641 = vpack.c.b16 %v2057, %v2055
  %v2642 = vpack.c.b16 %v2060, %v2058
  %v2643 = vpack.c.b16 %v2061, %v2059
  %v2644 = vpack.c.b16 %v2064, %v2062
  %v2645 = vpack.c.b16 %v2065, %v2063
  %v2646 = vpack.c.b16 %v2068, %v2066
  %v2647 = vpack.c.b16 %v2069, %v2067
  %v2648 = vpack.c.b16 %v2072, %v2070
  %v2649 = vpack.c.b16 %v2073, %v2071
  %v2650 = vpack.c.b16 %v2076, %v2074
  %v2651 = vpack.c.b16 %v2077, %v2075
  %v2652 = vpack.c.b16 %v2080, %v2078
  %v2653 = vpack.c.b16 %v2081, %v2079
  %v2654 = vpack.c.b16 %v2084, %v2082
  %v2655 = vpack.c.b16 %v2085, %v2083
  %v2656 = vpack.c.b16 %v2088, %v2086
  %v2657 = vpack.c.b16 %v2089, %v2087
  %v2658 = vpack.c.b16 %v2092, %v2090
  %v2659 = vpack.c.b16 %v2093, %v2091
  %v2660 = vpack.c.b16 %v2096, %v2094
  %v2661 = vpack.c.b16 %v2097, %v2095
  %v2662 = vpack.c.b16 %v2100, %v2098
  %v2663 = vpack.c.b16 %v2101, %v2099
  %v2664 = vpack.c.b16 %v2104, %v2102
  %v2665 = vpack.c.b16 %v2105, %v2103
  %v2666 = vpack.c.b16 %v2108, %v2106
  %v2667 = vpack.c.b16 %v2109, %v2107
  %v2668 = vpack.c.b16 %v2112, %v2110
  %v2669 = vpack.c.b16 %v2113, %v2111
  %v2670 = vpack.c.b16 %v2116, %v2114
  %v2671 = vpack.c.b16 %v2117, %v2115
  %v2672 = vpack.c.b16 %v2120, %v2118
  %v2673 = vpack.c.b16 %v2121, %v2119
  %v2674 = vpack.c.b16 %v2124, %v2122
  %v2675 = vpack.c.b16 %v2125, %v2123
  %v2676 = vpack.c.b16 %v2128, %v2126
  %v2677 = vpack.c.b16 %v2129, %v2127
  %v2678 = vpack.c.b16 %v2132, %v2130
  %v2679 = vpack.c.b16 %v2133, %v2131
  %v2680 = vpack.c.b16 %v2136, %v2134
  %v2681 = vpack.c.b16 %v2137, %v2135
  %v2682 = vpack.c.b16 %v2140, %v2138
  %v2683 = vpack.c.b16 %v2141, %v2139
  %v2684 = vpack.c.b16 %v2144, %v2142
  %v2685 = vpack.c.b16 %v2145, %v2143
  %v2686 = vpack.c.b16 %v2148, %v2146
  %v2687 = vpack.c.b16 %v2149, %v2147
  %v2688 = vpack.c.b16 %v2152, %v2150
  %v2689 = vpack.c.b16 %v2153, %v2151
  %v2690 = vpack.c.b16 %v2156, %v2154
  %v2691 = vpack.c.b16 %v2157, %v2155
  %v2692 = vpack.c.b16 %v2160, %v2158
  %v2693 = vpack.c.b16 %v2161, %v2159
  %v2694 = vpack.c.b16 %v2164, %v2162
  %v2695 = vpack.c.b16 %v2165, %v2163
  %v2696 = vpack.c.b16 %v2168, %v2166
  %v2697 = vpack.c.b16 %v2169, %v2167
  %v2698 = vpack.c.b16 %v2172, %v2170
  %v2699 = vpack.c.b16 %v2173, %v2171
  %v2700 = vpack.c.b16 %v2176, %v2174
  %v2701 = vpack.c.b16 %v2177, %v2175
  %v2702 = vpack.c.b16 %v2180, %v2178
  %v2703 = vpack.c.b16 %v2181, %v2179
  %v2704 = vpack.c.b16 %v2184, %v2182
  %v2705 = vpack.c.b16 %v2185, %v2183
  %v2706 = vpack.c.b16 %v2188, %v2186
  %v2707 = vpack.c.b16 %v2189, %v2187
  %v2708 = vpack.c.b16 %v2192, %v2190
  %v2709 = vpack.c.b16 %v2193, %v2191
  %v2710 = vpack.c.b16 %v2196, %v2194
  %v2711 = vpack.c.b16 %v2197, %v2195
  %v2712 = vpack.c.b16 %v2200, %v2198
  %v2713 = vpack.c.b16 %v2201, %v2199
  %3226 = vmatprep.subr.bf16.mxu0 %v2203
  %3227 = vmatpush1.bf16.msra.mxu0 %v2202
  %3228 = vmatprep.subr.bf16.mxu0 %v2205
  %3229 = vmatpush1.bf16.msra.mxu0 %v2204
  %3230 = vmatprep.subr.bf16.mxu0 %v2207
  %3231 = vmatpush1.bf16.msra.mxu0 %v2206
  %3232 = vmatprep.subr.bf16.mxu0 %v2209
  %3233 = vmatpush1.bf16.msra.mxu0 %v2208
  %3234 = vmatprep.subr.bf16.mxu0 %v2211
  %3235 = vmatpush1.bf16.msra.mxu0 %v2210
  %3236 = vmatprep.subr.bf16.mxu0 %v2213
  %3237 = vmatpush1.bf16.msra.mxu0 %v2212
  %3238 = vmatprep.subr.bf16.mxu0 %v2215
  %3239 = vmatpush1.bf16.msra.mxu0 %v2214
  %3240 = vmatprep.subr.bf16.mxu0 %v2217
  %3241 = vmatpush1.bf16.msra.mxu0 %v2216
  %3242 = vmatprep.subr.bf16.mxu0 %v2219
  %3243 = vmatpush1.bf16.msra.mxu0 %v2218
  %3244 = vmatprep.subr.bf16.mxu0 %v2221
  %3245 = vmatpush1.bf16.msra.mxu0 %v2220
  %3246 = vmatprep.subr.bf16.mxu0 %v2223
  %3247 = vmatpush1.bf16.msra.mxu0 %v2222
  %3248 = vmatprep.subr.bf16.mxu0 %v2225
  %3249 = vmatpush1.bf16.msra.mxu0 %v2224
  %3250 = vmatprep.subr.bf16.mxu0 %v2227
  %3251 = vmatpush1.bf16.msra.mxu0 %v2226
  %3252 = vmatprep.subr.bf16.mxu0 %v2229
  %3253 = vmatpush1.bf16.msra.mxu0 %v2228
  %3254 = vmatprep.subr.bf16.mxu0 %v2231
  %3255 = vmatpush1.bf16.msra.mxu0 %v2230
  %3256 = vmatprep.subr.bf16.mxu0 %v2233
  %3257 = vmatpush1.bf16.msra.mxu0 %v2232
  %3258 = vmatprep.mubr.bf16.mxu0 %v603
  %3259 = vmatmul.mubr.bf16.gmra.mrb[0].mxu0 %v602
  %v3260 = vpop.f32.mrb[0].mxu0
  %v3261 = vadd.f32 %v547, %v3260
  %v3262 = vpop.f32.mrb[0].mxu0
  %v3263 = vadd.f32 %v551, %v3262
  %v3264 = vpop.f32.mrb[0].mxu0
  %v3265 = vpop.f32.mrb[0].mxu0
  %3266 = vdwg.mxu0
  %3267 = vmatprep.subr.bf16.mxu0 %v2235
  %3268 = vmatpush1.bf16.msra.mxu0 %v2234
  %3269 = vmatprep.subr.bf16.mxu0 %v2237
  %3270 = vmatpush1.bf16.msra.mxu0 %v2236
  %3271 = vmatprep.subr.bf16.mxu0 %v2239
  %3272 = vmatpush1.bf16.msra.mxu0 %v2238
  %3273 = vmatprep.subr.bf16.mxu0 %v2241
  %3274 = vmatpush1.bf16.msra.mxu0 %v2240
  %3275 = vmatprep.subr.bf16.mxu0 %v2243
  %3276 = vmatpush1.bf16.msra.mxu0 %v2242
  %3277 = vmatprep.subr.bf16.mxu0 %v2245
  %3278 = vmatpush1.bf16.msra.mxu0 %v2244
  %3279 = vmatprep.subr.bf16.mxu0 %v2247
  %3280 = vmatpush1.bf16.msra.mxu0 %v2246
  %3281 = vmatprep.subr.bf16.mxu0 %v2249
  %3282 = vmatpush1.bf16.msra.mxu0 %v2248
  %3283 = vmatprep.subr.bf16.mxu0 %v2251
  %3284 = vmatpush1.bf16.msra.mxu0 %v2250
  %3285 = vmatprep.subr.bf16.mxu0 %v2253
  %3286 = vmatpush1.bf16.msra.mxu0 %v2252
  %3287 = vmatprep.subr.bf16.mxu0 %v2255
  %3288 = vmatpush1.bf16.msra.mxu0 %v2254
  %3289 = vmatprep.subr.bf16.mxu0 %v2257
  %3290 = vmatpush1.bf16.msra.mxu0 %v2256
  %3291 = vmatprep.subr.bf16.mxu0 %v2259
  %3292 = vmatpush1.bf16.msra.mxu0 %v2258
  %3293 = vmatprep.subr.bf16.mxu0 %v2261
  %3294 = vmatpush1.bf16.msra.mxu0 %v2260
  %3295 = vmatprep.subr.bf16.mxu0 %v2263
  %3296 = vmatpush1.bf16.msra.mxu0 %v2262
  %3297 = vmatprep.subr.bf16.mxu0 %v2265
  %3298 = vmatpush1.bf16.msra.mxu0 %v2264
  %3299 = vmatprep.mubr.bf16.mxu0 %v605
  %3300 = vmatmul.mubr.bf16.gmra.mrb[0].mxu0 %v604
  %v3301 = vpop.f32.mrb[0].mxu0
  %v3302 = vadd.f32 %v3261, %v3301
  %v3303 = vpop.f32.mrb[0].mxu0
  %v3304 = vadd.f32 %v3263, %v3303
  %v3305 = vpop.f32.mrb[0].mxu0
  %v3306 = vpop.f32.mrb[0].mxu0
  %3307 = vdwg.mxu0
  %3308 = vmatprep.subr.bf16.mxu0 %v2267
  %3309 = vmatpush1.bf16.msra.mxu0 %v2266
  %3310 = vmatprep.subr.bf16.mxu0 %v2269
  %3311 = vmatpush1.bf16.msra.mxu0 %v2268
  %3312 = vmatprep.subr.bf16.mxu0 %v2271
  %3313 = vmatpush1.bf16.msra.mxu0 %v2270
  %3314 = vmatprep.subr.bf16.mxu0 %v2273
  %3315 = vmatpush1.bf16.msra.mxu0 %v2272
  %3316 = vmatprep.subr.bf16.mxu0 %v2275
  %3317 = vmatpush1.bf16.msra.mxu0 %v2274
  %3318 = vmatprep.subr.bf16.mxu0 %v2277
  %3319 = vmatpush1.bf16.msra.mxu0 %v2276
  %3320 = vmatprep.subr.bf16.mxu0 %v2279
  %3321 = vmatpush1.bf16.msra.mxu0 %v2278
  %3322 = vmatprep.subr.bf16.mxu0 %v2281
  %3323 = vmatpush1.bf16.msra.mxu0 %v2280
  %3324 = vmatprep.subr.bf16.mxu0 %v2283
  %3325 = vmatpush1.bf16.msra.mxu0 %v2282
  %3326 = vmatprep.subr.bf16.mxu0 %v2285
  %3327 = vmatpush1.bf16.msra.mxu0 %v2284
  %3328 = vmatprep.subr.bf16.mxu0 %v2287
  %3329 = vmatpush1.bf16.msra.mxu0 %v2286
  %3330 = vmatprep.subr.bf16.mxu0 %v2289
  %3331 = vmatpush1.bf16.msra.mxu0 %v2288
  %3332 = vmatprep.subr.bf16.mxu0 %v2291
  %3333 = vmatpush1.bf16.msra.mxu0 %v2290
  %3334 = vmatprep.subr.bf16.mxu0 %v2293
  %3335 = vmatpush1.bf16.msra.mxu0 %v2292
  %3336 = vmatprep.subr.bf16.mxu0 %v2295
  %3337 = vmatpush1.bf16.msra.mxu0 %v2294
  %3338 = vmatprep.subr.bf16.mxu0 %v2297
  %3339 = vmatpush1.bf16.msra.mxu0 %v2296
  %3340 = vmatprep.mubr.bf16.mxu0 %v607
  %3341 = vmatmul.mubr.bf16.gmra.mrb[0].mxu0 %v606
  %v3342 = vpop.f32.mrb[0].mxu0
  %v3343 = vadd.f32 %v3302, %v3342
  %v3344 = vpop.f32.mrb[0].mxu0
  %v3345 = vadd.f32 %v3304, %v3344
  %v3346 = vpop.f32.mrb[0].mxu0
  %v3347 = vpop.f32.mrb[0].mxu0
  %3348 = vdwg.mxu0
  %3349 = vmatprep.subr.bf16.mxu0 %v2299
  %3350 = vmatpush1.bf16.msra.mxu0 %v2298
  %3351 = vmatprep.subr.bf16.mxu0 %v2301
  %3352 = vmatpush1.bf16.msra.mxu0 %v2300
  %3353 = vmatprep.subr.bf16.mxu0 %v2303
  %3354 = vmatpush1.bf16.msra.mxu0 %v2302
  %3355 = vmatprep.subr.bf16.mxu0 %v2305
  %3356 = vmatpush1.bf16.msra.mxu0 %v2304
  %3357 = vmatprep.subr.bf16.mxu0 %v2307
  %3358 = vmatpush1.bf16.msra.mxu0 %v2306
  %3359 = vmatprep.subr.bf16.mxu0 %v2309
  %3360 = vmatpush1.bf16.msra.mxu0 %v2308
  %3361 = vmatprep.subr.bf16.mxu0 %v2311
  %3362 = vmatpush1.bf16.msra.mxu0 %v2310
  %3363 = vmatprep.subr.bf16.mxu0 %v2313
  %3364 = vmatpush1.bf16.msra.mxu0 %v2312
  %3365 = vmatprep.subr.bf16.mxu0 %v2315
  %3366 = vmatpush1.bf16.msra.mxu0 %v2314
  %3367 = vmatprep.subr.bf16.mxu0 %v2317
  %3368 = vmatpush1.bf16.msra.mxu0 %v2316
  %3369 = vmatprep.subr.bf16.mxu0 %v2319
  %3370 = vmatpush1.bf16.msra.mxu0 %v2318
  %3371 = vmatprep.subr.bf16.mxu0 %v2321
  %3372 = vmatpush1.bf16.msra.mxu0 %v2320
  %3373 = vmatprep.subr.bf16.mxu0 %v2323
  %3374 = vmatpush1.bf16.msra.mxu0 %v2322
  %3375 = vmatprep.subr.bf16.mxu0 %v2325
  %3376 = vmatpush1.bf16.msra.mxu0 %v2324
  %3377 = vmatprep.subr.bf16.mxu0 %v2327
  %3378 = vmatpush1.bf16.msra.mxu0 %v2326
  %3379 = vmatprep.subr.bf16.mxu0 %v2329
  %3380 = vmatpush1.bf16.msra.mxu0 %v2328
  %3381 = vmatprep.mubr.bf16.mxu0 %v609
  %3382 = vmatmul.mubr.bf16.gmra.mrb[0].mxu0 %v608
  %v3383 = vpop.f32.mrb[0].mxu0
  %v3384 = vadd.f32 %v3343, %v3383
  %v3385 = vpop.f32.mrb[0].mxu0
  %v3386 = vadd.f32 %v3345, %v3385
  %v3387 = vpop.f32.mrb[0].mxu0
  %v3388 = vpop.f32.mrb[0].mxu0
  %3389 = vdwg.mxu0
  %3390 = vmatprep.subr.bf16.mxu0 %v2331
  %3391 = vmatpush1.bf16.msra.mxu0 %v2330
  %3392 = vmatprep.subr.bf16.mxu0 %v2333
  %3393 = vmatpush1.bf16.msra.mxu0 %v2332
  %3394 = vmatprep.subr.bf16.mxu0 %v2335
  %3395 = vmatpush1.bf16.msra.mxu0 %v2334
  %3396 = vmatprep.subr.bf16.mxu0 %v2337
  %3397 = vmatpush1.bf16.msra.mxu0 %v2336
  %3398 = vmatprep.subr.bf16.mxu0 %v2339
  %3399 = vmatpush1.bf16.msra.mxu0 %v2338
  %3400 = vmatprep.subr.bf16.mxu0 %v2341
  %3401 = vmatpush1.bf16.msra.mxu0 %v2340
  %3402 = vmatprep.subr.bf16.mxu0 %v2343
  %3403 = vmatpush1.bf16.msra.mxu0 %v2342
  %3404 = vmatprep.subr.bf16.mxu0 %v2345
  %3405 = vmatpush1.bf16.msra.mxu0 %v2344
  %3406 = vmatprep.subr.bf16.mxu0 %v2347
  %3407 = vmatpush1.bf16.msra.mxu0 %v2346
  %3408 = vmatprep.subr.bf16.mxu0 %v2349
  %3409 = vmatpush1.bf16.msra.mxu0 %v2348
  %3410 = vmatprep.subr.bf16.mxu0 %v2351
  %3411 = vmatpush1.bf16.msra.mxu0 %v2350
  %3412 = vmatprep.subr.bf16.mxu0 %v2353
  %3413 = vmatpush1.bf16.msra.mxu0 %v2352
  %3414 = vmatprep.subr.bf16.mxu0 %v2355
  %3415 = vmatpush1.bf16.msra.mxu0 %v2354
  %3416 = vmatprep.subr.bf16.mxu0 %v2357
  %3417 = vmatpush1.bf16.msra.mxu0 %v2356
  %3418 = vmatprep.subr.bf16.mxu0 %v2359
  %3419 = vmatpush1.bf16.msra.mxu0 %v2358
  %3420 = vmatprep.subr.bf16.mxu0 %v2361
  %3421 = vmatpush1.bf16.msra.mxu0 %v2360
  %3422 = vmatprep.mubr.bf16.mxu0 %v611
  %3423 = vmatmul.mubr.bf16.gmra.mrb[0].mxu0 %v610
  %v3424 = vpop.f32.mrb[0].mxu0
  %v3425 = vadd.f32 %v3384, %v3424
  %v3426 = vpop.f32.mrb[0].mxu0
  %v3427 = vadd.f32 %v3386, %v3426
  %v3428 = vpop.f32.mrb[0].mxu0
  %v3429 = vpop.f32.mrb[0].mxu0
  %3430 = vdwg.mxu0
  %3431 = vmatprep.subr.bf16.mxu0 %v2363
  %3432 = vmatpush1.bf16.msra.mxu0 %v2362
  %3433 = vmatprep.subr.bf16.mxu0 %v2365
  %3434 = vmatpush1.bf16.msra.mxu0 %v2364
  %3435 = vmatprep.subr.bf16.mxu0 %v2367
  %3436 = vmatpush1.bf16.msra.mxu0 %v2366
  %3437 = vmatprep.subr.bf16.mxu0 %v2369
  %3438 = vmatpush1.bf16.msra.mxu0 %v2368
  %3439 = vmatprep.subr.bf16.mxu0 %v2371
  %3440 = vmatpush1.bf16.msra.mxu0 %v2370
  %3441 = vmatprep.subr.bf16.mxu0 %v2373
  %3442 = vmatpush1.bf16.msra.mxu0 %v2372
  %3443 = vmatprep.subr.bf16.mxu0 %v2375
  %3444 = vmatpush1.bf16.msra.mxu0 %v2374
  %3445 = vmatprep.subr.bf16.mxu0 %v2377
  %3446 = vmatpush1.bf16.msra.mxu0 %v2376
  %3447 = vmatprep.subr.bf16.mxu0 %v2379
  %3448 = vmatpush1.bf16.msra.mxu0 %v2378
  %3449 = vmatprep.subr.bf16.mxu0 %v2381
  %3450 = vmatpush1.bf16.msra.mxu0 %v2380
  %3451 = vmatprep.subr.bf16.mxu0 %v2383
  %3452 = vmatpush1.bf16.msra.mxu0 %v2382
  %3453 = vmatprep.subr.bf16.mxu0 %v2385
  %3454 = vmatpush1.bf16.msra.mxu0 %v2384
  %3455 = vmatprep.subr.bf16.mxu0 %v2387
  %3456 = vmatpush1.bf16.msra.mxu0 %v2386
  %3457 = vmatprep.subr.bf16.mxu0 %v2389
  %3458 = vmatpush1.bf16.msra.mxu0 %v2388
  %3459 = vmatprep.subr.bf16.mxu0 %v2391
  %3460 = vmatpush1.bf16.msra.mxu0 %v2390
  %3461 = vmatprep.subr.bf16.mxu0 %v2393
  %3462 = vmatpush1.bf16.msra.mxu0 %v2392
  %3463 = vmatprep.mubr.bf16.mxu0 %v613
  %3464 = vmatmul.mubr.bf16.gmra.mrb[0].mxu0 %v612
  %v3465 = vpop.f32.mrb[0].mxu0
  %v3466 = vadd.f32 %v3425, %v3465
  %v3467 = vpop.f32.mrb[0].mxu0
  %v3468 = vadd.f32 %v3427, %v3467
  %v3469 = vpop.f32.mrb[0].mxu0
  %v3470 = vpop.f32.mrb[0].mxu0
  %3471 = vdwg.mxu0
  %3472 = vmatprep.subr.bf16.mxu0 %v2395
  %3473 = vmatpush1.bf16.msra.mxu0 %v2394
  %3474 = vmatprep.subr.bf16.mxu0 %v2397
  %3475 = vmatpush1.bf16.msra.mxu0 %v2396
  %3476 = vmatprep.subr.bf16.mxu0 %v2399
  %3477 = vmatpush1.bf16.msra.mxu0 %v2398
  %3478 = vmatprep.subr.bf16.mxu0 %v2401
  %3479 = vmatpush1.bf16.msra.mxu0 %v2400
  %3480 = vmatprep.subr.bf16.mxu0 %v2403
  %3481 = vmatpush1.bf16.msra.mxu0 %v2402
  %3482 = vmatprep.subr.bf16.mxu0 %v2405
  %3483 = vmatpush1.bf16.msra.mxu0 %v2404
  %3484 = vmatprep.subr.bf16.mxu0 %v2407
  %3485 = vmatpush1.bf16.msra.mxu0 %v2406
  %3486 = vmatprep.subr.bf16.mxu0 %v2409
  %3487 = vmatpush1.bf16.msra.mxu0 %v2408
  %3488 = vmatprep.subr.bf16.mxu0 %v2411
  %3489 = vmatpush1.bf16.msra.mxu0 %v2410
  %3490 = vmatprep.subr.bf16.mxu0 %v2413
  %3491 = vmatpush1.bf16.msra.mxu0 %v2412
  %3492 = vmatprep.subr.bf16.mxu0 %v2415
  %3493 = vmatpush1.bf16.msra.mxu0 %v2414
  %3494 = vmatprep.subr.bf16.mxu0 %v2417
  %3495 = vmatpush1.bf16.msra.mxu0 %v2416
  %3496 = vmatprep.subr.bf16.mxu0 %v2419
  %3497 = vmatpush1.bf16.msra.mxu0 %v2418
  %3498 = vmatprep.subr.bf16.mxu0 %v2421
  %3499 = vmatpush1.bf16.msra.mxu0 %v2420
  %3500 = vmatprep.subr.bf16.mxu0 %v2423
  %3501 = vmatpush1.bf16.msra.mxu0 %v2422
  %3502 = vmatprep.subr.bf16.mxu0 %v2425
  %3503 = vmatpush1.bf16.msra.mxu0 %v2424
  %3504 = vmatprep.mubr.bf16.mxu0 %v615
  %3505 = vmatmul.mubr.bf16.gmra.mrb[0].mxu0 %v614
  %v3506 = vpop.f32.mrb[0].mxu0
  %v3507 = vadd.f32 %v3466, %v3506
  %v3508 = vpop.f32.mrb[0].mxu0
  %v3509 = vadd.f32 %v3468, %v3508
  %v3510 = vpop.f32.mrb[0].mxu0
  %v3511 = vpop.f32.mrb[0].mxu0
  %3512 = vdwg.mxu0
  %3513 = vmatprep.subr.bf16.mxu0 %v2427
  %3514 = vmatpush1.bf16.msra.mxu0 %v2426
  %3515 = vmatprep.subr.bf16.mxu0 %v2429
  %3516 = vmatpush1.bf16.msra.mxu0 %v2428
  %3517 = vmatprep.subr.bf16.mxu0 %v2431
  %3518 = vmatpush1.bf16.msra.mxu0 %v2430
  %3519 = vmatprep.subr.bf16.mxu0 %v2433
  %3520 = vmatpush1.bf16.msra.mxu0 %v2432
  %3521 = vmatprep.subr.bf16.mxu0 %v2435
  %3522 = vmatpush1.bf16.msra.mxu0 %v2434
  %3523 = vmatprep.subr.bf16.mxu0 %v2437
  %3524 = vmatpush1.bf16.msra.mxu0 %v2436
  %3525 = vmatprep.subr.bf16.mxu0 %v2439
  %3526 = vmatpush1.bf16.msra.mxu0 %v2438
  %3527 = vmatprep.subr.bf16.mxu0 %v2441
  %3528 = vmatpush1.bf16.msra.mxu0 %v2440
  %3529 = vmatprep.subr.bf16.mxu0 %v2443
  %3530 = vmatpush1.bf16.msra.mxu0 %v2442
  %3531 = vmatprep.subr.bf16.mxu0 %v2445
  %3532 = vmatpush1.bf16.msra.mxu0 %v2444
  %3533 = vmatprep.subr.bf16.mxu0 %v2447
  %3534 = vmatpush1.bf16.msra.mxu0 %v2446
  %3535 = vmatprep.subr.bf16.mxu0 %v2449
  %3536 = vmatpush1.bf16.msra.mxu0 %v2448
  %3537 = vmatprep.subr.bf16.mxu0 %v2451
  %3538 = vmatpush1.bf16.msra.mxu0 %v2450
  %3539 = vmatprep.subr.bf16.mxu0 %v2453
  %3540 = vmatpush1.bf16.msra.mxu0 %v2452
  %3541 = vmatprep.subr.bf16.mxu0 %v2455
  %3542 = vmatpush1.bf16.msra.mxu0 %v2454
  %3543 = vmatprep.subr.bf16.mxu0 %v2457
  %3544 = vmatpush1.bf16.msra.mxu0 %v2456
  %3545 = vmatprep.mubr.bf16.mxu0 %v617
  %3546 = vmatmul.mubr.bf16.gmra.mrb[0].mxu0 %v616
  %v3547 = vpop.f32.mrb[0].mxu0
  %v3548 = vadd.f32 %v3507, %v3547
  %v3549 = vpop.f32.mrb[0].mxu0
  %v3550 = vadd.f32 %v3509, %v3549
  %v3551 = vpop.f32.mrb[0].mxu0
  %v3552 = vpop.f32.mrb[0].mxu0
  %3553 = vdwg.mxu0
  %3554 = vmatprep.subr.bf16.mxu0 %v2459
  %3555 = vmatpush1.bf16.msra.mxu0 %v2458
  %3556 = vmatprep.subr.bf16.mxu0 %v2461
  %3557 = vmatpush1.bf16.msra.mxu0 %v2460
  %3558 = vmatprep.subr.bf16.mxu0 %v2463
  %3559 = vmatpush1.bf16.msra.mxu0 %v2462
  %3560 = vmatprep.subr.bf16.mxu0 %v2465
  %3561 = vmatpush1.bf16.msra.mxu0 %v2464
  %3562 = vmatprep.subr.bf16.mxu0 %v2467
  %3563 = vmatpush1.bf16.msra.mxu0 %v2466
  %3564 = vmatprep.subr.bf16.mxu0 %v2469
  %3565 = vmatpush1.bf16.msra.mxu0 %v2468
  %3566 = vmatprep.subr.bf16.mxu0 %v2471
  %3567 = vmatpush1.bf16.msra.mxu0 %v2470
  %3568 = vmatprep.subr.bf16.mxu0 %v2473
  %3569 = vmatpush1.bf16.msra.mxu0 %v2472
  %3570 = vmatprep.subr.bf16.mxu0 %v2475
  %3571 = vmatpush1.bf16.msra.mxu0 %v2474
  %3572 = vmatprep.subr.bf16.mxu0 %v2477
  %3573 = vmatpush1.bf16.msra.mxu0 %v2476
  %3574 = vmatprep.subr.bf16.mxu0 %v2479
  %3575 = vmatpush1.bf16.msra.mxu0 %v2478
  %3576 = vmatprep.subr.bf16.mxu0 %v2481
  %3577 = vmatpush1.bf16.msra.mxu0 %v2480
  %3578 = vmatprep.subr.bf16.mxu0 %v2483
  %3579 = vmatpush1.bf16.msra.mxu0 %v2482
  %3580 = vmatprep.subr.bf16.mxu0 %v2485
  %3581 = vmatpush1.bf16.msra.mxu0 %v2484
  %3582 = vmatprep.subr.bf16.mxu0 %v2487
  %3583 = vmatpush1.bf16.msra.mxu0 %v2486
  %3584 = vmatprep.subr.bf16.mxu0 %v2489
  %3585 = vmatpush1.bf16.msra.mxu0 %v2488
  %3586 = vmatprep.mubr.bf16.mxu0 %v619
  %3587 = vmatmul.mubr.bf16.gmra.mrb[0].mxu0 %v618
  %v3588 = vpop.f32.mrb[0].mxu0
  %v3589 = vadd.f32 %v3548, %v3588
  %v3590 = vpop.f32.mrb[0].mxu0
  %v3591 = vadd.f32 %v3550, %v3590
  %v3592 = vpop.f32.mrb[0].mxu0
  %v3593 = vpop.f32.mrb[0].mxu0
  %3594 = vdwg.mxu0
  %3595 = vmatprep.subr.bf16.mxu0 %v2491
  %3596 = vmatpush1.bf16.msra.mxu0 %v2490
  %3597 = vmatprep.subr.bf16.mxu0 %v2493
  %3598 = vmatpush1.bf16.msra.mxu0 %v2492
  %3599 = vmatprep.subr.bf16.mxu0 %v2495
  %3600 = vmatpush1.bf16.msra.mxu0 %v2494
  %3601 = vmatprep.subr.bf16.mxu0 %v2497
  %3602 = vmatpush1.bf16.msra.mxu0 %v2496
  %3603 = vmatprep.subr.bf16.mxu0 %v2499
  %3604 = vmatpush1.bf16.msra.mxu0 %v2498
  %3605 = vmatprep.subr.bf16.mxu0 %v2501
  %3606 = vmatpush1.bf16.msra.mxu0 %v2500
  %3607 = vmatprep.subr.bf16.mxu0 %v2503
  %3608 = vmatpush1.bf16.msra.mxu0 %v2502
  %3609 = vmatprep.subr.bf16.mxu0 %v2505
  %3610 = vmatpush1.bf16.msra.mxu0 %v2504
  %3611 = vmatprep.subr.bf16.mxu0 %v2507
  %3612 = vmatpush1.bf16.msra.mxu0 %v2506
  %3613 = vmatprep.subr.bf16.mxu0 %v2509
  %3614 = vmatpush1.bf16.msra.mxu0 %v2508
  %3615 = vmatprep.subr.bf16.mxu0 %v2511
  %3616 = vmatpush1.bf16.msra.mxu0 %v2510
  %3617 = vmatprep.subr.bf16.mxu0 %v2513
  %3618 = vmatpush1.bf16.msra.mxu0 %v2512
  %3619 = vmatprep.subr.bf16.mxu0 %v2515
  %3620 = vmatpush1.bf16.msra.mxu0 %v2514
  %3621 = vmatprep.subr.bf16.mxu0 %v2517
  %3622 = vmatpush1.bf16.msra.mxu0 %v2516
  %3623 = vmatprep.subr.bf16.mxu0 %v2519
  %3624 = vmatpush1.bf16.msra.mxu0 %v2518
  %3625 = vmatprep.subr.bf16.mxu0 %v2521
  %3626 = vmatpush1.bf16.msra.mxu0 %v2520
  %3627 = vmatprep.mubr.bf16.mxu0 %v621
  %3628 = vmatmul.mubr.bf16.gmra.mrb[0].mxu0 %v620
  %v3629 = vpop.f32.mrb[0].mxu0
  %v3630 = vadd.f32 %v3589, %v3629
  %v3631 = vpop.f32.mrb[0].mxu0
  %v3632 = vadd.f32 %v3591, %v3631
  %v3633 = vpop.f32.mrb[0].mxu0
  %v3634 = vpop.f32.mrb[0].mxu0
  %3635 = vdwg.mxu0
  %3636 = vmatprep.subr.bf16.mxu0 %v2523
  %3637 = vmatpush1.bf16.msra.mxu0 %v2522
  %3638 = vmatprep.subr.bf16.mxu0 %v2525
  %3639 = vmatpush1.bf16.msra.mxu0 %v2524
  %3640 = vmatprep.subr.bf16.mxu0 %v2527
  %3641 = vmatpush1.bf16.msra.mxu0 %v2526
  %3642 = vmatprep.subr.bf16.mxu0 %v2529
  %3643 = vmatpush1.bf16.msra.mxu0 %v2528
  %3644 = vmatprep.subr.bf16.mxu0 %v2531
  %3645 = vmatpush1.bf16.msra.mxu0 %v2530
  %3646 = vmatprep.subr.bf16.mxu0 %v2533
  %3647 = vmatpush1.bf16.msra.mxu0 %v2532
  %3648 = vmatprep.subr.bf16.mxu0 %v2535
  %3649 = vmatpush1.bf16.msra.mxu0 %v2534
  %3650 = vmatprep.subr.bf16.mxu0 %v2537
  %3651 = vmatpush1.bf16.msra.mxu0 %v2536
  %3652 = vmatprep.subr.bf16.mxu0 %v2539
  %3653 = vmatpush1.bf16.msra.mxu0 %v2538
  %3654 = vmatprep.subr.bf16.mxu0 %v2541
  %3655 = vmatpush1.bf16.msra.mxu0 %v2540
  %3656 = vmatprep.subr.bf16.mxu0 %v2543
  %3657 = vmatpush1.bf16.msra.mxu0 %v2542
  %3658 = vmatprep.subr.bf16.mxu0 %v2545
  %3659 = vmatpush1.bf16.msra.mxu0 %v2544
  %3660 = vmatprep.subr.bf16.mxu0 %v2547
  %3661 = vmatpush1.bf16.msra.mxu0 %v2546
  %3662 = vmatprep.subr.bf16.mxu0 %v2549
  %3663 = vmatpush1.bf16.msra.mxu0 %v2548
  %3664 = vmatprep.subr.bf16.mxu0 %v2551
  %3665 = vmatpush1.bf16.msra.mxu0 %v2550
  %3666 = vmatprep.subr.bf16.mxu0 %v2553
  %3667 = vmatpush1.bf16.msra.mxu0 %v2552
  %3668 = vmatprep.mubr.bf16.mxu0 %v623
  %3669 = vmatmul.mubr.bf16.gmra.mrb[0].mxu0 %v622
  %v3670 = vpop.f32.mrb[0].mxu0
  %v3671 = vadd.f32 %v3630, %v3670
  %v3672 = vpop.f32.mrb[0].mxu0
  %v3673 = vadd.f32 %v3632, %v3672
  %v3674 = vpop.f32.mrb[0].mxu0
  %v3675 = vpop.f32.mrb[0].mxu0
  %3676 = vdwg.mxu0
  %3677 = vmatprep.subr.bf16.mxu0 %v2555
  %3678 = vmatpush1.bf16.msra.mxu0 %v2554
  %3679 = vmatprep.subr.bf16.mxu0 %v2557
  %3680 = vmatpush1.bf16.msra.mxu0 %v2556
  %3681 = vmatprep.subr.bf16.mxu0 %v2559
  %3682 = vmatpush1.bf16.msra.mxu0 %v2558
  %3683 = vmatprep.subr.bf16.mxu0 %v2561
  %3684 = vmatpush1.bf16.msra.mxu0 %v2560
  %3685 = vmatprep.subr.bf16.mxu0 %v2563
  %3686 = vmatpush1.bf16.msra.mxu0 %v2562
  %3687 = vmatprep.subr.bf16.mxu0 %v2565
  %3688 = vmatpush1.bf16.msra.mxu0 %v2564
  %3689 = vmatprep.subr.bf16.mxu0 %v2567
  %3690 = vmatpush1.bf16.msra.mxu0 %v2566
  %3691 = vmatprep.subr.bf16.mxu0 %v2569
  %3692 = vmatpush1.bf16.msra.mxu0 %v2568
  %3693 = vmatprep.subr.bf16.mxu0 %v2571
  %3694 = vmatpush1.bf16.msra.mxu0 %v2570
  %3695 = vmatprep.subr.bf16.mxu0 %v2573
  %3696 = vmatpush1.bf16.msra.mxu0 %v2572
  %3697 = vmatprep.subr.bf16.mxu0 %v2575
  %3698 = vmatpush1.bf16.msra.mxu0 %v2574
  %3699 = vmatprep.subr.bf16.mxu0 %v2577
  %3700 = vmatpush1.bf16.msra.mxu0 %v2576
  %3701 = vmatprep.subr.bf16.mxu0 %v2579
  %3702 = vmatpush1.bf16.msra.mxu0 %v2578
  %3703 = vmatprep.subr.bf16.mxu0 %v2581
  %3704 = vmatpush1.bf16.msra.mxu0 %v2580
  %3705 = vmatprep.subr.bf16.mxu0 %v2583
  %3706 = vmatpush1.bf16.msra.mxu0 %v2582
  %3707 = vmatprep.subr.bf16.mxu0 %v2585
  %3708 = vmatpush1.bf16.msra.mxu0 %v2584
  %3709 = vmatprep.mubr.bf16.mxu0 %v625
  %3710 = vmatmul.mubr.bf16.gmra.mrb[0].mxu0 %v624
  %v3711 = vpop.f32.mrb[0].mxu0
  %v3712 = vadd.f32 %v3671, %v3711
  %v3713 = vpop.f32.mrb[0].mxu0
  %v3714 = vadd.f32 %v3673, %v3713
  %v3715 = vpop.f32.mrb[0].mxu0
  %v3716 = vpop.f32.mrb[0].mxu0
  %3717 = vdwg.mxu0
  %3718 = vmatprep.subr.bf16.mxu0 %v2587
  %3719 = vmatpush1.bf16.msra.mxu0 %v2586
  %3720 = vmatprep.subr.bf16.mxu0 %v2589
  %3721 = vmatpush1.bf16.msra.mxu0 %v2588
  %3722 = vmatprep.subr.bf16.mxu0 %v2591
  %3723 = vmatpush1.bf16.msra.mxu0 %v2590
  %3724 = vmatprep.subr.bf16.mxu0 %v2593
  %3725 = vmatpush1.bf16.msra.mxu0 %v2592
  %3726 = vmatprep.subr.bf16.mxu0 %v2595
  %3727 = vmatpush1.bf16.msra.mxu0 %v2594
  %3728 = vmatprep.subr.bf16.mxu0 %v2597
  %3729 = vmatpush1.bf16.msra.mxu0 %v2596
  %3730 = vmatprep.subr.bf16.mxu0 %v2599
  %3731 = vmatpush1.bf16.msra.mxu0 %v2598
  %3732 = vmatprep.subr.bf16.mxu0 %v2601
  %3733 = vmatpush1.bf16.msra.mxu0 %v2600
  %3734 = vmatprep.subr.bf16.mxu0 %v2603
  %3735 = vmatpush1.bf16.msra.mxu0 %v2602
  %3736 = vmatprep.subr.bf16.mxu0 %v2605
  %3737 = vmatpush1.bf16.msra.mxu0 %v2604
  %3738 = vmatprep.subr.bf16.mxu0 %v2607
  %3739 = vmatpush1.bf16.msra.mxu0 %v2606
  %3740 = vmatprep.subr.bf16.mxu0 %v2609
  %3741 = vmatpush1.bf16.msra.mxu0 %v2608
  %3742 = vmatprep.subr.bf16.mxu0 %v2611
  %3743 = vmatpush1.bf16.msra.mxu0 %v2610
  %3744 = vmatprep.subr.bf16.mxu0 %v2613
  %3745 = vmatpush1.bf16.msra.mxu0 %v2612
  %3746 = vmatprep.subr.bf16.mxu0 %v2615
  %3747 = vmatpush1.bf16.msra.mxu0 %v2614
  %3748 = vmatprep.subr.bf16.mxu0 %v2617
  %3749 = vmatpush1.bf16.msra.mxu0 %v2616
  %3750 = vmatprep.mubr.bf16.mxu0 %v627
  %3751 = vmatmul.mubr.bf16.gmra.mrb[0].mxu0 %v626
  %v3752 = vpop.f32.mrb[0].mxu0
  %v3753 = vadd.f32 %v3712, %v3752
  %v3754 = vpop.f32.mrb[0].mxu0
  %v3755 = vadd.f32 %v3714, %v3754
  %v3756 = vpop.f32.mrb[0].mxu0
  %v3757 = vpop.f32.mrb[0].mxu0
  %3758 = vdwg.mxu0
  %3759 = vmatprep.subr.bf16.mxu0 %v2619
  %3760 = vmatpush1.bf16.msra.mxu0 %v2618
  %3761 = vmatprep.subr.bf16.mxu0 %v2621
  %3762 = vmatpush1.bf16.msra.mxu0 %v2620
  %3763 = vmatprep.subr.bf16.mxu0 %v2623
  %3764 = vmatpush1.bf16.msra.mxu0 %v2622
  %3765 = vmatprep.subr.bf16.mxu0 %v2625
  %3766 = vmatpush1.bf16.msra.mxu0 %v2624
  %3767 = vmatprep.subr.bf16.mxu0 %v2627
  %3768 = vmatpush1.bf16.msra.mxu0 %v2626
  %3769 = vmatprep.subr.bf16.mxu0 %v2629
  %3770 = vmatpush1.bf16.msra.mxu0 %v2628
  %3771 = vmatprep.subr.bf16.mxu0 %v2631
  %3772 = vmatpush1.bf16.msra.mxu0 %v2630
  %3773 = vmatprep.subr.bf16.mxu0 %v2633
  %3774 = vmatpush1.bf16.msra.mxu0 %v2632
  %3775 = vmatprep.subr.bf16.mxu0 %v2635
  %3776 = vmatpush1.bf16.msra.mxu0 %v2634
  %3777 = vmatprep.subr.bf16.mxu0 %v2637
  %3778 = vmatpush1.bf16.msra.mxu0 %v2636
  %3779 = vmatprep.subr.bf16.mxu0 %v2639
  %3780 = vmatpush1.bf16.msra.mxu0 %v2638
  %3781 = vmatprep.subr.bf16.mxu0 %v2641
  %3782 = vmatpush1.bf16.msra.mxu0 %v2640
  %3783 = vmatprep.subr.bf16.mxu0 %v2643
  %3784 = vmatpush1.bf16.msra.mxu0 %v2642
  %3785 = vmatprep.subr.bf16.mxu0 %v2645
  %3786 = vmatpush1.bf16.msra.mxu0 %v2644
  %3787 = vmatprep.subr.bf16.mxu0 %v2647
  %3788 = vmatpush1.bf16.msra.mxu0 %v2646
  %3789 = vmatprep.subr.bf16.mxu0 %v2649
  %3790 = vmatpush1.bf16.msra.mxu0 %v2648
  %3791 = vmatprep.mubr.bf16.mxu0 %v629
  %3792 = vmatmul.mubr.bf16.gmra.mrb[0].mxu0 %v628
  %v3793 = vpop.f32.mrb[0].mxu0
  %v3794 = vadd.f32 %v3753, %v3793
  %v3795 = vpop.f32.mrb[0].mxu0
  %v3796 = vadd.f32 %v3755, %v3795
  %v3797 = vpop.f32.mrb[0].mxu0
  %v3798 = vpop.f32.mrb[0].mxu0
  %3799 = vdwg.mxu0
  %3800 = vmatprep.subr.bf16.mxu0 %v2651
  %3801 = vmatpush1.bf16.msra.mxu0 %v2650
  %3802 = vmatprep.subr.bf16.mxu0 %v2653
  %3803 = vmatpush1.bf16.msra.mxu0 %v2652
  %3804 = vmatprep.subr.bf16.mxu0 %v2655
  %3805 = vmatpush1.bf16.msra.mxu0 %v2654
  %3806 = vmatprep.subr.bf16.mxu0 %v2657
  %3807 = vmatpush1.bf16.msra.mxu0 %v2656
  %3808 = vmatprep.subr.bf16.mxu0 %v2659
  %3809 = vmatpush1.bf16.msra.mxu0 %v2658
  %3810 = vmatprep.subr.bf16.mxu0 %v2661
  %3811 = vmatpush1.bf16.msra.mxu0 %v2660
  %3812 = vmatprep.subr.bf16.mxu0 %v2663
  %3813 = vmatpush1.bf16.msra.mxu0 %v2662
  %3814 = vmatprep.subr.bf16.mxu0 %v2665
  %3815 = vmatpush1.bf16.msra.mxu0 %v2664
  %3816 = vmatprep.subr.bf16.mxu0 %v2667
  %3817 = vmatpush1.bf16.msra.mxu0 %v2666
  %3818 = vmatprep.subr.bf16.mxu0 %v2669
  %3819 = vmatpush1.bf16.msra.mxu0 %v2668
  %3820 = vmatprep.subr.bf16.mxu0 %v2671
  %3821 = vmatpush1.bf16.msra.mxu0 %v2670
  %3822 = vmatprep.subr.bf16.mxu0 %v2673
  %3823 = vmatpush1.bf16.msra.mxu0 %v2672
  %3824 = vmatprep.subr.bf16.mxu0 %v2675
  %3825 = vmatpush1.bf16.msra.mxu0 %v2674
  %3826 = vmatprep.subr.bf16.mxu0 %v2677
  %3827 = vmatpush1.bf16.msra.mxu0 %v2676
  %3828 = vmatprep.subr.bf16.mxu0 %v2679
  %3829 = vmatpush1.bf16.msra.mxu0 %v2678
  %3830 = vmatprep.subr.bf16.mxu0 %v2681
  %3831 = vmatpush1.bf16.msra.mxu0 %v2680
  %3832 = vmatprep.mubr.bf16.mxu0 %v631
  %3833 = vmatmul.mubr.bf16.gmra.mrb[0].mxu0 %v630
  %v3834 = vpop.f32.mrb[0].mxu0
  %v3835 = vadd.f32 %v3794, %v3834
  %v3836 = vpop.f32.mrb[0].mxu0
  %v3837 = vadd.f32 %v3796, %v3836
  %v3838 = vpop.f32.mrb[0].mxu0
  %v3839 = vpop.f32.mrb[0].mxu0
  %3840 = vdwg.mxu0
  %3841 = vmatprep.subr.bf16.mxu0 %v2683
  %3842 = vmatpush1.bf16.msra.mxu0 %v2682
  %3843 = vmatprep.subr.bf16.mxu0 %v2685
  %3844 = vmatpush1.bf16.msra.mxu0 %v2684
  %3845 = vmatprep.subr.bf16.mxu0 %v2687
  %3846 = vmatpush1.bf16.msra.mxu0 %v2686
  %3847 = vmatprep.subr.bf16.mxu0 %v2689
  %3848 = vmatpush1.bf16.msra.mxu0 %v2688
  %3849 = vmatprep.subr.bf16.mxu0 %v2691
  %3850 = vmatpush1.bf16.msra.mxu0 %v2690
  %3851 = vmatprep.subr.bf16.mxu0 %v2693
  %3852 = vmatpush1.bf16.msra.mxu0 %v2692
  %3853 = vmatprep.subr.bf16.mxu0 %v2695
  %3854 = vmatpush1.bf16.msra.mxu0 %v2694
  %3855 = vmatprep.subr.bf16.mxu0 %v2697
  %3856 = vmatpush1.bf16.msra.mxu0 %v2696
  %3857 = vmatprep.subr.bf16.mxu0 %v2699
  %3858 = vmatpush1.bf16.msra.mxu0 %v2698
  %3859 = vmatprep.subr.bf16.mxu0 %v2701
  %3860 = vmatpush1.bf16.msra.mxu0 %v2700
  %3861 = vmatprep.subr.bf16.mxu0 %v2703
  %3862 = vmatpush1.bf16.msra.mxu0 %v2702
  %3863 = vmatprep.subr.bf16.mxu0 %v2705
  %3864 = vmatpush1.bf16.msra.mxu0 %v2704
  %3865 = vmatprep.subr.bf16.mxu0 %v2707
  %3866 = vmatpush1.bf16.msra.mxu0 %v2706
  %3867 = vmatprep.subr.bf16.mxu0 %v2709
  %3868 = vmatpush1.bf16.msra.mxu0 %v2708
  %3869 = vmatprep.subr.bf16.mxu0 %v2711
  %3870 = vmatpush1.bf16.msra.mxu0 %v2710
  %3871 = vmatprep.subr.bf16.mxu0 %v2713
  %3872 = vmatpush1.bf16.msra.mxu0 %v2712
  %3873 = vmatprep.mubr.bf16.mxu0 %v633
  %3874 = vmatmul.mubr.bf16.gmra.mrb[0].mxu0 %v632
  %v3875 = vpop.f32.mrb[0].mxu0
  %v3876 = vadd.f32 %v3835, %v3875
  %v3877 = vpop.f32.mrb[0].mxu0
  %v3878 = vadd.f32 %v3837, %v3877
  %v3879 = vpop.f32.mrb[0].mxu0
  %v3880 = vpop.f32.mrb[0].mxu0
  %3881 = vdwg.mxu0
  %v3882 = vmax.f32 %v3876, 0.0
  %v3883 = vmax.f32 %v3878, 0.0
  %v3884 = vpack.c.bf16 %v3882, %v3882
  %v3885 = vpack.c.bf16 %v3883, %v3883
  %v3888 = vunpack.c.l.b16 %v3884
  %v3889 = vunpack.c.l.b16 %v3885
  %v3890 = vpack.c.b16 %v3889, %v3888
  %3892 = vst [vmem:[%s3] sm:$0xff] %v3890
  // Predicated region
  $region14: #{md_e_attr_forward.8} parent=0 // pred_check
    _
  $region15: #{md_e_attr_forward.8} parent=0 // pred_check_branch
    %3894 = sbr.rel (0) target = $region17
  $region16: #{md_e_attr_forward.8} parent=0 // pred_region
    _
  $region17: #{md_e_attr_forward.8} parent=0 // pred_fallthru
    _
  // Predicated region
  $region18: #{md_e_attr_forward.8} parent=0 // pred_check
    _
  $region19: #{md_e_attr_forward.8} parent=0 // pred_check_branch
    %3896 = sbr.rel (0) target = $region21
  $region20: #{md_e_attr_forward.8} parent=0 // pred_region
    _
  $region21: #{md_e_attr_forward.8} parent=0 // pred_fallthru
    _

// kernel: md_e_attr_forward.9
$region0: #{md_e_attr_forward.9}
  #allocation0 [shape = 'u32[]', space=smem, size = 0x4, offset = 0x4, fixed_abs, tag = 'smem constant byte address 0x4 - core index']
  #allocation1 [shape = 'u32[144,128]{1,0:T(1,128)}', space=vmem, size = 0x12000, scoped, tag = 'internal scratch']
  %s0 = inlined_call_operand.vmem [shape: bf16[8,4096], index: 0, kind: input, shape index: {}]
  %s1 = inlined_call_operand.vmem [shape: bf16[4096,256], index: 1, kind: input, shape index: {}]
  %s2 = inlined_call_operand.vmem [shape: f32[1,256], index: 2, kind: input, shape index: {}]
  %s3 = inlined_call_operand.vmem [shape: f32[8,256], index: 3, kind: output, shape index: {}]
  %s4 = sld [smem:[#allocation0]]
  $region22: #{md_e_attr_forward.9} parent=0
    _
  %s6 = ssub.s32 1, %s4
  %s7 = scalar_select 0, %s6, %s4
  // Predicated region
  $region2: #{md_e_attr_forward.9} parent=0 // pred_check
    _
  $region3: #{md_e_attr_forward.9} parent=0 // pred_check_branch
    %9 = sbr.rel (0) target = $region5
  $region4: #{md_e_attr_forward.9} parent=0 // pred_region
    _
  $region5: #{md_e_attr_forward.9} parent=0 // pred_fallthru
    _
  // Predicated region
  $region6: #{md_e_attr_forward.9} parent=0 // pred_check
    _
  $region7: #{md_e_attr_forward.9} parent=0 // pred_check_branch
    %11 = sbr.rel (0) target = $region9
  $region8: #{md_e_attr_forward.9} parent=0 // pred_region
    _
  $region9: #{md_e_attr_forward.9} parent=0 // pred_fallthru
    _
  // Predicated region
  $region10: #{md_e_attr_forward.9} parent=0 // pred_check
    _
  $region11: #{md_e_attr_forward.9} parent=0 // pred_check_branch
    %13 = sbr.rel (0) target = $region13
  $region12: #{md_e_attr_forward.9} parent=0 // pred_region
    _
  $region13: #{md_e_attr_forward.9} parent=0 // pred_fallthru
    _
  %v14 = vld [vmem:[%s0] sm:$0xff]
  %v15 = vld [vmem:[%s0 + $0x8] sm:$0xff]
  %v16 = vld [vmem:[%s0 + $0x10] sm:$0xff]
  %v17 = vld [vmem:[%s0 + $0x18] sm:$0xff]
  %v18 = vld [vmem:[%s0 + $0x20] sm:$0xff]
  %v19 = vld [vmem:[%s0 + $0x28] sm:$0xff]
  %v20 = vld [vmem:[%s0 + $0x30] sm:$0xff]
  %v21 = vld [vmem:[%s0 + $0x38] sm:$0xff]
  %v22 = vld [vmem:[%s0 + $0x40] sm:$0xff]
  %v23 = vld [vmem:[%s0 + $0x48] sm:$0xff]
  %v24 = vld [vmem:[%s0 + $0x50] sm:$0xff]
  %v25 = vld [vmem:[%s0 + $0x58] sm:$0xff]
  %v26 = vld [vmem:[%s0 + $0x60] sm:$0xff]
  %v27 = vld [vmem:[%s0 + $0x68] sm:$0xff]
  %v28 = vld [vmem:[%s0 + $0x70] sm:$0xff]
  %v29 = vld [vmem:[%s0 + $0x78] sm:$0xff]
  %v30 = vld [vmem:[%s1] sm:$0xff]
  %v31 = vld [vmem:[%s1 + $0x8] sm:$0xff]
  %v32 = vld [vmem:[%s1 + $0x10] sm:$0xff]
  %v33 = vld [vmem:[%s1 + $0x18] sm:$0xff]
  %v34 = vld [vmem:[%s1 + $0x20] sm:$0xff]
  %v35 = vld [vmem:[%s1 + $0x28] sm:$0xff]
  %v36 = vld [vmem:[%s1 + $0x30] sm:$0xff]
  %v37 = vld [vmem:[%s1 + $0x38] sm:$0xff]
  %v38 = vld [vmem:[%s1 + $0x40] sm:$0xff]
  %v39 = vld [vmem:[%s1 + $0x48] sm:$0xff]
  %v40 = vld [vmem:[%s1 + $0x50] sm:$0xff]
  %v41 = vld [vmem:[%s1 + $0x58] sm:$0xff]
  %v42 = vld [vmem:[%s1 + $0x60] sm:$0xff]
  %v43 = vld [vmem:[%s1 + $0x68] sm:$0xff]
  %v44 = vld [vmem:[%s1 + $0x70] sm:$0xff]
  %v45 = vld [vmem:[%s1 + $0x78] sm:$0xff]
  %v46 = vld [vmem:[%s1 + $0x80] sm:$0xff]
  %v47 = vld [vmem:[%s1 + $0x88] sm:$0xff]
  %v48 = vld [vmem:[%s1 + $0x90] sm:$0xff]
  %v49 = vld [vmem:[%s1 + $0x98] sm:$0xff]
  %v50 = vld [vmem:[%s1 + $0xa0] sm:$0xff]
  %v51 = vld [vmem:[%s1 + $0xa8] sm:$0xff]
  %v52 = vld [vmem:[%s1 + $0xb0] sm:$0xff]
  %v53 = vld [vmem:[%s1 + $0xb8] sm:$0xff]
  %v54 = vld [vmem:[%s1 + $0xc0] sm:$0xff]
  %v55 = vld [vmem:[%s1 + $0xc8] sm:$0xff]
  %v56 = vld [vmem:[%s1 + $0xd0] sm:$0xff]
  %v57 = vld [vmem:[%s1 + $0xd8] sm:$0xff]
  %v58 = vld [vmem:[%s1 + $0xe0] sm:$0xff]
  %v59 = vld [vmem:[%s1 + $0xe8] sm:$0xff]
  %v60 = vld [vmem:[%s1 + $0xf0] sm:$0xff]
  %v61 = vld [vmem:[%s1 + $0xf8] sm:$0xff]
  %v62 = vld [vmem:[%s1 + $0x100] sm:$0xff]
  %v63 = vld [vmem:[%s1 + $0x108] sm:$0xff]
  %v64 = vld [vmem:[%s1 + $0x110] sm:$0xff]
  %v65 = vld [vmem:[%s1 + $0x118] sm:$0xff]
  %v66 = vld [vmem:[%s1 + $0x120] sm:$0xff]
  %v67 = vld [vmem:[%s1 + $0x128] sm:$0xff]
  %v68 = vld [vmem:[%s1 + $0x130] sm:$0xff]
  %v69 = vld [vmem:[%s1 + $0x138] sm:$0xff]
  %v70 = vld [vmem:[%s1 + $0x140] sm:$0xff]
  %v71 = vld [vmem:[%s1 + $0x148] sm:$0xff]
  %v72 = vld [vmem:[%s1 + $0x150] sm:$0xff]
  %v73 = vld [vmem:[%s1 + $0x158] sm:$0xff]
  %v74 = vld [vmem:[%s1 + $0x160] sm:$0xff]
  %v75 = vld [vmem:[%s1 + $0x168] sm:$0xff]
  %v76 = vld [vmem:[%s1 + $0x170] sm:$0xff]
  %v77 = vld [vmem:[%s1 + $0x178] sm:$0xff]
  %v78 = vld [vmem:[%s1 + $0x180] sm:$0xff]
  %v79 = vld [vmem:[%s1 + $0x188] sm:$0xff]
  %v80 = vld [vmem:[%s1 + $0x190] sm:$0xff]
  %v81 = vld [vmem:[%s1 + $0x198] sm:$0xff]
  %v82 = vld [vmem:[%s1 + $0x1a0] sm:$0xff]
  %v83 = vld [vmem:[%s1 + $0x1a8] sm:$0xff]
  %v84 = vld [vmem:[%s1 + $0x1b0] sm:$0xff]
  %v85 = vld [vmem:[%s1 + $0x1b8] sm:$0xff]
  %v86 = vld [vmem:[%s1 + $0x1c0] sm:$0xff]
  %v87 = vld [vmem:[%s1 + $0x1c8] sm:$0xff]
  %v88 = vld [vmem:[%s1 + $0x1d0] sm:$0xff]
  %v89 = vld [vmem:[%s1 + $0x1d8] sm:$0xff]
  %v90 = vld [vmem:[%s1 + $0x1e0] sm:$0xff]
  %v91 = vld [vmem:[%s1 + $0x1e8] sm:$0xff]
  %v92 = vld [vmem:[%s1 + $0x1f0] sm:$0xff]
  %v93 = vld [vmem:[%s1 + $0x1f8] sm:$0xff]
  %v94 = vld [vmem:[%s1 + $0x200] sm:$0xff]
  %v95 = vld [vmem:[%s1 + $0x208] sm:$0xff]
  %v96 = vld [vmem:[%s1 + $0x210] sm:$0xff]
  %v97 = vld [vmem:[%s1 + $0x218] sm:$0xff]
  %v98 = vld [vmem:[%s1 + $0x220] sm:$0xff]
  %v99 = vld [vmem:[%s1 + $0x228] sm:$0xff]
  %v100 = vld [vmem:[%s1 + $0x230] sm:$0xff]
  %v101 = vld [vmem:[%s1 + $0x238] sm:$0xff]
  %v102 = vld [vmem:[%s1 + $0x240] sm:$0xff]
  %v103 = vld [vmem:[%s1 + $0x248] sm:$0xff]
  %v104 = vld [vmem:[%s1 + $0x250] sm:$0xff]
  %v105 = vld [vmem:[%s1 + $0x258] sm:$0xff]
  %v106 = vld [vmem:[%s1 + $0x260] sm:$0xff]
  %v107 = vld [vmem:[%s1 + $0x268] sm:$0xff]
  %v108 = vld [vmem:[%s1 + $0x270] sm:$0xff]
  %v109 = vld [vmem:[%s1 + $0x278] sm:$0xff]
  %v110 = vld [vmem:[%s1 + $0x280] sm:$0xff]
  %v111 = vld [vmem:[%s1 + $0x288] sm:$0xff]
  %v112 = vld [vmem:[%s1 + $0x290] sm:$0xff]
  %v113 = vld [vmem:[%s1 + $0x298] sm:$0xff]
  %v114 = vld [vmem:[%s1 + $0x2a0] sm:$0xff]
  %v115 = vld [vmem:[%s1 + $0x2a8] sm:$0xff]
  %v116 = vld [vmem:[%s1 + $0x2b0] sm:$0xff]
  %v117 = vld [vmem:[%s1 + $0x2b8] sm:$0xff]
  %v118 = vld [vmem:[%s1 + $0x2c0] sm:$0xff]
  %v119 = vld [vmem:[%s1 + $0x2c8] sm:$0xff]
  %v120 = vld [vmem:[%s1 + $0x2d0] sm:$0xff]
  %v121 = vld [vmem:[%s1 + $0x2d8] sm:$0xff]
  %v122 = vld [vmem:[%s1 + $0x2e0] sm:$0xff]
  %v123 = vld [vmem:[%s1 + $0x2e8] sm:$0xff]
  %v124 = vld [vmem:[%s1 + $0x2f0] sm:$0xff]
  %v125 = vld [vmem:[%s1 + $0x2f8] sm:$0xff]
  %v126 = vld [vmem:[%s1 + $0x300] sm:$0xff]
  %v127 = vld [vmem:[%s1 + $0x308] sm:$0xff]
  %v128 = vld [vmem:[%s1 + $0x310] sm:$0xff]
  %v129 = vld [vmem:[%s1 + $0x318] sm:$0xff]
  %v130 = vld [vmem:[%s1 + $0x320] sm:$0xff]
  %v131 = vld [vmem:[%s1 + $0x328] sm:$0xff]
  %v132 = vld [vmem:[%s1 + $0x330] sm:$0xff]
  %v133 = vld [vmem:[%s1 + $0x338] sm:$0xff]
  %v134 = vld [vmem:[%s1 + $0x340] sm:$0xff]
  %v135 = vld [vmem:[%s1 + $0x348] sm:$0xff]
  %v136 = vld [vmem:[%s1 + $0x350] sm:$0xff]
  %v137 = vld [vmem:[%s1 + $0x358] sm:$0xff]
  %v138 = vld [vmem:[%s1 + $0x360] sm:$0xff]
  %v139 = vld [vmem:[%s1 + $0x368] sm:$0xff]
  %v140 = vld [vmem:[%s1 + $0x370] sm:$0xff]
  %v141 = vld [vmem:[%s1 + $0x378] sm:$0xff]
  %v142 = vld [vmem:[%s1 + $0x380] sm:$0xff]
  %v143 = vld [vmem:[%s1 + $0x388] sm:$0xff]
  %v144 = vld [vmem:[%s1 + $0x390] sm:$0xff]
  %v145 = vld [vmem:[%s1 + $0x398] sm:$0xff]
  %v146 = vld [vmem:[%s1 + $0x3a0] sm:$0xff]
  %v147 = vld [vmem:[%s1 + $0x3a8] sm:$0xff]
  %v148 = vld [vmem:[%s1 + $0x3b0] sm:$0xff]
  %v149 = vld [vmem:[%s1 + $0x3b8] sm:$0xff]
  %v150 = vld [vmem:[%s1 + $0x3c0] sm:$0xff]
  %v151 = vld [vmem:[%s1 + $0x3c8] sm:$0xff]
  %v152 = vld [vmem:[%s1 + $0x3d0] sm:$0xff]
  %v153 = vld [vmem:[%s1 + $0x3d8] sm:$0xff]
  %v154 = vld [vmem:[%s1 + $0x3e0] sm:$0xff]
  %v155 = vld [vmem:[%s1 + $0x3e8] sm:$0xff]
  %v156 = vld [vmem:[%s1 + $0x3f0] sm:$0xff]
  %v157 = vld [vmem:[%s1 + $0x3f8] sm:$0xff]
  %v158 = vld [vmem:[%s1 + $0x400] sm:$0xff]
  %v159 = vld [vmem:[%s1 + $0x408] sm:$0xff]
  %v160 = vld [vmem:[%s1 + $0x410] sm:$0xff]
  %v161 = vld [vmem:[%s1 + $0x418] sm:$0xff]
  %v162 = vld [vmem:[%s1 + $0x420] sm:$0xff]
  %v163 = vld [vmem:[%s1 + $0x428] sm:$0xff]
  %v164 = vld [vmem:[%s1 + $0x430] sm:$0xff]
  %v165 = vld [vmem:[%s1 + $0x438] sm:$0xff]
  %v166 = vld [vmem:[%s1 + $0x440] sm:$0xff]
  %v167 = vld [vmem:[%s1 + $0x448] sm:$0xff]
  %v168 = vld [vmem:[%s1 + $0x450] sm:$0xff]
  %v169 = vld [vmem:[%s1 + $0x458] sm:$0xff]
  %v170 = vld [vmem:[%s1 + $0x460] sm:$0xff]
  %v171 = vld [vmem:[%s1 + $0x468] sm:$0xff]
  %v172 = vld [vmem:[%s1 + $0x470] sm:$0xff]
  %v173 = vld [vmem:[%s1 + $0x478] sm:$0xff]
  %v174 = vld [vmem:[%s1 + $0x480] sm:$0xff]
  %v175 = vld [vmem:[%s1 + $0x488] sm:$0xff]
  %v176 = vld [vmem:[%s1 + $0x490] sm:$0xff]
  %v177 = vld [vmem:[%s1 + $0x498] sm:$0xff]
  %v178 = vld [vmem:[%s1 + $0x4a0] sm:$0xff]
  %v179 = vld [vmem:[%s1 + $0x4a8] sm:$0xff]
  %v180 = vld [vmem:[%s1 + $0x4b0] sm:$0xff]
  %v181 = vld [vmem:[%s1 + $0x4b8] sm:$0xff]
  %v182 = vld [vmem:[%s1 + $0x4c0] sm:$0xff]
  %v183 = vld [vmem:[%s1 + $0x4c8] sm:$0xff]
  %v184 = vld [vmem:[%s1 + $0x4d0] sm:$0xff]
  %v185 = vld [vmem:[%s1 + $0x4d8] sm:$0xff]
  %v186 = vld [vmem:[%s1 + $0x4e0] sm:$0xff]
  %v187 = vld [vmem:[%s1 + $0x4e8] sm:$0xff]
  %v188 = vld [vmem:[%s1 + $0x4f0] sm:$0xff]
  %v189 = vld [vmem:[%s1 + $0x4f8] sm:$0xff]
  %v190 = vld [vmem:[%s1 + $0x500] sm:$0xff]
  %v191 = vld [vmem:[%s1 + $0x508] sm:$0xff]
  %v192 = vld [vmem:[%s1 + $0x510] sm:$0xff]
  %v193 = vld [vmem:[%s1 + $0x518] sm:$0xff]
  %v194 = vld [vmem:[%s1 + $0x520] sm:$0xff]
  %v195 = vld [vmem:[%s1 + $0x528] sm:$0xff]
  %v196 = vld [vmem:[%s1 + $0x530] sm:$0xff]
  %v197 = vld [vmem:[%s1 + $0x538] sm:$0xff]
  %v198 = vld [vmem:[%s1 + $0x540] sm:$0xff]
  %v199 = vld [vmem:[%s1 + $0x548] sm:$0xff]
  %v200 = vld [vmem:[%s1 + $0x550] sm:$0xff]
  %v201 = vld [vmem:[%s1 + $0x558] sm:$0xff]
  %v202 = vld [vmem:[%s1 + $0x560] sm:$0xff]
  %v203 = vld [vmem:[%s1 + $0x568] sm:$0xff]
  %v204 = vld [vmem:[%s1 + $0x570] sm:$0xff]
  %v205 = vld [vmem:[%s1 + $0x578] sm:$0xff]
  %v206 = vld [vmem:[%s1 + $0x580] sm:$0xff]
  %v207 = vld [vmem:[%s1 + $0x588] sm:$0xff]
  %v208 = vld [vmem:[%s1 + $0x590] sm:$0xff]
  %v209 = vld [vmem:[%s1 + $0x598] sm:$0xff]
  %v210 = vld [vmem:[%s1 + $0x5a0] sm:$0xff]
  %v211 = vld [vmem:[%s1 + $0x5a8] sm:$0xff]
  %v212 = vld [vmem:[%s1 + $0x5b0] sm:$0xff]
  %v213 = vld [vmem:[%s1 + $0x5b8] sm:$0xff]
  %v214 = vld [vmem:[%s1 + $0x5c0] sm:$0xff]
  %v215 = vld [vmem:[%s1 + $0x5c8] sm:$0xff]
  %v216 = vld [vmem:[%s1 + $0x5d0] sm:$0xff]
  %v217 = vld [vmem:[%s1 + $0x5d8] sm:$0xff]
  %v218 = vld [vmem:[%s1 + $0x5e0] sm:$0xff]
  %v219 = vld [vmem:[%s1 + $0x5e8] sm:$0xff]
  %v220 = vld [vmem:[%s1 + $0x5f0] sm:$0xff]
  %v221 = vld [vmem:[%s1 + $0x5f8] sm:$0xff]
  %v222 = vld [vmem:[%s1 + $0x600] sm:$0xff]
  %v223 = vld [vmem:[%s1 + $0x608] sm:$0xff]
  %v224 = vld [vmem:[%s1 + $0x610] sm:$0xff]
  %v225 = vld [vmem:[%s1 + $0x618] sm:$0xff]
  %v226 = vld [vmem:[%s1 + $0x620] sm:$0xff]
  %v227 = vld [vmem:[%s1 + $0x628] sm:$0xff]
  %v228 = vld [vmem:[%s1 + $0x630] sm:$0xff]
  %v229 = vld [vmem:[%s1 + $0x638] sm:$0xff]
  %v230 = vld [vmem:[%s1 + $0x640] sm:$0xff]
  %v231 = vld [vmem:[%s1 + $0x648] sm:$0xff]
  %v232 = vld [vmem:[%s1 + $0x650] sm:$0xff]
  %v233 = vld [vmem:[%s1 + $0x658] sm:$0xff]
  %v234 = vld [vmem:[%s1 + $0x660] sm:$0xff]
  %v235 = vld [vmem:[%s1 + $0x668] sm:$0xff]
  %v236 = vld [vmem:[%s1 + $0x670] sm:$0xff]
  %v237 = vld [vmem:[%s1 + $0x678] sm:$0xff]
  %v238 = vld [vmem:[%s1 + $0x680] sm:$0xff]
  %v239 = vld [vmem:[%s1 + $0x688] sm:$0xff]
  %v240 = vld [vmem:[%s1 + $0x690] sm:$0xff]
  %v241 = vld [vmem:[%s1 + $0x698] sm:$0xff]
  %v242 = vld [vmem:[%s1 + $0x6a0] sm:$0xff]
  %v243 = vld [vmem:[%s1 + $0x6a8] sm:$0xff]
  %v244 = vld [vmem:[%s1 + $0x6b0] sm:$0xff]
  %v245 = vld [vmem:[%s1 + $0x6b8] sm:$0xff]
  %v246 = vld [vmem:[%s1 + $0x6c0] sm:$0xff]
  %v247 = vld [vmem:[%s1 + $0x6c8] sm:$0xff]
  %v248 = vld [vmem:[%s1 + $0x6d0] sm:$0xff]
  %v249 = vld [vmem:[%s1 + $0x6d8] sm:$0xff]
  %v250 = vld [vmem:[%s1 + $0x6e0] sm:$0xff]
  %v251 = vld [vmem:[%s1 + $0x6e8] sm:$0xff]
  %v252 = vld [vmem:[%s1 + $0x6f0] sm:$0xff]
  %v253 = vld [vmem:[%s1 + $0x6f8] sm:$0xff]
  %v254 = vld [vmem:[%s1 + $0x700] sm:$0xff]
  %v255 = vld [vmem:[%s1 + $0x708] sm:$0xff]
  %v256 = vld [vmem:[%s1 + $0x710] sm:$0xff]
  %v257 = vld [vmem:[%s1 + $0x718] sm:$0xff]
  %v258 = vld [vmem:[%s1 + $0x720] sm:$0xff]
  %v259 = vld [vmem:[%s1 + $0x728] sm:$0xff]
  %v260 = vld [vmem:[%s1 + $0x730] sm:$0xff]
  %v261 = vld [vmem:[%s1 + $0x738] sm:$0xff]
  %v262 = vld [vmem:[%s1 + $0x740] sm:$0xff]
  %v263 = vld [vmem:[%s1 + $0x748] sm:$0xff]
  %v264 = vld [vmem:[%s1 + $0x750] sm:$0xff]
  %v265 = vld [vmem:[%s1 + $0x758] sm:$0xff]
  %v266 = vld [vmem:[%s1 + $0x760] sm:$0xff]
  %v267 = vld [vmem:[%s1 + $0x768] sm:$0xff]
  %v268 = vld [vmem:[%s1 + $0x770] sm:$0xff]
  %v269 = vld [vmem:[%s1 + $0x778] sm:$0xff]
  %v270 = vld [vmem:[%s1 + $0x780] sm:$0xff]
  %v271 = vld [vmem:[%s1 + $0x788] sm:$0xff]
  %v272 = vld [vmem:[%s1 + $0x790] sm:$0xff]
  %v273 = vld [vmem:[%s1 + $0x798] sm:$0xff]
  %v274 = vld [vmem:[%s1 + $0x7a0] sm:$0xff]
  %v275 = vld [vmem:[%s1 + $0x7a8] sm:$0xff]
  %v276 = vld [vmem:[%s1 + $0x7b0] sm:$0xff]
  %v277 = vld [vmem:[%s1 + $0x7b8] sm:$0xff]
  %v278 = vld [vmem:[%s1 + $0x7c0] sm:$0xff]
  %v279 = vld [vmem:[%s1 + $0x7c8] sm:$0xff]
  %v280 = vld [vmem:[%s1 + $0x7d0] sm:$0xff]
  %v281 = vld [vmem:[%s1 + $0x7d8] sm:$0xff]
  %v282 = vld [vmem:[%s1 + $0x7e0] sm:$0xff]
  %v283 = vld [vmem:[%s1 + $0x7e8] sm:$0xff]
  %v284 = vld [vmem:[%s1 + $0x7f0] sm:$0xff]
  %v285 = vld [vmem:[%s1 + $0x7f8] sm:$0xff]
  %v286 = vld [vmem:[%s1 + $0x800] sm:$0xff]
  %v287 = vld [vmem:[%s1 + $0x808] sm:$0xff]
  %v288 = vld [vmem:[%s1 + $0x810] sm:$0xff]
  %v289 = vld [vmem:[%s1 + $0x818] sm:$0xff]
  %v290 = vld [vmem:[%s1 + $0x820] sm:$0xff]
  %v291 = vld [vmem:[%s1 + $0x828] sm:$0xff]
  %v292 = vld [vmem:[%s1 + $0x830] sm:$0xff]
  %v293 = vld [vmem:[%s1 + $0x838] sm:$0xff]
  %v294 = vld [vmem:[%s1 + $0x840] sm:$0xff]
  %v295 = vld [vmem:[%s1 + $0x848] sm:$0xff]
  %v296 = vld [vmem:[%s1 + $0x850] sm:$0xff]
  %v297 = vld [vmem:[%s1 + $0x858] sm:$0xff]
  %v298 = vld [vmem:[%s1 + $0x860] sm:$0xff]
  %v299 = vld [vmem:[%s1 + $0x868] sm:$0xff]
  %v300 = vld [vmem:[%s1 + $0x870] sm:$0xff]
  %v301 = vld [vmem:[%s1 + $0x878] sm:$0xff]
  %v302 = vld [vmem:[%s1 + $0x880] sm:$0xff]
  %v303 = vld [vmem:[%s1 + $0x888] sm:$0xff]
  %v304 = vld [vmem:[%s1 + $0x890] sm:$0xff]
  %v305 = vld [vmem:[%s1 + $0x898] sm:$0xff]
  %v306 = vld [vmem:[%s1 + $0x8a0] sm:$0xff]
  %v307 = vld [vmem:[%s1 + $0x8a8] sm:$0xff]
  %v308 = vld [vmem:[%s1 + $0x8b0] sm:$0xff]
  %v309 = vld [vmem:[%s1 + $0x8b8] sm:$0xff]
  %v310 = vld [vmem:[%s1 + $0x8c0] sm:$0xff]
  %v311 = vld [vmem:[%s1 + $0x8c8] sm:$0xff]
  %v312 = vld [vmem:[%s1 + $0x8d0] sm:$0xff]
  %v313 = vld [vmem:[%s1 + $0x8d8] sm:$0xff]
  %v314 = vld [vmem:[%s1 + $0x8e0] sm:$0xff]
  %v315 = vld [vmem:[%s1 + $0x8e8] sm:$0xff]
  %v316 = vld [vmem:[%s1 + $0x8f0] sm:$0xff]
  %v317 = vld [vmem:[%s1 + $0x8f8] sm:$0xff]
  %v318 = vld [vmem:[%s1 + $0x900] sm:$0xff]
  %v319 = vld [vmem:[%s1 + $0x908] sm:$0xff]
  %v320 = vld [vmem:[%s1 + $0x910] sm:$0xff]
  %v321 = vld [vmem:[%s1 + $0x918] sm:$0xff]
  %v322 = vld [vmem:[%s1 + $0x920] sm:$0xff]
  %v323 = vld [vmem:[%s1 + $0x928] sm:$0xff]
  %v324 = vld [vmem:[%s1 + $0x930] sm:$0xff]
  %v325 = vld [vmem:[%s1 + $0x938] sm:$0xff]
  %v326 = vld [vmem:[%s1 + $0x940] sm:$0xff]
  %v327 = vld [vmem:[%s1 + $0x948] sm:$0xff]
  %v328 = vld [vmem:[%s1 + $0x950] sm:$0xff]
  %v329 = vld [vmem:[%s1 + $0x958] sm:$0xff]
  %v330 = vld [vmem:[%s1 + $0x960] sm:$0xff]
  %v331 = vld [vmem:[%s1 + $0x968] sm:$0xff]
  %v332 = vld [vmem:[%s1 + $0x970] sm:$0xff]
  %v333 = vld [vmem:[%s1 + $0x978] sm:$0xff]
  %v334 = vld [vmem:[%s1 + $0x980] sm:$0xff]
  %v335 = vld [vmem:[%s1 + $0x988] sm:$0xff]
  %v336 = vld [vmem:[%s1 + $0x990] sm:$0xff]
  %v337 = vld [vmem:[%s1 + $0x998] sm:$0xff]
  %v338 = vld [vmem:[%s1 + $0x9a0] sm:$0xff]
  %v339 = vld [vmem:[%s1 + $0x9a8] sm:$0xff]
  %v340 = vld [vmem:[%s1 + $0x9b0] sm:$0xff]
  %v341 = vld [vmem:[%s1 + $0x9b8] sm:$0xff]
  %v342 = vld [vmem:[%s1 + $0x9c0] sm:$0xff]
  %v343 = vld [vmem:[%s1 + $0x9c8] sm:$0xff]
  %v344 = vld [vmem:[%s1 + $0x9d0] sm:$0xff]
  %v345 = vld [vmem:[%s1 + $0x9d8] sm:$0xff]
  %v346 = vld [vmem:[%s1 + $0x9e0] sm:$0xff]
  %v347 = vld [vmem:[%s1 + $0x9e8] sm:$0xff]
  %v348 = vld [vmem:[%s1 + $0x9f0] sm:$0xff]
  %v349 = vld [vmem:[%s1 + $0x9f8] sm:$0xff]
  %v350 = vld [vmem:[%s1 + $0xa00] sm:$0xff]
  %v351 = vld [vmem:[%s1 + $0xa08] sm:$0xff]
  %v352 = vld [vmem:[%s1 + $0xa10] sm:$0xff]
  %v353 = vld [vmem:[%s1 + $0xa18] sm:$0xff]
  %v354 = vld [vmem:[%s1 + $0xa20] sm:$0xff]
  %v355 = vld [vmem:[%s1 + $0xa28] sm:$0xff]
  %v356 = vld [vmem:[%s1 + $0xa30] sm:$0xff]
  %v357 = vld [vmem:[%s1 + $0xa38] sm:$0xff]
  %v358 = vld [vmem:[%s1 + $0xa40] sm:$0xff]
  %v359 = vld [vmem:[%s1 + $0xa48] sm:$0xff]
  %v360 = vld [vmem:[%s1 + $0xa50] sm:$0xff]
  %v361 = vld [vmem:[%s1 + $0xa58] sm:$0xff]
  %v362 = vld [vmem:[%s1 + $0xa60] sm:$0xff]
  %v363 = vld [vmem:[%s1 + $0xa68] sm:$0xff]
  %v364 = vld [vmem:[%s1 + $0xa70] sm:$0xff]
  %v365 = vld [vmem:[%s1 + $0xa78] sm:$0xff]
  %v366 = vld [vmem:[%s1 + $0xa80] sm:$0xff]
  %v367 = vld [vmem:[%s1 + $0xa88] sm:$0xff]
  %v368 = vld [vmem:[%s1 + $0xa90] sm:$0xff]
  %v369 = vld [vmem:[%s1 + $0xa98] sm:$0xff]
  %v370 = vld [vmem:[%s1 + $0xaa0] sm:$0xff]
  %v371 = vld [vmem:[%s1 + $0xaa8] sm:$0xff]
  %v372 = vld [vmem:[%s1 + $0xab0] sm:$0xff]
  %v373 = vld [vmem:[%s1 + $0xab8] sm:$0xff]
  %v374 = vld [vmem:[%s1 + $0xac0] sm:$0xff]
  %v375 = vld [vmem:[%s1 + $0xac8] sm:$0xff]
  %v376 = vld [vmem:[%s1 + $0xad0] sm:$0xff]
  %v377 = vld [vmem:[%s1 + $0xad8] sm:$0xff]
  %v378 = vld [vmem:[%s1 + $0xae0] sm:$0xff]
  %v379 = vld [vmem:[%s1 + $0xae8] sm:$0xff]
  %v380 = vld [vmem:[%s1 + $0xaf0] sm:$0xff]
  %v381 = vld [vmem:[%s1 + $0xaf8] sm:$0xff]
  %v382 = vld [vmem:[%s1 + $0xb00] sm:$0xff]
  %v383 = vld [vmem:[%s1 + $0xb08] sm:$0xff]
  %v384 = vld [vmem:[%s1 + $0xb10] sm:$0xff]
  %v385 = vld [vmem:[%s1 + $0xb18] sm:$0xff]
  %v386 = vld [vmem:[%s1 + $0xb20] sm:$0xff]
  %v387 = vld [vmem:[%s1 + $0xb28] sm:$0xff]
  %v388 = vld [vmem:[%s1 + $0xb30] sm:$0xff]
  %v389 = vld [vmem:[%s1 + $0xb38] sm:$0xff]
  %v390 = vld [vmem:[%s1 + $0xb40] sm:$0xff]
  %v391 = vld [vmem:[%s1 + $0xb48] sm:$0xff]
  %v392 = vld [vmem:[%s1 + $0xb50] sm:$0xff]
  %v393 = vld [vmem:[%s1 + $0xb58] sm:$0xff]
  %v394 = vld [vmem:[%s1 + $0xb60] sm:$0xff]
  %v395 = vld [vmem:[%s1 + $0xb68] sm:$0xff]
  %v396 = vld [vmem:[%s1 + $0xb70] sm:$0xff]
  %v397 = vld [vmem:[%s1 + $0xb78] sm:$0xff]
  %v398 = vld [vmem:[%s1 + $0xb80] sm:$0xff]
  %v399 = vld [vmem:[%s1 + $0xb88] sm:$0xff]
  %v400 = vld [vmem:[%s1 + $0xb90] sm:$0xff]
  %v401 = vld [vmem:[%s1 + $0xb98] sm:$0xff]
  %v402 = vld [vmem:[%s1 + $0xba0] sm:$0xff]
  %v403 = vld [vmem:[%s1 + $0xba8] sm:$0xff]
  %v404 = vld [vmem:[%s1 + $0xbb0] sm:$0xff]
  %v405 = vld [vmem:[%s1 + $0xbb8] sm:$0xff]
  %v406 = vld [vmem:[%s1 + $0xbc0] sm:$0xff]
  %v407 = vld [vmem:[%s1 + $0xbc8] sm:$0xff]
  %v408 = vld [vmem:[%s1 + $0xbd0] sm:$0xff]
  %v409 = vld [vmem:[%s1 + $0xbd8] sm:$0xff]
  %v410 = vld [vmem:[%s1 + $0xbe0] sm:$0xff]
  %v411 = vld [vmem:[%s1 + $0xbe8] sm:$0xff]
  %v412 = vld [vmem:[%s1 + $0xbf0] sm:$0xff]
  %v413 = vld [vmem:[%s1 + $0xbf8] sm:$0xff]
  %v414 = vld [vmem:[%s1 + $0xc00] sm:$0xff]
  %v415 = vld [vmem:[%s1 + $0xc08] sm:$0xff]
  %v416 = vld [vmem:[%s1 + $0xc10] sm:$0xff]
  %v417 = vld [vmem:[%s1 + $0xc18] sm:$0xff]
  %v418 = vld [vmem:[%s1 + $0xc20] sm:$0xff]
  %v419 = vld [vmem:[%s1 + $0xc28] sm:$0xff]
  %v420 = vld [vmem:[%s1 + $0xc30] sm:$0xff]
  %v421 = vld [vmem:[%s1 + $0xc38] sm:$0xff]
  %v422 = vld [vmem:[%s1 + $0xc40] sm:$0xff]
  %v423 = vld [vmem:[%s1 + $0xc48] sm:$0xff]
  %v424 = vld [vmem:[%s1 + $0xc50] sm:$0xff]
  %v425 = vld [vmem:[%s1 + $0xc58] sm:$0xff]
  %v426 = vld [vmem:[%s1 + $0xc60] sm:$0xff]
  %v427 = vld [vmem:[%s1 + $0xc68] sm:$0xff]
  %v428 = vld [vmem:[%s1 + $0xc70] sm:$0xff]
  %v429 = vld [vmem:[%s1 + $0xc78] sm:$0xff]
  %v430 = vld [vmem:[%s1 + $0xc80] sm:$0xff]
  %v431 = vld [vmem:[%s1 + $0xc88] sm:$0xff]
  %v432 = vld [vmem:[%s1 + $0xc90] sm:$0xff]
  %v433 = vld [vmem:[%s1 + $0xc98] sm:$0xff]
  %v434 = vld [vmem:[%s1 + $0xca0] sm:$0xff]
  %v435 = vld [vmem:[%s1 + $0xca8] sm:$0xff]
  %v436 = vld [vmem:[%s1 + $0xcb0] sm:$0xff]
  %v437 = vld [vmem:[%s1 + $0xcb8] sm:$0xff]
  %v438 = vld [vmem:[%s1 + $0xcc0] sm:$0xff]
  %v439 = vld [vmem:[%s1 + $0xcc8] sm:$0xff]
  %v440 = vld [vmem:[%s1 + $0xcd0] sm:$0xff]
  %v441 = vld [vmem:[%s1 + $0xcd8] sm:$0xff]
  %v442 = vld [vmem:[%s1 + $0xce0] sm:$0xff]
  %v443 = vld [vmem:[%s1 + $0xce8] sm:$0xff]
  %v444 = vld [vmem:[%s1 + $0xcf0] sm:$0xff]
  %v445 = vld [vmem:[%s1 + $0xcf8] sm:$0xff]
  %v446 = vld [vmem:[%s1 + $0xd00] sm:$0xff]
  %v447 = vld [vmem:[%s1 + $0xd08] sm:$0xff]
  %v448 = vld [vmem:[%s1 + $0xd10] sm:$0xff]
  %v449 = vld [vmem:[%s1 + $0xd18] sm:$0xff]
  %v450 = vld [vmem:[%s1 + $0xd20] sm:$0xff]
  %v451 = vld [vmem:[%s1 + $0xd28] sm:$0xff]
  %v452 = vld [vmem:[%s1 + $0xd30] sm:$0xff]
  %v453 = vld [vmem:[%s1 + $0xd38] sm:$0xff]
  %v454 = vld [vmem:[%s1 + $0xd40] sm:$0xff]
  %v455 = vld [vmem:[%s1 + $0xd48] sm:$0xff]
  %v456 = vld [vmem:[%s1 + $0xd50] sm:$0xff]
  %v457 = vld [vmem:[%s1 + $0xd58] sm:$0xff]
  %v458 = vld [vmem:[%s1 + $0xd60] sm:$0xff]
  %v459 = vld [vmem:[%s1 + $0xd68] sm:$0xff]
  %v460 = vld [vmem:[%s1 + $0xd70] sm:$0xff]
  %v461 = vld [vmem:[%s1 + $0xd78] sm:$0xff]
  %v462 = vld [vmem:[%s1 + $0xd80] sm:$0xff]
  %v463 = vld [vmem:[%s1 + $0xd88] sm:$0xff]
  %v464 = vld [vmem:[%s1 + $0xd90] sm:$0xff]
  %v465 = vld [vmem:[%s1 + $0xd98] sm:$0xff]
  %v466 = vld [vmem:[%s1 + $0xda0] sm:$0xff]
  %v467 = vld [vmem:[%s1 + $0xda8] sm:$0xff]
  %v468 = vld [vmem:[%s1 + $0xdb0] sm:$0xff]
  %v469 = vld [vmem:[%s1 + $0xdb8] sm:$0xff]
  %v470 = vld [vmem:[%s1 + $0xdc0] sm:$0xff]
  %v471 = vld [vmem:[%s1 + $0xdc8] sm:$0xff]
  %v472 = vld [vmem:[%s1 + $0xdd0] sm:$0xff]
  %v473 = vld [vmem:[%s1 + $0xdd8] sm:$0xff]
  %v474 = vld [vmem:[%s1 + $0xde0] sm:$0xff]
  %v475 = vld [vmem:[%s1 + $0xde8] sm:$0xff]
  %v476 = vld [vmem:[%s1 + $0xdf0] sm:$0xff]
  %v477 = vld [vmem:[%s1 + $0xdf8] sm:$0xff]
  %v478 = vld [vmem:[%s1 + $0xe00] sm:$0xff]
  %v479 = vld [vmem:[%s1 + $0xe08] sm:$0xff]
  %v480 = vld [vmem:[%s1 + $0xe10] sm:$0xff]
  %v481 = vld [vmem:[%s1 + $0xe18] sm:$0xff]
  %v482 = vld [vmem:[%s1 + $0xe20] sm:$0xff]
  %v483 = vld [vmem:[%s1 + $0xe28] sm:$0xff]
  %v484 = vld [vmem:[%s1 + $0xe30] sm:$0xff]
  %v485 = vld [vmem:[%s1 + $0xe38] sm:$0xff]
  %v486 = vld [vmem:[%s1 + $0xe40] sm:$0xff]
  %v487 = vld [vmem:[%s1 + $0xe48] sm:$0xff]
  %v488 = vld [vmem:[%s1 + $0xe50] sm:$0xff]
  %v489 = vld [vmem:[%s1 + $0xe58] sm:$0xff]
  %v490 = vld [vmem:[%s1 + $0xe60] sm:$0xff]
  %v491 = vld [vmem:[%s1 + $0xe68] sm:$0xff]
  %v492 = vld [vmem:[%s1 + $0xe70] sm:$0xff]
  %v493 = vld [vmem:[%s1 + $0xe78] sm:$0xff]
  %v494 = vld [vmem:[%s1 + $0xe80] sm:$0xff]
  %v495 = vld [vmem:[%s1 + $0xe88] sm:$0xff]
  %v496 = vld [vmem:[%s1 + $0xe90] sm:$0xff]
  %v497 = vld [vmem:[%s1 + $0xe98] sm:$0xff]
  %v498 = vld [vmem:[%s1 + $0xea0] sm:$0xff]
  %v499 = vld [vmem:[%s1 + $0xea8] sm:$0xff]
  %v500 = vld [vmem:[%s1 + $0xeb0] sm:$0xff]
  %v501 = vld [vmem:[%s1 + $0xeb8] sm:$0xff]
  %v502 = vld [vmem:[%s1 + $0xec0] sm:$0xff]
  %v503 = vld [vmem:[%s1 + $0xec8] sm:$0xff]
  %v504 = vld [vmem:[%s1 + $0xed0] sm:$0xff]
  %v505 = vld [vmem:[%s1 + $0xed8] sm:$0xff]
  %v506 = vld [vmem:[%s1 + $0xee0] sm:$0xff]
  %v507 = vld [vmem:[%s1 + $0xee8] sm:$0xff]
  %v508 = vld [vmem:[%s1 + $0xef0] sm:$0xff]
  %v509 = vld [vmem:[%s1 + $0xef8] sm:$0xff]
  %v510 = vld [vmem:[%s1 + $0xf00] sm:$0xff]
  %v511 = vld [vmem:[%s1 + $0xf08] sm:$0xff]
  %v512 = vld [vmem:[%s1 + $0xf10] sm:$0xff]
  %v513 = vld [vmem:[%s1 + $0xf18] sm:$0xff]
  %v514 = vld [vmem:[%s1 + $0xf20] sm:$0xff]
  %v515 = vld [vmem:[%s1 + $0xf28] sm:$0xff]
  %v516 = vld [vmem:[%s1 + $0xf30] sm:$0xff]
  %v517 = vld [vmem:[%s1 + $0xf38] sm:$0xff]
  %v518 = vld [vmem:[%s1 + $0xf40] sm:$0xff]
  %v519 = vld [vmem:[%s1 + $0xf48] sm:$0xff]
  %v520 = vld [vmem:[%s1 + $0xf50] sm:$0xff]
  %v521 = vld [vmem:[%s1 + $0xf58] sm:$0xff]
  %v522 = vld [vmem:[%s1 + $0xf60] sm:$0xff]
  %v523 = vld [vmem:[%s1 + $0xf68] sm:$0xff]
  %v524 = vld [vmem:[%s1 + $0xf70] sm:$0xff]
  %v525 = vld [vmem:[%s1 + $0xf78] sm:$0xff]
  %v526 = vld [vmem:[%s1 + $0xf80] sm:$0xff]
  %v527 = vld [vmem:[%s1 + $0xf88] sm:$0xff]
  %v528 = vld [vmem:[%s1 + $0xf90] sm:$0xff]
  %v529 = vld [vmem:[%s1 + $0xf98] sm:$0xff]
  %v530 = vld [vmem:[%s1 + $0xfa0] sm:$0xff]
  %v531 = vld [vmem:[%s1 + $0xfa8] sm:$0xff]
  %v532 = vld [vmem:[%s1 + $0xfb0] sm:$0xff]
  %v533 = vld [vmem:[%s1 + $0xfb8] sm:$0xff]
  %v534 = vld [vmem:[%s1 + $0xfc0] sm:$0xff]
  %v535 = vld [vmem:[%s1 + $0xfc8] sm:$0xff]
  %v536 = vld [vmem:[%s1 + $0xfd0] sm:$0xff]
  %v537 = vld [vmem:[%s1 + $0xfd8] sm:$0xff]
  %v538 = vld [vmem:[%s1 + $0xfe0] sm:$0xff]
  %v539 = vld [vmem:[%s1 + $0xfe8] sm:$0xff]
  %v540 = vld [vmem:[%s1 + $0xff0] sm:$0xff]
  %v541 = vld [vmem:[%s1 + $0xff8] sm:$0xff]
  %v542 = vld [vmem:[%s2] sm:$0x3]
  %v544 = vlaneseq
  %v545 = vshrl.u32 %v544, 7
  %v546 = vsub.s32 0, %v545
  %v547 = vrot.slane %v542, %v546
  %v548 = vlaneseq
  %v549 = vshrl.u32 %v548, 7
  %v550 = vsub.s32 1, %v549
  %v551 = vrot.slane %v542, %v550
  %v570 = vunpack.c.l.b16 %v14
  %v571 = vunpack.c.h.b16 %v14
  %v572 = vunpack.c.l.b16 %v15
  %v573 = vunpack.c.h.b16 %v15
  %v574 = vunpack.c.l.b16 %v16
  %v575 = vunpack.c.h.b16 %v16
  %v576 = vunpack.c.l.b16 %v17
  %v577 = vunpack.c.h.b16 %v17
  %v578 = vunpack.c.l.b16 %v18
  %v579 = vunpack.c.h.b16 %v18
  %v580 = vunpack.c.l.b16 %v19
  %v581 = vunpack.c.h.b16 %v19
  %v582 = vunpack.c.l.b16 %v20
  %v583 = vunpack.c.h.b16 %v20
  %v584 = vunpack.c.l.b16 %v21
  %v585 = vunpack.c.h.b16 %v21
  %v586 = vunpack.c.l.b16 %v22
  %v587 = vunpack.c.h.b16 %v22
  %v588 = vunpack.c.l.b16 %v23
  %v589 = vunpack.c.h.b16 %v23
  %v590 = vunpack.c.l.b16 %v24
  %v591 = vunpack.c.h.b16 %v24
  %v592 = vunpack.c.l.b16 %v25
  %v593 = vunpack.c.h.b16 %v25
  %v594 = vunpack.c.l.b16 %v26
  %v595 = vunpack.c.h.b16 %v26
  %v596 = vunpack.c.l.b16 %v27
  %v597 = vunpack.c.h.b16 %v27
  %v598 = vunpack.c.l.b16 %v28
  %v599 = vunpack.c.h.b16 %v28
  %v600 = vunpack.c.l.b16 %v29
  %v601 = vunpack.c.h.b16 %v29
  %v602 = vpack.c.b16 %v570, %v570
  %v603 = vpack.c.b16 %v571, %v571
  %v604 = vpack.c.b16 %v572, %v572
  %v605 = vpack.c.b16 %v573, %v573
  %v606 = vpack.c.b16 %v574, %v574
  %v607 = vpack.c.b16 %v575, %v575
  %v608 = vpack.c.b16 %v576, %v576
  %v609 = vpack.c.b16 %v577, %v577
  %v610 = vpack.c.b16 %v578, %v578
  %v611 = vpack.c.b16 %v579, %v579
  %v612 = vpack.c.b16 %v580, %v580
  %v613 = vpack.c.b16 %v581, %v581
  %v614 = vpack.c.b16 %v582, %v582
  %v615 = vpack.c.b16 %v583, %v583
  %v616 = vpack.c.b16 %v584, %v584
  %v617 = vpack.c.b16 %v585, %v585
  %v618 = vpack.c.b16 %v586, %v586
  %v619 = vpack.c.b16 %v587, %v587
  %v620 = vpack.c.b16 %v588, %v588
  %v621 = vpack.c.b16 %v589, %v589
  %v622 = vpack.c.b16 %v590, %v590
  %v623 = vpack.c.b16 %v591, %v591
  %v624 = vpack.c.b16 %v592, %v592
  %v625 = vpack.c.b16 %v593, %v593
  %v626 = vpack.c.b16 %v594, %v594
  %v627 = vpack.c.b16 %v595, %v595
  %v628 = vpack.c.b16 %v596, %v596
  %v629 = vpack.c.b16 %v597, %v597
  %v630 = vpack.c.b16 %v598, %v598
  %v631 = vpack.c.b16 %v599, %v599
  %v632 = vpack.c.b16 %v600, %v600
  %v633 = vpack.c.b16 %v601, %v601
  %v1178 = vunpack.c.l.b16 %v30
  %v1179 = vunpack.c.h.b16 %v30
  %v1180 = vunpack.c.l.b16 %v31
  %v1181 = vunpack.c.h.b16 %v31
  %v1182 = vunpack.c.l.b16 %v32
  %v1183 = vunpack.c.h.b16 %v32
  %v1184 = vunpack.c.l.b16 %v33
  %v1185 = vunpack.c.h.b16 %v33
  %v1186 = vunpack.c.l.b16 %v34
  %v1187 = vunpack.c.h.b16 %v34
  %v1188 = vunpack.c.l.b16 %v35
  %v1189 = vunpack.c.h.b16 %v35
  %v1190 = vunpack.c.l.b16 %v36
  %v1191 = vunpack.c.h.b16 %v36
  %v1192 = vunpack.c.l.b16 %v37
  %v1193 = vunpack.c.h.b16 %v37
  %v1194 = vunpack.c.l.b16 %v38
  %v1195 = vunpack.c.h.b16 %v38
  %v1196 = vunpack.c.l.b16 %v39
  %v1197 = vunpack.c.h.b16 %v39
  %v1198 = vunpack.c.l.b16 %v40
  %v1199 = vunpack.c.h.b16 %v40
  %v1200 = vunpack.c.l.b16 %v41
  %v1201 = vunpack.c.h.b16 %v41
  %v1202 = vunpack.c.l.b16 %v42
  %v1203 = vunpack.c.h.b16 %v42
  %v1204 = vunpack.c.l.b16 %v43
  %v1205 = vunpack.c.h.b16 %v43
  %v1206 = vunpack.c.l.b16 %v44
  %v1207 = vunpack.c.h.b16 %v44
  %v1208 = vunpack.c.l.b16 %v45
  %v1209 = vunpack.c.h.b16 %v45
  %v1210 = vunpack.c.l.b16 %v46
  %v1211 = vunpack.c.h.b16 %v46
  %v1212 = vunpack.c.l.b16 %v47
  %v1213 = vunpack.c.h.b16 %v47
  %v1214 = vunpack.c.l.b16 %v48
  %v1215 = vunpack.c.h.b16 %v48
  %v1216 = vunpack.c.l.b16 %v49
  %v1217 = vunpack.c.h.b16 %v49
  %v1218 = vunpack.c.l.b16 %v50
  %v1219 = vunpack.c.h.b16 %v50
  %v1220 = vunpack.c.l.b16 %v51
  %v1221 = vunpack.c.h.b16 %v51
  %v1222 = vunpack.c.l.b16 %v52
  %v1223 = vunpack.c.h.b16 %v52
  %v1224 = vunpack.c.l.b16 %v53
  %v1225 = vunpack.c.h.b16 %v53
  %v1226 = vunpack.c.l.b16 %v54
  %v1227 = vunpack.c.h.b16 %v54
  %v1228 = vunpack.c.l.b16 %v55
  %v1229 = vunpack.c.h.b16 %v55
  %v1230 = vunpack.c.l.b16 %v56
  %v1231 = vunpack.c.h.b16 %v56
  %v1232 = vunpack.c.l.b16 %v57
  %v1233 = vunpack.c.h.b16 %v57
  %v1234 = vunpack.c.l.b16 %v58
  %v1235 = vunpack.c.h.b16 %v58
  %v1236 = vunpack.c.l.b16 %v59
  %v1237 = vunpack.c.h.b16 %v59
  %v1238 = vunpack.c.l.b16 %v60
  %v1239 = vunpack.c.h.b16 %v60
  %v1240 = vunpack.c.l.b16 %v61
  %v1241 = vunpack.c.h.b16 %v61
  %v1242 = vunpack.c.l.b16 %v62
  %v1243 = vunpack.c.h.b16 %v62
  %v1244 = vunpack.c.l.b16 %v63
  %v1245 = vunpack.c.h.b16 %v63
  %v1246 = vunpack.c.l.b16 %v64
  %v1247 = vunpack.c.h.b16 %v64
  %v1248 = vunpack.c.l.b16 %v65
  %v1249 = vunpack.c.h.b16 %v65
  %v1250 = vunpack.c.l.b16 %v66
  %v1251 = vunpack.c.h.b16 %v66
  %v1252 = vunpack.c.l.b16 %v67
  %v1253 = vunpack.c.h.b16 %v67
  %v1254 = vunpack.c.l.b16 %v68
  %v1255 = vunpack.c.h.b16 %v68
  %v1256 = vunpack.c.l.b16 %v69
  %v1257 = vunpack.c.h.b16 %v69
  %v1258 = vunpack.c.l.b16 %v70
  %v1259 = vunpack.c.h.b16 %v70
  %v1260 = vunpack.c.l.b16 %v71
  %v1261 = vunpack.c.h.b16 %v71
  %v1262 = vunpack.c.l.b16 %v72
  %v1263 = vunpack.c.h.b16 %v72
  %v1264 = vunpack.c.l.b16 %v73
  %v1265 = vunpack.c.h.b16 %v73
  %v1266 = vunpack.c.l.b16 %v74
  %v1267 = vunpack.c.h.b16 %v74
  %v1268 = vunpack.c.l.b16 %v75
  %v1269 = vunpack.c.h.b16 %v75
  %v1270 = vunpack.c.l.b16 %v76
  %v1271 = vunpack.c.h.b16 %v76
  %v1272 = vunpack.c.l.b16 %v77
  %v1273 = vunpack.c.h.b16 %v77
  %v1274 = vunpack.c.l.b16 %v78
  %v1275 = vunpack.c.h.b16 %v78
  %v1276 = vunpack.c.l.b16 %v79
  %v1277 = vunpack.c.h.b16 %v79
  %v1278 = vunpack.c.l.b16 %v80
  %v1279 = vunpack.c.h.b16 %v80
  %v1280 = vunpack.c.l.b16 %v81
  %v1281 = vunpack.c.h.b16 %v81
  %v1282 = vunpack.c.l.b16 %v82
  %v1283 = vunpack.c.h.b16 %v82
  %v1284 = vunpack.c.l.b16 %v83
  %v1285 = vunpack.c.h.b16 %v83
  %v1286 = vunpack.c.l.b16 %v84
  %v1287 = vunpack.c.h.b16 %v84
  %v1288 = vunpack.c.l.b16 %v85
  %v1289 = vunpack.c.h.b16 %v85
  %v1290 = vunpack.c.l.b16 %v86
  %v1291 = vunpack.c.h.b16 %v86
  %v1292 = vunpack.c.l.b16 %v87
  %v1293 = vunpack.c.h.b16 %v87
  %v1294 = vunpack.c.l.b16 %v88
  %v1295 = vunpack.c.h.b16 %v88
  %v1296 = vunpack.c.l.b16 %v89
  %v1297 = vunpack.c.h.b16 %v89
  %v1298 = vunpack.c.l.b16 %v90
  %v1299 = vunpack.c.h.b16 %v90
  %v1300 = vunpack.c.l.b16 %v91
  %v1301 = vunpack.c.h.b16 %v91
  %v1302 = vunpack.c.l.b16 %v92
  %v1303 = vunpack.c.h.b16 %v92
  %v1304 = vunpack.c.l.b16 %v93
  %v1305 = vunpack.c.h.b16 %v93
  %v1306 = vunpack.c.l.b16 %v94
  %v1307 = vunpack.c.h.b16 %v94
  %v1308 = vunpack.c.l.b16 %v95
  %v1309 = vunpack.c.h.b16 %v95
  %v1310 = vunpack.c.l.b16 %v96
  %v1311 = vunpack.c.h.b16 %v96
  %v1312 = vunpack.c.l.b16 %v97
  %v1313 = vunpack.c.h.b16 %v97
  %v1314 = vunpack.c.l.b16 %v98
  %v1315 = vunpack.c.h.b16 %v98
  %v1316 = vunpack.c.l.b16 %v99
  %v1317 = vunpack.c.h.b16 %v99
  %v1318 = vunpack.c.l.b16 %v100
  %v1319 = vunpack.c.h.b16 %v100
  %v1320 = vunpack.c.l.b16 %v101
  %v1321 = vunpack.c.h.b16 %v101
  %v1322 = vunpack.c.l.b16 %v102
  %v1323 = vunpack.c.h.b16 %v102
  %v1324 = vunpack.c.l.b16 %v103
  %v1325 = vunpack.c.h.b16 %v103
  %v1326 = vunpack.c.l.b16 %v104
  %v1327 = vunpack.c.h.b16 %v104
  %v1328 = vunpack.c.l.b16 %v105
  %v1329 = vunpack.c.h.b16 %v105
  %v1330 = vunpack.c.l.b16 %v106
  %v1331 = vunpack.c.h.b16 %v106
  %v1332 = vunpack.c.l.b16 %v107
  %v1333 = vunpack.c.h.b16 %v107
  %v1334 = vunpack.c.l.b16 %v108
  %v1335 = vunpack.c.h.b16 %v108
  %v1336 = vunpack.c.l.b16 %v109
  %v1337 = vunpack.c.h.b16 %v109
  %v1338 = vunpack.c.l.b16 %v110
  %v1339 = vunpack.c.h.b16 %v110
  %v1340 = vunpack.c.l.b16 %v111
  %v1341 = vunpack.c.h.b16 %v111
  %v1342 = vunpack.c.l.b16 %v112
  %v1343 = vunpack.c.h.b16 %v112
  %v1344 = vunpack.c.l.b16 %v113
  %v1345 = vunpack.c.h.b16 %v113
  %v1346 = vunpack.c.l.b16 %v114
  %v1347 = vunpack.c.h.b16 %v114
  %v1348 = vunpack.c.l.b16 %v115
  %v1349 = vunpack.c.h.b16 %v115
  %v1350 = vunpack.c.l.b16 %v116
  %v1351 = vunpack.c.h.b16 %v116
  %v1352 = vunpack.c.l.b16 %v117
  %v1353 = vunpack.c.h.b16 %v117
  %v1354 = vunpack.c.l.b16 %v118
  %v1355 = vunpack.c.h.b16 %v118
  %v1356 = vunpack.c.l.b16 %v119
  %v1357 = vunpack.c.h.b16 %v119
  %v1358 = vunpack.c.l.b16 %v120
  %v1359 = vunpack.c.h.b16 %v120
  %v1360 = vunpack.c.l.b16 %v121
  %v1361 = vunpack.c.h.b16 %v121
  %v1362 = vunpack.c.l.b16 %v122
  %v1363 = vunpack.c.h.b16 %v122
  %v1364 = vunpack.c.l.b16 %v123
  %v1365 = vunpack.c.h.b16 %v123
  %v1366 = vunpack.c.l.b16 %v124
  %v1367 = vunpack.c.h.b16 %v124
  %v1368 = vunpack.c.l.b16 %v125
  %v1369 = vunpack.c.h.b16 %v125
  %v1370 = vunpack.c.l.b16 %v126
  %v1371 = vunpack.c.h.b16 %v126
  %v1372 = vunpack.c.l.b16 %v127
  %v1373 = vunpack.c.h.b16 %v127
  %v1374 = vunpack.c.l.b16 %v128
  %v1375 = vunpack.c.h.b16 %v128
  %v1376 = vunpack.c.l.b16 %v129
  %v1377 = vunpack.c.h.b16 %v129
  %v1378 = vunpack.c.l.b16 %v130
  %v1379 = vunpack.c.h.b16 %v130
  %v1380 = vunpack.c.l.b16 %v131
  %v1381 = vunpack.c.h.b16 %v131
  %v1382 = vunpack.c.l.b16 %v132
  %v1383 = vunpack.c.h.b16 %v132
  %v1384 = vunpack.c.l.b16 %v133
  %v1385 = vunpack.c.h.b16 %v133
  %v1386 = vunpack.c.l.b16 %v134
  %v1387 = vunpack.c.h.b16 %v134
  %v1388 = vunpack.c.l.b16 %v135
  %v1389 = vunpack.c.h.b16 %v135
  %v1390 = vunpack.c.l.b16 %v136
  %v1391 = vunpack.c.h.b16 %v136
  %v1392 = vunpack.c.l.b16 %v137
  %v1393 = vunpack.c.h.b16 %v137
  %v1394 = vunpack.c.l.b16 %v138
  %v1395 = vunpack.c.h.b16 %v138
  %v1396 = vunpack.c.l.b16 %v139
  %v1397 = vunpack.c.h.b16 %v139
  %v1398 = vunpack.c.l.b16 %v140
  %v1399 = vunpack.c.h.b16 %v140
  %v1400 = vunpack.c.l.b16 %v141
  %v1401 = vunpack.c.h.b16 %v141
  %v1402 = vunpack.c.l.b16 %v142
  %v1403 = vunpack.c.h.b16 %v142
  %v1404 = vunpack.c.l.b16 %v143
  %v1405 = vunpack.c.h.b16 %v143
  %v1406 = vunpack.c.l.b16 %v144
  %v1407 = vunpack.c.h.b16 %v144
  %v1408 = vunpack.c.l.b16 %v145
  %v1409 = vunpack.c.h.b16 %v145
  %v1410 = vunpack.c.l.b16 %v146
  %v1411 = vunpack.c.h.b16 %v146
  %v1412 = vunpack.c.l.b16 %v147
  %v1413 = vunpack.c.h.b16 %v147
  %v1414 = vunpack.c.l.b16 %v148
  %v1415 = vunpack.c.h.b16 %v148
  %v1416 = vunpack.c.l.b16 %v149
  %v1417 = vunpack.c.h.b16 %v149
  %v1418 = vunpack.c.l.b16 %v150
  %v1419 = vunpack.c.h.b16 %v150
  %v1420 = vunpack.c.l.b16 %v151
  %v1421 = vunpack.c.h.b16 %v151
  %v1422 = vunpack.c.l.b16 %v152
  %v1423 = vunpack.c.h.b16 %v152
  %v1424 = vunpack.c.l.b16 %v153
  %v1425 = vunpack.c.h.b16 %v153
  %v1426 = vunpack.c.l.b16 %v154
  %v1427 = vunpack.c.h.b16 %v154
  %v1428 = vunpack.c.l.b16 %v155
  %v1429 = vunpack.c.h.b16 %v155
  %v1430 = vunpack.c.l.b16 %v156
  %v1431 = vunpack.c.h.b16 %v156
  %v1432 = vunpack.c.l.b16 %v157
  %v1433 = vunpack.c.h.b16 %v157
  %v1434 = vunpack.c.l.b16 %v158
  %v1435 = vunpack.c.h.b16 %v158
  %v1436 = vunpack.c.l.b16 %v159
  %v1437 = vunpack.c.h.b16 %v159
  %v1438 = vunpack.c.l.b16 %v160
  %v1439 = vunpack.c.h.b16 %v160
  %v1440 = vunpack.c.l.b16 %v161
  %v1441 = vunpack.c.h.b16 %v161
  %v1442 = vunpack.c.l.b16 %v162
  %v1443 = vunpack.c.h.b16 %v162
  %v1444 = vunpack.c.l.b16 %v163
  %v1445 = vunpack.c.h.b16 %v163
  %v1446 = vunpack.c.l.b16 %v164
  %v1447 = vunpack.c.h.b16 %v164
  %v1448 = vunpack.c.l.b16 %v165
  %v1449 = vunpack.c.h.b16 %v165
  %v1450 = vunpack.c.l.b16 %v166
  %v1451 = vunpack.c.h.b16 %v166
  %v1452 = vunpack.c.l.b16 %v167
  %v1453 = vunpack.c.h.b16 %v167
  %v1454 = vunpack.c.l.b16 %v168
  %v1455 = vunpack.c.h.b16 %v168
  %v1456 = vunpack.c.l.b16 %v169
  %v1457 = vunpack.c.h.b16 %v169
  %v1458 = vunpack.c.l.b16 %v170
  %v1459 = vunpack.c.h.b16 %v170
  %v1460 = vunpack.c.l.b16 %v171
  %v1461 = vunpack.c.h.b16 %v171
  %v1462 = vunpack.c.l.b16 %v172
  %v1463 = vunpack.c.h.b16 %v172
  %v1464 = vunpack.c.l.b16 %v173
  %v1465 = vunpack.c.h.b16 %v173
  %v1466 = vunpack.c.l.b16 %v174
  %v1467 = vunpack.c.h.b16 %v174
  %v1468 = vunpack.c.l.b16 %v175
  %v1469 = vunpack.c.h.b16 %v175
  %v1470 = vunpack.c.l.b16 %v176
  %v1471 = vunpack.c.h.b16 %v176
  %v1472 = vunpack.c.l.b16 %v177
  %v1473 = vunpack.c.h.b16 %v177
  %v1474 = vunpack.c.l.b16 %v178
  %v1475 = vunpack.c.h.b16 %v178
  %v1476 = vunpack.c.l.b16 %v179
  %v1477 = vunpack.c.h.b16 %v179
  %v1478 = vunpack.c.l.b16 %v180
  %v1479 = vunpack.c.h.b16 %v180
  %v1480 = vunpack.c.l.b16 %v181
  %v1481 = vunpack.c.h.b16 %v181
  %v1482 = vunpack.c.l.b16 %v182
  %v1483 = vunpack.c.h.b16 %v182
  %v1484 = vunpack.c.l.b16 %v183
  %v1485 = vunpack.c.h.b16 %v183
  %v1486 = vunpack.c.l.b16 %v184
  %v1487 = vunpack.c.h.b16 %v184
  %v1488 = vunpack.c.l.b16 %v185
  %v1489 = vunpack.c.h.b16 %v185
  %v1490 = vunpack.c.l.b16 %v186
  %v1491 = vunpack.c.h.b16 %v186
  %v1492 = vunpack.c.l.b16 %v187
  %v1493 = vunpack.c.h.b16 %v187
  %v1494 = vunpack.c.l.b16 %v188
  %v1495 = vunpack.c.h.b16 %v188
  %v1496 = vunpack.c.l.b16 %v189
  %v1497 = vunpack.c.h.b16 %v189
  %v1498 = vunpack.c.l.b16 %v190
  %v1499 = vunpack.c.h.b16 %v190
  %v1500 = vunpack.c.l.b16 %v191
  %v1501 = vunpack.c.h.b16 %v191
  %v1502 = vunpack.c.l.b16 %v192
  %v1503 = vunpack.c.h.b16 %v192
  %v1504 = vunpack.c.l.b16 %v193
  %v1505 = vunpack.c.h.b16 %v193
  %v1506 = vunpack.c.l.b16 %v194
  %v1507 = vunpack.c.h.b16 %v194
  %v1508 = vunpack.c.l.b16 %v195
  %v1509 = vunpack.c.h.b16 %v195
  %v1510 = vunpack.c.l.b16 %v196
  %v1511 = vunpack.c.h.b16 %v196
  %v1512 = vunpack.c.l.b16 %v197
  %v1513 = vunpack.c.h.b16 %v197
  %v1514 = vunpack.c.l.b16 %v198
  %v1515 = vunpack.c.h.b16 %v198
  %v1516 = vunpack.c.l.b16 %v199
  %v1517 = vunpack.c.h.b16 %v199
  %v1518 = vunpack.c.l.b16 %v200
  %v1519 = vunpack.c.h.b16 %v200
  %v1520 = vunpack.c.l.b16 %v201
  %v1521 = vunpack.c.h.b16 %v201
  %v1522 = vunpack.c.l.b16 %v202
  %v1523 = vunpack.c.h.b16 %v202
  %v1524 = vunpack.c.l.b16 %v203
  %v1525 = vunpack.c.h.b16 %v203
  %v1526 = vunpack.c.l.b16 %v204
  %v1527 = vunpack.c.h.b16 %v204
  %v1528 = vunpack.c.l.b16 %v205
  %v1529 = vunpack.c.h.b16 %v205
  %v1530 = vunpack.c.l.b16 %v206
  %v1531 = vunpack.c.h.b16 %v206
  %v1532 = vunpack.c.l.b16 %v207
  %v1533 = vunpack.c.h.b16 %v207
  %v1534 = vunpack.c.l.b16 %v208
  %v1535 = vunpack.c.h.b16 %v208
  %v1536 = vunpack.c.l.b16 %v209
  %v1537 = vunpack.c.h.b16 %v209
  %v1538 = vunpack.c.l.b16 %v210
  %v1539 = vunpack.c.h.b16 %v210
  %v1540 = vunpack.c.l.b16 %v211
  %v1541 = vunpack.c.h.b16 %v211
  %v1542 = vunpack.c.l.b16 %v212
  %v1543 = vunpack.c.h.b16 %v212
  %v1544 = vunpack.c.l.b16 %v213
  %v1545 = vunpack.c.h.b16 %v213
  %v1546 = vunpack.c.l.b16 %v214
  %v1547 = vunpack.c.h.b16 %v214
  %v1548 = vunpack.c.l.b16 %v215
  %v1549 = vunpack.c.h.b16 %v215
  %v1550 = vunpack.c.l.b16 %v216
  %v1551 = vunpack.c.h.b16 %v216
  %v1552 = vunpack.c.l.b16 %v217
  %v1553 = vunpack.c.h.b16 %v217
  %v1554 = vunpack.c.l.b16 %v218
  %v1555 = vunpack.c.h.b16 %v218
  %v1556 = vunpack.c.l.b16 %v219
  %v1557 = vunpack.c.h.b16 %v219
  %v1558 = vunpack.c.l.b16 %v220
  %v1559 = vunpack.c.h.b16 %v220
  %v1560 = vunpack.c.l.b16 %v221
  %v1561 = vunpack.c.h.b16 %v221
  %v1562 = vunpack.c.l.b16 %v222
  %v1563 = vunpack.c.h.b16 %v222
  %v1564 = vunpack.c.l.b16 %v223
  %v1565 = vunpack.c.h.b16 %v223
  %v1566 = vunpack.c.l.b16 %v224
  %v1567 = vunpack.c.h.b16 %v224
  %v1568 = vunpack.c.l.b16 %v225
  %v1569 = vunpack.c.h.b16 %v225
  %v1570 = vunpack.c.l.b16 %v226
  %v1571 = vunpack.c.h.b16 %v226
  %v1572 = vunpack.c.l.b16 %v227
  %v1573 = vunpack.c.h.b16 %v227
  %v1574 = vunpack.c.l.b16 %v228
  %v1575 = vunpack.c.h.b16 %v228
  %v1576 = vunpack.c.l.b16 %v229
  %v1577 = vunpack.c.h.b16 %v229
  %v1578 = vunpack.c.l.b16 %v230
  %v1579 = vunpack.c.h.b16 %v230
  %v1580 = vunpack.c.l.b16 %v231
  %v1581 = vunpack.c.h.b16 %v231
  %v1582 = vunpack.c.l.b16 %v232
  %v1583 = vunpack.c.h.b16 %v232
  %v1584 = vunpack.c.l.b16 %v233
  %v1585 = vunpack.c.h.b16 %v233
  %v1586 = vunpack.c.l.b16 %v234
  %v1587 = vunpack.c.h.b16 %v234
  %v1588 = vunpack.c.l.b16 %v235
  %v1589 = vunpack.c.h.b16 %v235
  %v1590 = vunpack.c.l.b16 %v236
  %v1591 = vunpack.c.h.b16 %v236
  %v1592 = vunpack.c.l.b16 %v237
  %v1593 = vunpack.c.h.b16 %v237
  %v1594 = vunpack.c.l.b16 %v238
  %v1595 = vunpack.c.h.b16 %v238
  %v1596 = vunpack.c.l.b16 %v239
  %v1597 = vunpack.c.h.b16 %v239
  %v1598 = vunpack.c.l.b16 %v240
  %v1599 = vunpack.c.h.b16 %v240
  %v1600 = vunpack.c.l.b16 %v241
  %v1601 = vunpack.c.h.b16 %v241
  %v1602 = vunpack.c.l.b16 %v242
  %v1603 = vunpack.c.h.b16 %v242
  %v1604 = vunpack.c.l.b16 %v243
  %v1605 = vunpack.c.h.b16 %v243
  %v1606 = vunpack.c.l.b16 %v244
  %v1607 = vunpack.c.h.b16 %v244
  %v1608 = vunpack.c.l.b16 %v245
  %v1609 = vunpack.c.h.b16 %v245
  %v1610 = vunpack.c.l.b16 %v246
  %v1611 = vunpack.c.h.b16 %v246
  %v1612 = vunpack.c.l.b16 %v247
  %v1613 = vunpack.c.h.b16 %v247
  %v1614 = vunpack.c.l.b16 %v248
  %v1615 = vunpack.c.h.b16 %v248
  %v1616 = vunpack.c.l.b16 %v249
  %v1617 = vunpack.c.h.b16 %v249
  %v1618 = vunpack.c.l.b16 %v250
  %v1619 = vunpack.c.h.b16 %v250
  %v1620 = vunpack.c.l.b16 %v251
  %v1621 = vunpack.c.h.b16 %v251
  %v1622 = vunpack.c.l.b16 %v252
  %v1623 = vunpack.c.h.b16 %v252
  %v1624 = vunpack.c.l.b16 %v253
  %v1625 = vunpack.c.h.b16 %v253
  %v1626 = vunpack.c.l.b16 %v254
  %v1627 = vunpack.c.h.b16 %v254
  %v1628 = vunpack.c.l.b16 %v255
  %v1629 = vunpack.c.h.b16 %v255
  %v1630 = vunpack.c.l.b16 %v256
  %v1631 = vunpack.c.h.b16 %v256
  %v1632 = vunpack.c.l.b16 %v257
  %v1633 = vunpack.c.h.b16 %v257
  %v1634 = vunpack.c.l.b16 %v258
  %v1635 = vunpack.c.h.b16 %v258
  %v1636 = vunpack.c.l.b16 %v259
  %v1637 = vunpack.c.h.b16 %v259
  %v1638 = vunpack.c.l.b16 %v260
  %v1639 = vunpack.c.h.b16 %v260
  %v1640 = vunpack.c.l.b16 %v261
  %v1641 = vunpack.c.h.b16 %v261
  %v1642 = vunpack.c.l.b16 %v262
  %v1643 = vunpack.c.h.b16 %v262
  %v1644 = vunpack.c.l.b16 %v263
  %v1645 = vunpack.c.h.b16 %v263
  %v1646 = vunpack.c.l.b16 %v264
  %v1647 = vunpack.c.h.b16 %v264
  %v1648 = vunpack.c.l.b16 %v265
  %v1649 = vunpack.c.h.b16 %v265
  %v1650 = vunpack.c.l.b16 %v266
  %v1651 = vunpack.c.h.b16 %v266
  %v1652 = vunpack.c.l.b16 %v267
  %v1653 = vunpack.c.h.b16 %v267
  %v1654 = vunpack.c.l.b16 %v268
  %v1655 = vunpack.c.h.b16 %v268
  %v1656 = vunpack.c.l.b16 %v269
  %v1657 = vunpack.c.h.b16 %v269
  %v1658 = vunpack.c.l.b16 %v270
  %v1659 = vunpack.c.h.b16 %v270
  %v1660 = vunpack.c.l.b16 %v271
  %v1661 = vunpack.c.h.b16 %v271
  %v1662 = vunpack.c.l.b16 %v272
  %v1663 = vunpack.c.h.b16 %v272
  %v1664 = vunpack.c.l.b16 %v273
  %v1665 = vunpack.c.h.b16 %v273
  %v1666 = vunpack.c.l.b16 %v274
  %v1667 = vunpack.c.h.b16 %v274
  %v1668 = vunpack.c.l.b16 %v275
  %v1669 = vunpack.c.h.b16 %v275
  %v1670 = vunpack.c.l.b16 %v276
  %v1671 = vunpack.c.h.b16 %v276
  %v1672 = vunpack.c.l.b16 %v277
  %v1673 = vunpack.c.h.b16 %v277
  %v1674 = vunpack.c.l.b16 %v278
  %v1675 = vunpack.c.h.b16 %v278
  %v1676 = vunpack.c.l.b16 %v279
  %v1677 = vunpack.c.h.b16 %v279
  %v1678 = vunpack.c.l.b16 %v280
  %v1679 = vunpack.c.h.b16 %v280
  %v1680 = vunpack.c.l.b16 %v281
  %v1681 = vunpack.c.h.b16 %v281
  %v1682 = vunpack.c.l.b16 %v282
  %v1683 = vunpack.c.h.b16 %v282
  %v1684 = vunpack.c.l.b16 %v283
  %v1685 = vunpack.c.h.b16 %v283
  %v1686 = vunpack.c.l.b16 %v284
  %v1687 = vunpack.c.h.b16 %v284
  %v1688 = vunpack.c.l.b16 %v285
  %v1689 = vunpack.c.h.b16 %v285
  %v1690 = vunpack.c.l.b16 %v286
  %v1691 = vunpack.c.h.b16 %v286
  %v1692 = vunpack.c.l.b16 %v287
  %v1693 = vunpack.c.h.b16 %v287
  %v1694 = vunpack.c.l.b16 %v288
  %v1695 = vunpack.c.h.b16 %v288
  %v1696 = vunpack.c.l.b16 %v289
  %v1697 = vunpack.c.h.b16 %v289
  %v1698 = vunpack.c.l.b16 %v290
  %v1699 = vunpack.c.h.b16 %v290
  %v1700 = vunpack.c.l.b16 %v291
  %v1701 = vunpack.c.h.b16 %v291
  %v1702 = vunpack.c.l.b16 %v292
  %v1703 = vunpack.c.h.b16 %v292
  %v1704 = vunpack.c.l.b16 %v293
  %v1705 = vunpack.c.h.b16 %v293
  %v1706 = vunpack.c.l.b16 %v294
  %v1707 = vunpack.c.h.b16 %v294
  %v1708 = vunpack.c.l.b16 %v295
  %v1709 = vunpack.c.h.b16 %v295
  %v1710 = vunpack.c.l.b16 %v296
  %v1711 = vunpack.c.h.b16 %v296
  %v1712 = vunpack.c.l.b16 %v297
  %v1713 = vunpack.c.h.b16 %v297
  %v1714 = vunpack.c.l.b16 %v298
  %v1715 = vunpack.c.h.b16 %v298
  %v1716 = vunpack.c.l.b16 %v299
  %v1717 = vunpack.c.h.b16 %v299
  %v1718 = vunpack.c.l.b16 %v300
  %v1719 = vunpack.c.h.b16 %v300
  %v1720 = vunpack.c.l.b16 %v301
  %v1721 = vunpack.c.h.b16 %v301
  %v1722 = vunpack.c.l.b16 %v302
  %v1723 = vunpack.c.h.b16 %v302
  %v1724 = vunpack.c.l.b16 %v303
  %v1725 = vunpack.c.h.b16 %v303
  %v1726 = vunpack.c.l.b16 %v304
  %v1727 = vunpack.c.h.b16 %v304
  %v1728 = vunpack.c.l.b16 %v305
  %v1729 = vunpack.c.h.b16 %v305
  %v1730 = vunpack.c.l.b16 %v306
  %v1731 = vunpack.c.h.b16 %v306
  %v1732 = vunpack.c.l.b16 %v307
  %v1733 = vunpack.c.h.b16 %v307
  %v1734 = vunpack.c.l.b16 %v308
  %v1735 = vunpack.c.h.b16 %v308
  %v1736 = vunpack.c.l.b16 %v309
  %v1737 = vunpack.c.h.b16 %v309
  %v1738 = vunpack.c.l.b16 %v310
  %v1739 = vunpack.c.h.b16 %v310
  %v1740 = vunpack.c.l.b16 %v311
  %v1741 = vunpack.c.h.b16 %v311
  %v1742 = vunpack.c.l.b16 %v312
  %v1743 = vunpack.c.h.b16 %v312
  %v1744 = vunpack.c.l.b16 %v313
  %v1745 = vunpack.c.h.b16 %v313
  %v1746 = vunpack.c.l.b16 %v314
  %v1747 = vunpack.c.h.b16 %v314
  %v1748 = vunpack.c.l.b16 %v315
  %v1749 = vunpack.c.h.b16 %v315
  %v1750 = vunpack.c.l.b16 %v316
  %v1751 = vunpack.c.h.b16 %v316
  %v1752 = vunpack.c.l.b16 %v317
  %v1753 = vunpack.c.h.b16 %v317
  %v1754 = vunpack.c.l.b16 %v318
  %v1755 = vunpack.c.h.b16 %v318
  %v1756 = vunpack.c.l.b16 %v319
  %v1757 = vunpack.c.h.b16 %v319
  %v1758 = vunpack.c.l.b16 %v320
  %v1759 = vunpack.c.h.b16 %v320
  %v1760 = vunpack.c.l.b16 %v321
  %v1761 = vunpack.c.h.b16 %v321
  %v1762 = vunpack.c.l.b16 %v322
  %v1763 = vunpack.c.h.b16 %v322
  %v1764 = vunpack.c.l.b16 %v323
  %v1765 = vunpack.c.h.b16 %v323
  %v1766 = vunpack.c.l.b16 %v324
  %v1767 = vunpack.c.h.b16 %v324
  %v1768 = vunpack.c.l.b16 %v325
  %v1769 = vunpack.c.h.b16 %v325
  %v1770 = vunpack.c.l.b16 %v326
  %v1771 = vunpack.c.h.b16 %v326
  %v1772 = vunpack.c.l.b16 %v327
  %v1773 = vunpack.c.h.b16 %v327
  %v1774 = vunpack.c.l.b16 %v328
  %v1775 = vunpack.c.h.b16 %v328
  %v1776 = vunpack.c.l.b16 %v329
  %v1777 = vunpack.c.h.b16 %v329
  %v1778 = vunpack.c.l.b16 %v330
  %v1779 = vunpack.c.h.b16 %v330
  %v1780 = vunpack.c.l.b16 %v331
  %v1781 = vunpack.c.h.b16 %v331
  %v1782 = vunpack.c.l.b16 %v332
  %v1783 = vunpack.c.h.b16 %v332
  %v1784 = vunpack.c.l.b16 %v333
  %v1785 = vunpack.c.h.b16 %v333
  %v1786 = vunpack.c.l.b16 %v334
  %v1787 = vunpack.c.h.b16 %v334
  %v1788 = vunpack.c.l.b16 %v335
  %v1789 = vunpack.c.h.b16 %v335
  %v1790 = vunpack.c.l.b16 %v336
  %v1791 = vunpack.c.h.b16 %v336
  %v1792 = vunpack.c.l.b16 %v337
  %v1793 = vunpack.c.h.b16 %v337
  %v1794 = vunpack.c.l.b16 %v338
  %v1795 = vunpack.c.h.b16 %v338
  %v1796 = vunpack.c.l.b16 %v339
  %v1797 = vunpack.c.h.b16 %v339
  %v1798 = vunpack.c.l.b16 %v340
  %v1799 = vunpack.c.h.b16 %v340
  %v1800 = vunpack.c.l.b16 %v341
  %v1801 = vunpack.c.h.b16 %v341
  %v1802 = vunpack.c.l.b16 %v342
  %v1803 = vunpack.c.h.b16 %v342
  %v1804 = vunpack.c.l.b16 %v343
  %v1805 = vunpack.c.h.b16 %v343
  %v1806 = vunpack.c.l.b16 %v344
  %v1807 = vunpack.c.h.b16 %v344
  %v1808 = vunpack.c.l.b16 %v345
  %v1809 = vunpack.c.h.b16 %v345
  %v1810 = vunpack.c.l.b16 %v346
  %v1811 = vunpack.c.h.b16 %v346
  %v1812 = vunpack.c.l.b16 %v347
  %v1813 = vunpack.c.h.b16 %v347
  %v1814 = vunpack.c.l.b16 %v348
  %v1815 = vunpack.c.h.b16 %v348
  %v1816 = vunpack.c.l.b16 %v349
  %v1817 = vunpack.c.h.b16 %v349
  %v1818 = vunpack.c.l.b16 %v350
  %v1819 = vunpack.c.h.b16 %v350
  %v1820 = vunpack.c.l.b16 %v351
  %v1821 = vunpack.c.h.b16 %v351
  %v1822 = vunpack.c.l.b16 %v352
  %v1823 = vunpack.c.h.b16 %v352
  %v1824 = vunpack.c.l.b16 %v353
  %v1825 = vunpack.c.h.b16 %v353
  %v1826 = vunpack.c.l.b16 %v354
  %v1827 = vunpack.c.h.b16 %v354
  %v1828 = vunpack.c.l.b16 %v355
  %v1829 = vunpack.c.h.b16 %v355
  %v1830 = vunpack.c.l.b16 %v356
  %v1831 = vunpack.c.h.b16 %v356
  %v1832 = vunpack.c.l.b16 %v357
  %v1833 = vunpack.c.h.b16 %v357
  %v1834 = vunpack.c.l.b16 %v358
  %v1835 = vunpack.c.h.b16 %v358
  %v1836 = vunpack.c.l.b16 %v359
  %v1837 = vunpack.c.h.b16 %v359
  %v1838 = vunpack.c.l.b16 %v360
  %v1839 = vunpack.c.h.b16 %v360
  %v1840 = vunpack.c.l.b16 %v361
  %v1841 = vunpack.c.h.b16 %v361
  %v1842 = vunpack.c.l.b16 %v362
  %v1843 = vunpack.c.h.b16 %v362
  %v1844 = vunpack.c.l.b16 %v363
  %v1845 = vunpack.c.h.b16 %v363
  %v1846 = vunpack.c.l.b16 %v364
  %v1847 = vunpack.c.h.b16 %v364
  %v1848 = vunpack.c.l.b16 %v365
  %v1849 = vunpack.c.h.b16 %v365
  %v1850 = vunpack.c.l.b16 %v366
  %v1851 = vunpack.c.h.b16 %v366
  %v1852 = vunpack.c.l.b16 %v367
  %v1853 = vunpack.c.h.b16 %v367
  %v1854 = vunpack.c.l.b16 %v368
  %v1855 = vunpack.c.h.b16 %v368
  %v1856 = vunpack.c.l.b16 %v369
  %v1857 = vunpack.c.h.b16 %v369
  %v1858 = vunpack.c.l.b16 %v370
  %v1859 = vunpack.c.h.b16 %v370
  %v1860 = vunpack.c.l.b16 %v371
  %v1861 = vunpack.c.h.b16 %v371
  %v1862 = vunpack.c.l.b16 %v372
  %v1863 = vunpack.c.h.b16 %v372
  %v1864 = vunpack.c.l.b16 %v373
  %v1865 = vunpack.c.h.b16 %v373
  %v1866 = vunpack.c.l.b16 %v374
  %v1867 = vunpack.c.h.b16 %v374
  %v1868 = vunpack.c.l.b16 %v375
  %v1869 = vunpack.c.h.b16 %v375
  %v1870 = vunpack.c.l.b16 %v376
  %v1871 = vunpack.c.h.b16 %v376
  %v1872 = vunpack.c.l.b16 %v377
  %v1873 = vunpack.c.h.b16 %v377
  %v1874 = vunpack.c.l.b16 %v378
  %v1875 = vunpack.c.h.b16 %v378
  %v1876 = vunpack.c.l.b16 %v379
  %v1877 = vunpack.c.h.b16 %v379
  %v1878 = vunpack.c.l.b16 %v380
  %v1879 = vunpack.c.h.b16 %v380
  %v1880 = vunpack.c.l.b16 %v381
  %v1881 = vunpack.c.h.b16 %v381
  %v1882 = vunpack.c.l.b16 %v382
  %v1883 = vunpack.c.h.b16 %v382
  %v1884 = vunpack.c.l.b16 %v383
  %v1885 = vunpack.c.h.b16 %v383
  %v1886 = vunpack.c.l.b16 %v384
  %v1887 = vunpack.c.h.b16 %v384
  %v1888 = vunpack.c.l.b16 %v385
  %v1889 = vunpack.c.h.b16 %v385
  %v1890 = vunpack.c.l.b16 %v386
  %v1891 = vunpack.c.h.b16 %v386
  %v1892 = vunpack.c.l.b16 %v387
  %v1893 = vunpack.c.h.b16 %v387
  %v1894 = vunpack.c.l.b16 %v388
  %v1895 = vunpack.c.h.b16 %v388
  %v1896 = vunpack.c.l.b16 %v389
  %v1897 = vunpack.c.h.b16 %v389
  %v1898 = vunpack.c.l.b16 %v390
  %v1899 = vunpack.c.h.b16 %v390
  %v1900 = vunpack.c.l.b16 %v391
  %v1901 = vunpack.c.h.b16 %v391
  %v1902 = vunpack.c.l.b16 %v392
  %v1903 = vunpack.c.h.b16 %v392
  %v1904 = vunpack.c.l.b16 %v393
  %v1905 = vunpack.c.h.b16 %v393
  %v1906 = vunpack.c.l.b16 %v394
  %v1907 = vunpack.c.h.b16 %v394
  %v1908 = vunpack.c.l.b16 %v395
  %v1909 = vunpack.c.h.b16 %v395
  %v1910 = vunpack.c.l.b16 %v396
  %v1911 = vunpack.c.h.b16 %v396
  %v1912 = vunpack.c.l.b16 %v397
  %v1913 = vunpack.c.h.b16 %v397
  %v1914 = vunpack.c.l.b16 %v398
  %v1915 = vunpack.c.h.b16 %v398
  %v1916 = vunpack.c.l.b16 %v399
  %v1917 = vunpack.c.h.b16 %v399
  %v1918 = vunpack.c.l.b16 %v400
  %v1919 = vunpack.c.h.b16 %v400
  %v1920 = vunpack.c.l.b16 %v401
  %v1921 = vunpack.c.h.b16 %v401
  %v1922 = vunpack.c.l.b16 %v402
  %v1923 = vunpack.c.h.b16 %v402
  %v1924 = vunpack.c.l.b16 %v403
  %v1925 = vunpack.c.h.b16 %v403
  %v1926 = vunpack.c.l.b16 %v404
  %v1927 = vunpack.c.h.b16 %v404
  %v1928 = vunpack.c.l.b16 %v405
  %v1929 = vunpack.c.h.b16 %v405
  %v1930 = vunpack.c.l.b16 %v406
  %v1931 = vunpack.c.h.b16 %v406
  %v1932 = vunpack.c.l.b16 %v407
  %v1933 = vunpack.c.h.b16 %v407
  %v1934 = vunpack.c.l.b16 %v408
  %v1935 = vunpack.c.h.b16 %v408
  %v1936 = vunpack.c.l.b16 %v409
  %v1937 = vunpack.c.h.b16 %v409
  %v1938 = vunpack.c.l.b16 %v410
  %v1939 = vunpack.c.h.b16 %v410
  %v1940 = vunpack.c.l.b16 %v411
  %v1941 = vunpack.c.h.b16 %v411
  %v1942 = vunpack.c.l.b16 %v412
  %v1943 = vunpack.c.h.b16 %v412
  %v1944 = vunpack.c.l.b16 %v413
  %v1945 = vunpack.c.h.b16 %v413
  %v1946 = vunpack.c.l.b16 %v414
  %v1947 = vunpack.c.h.b16 %v414
  %v1948 = vunpack.c.l.b16 %v415
  %v1949 = vunpack.c.h.b16 %v415
  %v1950 = vunpack.c.l.b16 %v416
  %v1951 = vunpack.c.h.b16 %v416
  %v1952 = vunpack.c.l.b16 %v417
  %v1953 = vunpack.c.h.b16 %v417
  %v1954 = vunpack.c.l.b16 %v418
  %v1955 = vunpack.c.h.b16 %v418
  %v1956 = vunpack.c.l.b16 %v419
  %v1957 = vunpack.c.h.b16 %v419
  %v1958 = vunpack.c.l.b16 %v420
  %v1959 = vunpack.c.h.b16 %v420
  %v1960 = vunpack.c.l.b16 %v421
  %v1961 = vunpack.c.h.b16 %v421
  %v1962 = vunpack.c.l.b16 %v422
  %v1963 = vunpack.c.h.b16 %v422
  %v1964 = vunpack.c.l.b16 %v423
  %v1965 = vunpack.c.h.b16 %v423
  %v1966 = vunpack.c.l.b16 %v424
  %v1967 = vunpack.c.h.b16 %v424
  %v1968 = vunpack.c.l.b16 %v425
  %v1969 = vunpack.c.h.b16 %v425
  %v1970 = vunpack.c.l.b16 %v426
  %v1971 = vunpack.c.h.b16 %v426
  %v1972 = vunpack.c.l.b16 %v427
  %v1973 = vunpack.c.h.b16 %v427
  %v1974 = vunpack.c.l.b16 %v428
  %v1975 = vunpack.c.h.b16 %v428
  %v1976 = vunpack.c.l.b16 %v429
  %v1977 = vunpack.c.h.b16 %v429
  %v1978 = vunpack.c.l.b16 %v430
  %v1979 = vunpack.c.h.b16 %v430
  %v1980 = vunpack.c.l.b16 %v431
  %v1981 = vunpack.c.h.b16 %v431
  %v1982 = vunpack.c.l.b16 %v432
  %v1983 = vunpack.c.h.b16 %v432
  %v1984 = vunpack.c.l.b16 %v433
  %v1985 = vunpack.c.h.b16 %v433
  %v1986 = vunpack.c.l.b16 %v434
  %v1987 = vunpack.c.h.b16 %v434
  %v1988 = vunpack.c.l.b16 %v435
  %v1989 = vunpack.c.h.b16 %v435
  %v1990 = vunpack.c.l.b16 %v436
  %v1991 = vunpack.c.h.b16 %v436
  %v1992 = vunpack.c.l.b16 %v437
  %v1993 = vunpack.c.h.b16 %v437
  %v1994 = vunpack.c.l.b16 %v438
  %v1995 = vunpack.c.h.b16 %v438
  %v1996 = vunpack.c.l.b16 %v439
  %v1997 = vunpack.c.h.b16 %v439
  %v1998 = vunpack.c.l.b16 %v440
  %v1999 = vunpack.c.h.b16 %v440
  %v2000 = vunpack.c.l.b16 %v441
  %v2001 = vunpack.c.h.b16 %v441
  %v2002 = vunpack.c.l.b16 %v442
  %v2003 = vunpack.c.h.b16 %v442
  %v2004 = vunpack.c.l.b16 %v443
  %v2005 = vunpack.c.h.b16 %v443
  %v2006 = vunpack.c.l.b16 %v444
  %v2007 = vunpack.c.h.b16 %v444
  %v2008 = vunpack.c.l.b16 %v445
  %v2009 = vunpack.c.h.b16 %v445
  %v2010 = vunpack.c.l.b16 %v446
  %v2011 = vunpack.c.h.b16 %v446
  %v2012 = vunpack.c.l.b16 %v447
  %v2013 = vunpack.c.h.b16 %v447
  %v2014 = vunpack.c.l.b16 %v448
  %v2015 = vunpack.c.h.b16 %v448
  %v2016 = vunpack.c.l.b16 %v449
  %v2017 = vunpack.c.h.b16 %v449
  %v2018 = vunpack.c.l.b16 %v450
  %v2019 = vunpack.c.h.b16 %v450
  %v2020 = vunpack.c.l.b16 %v451
  %v2021 = vunpack.c.h.b16 %v451
  %v2022 = vunpack.c.l.b16 %v452
  %v2023 = vunpack.c.h.b16 %v452
  %v2024 = vunpack.c.l.b16 %v453
  %v2025 = vunpack.c.h.b16 %v453
  %v2026 = vunpack.c.l.b16 %v454
  %v2027 = vunpack.c.h.b16 %v454
  %v2028 = vunpack.c.l.b16 %v455
  %v2029 = vunpack.c.h.b16 %v455
  %v2030 = vunpack.c.l.b16 %v456
  %v2031 = vunpack.c.h.b16 %v456
  %v2032 = vunpack.c.l.b16 %v457
  %v2033 = vunpack.c.h.b16 %v457
  %v2034 = vunpack.c.l.b16 %v458
  %v2035 = vunpack.c.h.b16 %v458
  %v2036 = vunpack.c.l.b16 %v459
  %v2037 = vunpack.c.h.b16 %v459
  %v2038 = vunpack.c.l.b16 %v460
  %v2039 = vunpack.c.h.b16 %v460
  %v2040 = vunpack.c.l.b16 %v461
  %v2041 = vunpack.c.h.b16 %v461
  %v2042 = vunpack.c.l.b16 %v462
  %v2043 = vunpack.c.h.b16 %v462
  %v2044 = vunpack.c.l.b16 %v463
  %v2045 = vunpack.c.h.b16 %v463
  %v2046 = vunpack.c.l.b16 %v464
  %v2047 = vunpack.c.h.b16 %v464
  %v2048 = vunpack.c.l.b16 %v465
  %v2049 = vunpack.c.h.b16 %v465
  %v2050 = vunpack.c.l.b16 %v466
  %v2051 = vunpack.c.h.b16 %v466
  %v2052 = vunpack.c.l.b16 %v467
  %v2053 = vunpack.c.h.b16 %v467
  %v2054 = vunpack.c.l.b16 %v468
  %v2055 = vunpack.c.h.b16 %v468
  %v2056 = vunpack.c.l.b16 %v469
  %v2057 = vunpack.c.h.b16 %v469
  %v2058 = vunpack.c.l.b16 %v470
  %v2059 = vunpack.c.h.b16 %v470
  %v2060 = vunpack.c.l.b16 %v471
  %v2061 = vunpack.c.h.b16 %v471
  %v2062 = vunpack.c.l.b16 %v472
  %v2063 = vunpack.c.h.b16 %v472
  %v2064 = vunpack.c.l.b16 %v473
  %v2065 = vunpack.c.h.b16 %v473
  %v2066 = vunpack.c.l.b16 %v474
  %v2067 = vunpack.c.h.b16 %v474
  %v2068 = vunpack.c.l.b16 %v475
  %v2069 = vunpack.c.h.b16 %v475
  %v2070 = vunpack.c.l.b16 %v476
  %v2071 = vunpack.c.h.b16 %v476
  %v2072 = vunpack.c.l.b16 %v477
  %v2073 = vunpack.c.h.b16 %v477
  %v2074 = vunpack.c.l.b16 %v478
  %v2075 = vunpack.c.h.b16 %v478
  %v2076 = vunpack.c.l.b16 %v479
  %v2077 = vunpack.c.h.b16 %v479
  %v2078 = vunpack.c.l.b16 %v480
  %v2079 = vunpack.c.h.b16 %v480
  %v2080 = vunpack.c.l.b16 %v481
  %v2081 = vunpack.c.h.b16 %v481
  %v2082 = vunpack.c.l.b16 %v482
  %v2083 = vunpack.c.h.b16 %v482
  %v2084 = vunpack.c.l.b16 %v483
  %v2085 = vunpack.c.h.b16 %v483
  %v2086 = vunpack.c.l.b16 %v484
  %v2087 = vunpack.c.h.b16 %v484
  %v2088 = vunpack.c.l.b16 %v485
  %v2089 = vunpack.c.h.b16 %v485
  %v2090 = vunpack.c.l.b16 %v486
  %v2091 = vunpack.c.h.b16 %v486
  %v2092 = vunpack.c.l.b16 %v487
  %v2093 = vunpack.c.h.b16 %v487
  %v2094 = vunpack.c.l.b16 %v488
  %v2095 = vunpack.c.h.b16 %v488
  %v2096 = vunpack.c.l.b16 %v489
  %v2097 = vunpack.c.h.b16 %v489
  %v2098 = vunpack.c.l.b16 %v490
  %v2099 = vunpack.c.h.b16 %v490
  %v2100 = vunpack.c.l.b16 %v491
  %v2101 = vunpack.c.h.b16 %v491
  %v2102 = vunpack.c.l.b16 %v492
  %v2103 = vunpack.c.h.b16 %v492
  %v2104 = vunpack.c.l.b16 %v493
  %v2105 = vunpack.c.h.b16 %v493
  %v2106 = vunpack.c.l.b16 %v494
  %v2107 = vunpack.c.h.b16 %v494
  %v2108 = vunpack.c.l.b16 %v495
  %v2109 = vunpack.c.h.b16 %v495
  %v2110 = vunpack.c.l.b16 %v496
  %v2111 = vunpack.c.h.b16 %v496
  %v2112 = vunpack.c.l.b16 %v497
  %v2113 = vunpack.c.h.b16 %v497
  %v2114 = vunpack.c.l.b16 %v498
  %v2115 = vunpack.c.h.b16 %v498
  %v2116 = vunpack.c.l.b16 %v499
  %v2117 = vunpack.c.h.b16 %v499
  %v2118 = vunpack.c.l.b16 %v500
  %v2119 = vunpack.c.h.b16 %v500
  %v2120 = vunpack.c.l.b16 %v501
  %v2121 = vunpack.c.h.b16 %v501
  %v2122 = vunpack.c.l.b16 %v502
  %v2123 = vunpack.c.h.b16 %v502
  %v2124 = vunpack.c.l.b16 %v503
  %v2125 = vunpack.c.h.b16 %v503
  %v2126 = vunpack.c.l.b16 %v504
  %v2127 = vunpack.c.h.b16 %v504
  %v2128 = vunpack.c.l.b16 %v505
  %v2129 = vunpack.c.h.b16 %v505
  %v2130 = vunpack.c.l.b16 %v506
  %v2131 = vunpack.c.h.b16 %v506
  %v2132 = vunpack.c.l.b16 %v507
  %v2133 = vunpack.c.h.b16 %v507
  %v2134 = vunpack.c.l.b16 %v508
  %v2135 = vunpack.c.h.b16 %v508
  %v2136 = vunpack.c.l.b16 %v509
  %v2137 = vunpack.c.h.b16 %v509
  %v2138 = vunpack.c.l.b16 %v510
  %v2139 = vunpack.c.h.b16 %v510
  %v2140 = vunpack.c.l.b16 %v511
  %v2141 = vunpack.c.h.b16 %v511
  %v2142 = vunpack.c.l.b16 %v512
  %v2143 = vunpack.c.h.b16 %v512
  %v2144 = vunpack.c.l.b16 %v513
  %v2145 = vunpack.c.h.b16 %v513
  %v2146 = vunpack.c.l.b16 %v514
  %v2147 = vunpack.c.h.b16 %v514
  %v2148 = vunpack.c.l.b16 %v515
  %v2149 = vunpack.c.h.b16 %v515
  %v2150 = vunpack.c.l.b16 %v516
  %v2151 = vunpack.c.h.b16 %v516
  %v2152 = vunpack.c.l.b16 %v517
  %v2153 = vunpack.c.h.b16 %v517
  %v2154 = vunpack.c.l.b16 %v518
  %v2155 = vunpack.c.h.b16 %v518
  %v2156 = vunpack.c.l.b16 %v519
  %v2157 = vunpack.c.h.b16 %v519
  %v2158 = vunpack.c.l.b16 %v520
  %v2159 = vunpack.c.h.b16 %v520
  %v2160 = vunpack.c.l.b16 %v521
  %v2161 = vunpack.c.h.b16 %v521
  %v2162 = vunpack.c.l.b16 %v522
  %v2163 = vunpack.c.h.b16 %v522
  %v2164 = vunpack.c.l.b16 %v523
  %v2165 = vunpack.c.h.b16 %v523
  %v2166 = vunpack.c.l.b16 %v524
  %v2167 = vunpack.c.h.b16 %v524
  %v2168 = vunpack.c.l.b16 %v525
  %v2169 = vunpack.c.h.b16 %v525
  %v2170 = vunpack.c.l.b16 %v526
  %v2171 = vunpack.c.h.b16 %v526
  %v2172 = vunpack.c.l.b16 %v527
  %v2173 = vunpack.c.h.b16 %v527
  %v2174 = vunpack.c.l.b16 %v528
  %v2175 = vunpack.c.h.b16 %v528
  %v2176 = vunpack.c.l.b16 %v529
  %v2177 = vunpack.c.h.b16 %v529
  %v2178 = vunpack.c.l.b16 %v530
  %v2179 = vunpack.c.h.b16 %v530
  %v2180 = vunpack.c.l.b16 %v531
  %v2181 = vunpack.c.h.b16 %v531
  %v2182 = vunpack.c.l.b16 %v532
  %v2183 = vunpack.c.h.b16 %v532
  %v2184 = vunpack.c.l.b16 %v533
  %v2185 = vunpack.c.h.b16 %v533
  %v2186 = vunpack.c.l.b16 %v534
  %v2187 = vunpack.c.h.b16 %v534
  %v2188 = vunpack.c.l.b16 %v535
  %v2189 = vunpack.c.h.b16 %v535
  %v2190 = vunpack.c.l.b16 %v536
  %v2191 = vunpack.c.h.b16 %v536
  %v2192 = vunpack.c.l.b16 %v537
  %v2193 = vunpack.c.h.b16 %v537
  %v2194 = vunpack.c.l.b16 %v538
  %v2195 = vunpack.c.h.b16 %v538
  %v2196 = vunpack.c.l.b16 %v539
  %v2197 = vunpack.c.h.b16 %v539
  %v2198 = vunpack.c.l.b16 %v540
  %v2199 = vunpack.c.h.b16 %v540
  %v2200 = vunpack.c.l.b16 %v541
  %v2201 = vunpack.c.h.b16 %v541
  %v2202 = vpack.c.b16 %v1180, %v1178
  %v2203 = vpack.c.b16 %v1181, %v1179
  %v2204 = vpack.c.b16 %v1184, %v1182
  %v2205 = vpack.c.b16 %v1185, %v1183
  %v2206 = vpack.c.b16 %v1188, %v1186
  %v2207 = vpack.c.b16 %v1189, %v1187
  %v2208 = vpack.c.b16 %v1192, %v1190
  %v2209 = vpack.c.b16 %v1193, %v1191
  %v2210 = vpack.c.b16 %v1196, %v1194
  %v2211 = vpack.c.b16 %v1197, %v1195
  %v2212 = vpack.c.b16 %v1200, %v1198
  %v2213 = vpack.c.b16 %v1201, %v1199
  %v2214 = vpack.c.b16 %v1204, %v1202
  %v2215 = vpack.c.b16 %v1205, %v1203
  %v2216 = vpack.c.b16 %v1208, %v1206
  %v2217 = vpack.c.b16 %v1209, %v1207
  %v2218 = vpack.c.b16 %v1212, %v1210
  %v2219 = vpack.c.b16 %v1213, %v1211
  %v2220 = vpack.c.b16 %v1216, %v1214
  %v2221 = vpack.c.b16 %v1217, %v1215
  %v2222 = vpack.c.b16 %v1220, %v1218
  %v2223 = vpack.c.b16 %v1221, %v1219
  %v2224 = vpack.c.b16 %v1224, %v1222
  %v2225 = vpack.c.b16 %v1225, %v1223
  %v2226 = vpack.c.b16 %v1228, %v1226
  %v2227 = vpack.c.b16 %v1229, %v1227
  %v2228 = vpack.c.b16 %v1232, %v1230
  %v2229 = vpack.c.b16 %v1233, %v1231
  %v2230 = vpack.c.b16 %v1236, %v1234
  %v2231 = vpack.c.b16 %v1237, %v1235
  %v2232 = vpack.c.b16 %v1240, %v1238
  %v2233 = vpack.c.b16 %v1241, %v1239
  %v2234 = vpack.c.b16 %v1244, %v1242
  %v2235 = vpack.c.b16 %v1245, %v1243
  %v2236 = vpack.c.b16 %v1248, %v1246
  %v2237 = vpack.c.b16 %v1249, %v1247
  %v2238 = vpack.c.b16 %v1252, %v1250
  %v2239 = vpack.c.b16 %v1253, %v1251
  %v2240 = vpack.c.b16 %v1256, %v1254
  %v2241 = vpack.c.b16 %v1257, %v1255
  %v2242 = vpack.c.b16 %v1260, %v1258
  %v2243 = vpack.c.b16 %v1261, %v1259
  %v2244 = vpack.c.b16 %v1264, %v1262
  %v2245 = vpack.c.b16 %v1265, %v1263
  %v2246 = vpack.c.b16 %v1268, %v1266
  %v2247 = vpack.c.b16 %v1269, %v1267
  %v2248 = vpack.c.b16 %v1272, %v1270
  %v2249 = vpack.c.b16 %v1273, %v1271
  %v2250 = vpack.c.b16 %v1276, %v1274
  %v2251 = vpack.c.b16 %v1277, %v1275
  %v2252 = vpack.c.b16 %v1280, %v1278
  %v2253 = vpack.c.b16 %v1281, %v1279
  %v2254 = vpack.c.b16 %v1284, %v1282
  %v2255 = vpack.c.b16 %v1285, %v1283
  %v2256 = vpack.c.b16 %v1288, %v1286
  %v2257 = vpack.c.b16 %v1289, %v1287
  %v2258 = vpack.c.b16 %v1292, %v1290
  %v2259 = vpack.c.b16 %v1293, %v1291
  %v2260 = vpack.c.b16 %v1296, %v1294
  %v2261 = vpack.c.b16 %v1297, %v1295
  %v2262 = vpack.c.b16 %v1300, %v1298
  %v2263 = vpack.c.b16 %v1301, %v1299
  %v2264 = vpack.c.b16 %v1304, %v1302
  %v2265 = vpack.c.b16 %v1305, %v1303
  %v2266 = vpack.c.b16 %v1308, %v1306
  %v2267 = vpack.c.b16 %v1309, %v1307
  %v2268 = vpack.c.b16 %v1312, %v1310
  %v2269 = vpack.c.b16 %v1313, %v1311
  %v2270 = vpack.c.b16 %v1316, %v1314
  %v2271 = vpack.c.b16 %v1317, %v1315
  %v2272 = vpack.c.b16 %v1320, %v1318
  %v2273 = vpack.c.b16 %v1321, %v1319
  %v2274 = vpack.c.b16 %v1324, %v1322
  %v2275 = vpack.c.b16 %v1325, %v1323
  %v2276 = vpack.c.b16 %v1328, %v1326
  %v2277 = vpack.c.b16 %v1329, %v1327
  %v2278 = vpack.c.b16 %v1332, %v1330
  %v2279 = vpack.c.b16 %v1333, %v1331
  %v2280 = vpack.c.b16 %v1336, %v1334
  %v2281 = vpack.c.b16 %v1337, %v1335
  %v2282 = vpack.c.b16 %v1340, %v1338
  %v2283 = vpack.c.b16 %v1341, %v1339
  %v2284 = vpack.c.b16 %v1344, %v1342
  %v2285 = vpack.c.b16 %v1345, %v1343
  %v2286 = vpack.c.b16 %v1348, %v1346
  %v2287 = vpack.c.b16 %v1349, %v1347
  %v2288 = vpack.c.b16 %v1352, %v1350
  %v2289 = vpack.c.b16 %v1353, %v1351
  %v2290 = vpack.c.b16 %v1356, %v1354
  %v2291 = vpack.c.b16 %v1357, %v1355
  %v2292 = vpack.c.b16 %v1360, %v1358
  %v2293 = vpack.c.b16 %v1361, %v1359
  %v2294 = vpack.c.b16 %v1364, %v1362
  %v2295 = vpack.c.b16 %v1365, %v1363
  %v2296 = vpack.c.b16 %v1368, %v1366
  %v2297 = vpack.c.b16 %v1369, %v1367
  %v2298 = vpack.c.b16 %v1372, %v1370
  %v2299 = vpack.c.b16 %v1373, %v1371
  %v2300 = vpack.c.b16 %v1376, %v1374
  %v2301 = vpack.c.b16 %v1377, %v1375
  %v2302 = vpack.c.b16 %v1380, %v1378
  %v2303 = vpack.c.b16 %v1381, %v1379
  %v2304 = vpack.c.b16 %v1384, %v1382
  %v2305 = vpack.c.b16 %v1385, %v1383
  %v2306 = vpack.c.b16 %v1388, %v1386
  %v2307 = vpack.c.b16 %v1389, %v1387
  %v2308 = vpack.c.b16 %v1392, %v1390
  %v2309 = vpack.c.b16 %v1393, %v1391
  %v2310 = vpack.c.b16 %v1396, %v1394
  %v2311 = vpack.c.b16 %v1397, %v1395
  %v2312 = vpack.c.b16 %v1400, %v1398
  %v2313 = vpack.c.b16 %v1401, %v1399
  %v2314 = vpack.c.b16 %v1404, %v1402
  %v2315 = vpack.c.b16 %v1405, %v1403
  %v2316 = vpack.c.b16 %v1408, %v1406
  %v2317 = vpack.c.b16 %v1409, %v1407
  %v2318 = vpack.c.b16 %v1412, %v1410
  %v2319 = vpack.c.b16 %v1413, %v1411
  %v2320 = vpack.c.b16 %v1416, %v1414
  %v2321 = vpack.c.b16 %v1417, %v1415
  %v2322 = vpack.c.b16 %v1420, %v1418
  %v2323 = vpack.c.b16 %v1421, %v1419
  %v2324 = vpack.c.b16 %v1424, %v1422
  %v2325 = vpack.c.b16 %v1425, %v1423
  %v2326 = vpack.c.b16 %v1428, %v1426
  %v2327 = vpack.c.b16 %v1429, %v1427
  %v2328 = vpack.c.b16 %v1432, %v1430
  %v2329 = vpack.c.b16 %v1433, %v1431
  %v2330 = vpack.c.b16 %v1436, %v1434
  %v2331 = vpack.c.b16 %v1437, %v1435
  %v2332 = vpack.c.b16 %v1440, %v1438
  %v2333 = vpack.c.b16 %v1441, %v1439
  %v2334 = vpack.c.b16 %v1444, %v1442
  %v2335 = vpack.c.b16 %v1445, %v1443
  %v2336 = vpack.c.b16 %v1448, %v1446
  %v2337 = vpack.c.b16 %v1449, %v1447
  %v2338 = vpack.c.b16 %v1452, %v1450
  %v2339 = vpack.c.b16 %v1453, %v1451
  %v2340 = vpack.c.b16 %v1456, %v1454
  %v2341 = vpack.c.b16 %v1457, %v1455
  %v2342 = vpack.c.b16 %v1460, %v1458
  %v2343 = vpack.c.b16 %v1461, %v1459
  %v2344 = vpack.c.b16 %v1464, %v1462
  %v2345 = vpack.c.b16 %v1465, %v1463
  %v2346 = vpack.c.b16 %v1468, %v1466
  %v2347 = vpack.c.b16 %v1469, %v1467
  %v2348 = vpack.c.b16 %v1472, %v1470
  %v2349 = vpack.c.b16 %v1473, %v1471
  %v2350 = vpack.c.b16 %v1476, %v1474
  %v2351 = vpack.c.b16 %v1477, %v1475
  %v2352 = vpack.c.b16 %v1480, %v1478
  %v2353 = vpack.c.b16 %v1481, %v1479
  %v2354 = vpack.c.b16 %v1484, %v1482
  %v2355 = vpack.c.b16 %v1485, %v1483
  %v2356 = vpack.c.b16 %v1488, %v1486
  %v2357 = vpack.c.b16 %v1489, %v1487
  %v2358 = vpack.c.b16 %v1492, %v1490
  %v2359 = vpack.c.b16 %v1493, %v1491
  %v2360 = vpack.c.b16 %v1496, %v1494
  %v2361 = vpack.c.b16 %v1497, %v1495
  %v2362 = vpack.c.b16 %v1500, %v1498
  %v2363 = vpack.c.b16 %v1501, %v1499
  %v2364 = vpack.c.b16 %v1504, %v1502
  %v2365 = vpack.c.b16 %v1505, %v1503
  %v2366 = vpack.c.b16 %v1508, %v1506
  %v2367 = vpack.c.b16 %v1509, %v1507
  %v2368 = vpack.c.b16 %v1512, %v1510
  %v2369 = vpack.c.b16 %v1513, %v1511
  %v2370 = vpack.c.b16 %v1516, %v1514
  %v2371 = vpack.c.b16 %v1517, %v1515
  %v2372 = vpack.c.b16 %v1520, %v1518
  %v2373 = vpack.c.b16 %v1521, %v1519
  %v2374 = vpack.c.b16 %v1524, %v1522
  %v2375 = vpack.c.b16 %v1525, %v1523
  %v2376 = vpack.c.b16 %v1528, %v1526
  %v2377 = vpack.c.b16 %v1529, %v1527
  %v2378 = vpack.c.b16 %v1532, %v1530
  %v2379 = vpack.c.b16 %v1533, %v1531
  %v2380 = vpack.c.b16 %v1536, %v1534
  %v2381 = vpack.c.b16 %v1537, %v1535
  %v2382 = vpack.c.b16 %v1540, %v1538
  %v2383 = vpack.c.b16 %v1541, %v1539
  %v2384 = vpack.c.b16 %v1544, %v1542
  %v2385 = vpack.c.b16 %v1545, %v1543
  %v2386 = vpack.c.b16 %v1548, %v1546
  %v2387 = vpack.c.b16 %v1549, %v1547
  %v2388 = vpack.c.b16 %v1552, %v1550
  %v2389 = vpack.c.b16 %v1553, %v1551
  %v2390 = vpack.c.b16 %v1556, %v1554
  %v2391 = vpack.c.b16 %v1557, %v1555
  %v2392 = vpack.c.b16 %v1560, %v1558
  %v2393 = vpack.c.b16 %v1561, %v1559
  %v2394 = vpack.c.b16 %v1564, %v1562
  %v2395 = vpack.c.b16 %v1565, %v1563
  %v2396 = vpack.c.b16 %v1568, %v1566
  %v2397 = vpack.c.b16 %v1569, %v1567
  %v2398 = vpack.c.b16 %v1572, %v1570
  %v2399 = vpack.c.b16 %v1573, %v1571
  %v2400 = vpack.c.b16 %v1576, %v1574
  %v2401 = vpack.c.b16 %v1577, %v1575
  %v2402 = vpack.c.b16 %v1580, %v1578
  %v2403 = vpack.c.b16 %v1581, %v1579
  %v2404 = vpack.c.b16 %v1584, %v1582
  %v2405 = vpack.c.b16 %v1585, %v1583
  %v2406 = vpack.c.b16 %v1588, %v1586
  %v2407 = vpack.c.b16 %v1589, %v1587
  %v2408 = vpack.c.b16 %v1592, %v1590
  %v2409 = vpack.c.b16 %v1593, %v1591
  %v2410 = vpack.c.b16 %v1596, %v1594
  %v2411 = vpack.c.b16 %v1597, %v1595
  %v2412 = vpack.c.b16 %v1600, %v1598
  %v2413 = vpack.c.b16 %v1601, %v1599
  %v2414 = vpack.c.b16 %v1604, %v1602
  %v2415 = vpack.c.b16 %v1605, %v1603
  %v2416 = vpack.c.b16 %v1608, %v1606
  %v2417 = vpack.c.b16 %v1609, %v1607
  %v2418 = vpack.c.b16 %v1612, %v1610
  %v2419 = vpack.c.b16 %v1613, %v1611
  %v2420 = vpack.c.b16 %v1616, %v1614
  %v2421 = vpack.c.b16 %v1617, %v1615
  %v2422 = vpack.c.b16 %v1620, %v1618
  %v2423 = vpack.c.b16 %v1621, %v1619
  %v2424 = vpack.c.b16 %v1624, %v1622
  %v2425 = vpack.c.b16 %v1625, %v1623
  %v2426 = vpack.c.b16 %v1628, %v1626
  %v2427 = vpack.c.b16 %v1629, %v1627
  %v2428 = vpack.c.b16 %v1632, %v1630
  %v2429 = vpack.c.b16 %v1633, %v1631
  %v2430 = vpack.c.b16 %v1636, %v1634
  %v2431 = vpack.c.b16 %v1637, %v1635
  %v2432 = vpack.c.b16 %v1640, %v1638
  %v2433 = vpack.c.b16 %v1641, %v1639
  %v2434 = vpack.c.b16 %v1644, %v1642
  %v2435 = vpack.c.b16 %v1645, %v1643
  %v2436 = vpack.c.b16 %v1648, %v1646
  %v2437 = vpack.c.b16 %v1649, %v1647
  %v2438 = vpack.c.b16 %v1652, %v1650
  %v2439 = vpack.c.b16 %v1653, %v1651
  %v2440 = vpack.c.b16 %v1656, %v1654
  %v2441 = vpack.c.b16 %v1657, %v1655
  %v2442 = vpack.c.b16 %v1660, %v1658
  %v2443 = vpack.c.b16 %v1661, %v1659
  %v2444 = vpack.c.b16 %v1664, %v1662
  %v2445 = vpack.c.b16 %v1665, %v1663
  %v2446 = vpack.c.b16 %v1668, %v1666
  %v2447 = vpack.c.b16 %v1669, %v1667
  %v2448 = vpack.c.b16 %v1672, %v1670
  %v2449 = vpack.c.b16 %v1673, %v1671
  %v2450 = vpack.c.b16 %v1676, %v1674
  %v2451 = vpack.c.b16 %v1677, %v1675
  %v2452 = vpack.c.b16 %v1680, %v1678
  %v2453 = vpack.c.b16 %v1681, %v1679
  %v2454 = vpack.c.b16 %v1684, %v1682
  %v2455 = vpack.c.b16 %v1685, %v1683
  %v2456 = vpack.c.b16 %v1688, %v1686
  %v2457 = vpack.c.b16 %v1689, %v1687
  %v2458 = vpack.c.b16 %v1692, %v1690
  %v2459 = vpack.c.b16 %v1693, %v1691
  %v2460 = vpack.c.b16 %v1696, %v1694
  %v2461 = vpack.c.b16 %v1697, %v1695
  %v2462 = vpack.c.b16 %v1700, %v1698
  %v2463 = vpack.c.b16 %v1701, %v1699
  %v2464 = vpack.c.b16 %v1704, %v1702
  %v2465 = vpack.c.b16 %v1705, %v1703
  %v2466 = vpack.c.b16 %v1708, %v1706
  %v2467 = vpack.c.b16 %v1709, %v1707
  %v2468 = vpack.c.b16 %v1712, %v1710
  %v2469 = vpack.c.b16 %v1713, %v1711
  %v2470 = vpack.c.b16 %v1716, %v1714
  %v2471 = vpack.c.b16 %v1717, %v1715
  %v2472 = vpack.c.b16 %v1720, %v1718
  %v2473 = vpack.c.b16 %v1721, %v1719
  %v2474 = vpack.c.b16 %v1724, %v1722
  %v2475 = vpack.c.b16 %v1725, %v1723
  %v2476 = vpack.c.b16 %v1728, %v1726
  %v2477 = vpack.c.b16 %v1729, %v1727
  %v2478 = vpack.c.b16 %v1732, %v1730
  %v2479 = vpack.c.b16 %v1733, %v1731
  %v2480 = vpack.c.b16 %v1736, %v1734
  %v2481 = vpack.c.b16 %v1737, %v1735
  %v2482 = vpack.c.b16 %v1740, %v1738
  %v2483 = vpack.c.b16 %v1741, %v1739
  %v2484 = vpack.c.b16 %v1744, %v1742
  %v2485 = vpack.c.b16 %v1745, %v1743
  %v2486 = vpack.c.b16 %v1748, %v1746
  %v2487 = vpack.c.b16 %v1749, %v1747
  %v2488 = vpack.c.b16 %v1752, %v1750
  %v2489 = vpack.c.b16 %v1753, %v1751
  %v2490 = vpack.c.b16 %v1756, %v1754
  %v2491 = vpack.c.b16 %v1757, %v1755
  %v2492 = vpack.c.b16 %v1760, %v1758
  %v2493 = vpack.c.b16 %v1761, %v1759
  %v2494 = vpack.c.b16 %v1764, %v1762
  %v2495 = vpack.c.b16 %v1765, %v1763
  %v2496 = vpack.c.b16 %v1768, %v1766
  %v2497 = vpack.c.b16 %v1769, %v1767
  %v2498 = vpack.c.b16 %v1772, %v1770
  %v2499 = vpack.c.b16 %v1773, %v1771
  %v2500 = vpack.c.b16 %v1776, %v1774
  %v2501 = vpack.c.b16 %v1777, %v1775
  %v2502 = vpack.c.b16 %v1780, %v1778
  %v2503 = vpack.c.b16 %v1781, %v1779
  %v2504 = vpack.c.b16 %v1784, %v1782
  %v2505 = vpack.c.b16 %v1785, %v1783
  %v2506 = vpack.c.b16 %v1788, %v1786
  %v2507 = vpack.c.b16 %v1789, %v1787
  %v2508 = vpack.c.b16 %v1792, %v1790
  %v2509 = vpack.c.b16 %v1793, %v1791
  %v2510 = vpack.c.b16 %v1796, %v1794
  %v2511 = vpack.c.b16 %v1797, %v1795
  %v2512 = vpack.c.b16 %v1800, %v1798
  %v2513 = vpack.c.b16 %v1801, %v1799
  %v2514 = vpack.c.b16 %v1804, %v1802
  %v2515 = vpack.c.b16 %v1805, %v1803
  %v2516 = vpack.c.b16 %v1808, %v1806
  %v2517 = vpack.c.b16 %v1809, %v1807
  %v2518 = vpack.c.b16 %v1812, %v1810
  %v2519 = vpack.c.b16 %v1813, %v1811
  %v2520 = vpack.c.b16 %v1816, %v1814
  %v2521 = vpack.c.b16 %v1817, %v1815
  %v2522 = vpack.c.b16 %v1820, %v1818
  %v2523 = vpack.c.b16 %v1821, %v1819
  %v2524 = vpack.c.b16 %v1824, %v1822
  %v2525 = vpack.c.b16 %v1825, %v1823
  %v2526 = vpack.c.b16 %v1828, %v1826
  %v2527 = vpack.c.b16 %v1829, %v1827
  %v2528 = vpack.c.b16 %v1832, %v1830
  %v2529 = vpack.c.b16 %v1833, %v1831
  %v2530 = vpack.c.b16 %v1836, %v1834
  %v2531 = vpack.c.b16 %v1837, %v1835
  %v2532 = vpack.c.b16 %v1840, %v1838
  %v2533 = vpack.c.b16 %v1841, %v1839
  %v2534 = vpack.c.b16 %v1844, %v1842
  %v2535 = vpack.c.b16 %v1845, %v1843
  %v2536 = vpack.c.b16 %v1848, %v1846
  %v2537 = vpack.c.b16 %v1849, %v1847
  %v2538 = vpack.c.b16 %v1852, %v1850
  %v2539 = vpack.c.b16 %v1853, %v1851
  %v2540 = vpack.c.b16 %v1856, %v1854
  %v2541 = vpack.c.b16 %v1857, %v1855
  %v2542 = vpack.c.b16 %v1860, %v1858
  %v2543 = vpack.c.b16 %v1861, %v1859
  %v2544 = vpack.c.b16 %v1864, %v1862
  %v2545 = vpack.c.b16 %v1865, %v1863
  %v2546 = vpack.c.b16 %v1868, %v1866
  %v2547 = vpack.c.b16 %v1869, %v1867
  %v2548 = vpack.c.b16 %v1872, %v1870
  %v2549 = vpack.c.b16 %v1873, %v1871
  %v2550 = vpack.c.b16 %v1876, %v1874
  %v2551 = vpack.c.b16 %v1877, %v1875
  %v2552 = vpack.c.b16 %v1880, %v1878
  %v2553 = vpack.c.b16 %v1881, %v1879
  %v2554 = vpack.c.b16 %v1884, %v1882
  %v2555 = vpack.c.b16 %v1885, %v1883
  %v2556 = vpack.c.b16 %v1888, %v1886
  %v2557 = vpack.c.b16 %v1889, %v1887
  %v2558 = vpack.c.b16 %v1892, %v1890
  %v2559 = vpack.c.b16 %v1893, %v1891
  %v2560 = vpack.c.b16 %v1896, %v1894
  %v2561 = vpack.c.b16 %v1897, %v1895
  %v2562 = vpack.c.b16 %v1900, %v1898
  %v2563 = vpack.c.b16 %v1901, %v1899
  %v2564 = vpack.c.b16 %v1904, %v1902
  %v2565 = vpack.c.b16 %v1905, %v1903
  %v2566 = vpack.c.b16 %v1908, %v1906
  %v2567 = vpack.c.b16 %v1909, %v1907
  %v2568 = vpack.c.b16 %v1912, %v1910
  %v2569 = vpack.c.b16 %v1913, %v1911
  %v2570 = vpack.c.b16 %v1916, %v1914
  %v2571 = vpack.c.b16 %v1917, %v1915
  %v2572 = vpack.c.b16 %v1920, %v1918
  %v2573 = vpack.c.b16 %v1921, %v1919
  %v2574 = vpack.c.b16 %v1924, %v1922
  %v2575 = vpack.c.b16 %v1925, %v1923
  %v2576 = vpack.c.b16 %v1928, %v1926
  %v2577 = vpack.c.b16 %v1929, %v1927
  %v2578 = vpack.c.b16 %v1932, %v1930
  %v2579 = vpack.c.b16 %v1933, %v1931
  %v2580 = vpack.c.b16 %v1936, %v1934
  %v2581 = vpack.c.b16 %v1937, %v1935
  %v2582 = vpack.c.b16 %v1940, %v1938
  %v2583 = vpack.c.b16 %v1941, %v1939
  %v2584 = vpack.c.b16 %v1944, %v1942
  %v2585 = vpack.c.b16 %v1945, %v1943
  %v2586 = vpack.c.b16 %v1948, %v1946
  %v2587 = vpack.c.b16 %v1949, %v1947
  %v2588 = vpack.c.b16 %v1952, %v1950
  %v2589 = vpack.c.b16 %v1953, %v1951
  %v2590 = vpack.c.b16 %v1956, %v1954
  %v2591 = vpack.c.b16 %v1957, %v1955
  %v2592 = vpack.c.b16 %v1960, %v1958
  %v2593 = vpack.c.b16 %v1961, %v1959
  %v2594 = vpack.c.b16 %v1964, %v1962
  %v2595 = vpack.c.b16 %v1965, %v1963
  %v2596 = vpack.c.b16 %v1968, %v1966
  %v2597 = vpack.c.b16 %v1969, %v1967
  %v2598 = vpack.c.b16 %v1972, %v1970
  %v2599 = vpack.c.b16 %v1973, %v1971
  %v2600 = vpack.c.b16 %v1976, %v1974
  %v2601 = vpack.c.b16 %v1977, %v1975
  %v2602 = vpack.c.b16 %v1980, %v1978
  %v2603 = vpack.c.b16 %v1981, %v1979
  %v2604 = vpack.c.b16 %v1984, %v1982
  %v2605 = vpack.c.b16 %v1985, %v1983
  %v2606 = vpack.c.b16 %v1988, %v1986
  %v2607 = vpack.c.b16 %v1989, %v1987
  %v2608 = vpack.c.b16 %v1992, %v1990
  %v2609 = vpack.c.b16 %v1993, %v1991
  %v2610 = vpack.c.b16 %v1996, %v1994
  %v2611 = vpack.c.b16 %v1997, %v1995
  %v2612 = vpack.c.b16 %v2000, %v1998
  %v2613 = vpack.c.b16 %v2001, %v1999
  %v2614 = vpack.c.b16 %v2004, %v2002
  %v2615 = vpack.c.b16 %v2005, %v2003
  %v2616 = vpack.c.b16 %v2008, %v2006
  %v2617 = vpack.c.b16 %v2009, %v2007
  %v2618 = vpack.c.b16 %v2012, %v2010
  %v2619 = vpack.c.b16 %v2013, %v2011
  %v2620 = vpack.c.b16 %v2016, %v2014
  %v2621 = vpack.c.b16 %v2017, %v2015
  %v2622 = vpack.c.b16 %v2020, %v2018
  %v2623 = vpack.c.b16 %v2021, %v2019
  %v2624 = vpack.c.b16 %v2024, %v2022
  %v2625 = vpack.c.b16 %v2025, %v2023
  %v2626 = vpack.c.b16 %v2028, %v2026
  %v2627 = vpack.c.b16 %v2029, %v2027
  %v2628 = vpack.c.b16 %v2032, %v2030
  %v2629 = vpack.c.b16 %v2033, %v2031
  %v2630 = vpack.c.b16 %v2036, %v2034
  %v2631 = vpack.c.b16 %v2037, %v2035
  %v2632 = vpack.c.b16 %v2040, %v2038
  %v2633 = vpack.c.b16 %v2041, %v2039
  %v2634 = vpack.c.b16 %v2044, %v2042
  %v2635 = vpack.c.b16 %v2045, %v2043
  %v2636 = vpack.c.b16 %v2048, %v2046
  %v2637 = vpack.c.b16 %v2049, %v2047
  %v2638 = vpack.c.b16 %v2052, %v2050
  %v2639 = vpack.c.b16 %v2053, %v2051
  %v2640 = vpack.c.b16 %v2056, %v2054
  %v2641 = vpack.c.b16 %v2057, %v2055
  %v2642 = vpack.c.b16 %v2060, %v2058
  %v2643 = vpack.c.b16 %v2061, %v2059
  %v2644 = vpack.c.b16 %v2064, %v2062
  %v2645 = vpack.c.b16 %v2065, %v2063
  %v2646 = vpack.c.b16 %v2068, %v2066
  %v2647 = vpack.c.b16 %v2069, %v2067
  %v2648 = vpack.c.b16 %v2072, %v2070
  %v2649 = vpack.c.b16 %v2073, %v2071
  %v2650 = vpack.c.b16 %v2076, %v2074
  %v2651 = vpack.c.b16 %v2077, %v2075
  %v2652 = vpack.c.b16 %v2080, %v2078
  %v2653 = vpack.c.b16 %v2081, %v2079
  %v2654 = vpack.c.b16 %v2084, %v2082
  %v2655 = vpack.c.b16 %v2085, %v2083
  %v2656 = vpack.c.b16 %v2088, %v2086
  %v2657 = vpack.c.b16 %v2089, %v2087
  %v2658 = vpack.c.b16 %v2092, %v2090
  %v2659 = vpack.c.b16 %v2093, %v2091
  %v2660 = vpack.c.b16 %v2096, %v2094
  %v2661 = vpack.c.b16 %v2097, %v2095
  %v2662 = vpack.c.b16 %v2100, %v2098
  %v2663 = vpack.c.b16 %v2101, %v2099
  %v2664 = vpack.c.b16 %v2104, %v2102
  %v2665 = vpack.c.b16 %v2105, %v2103
  %v2666 = vpack.c.b16 %v2108, %v2106
  %v2667 = vpack.c.b16 %v2109, %v2107
  %v2668 = vpack.c.b16 %v2112, %v2110
  %v2669 = vpack.c.b16 %v2113, %v2111
  %v2670 = vpack.c.b16 %v2116, %v2114
  %v2671 = vpack.c.b16 %v2117, %v2115
  %v2672 = vpack.c.b16 %v2120, %v2118
  %v2673 = vpack.c.b16 %v2121, %v2119
  %v2674 = vpack.c.b16 %v2124, %v2122
  %v2675 = vpack.c.b16 %v2125, %v2123
  %v2676 = vpack.c.b16 %v2128, %v2126
  %v2677 = vpack.c.b16 %v2129, %v2127
  %v2678 = vpack.c.b16 %v2132, %v2130
  %v2679 = vpack.c.b16 %v2133, %v2131
  %v2680 = vpack.c.b16 %v2136, %v2134
  %v2681 = vpack.c.b16 %v2137, %v2135
  %v2682 = vpack.c.b16 %v2140, %v2138
  %v2683 = vpack.c.b16 %v2141, %v2139
  %v2684 = vpack.c.b16 %v2144, %v2142
  %v2685 = vpack.c.b16 %v2145, %v2143
  %v2686 = vpack.c.b16 %v2148, %v2146
  %v2687 = vpack.c.b16 %v2149, %v2147
  %v2688 = vpack.c.b16 %v2152, %v2150
  %v2689 = vpack.c.b16 %v2153, %v2151
  %v2690 = vpack.c.b16 %v2156, %v2154
  %v2691 = vpack.c.b16 %v2157, %v2155
  %v2692 = vpack.c.b16 %v2160, %v2158
  %v2693 = vpack.c.b16 %v2161, %v2159
  %v2694 = vpack.c.b16 %v2164, %v2162
  %v2695 = vpack.c.b16 %v2165, %v2163
  %v2696 = vpack.c.b16 %v2168, %v2166
  %v2697 = vpack.c.b16 %v2169, %v2167
  %v2698 = vpack.c.b16 %v2172, %v2170
  %v2699 = vpack.c.b16 %v2173, %v2171
  %v2700 = vpack.c.b16 %v2176, %v2174
  %v2701 = vpack.c.b16 %v2177, %v2175
  %v2702 = vpack.c.b16 %v2180, %v2178
  %v2703 = vpack.c.b16 %v2181, %v2179
  %v2704 = vpack.c.b16 %v2184, %v2182
  %v2705 = vpack.c.b16 %v2185, %v2183
  %v2706 = vpack.c.b16 %v2188, %v2186
  %v2707 = vpack.c.b16 %v2189, %v2187
  %v2708 = vpack.c.b16 %v2192, %v2190
  %v2709 = vpack.c.b16 %v2193, %v2191
  %v2710 = vpack.c.b16 %v2196, %v2194
  %v2711 = vpack.c.b16 %v2197, %v2195
  %v2712 = vpack.c.b16 %v2200, %v2198
  %v2713 = vpack.c.b16 %v2201, %v2199
  %3226 = vmatprep.subr.bf16.mxu0 %v2203
  %3227 = vmatpush1.bf16.msra.mxu0 %v2202
  %3228 = vmatprep.subr.bf16.mxu0 %v2205
  %3229 = vmatpush1.bf16.msra.mxu0 %v2204
  %3230 = vmatprep.subr.bf16.mxu0 %v2207
  %3231 = vmatpush1.bf16.msra.mxu0 %v2206
  %3232 = vmatprep.subr.bf16.mxu0 %v2209
  %3233 = vmatpush1.bf16.msra.mxu0 %v2208
  %3234 = vmatprep.subr.bf16.mxu0 %v2211
  %3235 = vmatpush1.bf16.msra.mxu0 %v2210
  %3236 = vmatprep.subr.bf16.mxu0 %v2213
  %3237 = vmatpush1.bf16.msra.mxu0 %v2212
  %3238 = vmatprep.subr.bf16.mxu0 %v2215
  %3239 = vmatpush1.bf16.msra.mxu0 %v2214
  %3240 = vmatprep.subr.bf16.mxu0 %v2217
  %3241 = vmatpush1.bf16.msra.mxu0 %v2216
  %3242 = vmatprep.subr.bf16.mxu0 %v2219
  %3243 = vmatpush1.bf16.msra.mxu0 %v2218
  %3244 = vmatprep.subr.bf16.mxu0 %v2221
  %3245 = vmatpush1.bf16.msra.mxu0 %v2220
  %3246 = vmatprep.subr.bf16.mxu0 %v2223
  %3247 = vmatpush1.bf16.msra.mxu0 %v2222
  %3248 = vmatprep.subr.bf16.mxu0 %v2225
  %3249 = vmatpush1.bf16.msra.mxu0 %v2224
  %3250 = vmatprep.subr.bf16.mxu0 %v2227
  %3251 = vmatpush1.bf16.msra.mxu0 %v2226
  %3252 = vmatprep.subr.bf16.mxu0 %v2229
  %3253 = vmatpush1.bf16.msra.mxu0 %v2228
  %3254 = vmatprep.subr.bf16.mxu0 %v2231
  %3255 = vmatpush1.bf16.msra.mxu0 %v2230
  %3256 = vmatprep.subr.bf16.mxu0 %v2233
  %3257 = vmatpush1.bf16.msra.mxu0 %v2232
  %3258 = vmatprep.mubr.bf16.mxu0 %v603
  %3259 = vmatmul.mubr.bf16.gmra.mrb[0].mxu0 %v602
  %v3260 = vpop.f32.mrb[0].mxu0
  %v3261 = vadd.f32 %v547, %v3260
  %v3262 = vpop.f32.mrb[0].mxu0
  %v3263 = vadd.f32 %v551, %v3262
  %v3264 = vpop.f32.mrb[0].mxu0
  %v3265 = vpop.f32.mrb[0].mxu0
  %3266 = vdwg.mxu0
  %3267 = vmatprep.subr.bf16.mxu0 %v2235
  %3268 = vmatpush1.bf16.msra.mxu0 %v2234
  %3269 = vmatprep.subr.bf16.mxu0 %v2237
  %3270 = vmatpush1.bf16.msra.mxu0 %v2236
  %3271 = vmatprep.subr.bf16.mxu0 %v2239
  %3272 = vmatpush1.bf16.msra.mxu0 %v2238
  %3273 = vmatprep.subr.bf16.mxu0 %v2241
  %3274 = vmatpush1.bf16.msra.mxu0 %v2240
  %3275 = vmatprep.subr.bf16.mxu0 %v2243
  %3276 = vmatpush1.bf16.msra.mxu0 %v2242
  %3277 = vmatprep.subr.bf16.mxu0 %v2245
  %3278 = vmatpush1.bf16.msra.mxu0 %v2244
  %3279 = vmatprep.subr.bf16.mxu0 %v2247
  %3280 = vmatpush1.bf16.msra.mxu0 %v2246
  %3281 = vmatprep.subr.bf16.mxu0 %v2249
  %3282 = vmatpush1.bf16.msra.mxu0 %v2248
  %3283 = vmatprep.subr.bf16.mxu0 %v2251
  %3284 = vmatpush1.bf16.msra.mxu0 %v2250
  %3285 = vmatprep.subr.bf16.mxu0 %v2253
  %3286 = vmatpush1.bf16.msra.mxu0 %v2252
  %3287 = vmatprep.subr.bf16.mxu0 %v2255
  %3288 = vmatpush1.bf16.msra.mxu0 %v2254
  %3289 = vmatprep.subr.bf16.mxu0 %v2257
  %3290 = vmatpush1.bf16.msra.mxu0 %v2256
  %3291 = vmatprep.subr.bf16.mxu0 %v2259
  %3292 = vmatpush1.bf16.msra.mxu0 %v2258
  %3293 = vmatprep.subr.bf16.mxu0 %v2261
  %3294 = vmatpush1.bf16.msra.mxu0 %v2260
  %3295 = vmatprep.subr.bf16.mxu0 %v2263
  %3296 = vmatpush1.bf16.msra.mxu0 %v2262
  %3297 = vmatprep.subr.bf16.mxu0 %v2265
  %3298 = vmatpush1.bf16.msra.mxu0 %v2264
  %3299 = vmatprep.mubr.bf16.mxu0 %v605
  %3300 = vmatmul.mubr.bf16.gmra.mrb[0].mxu0 %v604
  %v3301 = vpop.f32.mrb[0].mxu0
  %v3302 = vadd.f32 %v3261, %v3301
  %v3303 = vpop.f32.mrb[0].mxu0
  %v3304 = vadd.f32 %v3263, %v3303
  %v3305 = vpop.f32.mrb[0].mxu0
  %v3306 = vpop.f32.mrb[0].mxu0
  %3307 = vdwg.mxu0
  %3308 = vmatprep.subr.bf16.mxu0 %v2267
  %3309 = vmatpush1.bf16.msra.mxu0 %v2266
  %3310 = vmatprep.subr.bf16.mxu0 %v2269
  %3311 = vmatpush1.bf16.msra.mxu0 %v2268
  %3312 = vmatprep.subr.bf16.mxu0 %v2271
  %3313 = vmatpush1.bf16.msra.mxu0 %v2270
  %3314 = vmatprep.subr.bf16.mxu0 %v2273
  %3315 = vmatpush1.bf16.msra.mxu0 %v2272
  %3316 = vmatprep.subr.bf16.mxu0 %v2275
  %3317 = vmatpush1.bf16.msra.mxu0 %v2274
  %3318 = vmatprep.subr.bf16.mxu0 %v2277
  %3319 = vmatpush1.bf16.msra.mxu0 %v2276
  %3320 = vmatprep.subr.bf16.mxu0 %v2279
  %3321 = vmatpush1.bf16.msra.mxu0 %v2278
  %3322 = vmatprep.subr.bf16.mxu0 %v2281
  %3323 = vmatpush1.bf16.msra.mxu0 %v2280
  %3324 = vmatprep.subr.bf16.mxu0 %v2283
  %3325 = vmatpush1.bf16.msra.mxu0 %v2282
  %3326 = vmatprep.subr.bf16.mxu0 %v2285
  %3327 = vmatpush1.bf16.msra.mxu0 %v2284
  %3328 = vmatprep.subr.bf16.mxu0 %v2287
  %3329 = vmatpush1.bf16.msra.mxu0 %v2286
  %3330 = vmatprep.subr.bf16.mxu0 %v2289
  %3331 = vmatpush1.bf16.msra.mxu0 %v2288
  %3332 = vmatprep.subr.bf16.mxu0 %v2291
  %3333 = vmatpush1.bf16.msra.mxu0 %v2290
  %3334 = vmatprep.subr.bf16.mxu0 %v2293
  %3335 = vmatpush1.bf16.msra.mxu0 %v2292
  %3336 = vmatprep.subr.bf16.mxu0 %v2295
  %3337 = vmatpush1.bf16.msra.mxu0 %v2294
  %3338 = vmatprep.subr.bf16.mxu0 %v2297
  %3339 = vmatpush1.bf16.msra.mxu0 %v2296
  %3340 = vmatprep.mubr.bf16.mxu0 %v607
  %3341 = vmatmul.mubr.bf16.gmra.mrb[0].mxu0 %v606
  %v3342 = vpop.f32.mrb[0].mxu0
  %v3343 = vadd.f32 %v3302, %v3342
  %v3344 = vpop.f32.mrb[0].mxu0
  %v3345 = vadd.f32 %v3304, %v3344
  %v3346 = vpop.f32.mrb[0].mxu0
  %v3347 = vpop.f32.mrb[0].mxu0
  %3348 = vdwg.mxu0
  %3349 = vmatprep.subr.bf16.mxu0 %v2299
  %3350 = vmatpush1.bf16.msra.mxu0 %v2298
  %3351 = vmatprep.subr.bf16.mxu0 %v2301
  %3352 = vmatpush1.bf16.msra.mxu0 %v2300
  %3353 = vmatprep.subr.bf16.mxu0 %v2303
  %3354 = vmatpush1.bf16.msra.mxu0 %v2302
  %3355 = vmatprep.subr.bf16.mxu0 %v2305
  %3356 = vmatpush1.bf16.msra.mxu0 %v2304
  %3357 = vmatprep.subr.bf16.mxu0 %v2307
  %3358 = vmatpush1.bf16.msra.mxu0 %v2306
  %3359 = vmatprep.subr.bf16.mxu0 %v2309
  %3360 = vmatpush1.bf16.msra.mxu0 %v2308
  %3361 = vmatprep.subr.bf16.mxu0 %v2311
  %3362 = vmatpush1.bf16.msra.mxu0 %v2310
  %3363 = vmatprep.subr.bf16.mxu0 %v2313
  %3364 = vmatpush1.bf16.msra.mxu0 %v2312
  %3365 = vmatprep.subr.bf16.mxu0 %v2315
  %3366 = vmatpush1.bf16.msra.mxu0 %v2314
  %3367 = vmatprep.subr.bf16.mxu0 %v2317
  %3368 = vmatpush1.bf16.msra.mxu0 %v2316
  %3369 = vmatprep.subr.bf16.mxu0 %v2319
  %3370 = vmatpush1.bf16.msra.mxu0 %v2318
  %3371 = vmatprep.subr.bf16.mxu0 %v2321
  %3372 = vmatpush1.bf16.msra.mxu0 %v2320
  %3373 = vmatprep.subr.bf16.mxu0 %v2323
  %3374 = vmatpush1.bf16.msra.mxu0 %v2322
  %3375 = vmatprep.subr.bf16.mxu0 %v2325
  %3376 = vmatpush1.bf16.msra.mxu0 %v2324
  %3377 = vmatprep.subr.bf16.mxu0 %v2327
  %3378 = vmatpush1.bf16.msra.mxu0 %v2326
  %3379 = vmatprep.subr.bf16.mxu0 %v2329
  %3380 = vmatpush1.bf16.msra.mxu0 %v2328
  %3381 = vmatprep.mubr.bf16.mxu0 %v609
  %3382 = vmatmul.mubr.bf16.gmra.mrb[0].mxu0 %v608
  %v3383 = vpop.f32.mrb[0].mxu0
  %v3384 = vadd.f32 %v3343, %v3383
  %v3385 = vpop.f32.mrb[0].mxu0
  %v3386 = vadd.f32 %v3345, %v3385
  %v3387 = vpop.f32.mrb[0].mxu0
  %v3388 = vpop.f32.mrb[0].mxu0
  %3389 = vdwg.mxu0
  %3390 = vmatprep.subr.bf16.mxu0 %v2331
  %3391 = vmatpush1.bf16.msra.mxu0 %v2330
  %3392 = vmatprep.subr.bf16.mxu0 %v2333
  %3393 = vmatpush1.bf16.msra.mxu0 %v2332
  %3394 = vmatprep.subr.bf16.mxu0 %v2335
  %3395 = vmatpush1.bf16.msra.mxu0 %v2334
  %3396 = vmatprep.subr.bf16.mxu0 %v2337
  %3397 = vmatpush1.bf16.msra.mxu0 %v2336
  %3398 = vmatprep.subr.bf16.mxu0 %v2339
  %3399 = vmatpush1.bf16.msra.mxu0 %v2338
  %3400 = vmatprep.subr.bf16.mxu0 %v2341
  %3401 = vmatpush1.bf16.msra.mxu0 %v2340
  %3402 = vmatprep.subr.bf16.mxu0 %v2343
  %3403 = vmatpush1.bf16.msra.mxu0 %v2342
  %3404 = vmatprep.subr.bf16.mxu0 %v2345
  %3405 = vmatpush1.bf16.msra.mxu0 %v2344
  %3406 = vmatprep.subr.bf16.mxu0 %v2347
  %3407 = vmatpush1.bf16.msra.mxu0 %v2346
  %3408 = vmatprep.subr.bf16.mxu0 %v2349
  %3409 = vmatpush1.bf16.msra.mxu0 %v2348
  %3410 = vmatprep.subr.bf16.mxu0 %v2351
  %3411 = vmatpush1.bf16.msra.mxu0 %v2350
  %3412 = vmatprep.subr.bf16.mxu0 %v2353
  %3413 = vmatpush1.bf16.msra.mxu0 %v2352
  %3414 = vmatprep.subr.bf16.mxu0 %v2355
  %3415 = vmatpush1.bf16.msra.mxu0 %v2354
  %3416 = vmatprep.subr.bf16.mxu0 %v2357
  %3417 = vmatpush1.bf16.msra.mxu0 %v2356
  %3418 = vmatprep.subr.bf16.mxu0 %v2359
  %3419 = vmatpush1.bf16.msra.mxu0 %v2358
  %3420 = vmatprep.subr.bf16.mxu0 %v2361
  %3421 = vmatpush1.bf16.msra.mxu0 %v2360
  %3422 = vmatprep.mubr.bf16.mxu0 %v611
  %3423 = vmatmul.mubr.bf16.gmra.mrb[0].mxu0 %v610
  %v3424 = vpop.f32.mrb[0].mxu0
  %v3425 = vadd.f32 %v3384, %v3424
  %v3426 = vpop.f32.mrb[0].mxu0
  %v3427 = vadd.f32 %v3386, %v3426
  %v3428 = vpop.f32.mrb[0].mxu0
  %v3429 = vpop.f32.mrb[0].mxu0
  %3430 = vdwg.mxu0
  %3431 = vmatprep.subr.bf16.mxu0 %v2363
  %3432 = vmatpush1.bf16.msra.mxu0 %v2362
  %3433 = vmatprep.subr.bf16.mxu0 %v2365
  %3434 = vmatpush1.bf16.msra.mxu0 %v2364
  %3435 = vmatprep.subr.bf16.mxu0 %v2367
  %3436 = vmatpush1.bf16.msra.mxu0 %v2366
  %3437 = vmatprep.subr.bf16.mxu0 %v2369
  %3438 = vmatpush1.bf16.msra.mxu0 %v2368
  %3439 = vmatprep.subr.bf16.mxu0 %v2371
  %3440 = vmatpush1.bf16.msra.mxu0 %v2370
  %3441 = vmatprep.subr.bf16.mxu0 %v2373
  %3442 = vmatpush1.bf16.msra.mxu0 %v2372
  %3443 = vmatprep.subr.bf16.mxu0 %v2375
  %3444 = vmatpush1.bf16.msra.mxu0 %v2374
  %3445 = vmatprep.subr.bf16.mxu0 %v2377
  %3446 = vmatpush1.bf16.msra.mxu0 %v2376
  %3447 = vmatprep.subr.bf16.mxu0 %v2379
  %3448 = vmatpush1.bf16.msra.mxu0 %v2378
  %3449 = vmatprep.subr.bf16.mxu0 %v2381
  %3450 = vmatpush1.bf16.msra.mxu0 %v2380
  %3451 = vmatprep.subr.bf16.mxu0 %v2383
  %3452 = vmatpush1.bf16.msra.mxu0 %v2382
  %3453 = vmatprep.subr.bf16.mxu0 %v2385
  %3454 = vmatpush1.bf16.msra.mxu0 %v2384
  %3455 = vmatprep.subr.bf16.mxu0 %v2387
  %3456 = vmatpush1.bf16.msra.mxu0 %v2386
  %3457 = vmatprep.subr.bf16.mxu0 %v2389
  %3458 = vmatpush1.bf16.msra.mxu0 %v2388
  %3459 = vmatprep.subr.bf16.mxu0 %v2391
  %3460 = vmatpush1.bf16.msra.mxu0 %v2390
  %3461 = vmatprep.subr.bf16.mxu0 %v2393
  %3462 = vmatpush1.bf16.msra.mxu0 %v2392
  %3463 = vmatprep.mubr.bf16.mxu0 %v613
  %3464 = vmatmul.mubr.bf16.gmra.mrb[0].mxu0 %v612
  %v3465 = vpop.f32.mrb[0].mxu0
  %v3466 = vadd.f32 %v3425, %v3465
  %v3467 = vpop.f32.mrb[0].mxu0
  %v3468 = vadd.f32 %v3427, %v3467
  %v3469 = vpop.f32.mrb[0].mxu0
  %v3470 = vpop.f32.mrb[0].mxu0
  %3471 = vdwg.mxu0
  %3472 = vmatprep.subr.bf16.mxu0 %v2395
  %3473 = vmatpush1.bf16.msra.mxu0 %v2394
  %3474 = vmatprep.subr.bf16.mxu0 %v2397
  %3475 = vmatpush1.bf16.msra.mxu0 %v2396
  %3476 = vmatprep.subr.bf16.mxu0 %v2399
  %3477 = vmatpush1.bf16.msra.mxu0 %v2398
  %3478 = vmatprep.subr.bf16.mxu0 %v2401
  %3479 = vmatpush1.bf16.msra.mxu0 %v2400
  %3480 = vmatprep.subr.bf16.mxu0 %v2403
  %3481 = vmatpush1.bf16.msra.mxu0 %v2402
  %3482 = vmatprep.subr.bf16.mxu0 %v2405
  %3483 = vmatpush1.bf16.msra.mxu0 %v2404
  %3484 = vmatprep.subr.bf16.mxu0 %v2407
  %3485 = vmatpush1.bf16.msra.mxu0 %v2406
  %3486 = vmatprep.subr.bf16.mxu0 %v2409
  %3487 = vmatpush1.bf16.msra.mxu0 %v2408
  %3488 = vmatprep.subr.bf16.mxu0 %v2411
  %3489 = vmatpush1.bf16.msra.mxu0 %v2410
  %3490 = vmatprep.subr.bf16.mxu0 %v2413
  %3491 = vmatpush1.bf16.msra.mxu0 %v2412
  %3492 = vmatprep.subr.bf16.mxu0 %v2415
  %3493 = vmatpush1.bf16.msra.mxu0 %v2414
  %3494 = vmatprep.subr.bf16.mxu0 %v2417
  %3495 = vmatpush1.bf16.msra.mxu0 %v2416
  %3496 = vmatprep.subr.bf16.mxu0 %v2419
  %3497 = vmatpush1.bf16.msra.mxu0 %v2418
  %3498 = vmatprep.subr.bf16.mxu0 %v2421
  %3499 = vmatpush1.bf16.msra.mxu0 %v2420
  %3500 = vmatprep.subr.bf16.mxu0 %v2423
  %3501 = vmatpush1.bf16.msra.mxu0 %v2422
  %3502 = vmatprep.subr.bf16.mxu0 %v2425
  %3503 = vmatpush1.bf16.msra.mxu0 %v2424
  %3504 = vmatprep.mubr.bf16.mxu0 %v615
  %3505 = vmatmul.mubr.bf16.gmra.mrb[0].mxu0 %v614
  %v3506 = vpop.f32.mrb[0].mxu0
  %v3507 = vadd.f32 %v3466, %v3506
  %v3508 = vpop.f32.mrb[0].mxu0
  %v3509 = vadd.f32 %v3468, %v3508
  %v3510 = vpop.f32.mrb[0].mxu0
  %v3511 = vpop.f32.mrb[0].mxu0
  %3512 = vdwg.mxu0
  %3513 = vmatprep.subr.bf16.mxu0 %v2427
  %3514 = vmatpush1.bf16.msra.mxu0 %v2426
  %3515 = vmatprep.subr.bf16.mxu0 %v2429
  %3516 = vmatpush1.bf16.msra.mxu0 %v2428
  %3517 = vmatprep.subr.bf16.mxu0 %v2431
  %3518 = vmatpush1.bf16.msra.mxu0 %v2430
  %3519 = vmatprep.subr.bf16.mxu0 %v2433
  %3520 = vmatpush1.bf16.msra.mxu0 %v2432
  %3521 = vmatprep.subr.bf16.mxu0 %v2435
  %3522 = vmatpush1.bf16.msra.mxu0 %v2434
  %3523 = vmatprep.subr.bf16.mxu0 %v2437
  %3524 = vmatpush1.bf16.msra.mxu0 %v2436
  %3525 = vmatprep.subr.bf16.mxu0 %v2439
  %3526 = vmatpush1.bf16.msra.mxu0 %v2438
  %3527 = vmatprep.subr.bf16.mxu0 %v2441
  %3528 = vmatpush1.bf16.msra.mxu0 %v2440
  %3529 = vmatprep.subr.bf16.mxu0 %v2443
  %3530 = vmatpush1.bf16.msra.mxu0 %v2442
  %3531 = vmatprep.subr.bf16.mxu0 %v2445
  %3532 = vmatpush1.bf16.msra.mxu0 %v2444
  %3533 = vmatprep.subr.bf16.mxu0 %v2447
  %3534 = vmatpush1.bf16.msra.mxu0 %v2446
  %3535 = vmatprep.subr.bf16.mxu0 %v2449
  %3536 = vmatpush1.bf16.msra.mxu0 %v2448
  %3537 = vmatprep.subr.bf16.mxu0 %v2451
  %3538 = vmatpush1.bf16.msra.mxu0 %v2450
  %3539 = vmatprep.subr.bf16.mxu0 %v2453
  %3540 = vmatpush1.bf16.msra.mxu0 %v2452
  %3541 = vmatprep.subr.bf16.mxu0 %v2455
  %3542 = vmatpush1.bf16.msra.mxu0 %v2454
  %3543 = vmatprep.subr.bf16.mxu0 %v2457
  %3544 = vmatpush1.bf16.msra.mxu0 %v2456
  %3545 = vmatprep.mubr.bf16.mxu0 %v617
  %3546 = vmatmul.mubr.bf16.gmra.mrb[0].mxu0 %v616
  %v3547 = vpop.f32.mrb[0].mxu0
  %v3548 = vadd.f32 %v3507, %v3547
  %v3549 = vpop.f32.mrb[0].mxu0
  %v3550 = vadd.f32 %v3509, %v3549
  %v3551 = vpop.f32.mrb[0].mxu0
  %v3552 = vpop.f32.mrb[0].mxu0
  %3553 = vdwg.mxu0
  %3554 = vmatprep.subr.bf16.mxu0 %v2459
  %3555 = vmatpush1.bf16.msra.mxu0 %v2458
  %3556 = vmatprep.subr.bf16.mxu0 %v2461
  %3557 = vmatpush1.bf16.msra.mxu0 %v2460
  %3558 = vmatprep.subr.bf16.mxu0 %v2463
  %3559 = vmatpush1.bf16.msra.mxu0 %v2462
  %3560 = vmatprep.subr.bf16.mxu0 %v2465
  %3561 = vmatpush1.bf16.msra.mxu0 %v2464
  %3562 = vmatprep.subr.bf16.mxu0 %v2467
  %3563 = vmatpush1.bf16.msra.mxu0 %v2466
  %3564 = vmatprep.subr.bf16.mxu0 %v2469
  %3565 = vmatpush1.bf16.msra.mxu0 %v2468
  %3566 = vmatprep.subr.bf16.mxu0 %v2471
  %3567 = vmatpush1.bf16.msra.mxu0 %v2470
  %3568 = vmatprep.subr.bf16.mxu0 %v2473
  %3569 = vmatpush1.bf16.msra.mxu0 %v2472
  %3570 = vmatprep.subr.bf16.mxu0 %v2475
  %3571 = vmatpush1.bf16.msra.mxu0 %v2474
  %3572 = vmatprep.subr.bf16.mxu0 %v2477
  %3573 = vmatpush1.bf16.msra.mxu0 %v2476
  %3574 = vmatprep.subr.bf16.mxu0 %v2479
  %3575 = vmatpush1.bf16.msra.mxu0 %v2478
  %3576 = vmatprep.subr.bf16.mxu0 %v2481
  %3577 = vmatpush1.bf16.msra.mxu0 %v2480
  %3578 = vmatprep.subr.bf16.mxu0 %v2483
  %3579 = vmatpush1.bf16.msra.mxu0 %v2482
  %3580 = vmatprep.subr.bf16.mxu0 %v2485
  %3581 = vmatpush1.bf16.msra.mxu0 %v2484
  %3582 = vmatprep.subr.bf16.mxu0 %v2487
  %3583 = vmatpush1.bf16.msra.mxu0 %v2486
  %3584 = vmatprep.subr.bf16.mxu0 %v2489
  %3585 = vmatpush1.bf16.msra.mxu0 %v2488
  %3586 = vmatprep.mubr.bf16.mxu0 %v619
  %3587 = vmatmul.mubr.bf16.gmra.mrb[0].mxu0 %v618
  %v3588 = vpop.f32.mrb[0].mxu0
  %v3589 = vadd.f32 %v3548, %v3588
  %v3590 = vpop.f32.mrb[0].mxu0
  %v3591 = vadd.f32 %v3550, %v3590
  %v3592 = vpop.f32.mrb[0].mxu0
  %v3593 = vpop.f32.mrb[0].mxu0
  %3594 = vdwg.mxu0
  %3595 = vmatprep.subr.bf16.mxu0 %v2491
  %3596 = vmatpush1.bf16.msra.mxu0 %v2490
  %3597 = vmatprep.subr.bf16.mxu0 %v2493
  %3598 = vmatpush1.bf16.msra.mxu0 %v2492
  %3599 = vmatprep.subr.bf16.mxu0 %v2495
  %3600 = vmatpush1.bf16.msra.mxu0 %v2494
  %3601 = vmatprep.subr.bf16.mxu0 %v2497
  %3602 = vmatpush1.bf16.msra.mxu0 %v2496
  %3603 = vmatprep.subr.bf16.mxu0 %v2499
  %3604 = vmatpush1.bf16.msra.mxu0 %v2498
  %3605 = vmatprep.subr.bf16.mxu0 %v2501
  %3606 = vmatpush1.bf16.msra.mxu0 %v2500
  %3607 = vmatprep.subr.bf16.mxu0 %v2503
  %3608 = vmatpush1.bf16.msra.mxu0 %v2502
  %3609 = vmatprep.subr.bf16.mxu0 %v2505
  %3610 = vmatpush1.bf16.msra.mxu0 %v2504
  %3611 = vmatprep.subr.bf16.mxu0 %v2507
  %3612 = vmatpush1.bf16.msra.mxu0 %v2506
  %3613 = vmatprep.subr.bf16.mxu0 %v2509
  %3614 = vmatpush1.bf16.msra.mxu0 %v2508
  %3615 = vmatprep.subr.bf16.mxu0 %v2511
  %3616 = vmatpush1.bf16.msra.mxu0 %v2510
  %3617 = vmatprep.subr.bf16.mxu0 %v2513
  %3618 = vmatpush1.bf16.msra.mxu0 %v2512
  %3619 = vmatprep.subr.bf16.mxu0 %v2515
  %3620 = vmatpush1.bf16.msra.mxu0 %v2514
  %3621 = vmatprep.subr.bf16.mxu0 %v2517
  %3622 = vmatpush1.bf16.msra.mxu0 %v2516
  %3623 = vmatprep.subr.bf16.mxu0 %v2519
  %3624 = vmatpush1.bf16.msra.mxu0 %v2518
  %3625 = vmatprep.subr.bf16.mxu0 %v2521
  %3626 = vmatpush1.bf16.msra.mxu0 %v2520
  %3627 = vmatprep.mubr.bf16.mxu0 %v621
  %3628 = vmatmul.mubr.bf16.gmra.mrb[0].mxu0 %v620
  %v3629 = vpop.f32.mrb[0].mxu0
  %v3630 = vadd.f32 %v3589, %v3629
  %v3631 = vpop.f32.mrb[0].mxu0
  %v3632 = vadd.f32 %v3591, %v3631
  %v3633 = vpop.f32.mrb[0].mxu0
  %v3634 = vpop.f32.mrb[0].mxu0
  %3635 = vdwg.mxu0
  %3636 = vmatprep.subr.bf16.mxu0 %v2523
  %3637 = vmatpush1.bf16.msra.mxu0 %v2522
  %3638 = vmatprep.subr.bf16.mxu0 %v2525
  %3639 = vmatpush1.bf16.msra.mxu0 %v2524
  %3640 = vmatprep.subr.bf16.mxu0 %v2527
  %3641 = vmatpush1.bf16.msra.mxu0 %v2526
  %3642 = vmatprep.subr.bf16.mxu0 %v2529
  %3643 = vmatpush1.bf16.msra.mxu0 %v2528
  %3644 = vmatprep.subr.bf16.mxu0 %v2531
  %3645 = vmatpush1.bf16.msra.mxu0 %v2530
  %3646 = vmatprep.subr.bf16.mxu0 %v2533
  %3647 = vmatpush1.bf16.msra.mxu0 %v2532
  %3648 = vmatprep.subr.bf16.mxu0 %v2535
  %3649 = vmatpush1.bf16.msra.mxu0 %v2534
  %3650 = vmatprep.subr.bf16.mxu0 %v2537
  %3651 = vmatpush1.bf16.msra.mxu0 %v2536
  %3652 = vmatprep.subr.bf16.mxu0 %v2539
  %3653 = vmatpush1.bf16.msra.mxu0 %v2538
  %3654 = vmatprep.subr.bf16.mxu0 %v2541
  %3655 = vmatpush1.bf16.msra.mxu0 %v2540
  %3656 = vmatprep.subr.bf16.mxu0 %v2543
  %3657 = vmatpush1.bf16.msra.mxu0 %v2542
  %3658 = vmatprep.subr.bf16.mxu0 %v2545
  %3659 = vmatpush1.bf16.msra.mxu0 %v2544
  %3660 = vmatprep.subr.bf16.mxu0 %v2547
  %3661 = vmatpush1.bf16.msra.mxu0 %v2546
  %3662 = vmatprep.subr.bf16.mxu0 %v2549
  %3663 = vmatpush1.bf16.msra.mxu0 %v2548
  %3664 = vmatprep.subr.bf16.mxu0 %v2551
  %3665 = vmatpush1.bf16.msra.mxu0 %v2550
  %3666 = vmatprep.subr.bf16.mxu0 %v2553
  %3667 = vmatpush1.bf16.msra.mxu0 %v2552
  %3668 = vmatprep.mubr.bf16.mxu0 %v623
  %3669 = vmatmul.mubr.bf16.gmra.mrb[0].mxu0 %v622
  %v3670 = vpop.f32.mrb[0].mxu0
  %v3671 = vadd.f32 %v3630, %v3670
  %v3672 = vpop.f32.mrb[0].mxu0
  %v3673 = vadd.f32 %v3632, %v3672
  %v3674 = vpop.f32.mrb[0].mxu0
  %v3675 = vpop.f32.mrb[0].mxu0
  %3676 = vdwg.mxu0
  %3677 = vmatprep.subr.bf16.mxu0 %v2555
  %3678 = vmatpush1.bf16.msra.mxu0 %v2554
  %3679 = vmatprep.subr.bf16.mxu0 %v2557
  %3680 = vmatpush1.bf16.msra.mxu0 %v2556
  %3681 = vmatprep.subr.bf16.mxu0 %v2559
  %3682 = vmatpush1.bf16.msra.mxu0 %v2558
  %3683 = vmatprep.subr.bf16.mxu0 %v2561
  %3684 = vmatpush1.bf16.msra.mxu0 %v2560
  %3685 = vmatprep.subr.bf16.mxu0 %v2563
  %3686 = vmatpush1.bf16.msra.mxu0 %v2562
  %3687 = vmatprep.subr.bf16.mxu0 %v2565
  %3688 = vmatpush1.bf16.msra.mxu0 %v2564
  %3689 = vmatprep.subr.bf16.mxu0 %v2567
  %3690 = vmatpush1.bf16.msra.mxu0 %v2566
  %3691 = vmatprep.subr.bf16.mxu0 %v2569
  %3692 = vmatpush1.bf16.msra.mxu0 %v2568
  %3693 = vmatprep.subr.bf16.mxu0 %v2571
  %3694 = vmatpush1.bf16.msra.mxu0 %v2570
  %3695 = vmatprep.subr.bf16.mxu0 %v2573
  %3696 = vmatpush1.bf16.msra.mxu0 %v2572
  %3697 = vmatprep.subr.bf16.mxu0 %v2575
  %3698 = vmatpush1.bf16.msra.mxu0 %v2574
  %3699 = vmatprep.subr.bf16.mxu0 %v2577
  %3700 = vmatpush1.bf16.msra.mxu0 %v2576
  %3701 = vmatprep.subr.bf16.mxu0 %v2579
  %3702 = vmatpush1.bf16.msra.mxu0 %v2578
  %3703 = vmatprep.subr.bf16.mxu0 %v2581
  %3704 = vmatpush1.bf16.msra.mxu0 %v2580
  %3705 = vmatprep.subr.bf16.mxu0 %v2583
  %3706 = vmatpush1.bf16.msra.mxu0 %v2582
  %3707 = vmatprep.subr.bf16.mxu0 %v2585
  %3708 = vmatpush1.bf16.msra.mxu0 %v2584
  %3709 = vmatprep.mubr.bf16.mxu0 %v625
  %3710 = vmatmul.mubr.bf16.gmra.mrb[0].mxu0 %v624
  %v3711 = vpop.f32.mrb[0].mxu0
  %v3712 = vadd.f32 %v3671, %v3711
  %v3713 = vpop.f32.mrb[0].mxu0
  %v3714 = vadd.f32 %v3673, %v3713
  %v3715 = vpop.f32.mrb[0].mxu0
  %v3716 = vpop.f32.mrb[0].mxu0
  %3717 = vdwg.mxu0
  %3718 = vmatprep.subr.bf16.mxu0 %v2587
  %3719 = vmatpush1.bf16.msra.mxu0 %v2586
  %3720 = vmatprep.subr.bf16.mxu0 %v2589
  %3721 = vmatpush1.bf16.msra.mxu0 %v2588
  %3722 = vmatprep.subr.bf16.mxu0 %v2591
  %3723 = vmatpush1.bf16.msra.mxu0 %v2590
  %3724 = vmatprep.subr.bf16.mxu0 %v2593
  %3725 = vmatpush1.bf16.msra.mxu0 %v2592
  %3726 = vmatprep.subr.bf16.mxu0 %v2595
  %3727 = vmatpush1.bf16.msra.mxu0 %v2594
  %3728 = vmatprep.subr.bf16.mxu0 %v2597
  %3729 = vmatpush1.bf16.msra.mxu0 %v2596
  %3730 = vmatprep.subr.bf16.mxu0 %v2599
  %3731 = vmatpush1.bf16.msra.mxu0 %v2598
  %3732 = vmatprep.subr.bf16.mxu0 %v2601
  %3733 = vmatpush1.bf16.msra.mxu0 %v2600
  %3734 = vmatprep.subr.bf16.mxu0 %v2603
  %3735 = vmatpush1.bf16.msra.mxu0 %v2602
  %3736 = vmatprep.subr.bf16.mxu0 %v2605
  %3737 = vmatpush1.bf16.msra.mxu0 %v2604
  %3738 = vmatprep.subr.bf16.mxu0 %v2607
  %3739 = vmatpush1.bf16.msra.mxu0 %v2606
  %3740 = vmatprep.subr.bf16.mxu0 %v2609
  %3741 = vmatpush1.bf16.msra.mxu0 %v2608
  %3742 = vmatprep.subr.bf16.mxu0 %v2611
  %3743 = vmatpush1.bf16.msra.mxu0 %v2610
  %3744 = vmatprep.subr.bf16.mxu0 %v2613
  %3745 = vmatpush1.bf16.msra.mxu0 %v2612
  %3746 = vmatprep.subr.bf16.mxu0 %v2615
  %3747 = vmatpush1.bf16.msra.mxu0 %v2614
  %3748 = vmatprep.subr.bf16.mxu0 %v2617
  %3749 = vmatpush1.bf16.msra.mxu0 %v2616
  %3750 = vmatprep.mubr.bf16.mxu0 %v627
  %3751 = vmatmul.mubr.bf16.gmra.mrb[0].mxu0 %v626
  %v3752 = vpop.f32.mrb[0].mxu0
  %v3753 = vadd.f32 %v3712, %v3752
  %v3754 = vpop.f32.mrb[0].mxu0
  %v3755 = vadd.f32 %v3714, %v3754
  %v3756 = vpop.f32.mrb[0].mxu0
  %v3757 = vpop.f32.mrb[0].mxu0
  %3758 = vdwg.mxu0
  %3759 = vmatprep.subr.bf16.mxu0 %v2619
  %3760 = vmatpush1.bf16.msra.mxu0 %v2618
  %3761 = vmatprep.subr.bf16.mxu0 %v2621
  %3762 = vmatpush1.bf16.msra.mxu0 %v2620
  %3763 = vmatprep.subr.bf16.mxu0 %v2623
  %3764 = vmatpush1.bf16.msra.mxu0 %v2622
  %3765 = vmatprep.subr.bf16.mxu0 %v2625
  %3766 = vmatpush1.bf16.msra.mxu0 %v2624
  %3767 = vmatprep.subr.bf16.mxu0 %v2627
  %3768 = vmatpush1.bf16.msra.mxu0 %v2626
  %3769 = vmatprep.subr.bf16.mxu0 %v2629
  %3770 = vmatpush1.bf16.msra.mxu0 %v2628
  %3771 = vmatprep.subr.bf16.mxu0 %v2631
  %3772 = vmatpush1.bf16.msra.mxu0 %v2630
  %3773 = vmatprep.subr.bf16.mxu0 %v2633
  %3774 = vmatpush1.bf16.msra.mxu0 %v2632
  %3775 = vmatprep.subr.bf16.mxu0 %v2635
  %3776 = vmatpush1.bf16.msra.mxu0 %v2634
  %3777 = vmatprep.subr.bf16.mxu0 %v2637
  %3778 = vmatpush1.bf16.msra.mxu0 %v2636
  %3779 = vmatprep.subr.bf16.mxu0 %v2639
  %3780 = vmatpush1.bf16.msra.mxu0 %v2638
  %3781 = vmatprep.subr.bf16.mxu0 %v2641
  %3782 = vmatpush1.bf16.msra.mxu0 %v2640
  %3783 = vmatprep.subr.bf16.mxu0 %v2643
  %3784 = vmatpush1.bf16.msra.mxu0 %v2642
  %3785 = vmatprep.subr.bf16.mxu0 %v2645
  %3786 = vmatpush1.bf16.msra.mxu0 %v2644
  %3787 = vmatprep.subr.bf16.mxu0 %v2647
  %3788 = vmatpush1.bf16.msra.mxu0 %v2646
  %3789 = vmatprep.subr.bf16.mxu0 %v2649
  %3790 = vmatpush1.bf16.msra.mxu0 %v2648
  %3791 = vmatprep.mubr.bf16.mxu0 %v629
  %3792 = vmatmul.mubr.bf16.gmra.mrb[0].mxu0 %v628
  %v3793 = vpop.f32.mrb[0].mxu0
  %v3794 = vadd.f32 %v3753, %v3793
  %v3795 = vpop.f32.mrb[0].mxu0
  %v3796 = vadd.f32 %v3755, %v3795
  %v3797 = vpop.f32.mrb[0].mxu0
  %v3798 = vpop.f32.mrb[0].mxu0
  %3799 = vdwg.mxu0
  %3800 = vmatprep.subr.bf16.mxu0 %v2651
  %3801 = vmatpush1.bf16.msra.mxu0 %v2650
  %3802 = vmatprep.subr.bf16.mxu0 %v2653
  %3803 = vmatpush1.bf16.msra.mxu0 %v2652
  %3804 = vmatprep.subr.bf16.mxu0 %v2655
  %3805 = vmatpush1.bf16.msra.mxu0 %v2654
  %3806 = vmatprep.subr.bf16.mxu0 %v2657
  %3807 = vmatpush1.bf16.msra.mxu0 %v2656
  %3808 = vmatprep.subr.bf16.mxu0 %v2659
  %3809 = vmatpush1.bf16.msra.mxu0 %v2658
  %3810 = vmatprep.subr.bf16.mxu0 %v2661
  %3811 = vmatpush1.bf16.msra.mxu0 %v2660
  %3812 = vmatprep.subr.bf16.mxu0 %v2663
  %3813 = vmatpush1.bf16.msra.mxu0 %v2662
  %3814 = vmatprep.subr.bf16.mxu0 %v2665
  %3815 = vmatpush1.bf16.msra.mxu0 %v2664
  %3816 = vmatprep.subr.bf16.mxu0 %v2667
  %3817 = vmatpush1.bf16.msra.mxu0 %v2666
  %3818 = vmatprep.subr.bf16.mxu0 %v2669
  %3819 = vmatpush1.bf16.msra.mxu0 %v2668
  %3820 = vmatprep.subr.bf16.mxu0 %v2671
  %3821 = vmatpush1.bf16.msra.mxu0 %v2670
  %3822 = vmatprep.subr.bf16.mxu0 %v2673
  %3823 = vmatpush1.bf16.msra.mxu0 %v2672
  %3824 = vmatprep.subr.bf16.mxu0 %v2675
  %3825 = vmatpush1.bf16.msra.mxu0 %v2674
  %3826 = vmatprep.subr.bf16.mxu0 %v2677
  %3827 = vmatpush1.bf16.msra.mxu0 %v2676
  %3828 = vmatprep.subr.bf16.mxu0 %v2679
  %3829 = vmatpush1.bf16.msra.mxu0 %v2678
  %3830 = vmatprep.subr.bf16.mxu0 %v2681
  %3831 = vmatpush1.bf16.msra.mxu0 %v2680
  %3832 = vmatprep.mubr.bf16.mxu0 %v631
  %3833 = vmatmul.mubr.bf16.gmra.mrb[0].mxu0 %v630
  %v3834 = vpop.f32.mrb[0].mxu0
  %v3835 = vadd.f32 %v3794, %v3834
  %v3836 = vpop.f32.mrb[0].mxu0
  %v3837 = vadd.f32 %v3796, %v3836
  %v3838 = vpop.f32.mrb[0].mxu0
  %v3839 = vpop.f32.mrb[0].mxu0
  %3840 = vdwg.mxu0
  %3841 = vmatprep.subr.bf16.mxu0 %v2683
  %3842 = vmatpush1.bf16.msra.mxu0 %v2682
  %3843 = vmatprep.subr.bf16.mxu0 %v2685
  %3844 = vmatpush1.bf16.msra.mxu0 %v2684
  %3845 = vmatprep.subr.bf16.mxu0 %v2687
  %3846 = vmatpush1.bf16.msra.mxu0 %v2686
  %3847 = vmatprep.subr.bf16.mxu0 %v2689
  %3848 = vmatpush1.bf16.msra.mxu0 %v2688
  %3849 = vmatprep.subr.bf16.mxu0 %v2691
  %3850 = vmatpush1.bf16.msra.mxu0 %v2690
  %3851 = vmatprep.subr.bf16.mxu0 %v2693
  %3852 = vmatpush1.bf16.msra.mxu0 %v2692
  %3853 = vmatprep.subr.bf16.mxu0 %v2695
  %3854 = vmatpush1.bf16.msra.mxu0 %v2694
  %3855 = vmatprep.subr.bf16.mxu0 %v2697
  %3856 = vmatpush1.bf16.msra.mxu0 %v2696
  %3857 = vmatprep.subr.bf16.mxu0 %v2699
  %3858 = vmatpush1.bf16.msra.mxu0 %v2698
  %3859 = vmatprep.subr.bf16.mxu0 %v2701
  %3860 = vmatpush1.bf16.msra.mxu0 %v2700
  %3861 = vmatprep.subr.bf16.mxu0 %v2703
  %3862 = vmatpush1.bf16.msra.mxu0 %v2702
  %3863 = vmatprep.subr.bf16.mxu0 %v2705
  %3864 = vmatpush1.bf16.msra.mxu0 %v2704
  %3865 = vmatprep.subr.bf16.mxu0 %v2707
  %3866 = vmatpush1.bf16.msra.mxu0 %v2706
  %3867 = vmatprep.subr.bf16.mxu0 %v2709
  %3868 = vmatpush1.bf16.msra.mxu0 %v2708
  %3869 = vmatprep.subr.bf16.mxu0 %v2711
  %3870 = vmatpush1.bf16.msra.mxu0 %v2710
  %3871 = vmatprep.subr.bf16.mxu0 %v2713
  %3872 = vmatpush1.bf16.msra.mxu0 %v2712
  %3873 = vmatprep.mubr.bf16.mxu0 %v633
  %3874 = vmatmul.mubr.bf16.gmra.mrb[0].mxu0 %v632
  %v3875 = vpop.f32.mrb[0].mxu0
  %v3876 = vadd.f32 %v3835, %v3875
  %v3877 = vpop.f32.mrb[0].mxu0
  %v3878 = vadd.f32 %v3837, %v3877
  %v3879 = vpop.f32.mrb[0].mxu0
  %v3880 = vpop.f32.mrb[0].mxu0
  %3881 = vdwg.mxu0
  %v3882 = vmax.f32 %v3876, 0.0
  %v3883 = vmax.f32 %v3878, 0.0
  %3884 = vst [vmem:[%s3] sm:$0xff] %v3882
  %3885 = vst [vmem:[%s3 + $0x8] sm:$0xff] %v3883
  // Predicated region
  $region14: #{md_e_attr_forward.9} parent=0 // pred_check
    _
  $region15: #{md_e_attr_forward.9} parent=0 // pred_check_branch
    %3887 = sbr.rel (0) target = $region17
  $region16: #{md_e_attr_forward.9} parent=0 // pred_region
    _
  $region17: #{md_e_attr_forward.9} parent=0 // pred_fallthru
    _
  // Predicated region
  $region18: #{md_e_attr_forward.9} parent=0 // pred_check
    _
  $region19: #{md_e_attr_forward.9} parent=0 // pred_check_branch
    %3889 = sbr.rel (0) target = $region21
  $region20: #{md_e_attr_forward.9} parent=0 // pred_region
    _
  $region21: #{md_e_attr_forward.9} parent=0 // pred_fallthru
    _

</llo_original>
